<compile_context>
chip_gen: v6e
topology: v6e:2x2x1
jax: 0.10.0
libtpu: 0.0.40
codegen_flags: <defaults>
</compile_context>

<pallas_src>
import functools

import jax
import jax.numpy as jnp
from jax import lax
from jax.experimental import pallas as pl
from jax.experimental.pallas import tpu as pltpu


# --------------------------------------------------------------------------- #
# Kernel                                                                       #
# --------------------------------------------------------------------------- #
def _bottleneck_kernel(x_ref, w1_ref, b1_ref, w2_ref, b2_ref, w3_ref, b3_ref,
                       o_ref, pad_ref, *, dilation, im2col):
    """One batch block per grid step. NHWC; all convs via MXU matmuls (bf16 in,
    f32 accumulate). BN scales are pre-folded into the weights; only bias+ReLU
    remain as element-wise work."""
    Bb, H, W, Cin = x_ref.shape
    Cmid = w1_ref.shape[1]
    Cout = w3_ref.shape[1]
    d = dilation
    M = Bb * H * W
    mxu = w1_ref.dtype                       # bf16 MXU operand dtype (weights pre-cast)

    # ---- conv1: 1x1 (BN scale folded into w1) + bias + ReLU -------------------
    x2d = x_ref[...].reshape(M, Cin)                       # leading-dim fold only
    y1 = jnp.dot(x2d.astype(mxu), w1_ref[...], preferred_element_type=jnp.float32)
    y1 = jnp.maximum(y1 + b1_ref[...], 0.0)                # (M, Cmid) f32

    # ---- conv2: dense 3x3, stride 1, pad=d, rhs dilation=d --------------------
    # Halo scratch: zero only the border (interior fully rewritten each step).
    # Border zeroed every step (cheap, a few KiB): under a "parallel" grid axis a
    # core may never run global step 0, so a program_id==0 guard would be unsafe.
    pad_ref[:, :d, :, :] = jnp.zeros((Bb, d, W + 2 * d, Cmid), jnp.float32)
    pad_ref[:, d + H:, :, :] = jnp.zeros((Bb, d, W + 2 * d, Cmid), jnp.float32)
    pad_ref[:, d:d + H, :d, :] = jnp.zeros((Bb, H, d, Cmid), jnp.float32)
    pad_ref[:, d:d + H, d + W:, :] = jnp.zeros((Bb, H, d, Cmid), jnp.float32)
    pad_ref[:, d:d + H, d:d + W, :] = y1.reshape(Bb, H, W, Cmid)

    # Gather the nine taps once.
    taps = []
    for ky in range(3):
        for kx in range(3):
            tap = pad_ref[:, ky * d:ky * d + H, kx * d:kx * d + W, :]
            taps.append(tap.reshape(M, Cmid))

    if im2col:
        # Single K = 9*Cmid matmul: tap accumulation happens inside the MXU.
        col = jnp.concatenate(taps, axis=-1)               # (M, 9*Cmid) f32
        y2 = jnp.dot(col.astype(mxu), w2_ref[...],
                     preferred_element_type=jnp.float32)
    else:
        # Fallback: per-tap matmuls against row-slices of the same packed weight.
        y2 = jnp.zeros((M, Cmid), jnp.float32)
        for t, tap in enumerate(taps):
            y2 = y2 + jnp.dot(tap.astype(mxu),
                              w2_ref[t * Cmid:(t + 1) * Cmid, :],
                              preferred_element_type=jnp.float32)
    y2 = jnp.maximum(y2 + b2_ref[...], 0.0)                 # (M, Cmid) f32

    # ---- conv3: 1x1 (BN scale folded) + bias (no ReLU before the residual) ----
    y3 = jnp.dot(y2.astype(mxu), w3_ref[...], preferred_element_type=jnp.float32)
    y3 = y3 + b3_ref[...]                                   # (M, Cout) f32

    # ---- identity residual (downsample=None => Cin == Cout) + final ReLU ------
    # Re-read x here (instead of keeping x2d live across all three convs).
    xres = x_ref[...].reshape(M, Cout)
    out = jnp.maximum(y3 + xres, 0.0)
    o_ref[...] = out.reshape(Bb, H, W, Cout).astype(o_ref.dtype)


# --------------------------------------------------------------------------- #
# Blocking / VMEM budgeting                                                    #
# --------------------------------------------------------------------------- #
def _vmem_budget_bytes():
    """Conservative per-core VMEM budget (~45% of physical, fallback 48 MiB)."""
    try:
        return int(pltpu.get_tpu_info().vmem_capacity_bytes * 0.45)
    except Exception:
        return 48 << 20


def _block_vmem_bytes(b, H, W, Cin, Cmid, Cout, d):
    m = b * H * W
    io = 2 * m * (Cin + Cout) * 4                     # double-buffered in/out blocks
    pad = b * (H + 2 * d) * (W + 2 * d) * Cmid * 4    # halo scratch (f32)
    col = m * 9 * Cmid * (4 + 2)                      # im2col operand (f32 + bf16 copy)
    work = 3 * m * max(Cmid, Cout) * 4                # f32 intermediates headroom
    return io + pad + col + work


def _pick_batch_block(N, H, W, Cin, Cmid, Cout, d):
    budget = _vmem_budget_bytes()
    divisors = [b for b in range(1, N + 1) if N % b == 0]
    fitting = [b for b in divisors
               if _block_vmem_bytes(b, H, W, Cin, Cmid, Cout, d) <= budget]
    if not fitting:
        return 1
    b = max(fitting)
    # Prefer >= 2 grid steps when the batch allows it so multi-TensorCore chips
    # (v7x) can shard the "parallel" axis; costs ~0.35us/step on 1-TC chips.
    if b == N and N > 1:
        smaller = [s for s in fitting if s < N]
        if smaller:
            b = max(smaller)
    return b


# --------------------------------------------------------------------------- #
# Wrappers                                                                     #
# --------------------------------------------------------------------------- #
def bottleneck_nhwc(x, packed, *, dilation=1, batch_block=None):
    """NHWC-native entry point (keeps a full NHWC network transpose-free)."""
    N, H, W, Cin = x.shape
    Cmid = packed["w1"].shape[1]
    Cout = packed["w3"].shape[1]
    assert Cin == Cout, "downsample=None requires inplanes == planes * expansion"
    d = dilation
    if batch_block is None:
        batch_block = _pick_batch_block(N, H, W, Cin, Cmid, Cout, d)
    assert N % batch_block == 0
    grid = (N // batch_block,)

    cp = dict(dimension_semantics=("parallel",))
    need = _block_vmem_bytes(batch_block, H, W, Cin, Cmid, Cout, d)
    if need > (30 << 20):
        # Only raise the scoped-VMEM limit when big blocks actually need it.
        cp["vmem_limit_bytes"] = int(min(need + (8 << 20), 100 << 20))

    def build(im2col):
        kernel = functools.partial(_bottleneck_kernel, dilation=d, im2col=im2col)
        return pl.pallas_call(
            kernel,
            out_shape=jax.ShapeDtypeStruct((N, H, W, Cout), x.dtype),
            grid_spec=pltpu.PrefetchScalarGridSpec(
                num_scalar_prefetch=0,
                grid=grid,
                in_specs=[
                    pl.BlockSpec((batch_block, H, W, Cin), lambda n: (n, 0, 0, 0)),
                    pl.BlockSpec((Cin, Cmid), lambda n: (0, 0)),        # w1 (folded)
                    pl.BlockSpec((1, Cmid), lambda n: (0, 0)),          # bias1
                    pl.BlockSpec((9 * Cmid, Cmid), lambda n: (0, 0)),   # w2 (im2col)
                    pl.BlockSpec((1, Cmid), lambda n: (0, 0)),          # bias2
                    pl.BlockSpec((Cmid, Cout), lambda n: (0, 0)),       # w3 (folded)
                    pl.BlockSpec((1, Cout), lambda n: (0, 0)),          # bias3
                ],
                out_specs=pl.BlockSpec((batch_block, H, W, Cout),
                                       lambda n: (n, 0, 0, 0)),
                scratch_shapes=[
                    pltpu.VMEM((batch_block, H + 2 * d, W + 2 * d, Cmid),
                               jnp.float32),
                ],
            ),
            compiler_params=pltpu.CompilerParams(**cp),
        )

    args = (x, packed["w1"], packed["b1"], packed["w2"], packed["b2"],
            packed["w3"], packed["b3"])
    try:
        return build(im2col=True)(*args)
    except Exception:
        # Fallback for toolchains lacking unaligned minor-dim concatenation;
        # still uses folded bf16 weights and the same packed (9*Cmid, Cmid) w2.
        return build(im2col=False)(*args)


def bottleneck_nchw(x_nchw, packed, *, dilation=1, batch_block=None):
    """PyTorch-parity wrapper; in a full NHWC network these transposes vanish."""
    x = jnp.transpose(x_nchw, (0, 2, 3, 1))
    y = bottleneck_nhwc(x, packed, dilation=dilation, batch_block=batch_block)
    return jnp.transpose(y, (0, 3, 1, 2))


# --------------------------------------------------------------------------- #
# Parameters                                                                   #
# --------------------------------------------------------------------------- #
def make_params(key, inplanes, planes, *, groups=1, base_width=64):
    """Synthetic module params (PyTorch shapes) with inference-mode BN folded to
    per-channel scale/shift."""
    assert groups == 1 and base_width == 64
    width = int(planes * (base_width / 64.0)) * groups
    out_ch = planes * 4                                    # Bottleneck.expansion = 4
    eps = 1e-5
    ks = jax.random.split(key, 15)

    w1_pt = jax.random.normal(ks[0], (width, inplanes, 1, 1), jnp.float32) / jnp.sqrt(
        jnp.float32(inplanes))
    w2_pt = jax.random.normal(ks[1], (width, width, 3, 3), jnp.float32) / jnp.sqrt(
        jnp.float32(9 * width))
    w3_pt = jax.random.normal(ks[2], (out_ch, width, 1, 1), jnp.float32) / jnp.sqrt(
        jnp.float32(width))

    def bn_fold(kg, kb, km, kv, c):
        gamma = 1.0 + 0.1 * jax.random.normal(kg, (c,), jnp.float32)
        beta = 0.1 * jax.random.normal(kb, (c,), jnp.float32)
        mean = 0.1 * jax.random.normal(km, (c,), jnp.float32)
        var = jnp.abs(1.0 + 0.1 * jax.random.normal(kv, (c,), jnp.float32))
        scale = gamma / jnp.sqrt(var + eps)
        shift = beta - mean * scale
        return scale[None, :], shift[None, :]

    s1, b1 = bn_fold(ks[3], ks[4], ks[5], ks[6], width)
    s2, b2 = bn_fold(ks[7], ks[8], ks[9], ks[10], width)
    s3, b3 = bn_fold(ks[11], ks[12], ks[13], ks[14], out_ch)

    return {
        "w1": jnp.transpose(w1_pt[:, :, 0, 0], (1, 0)),    # (Cin, width)
        "w2": jnp.transpose(w2_pt, (2, 3, 1, 0)),          # (kh, kw, in, out) HWIO
        "w3": jnp.transpose(w3_pt[:, :, 0, 0], (1, 0)),    # (width, Cout)
        "s1": s1, "b1": b1, "s2": s2, "b2": b2, "s3": s3, "b3": b3,
    }


def pack_params(params, mxu_dtype=jnp.bfloat16):
    """One-time transform: fold BN scales into conv weights, reshape the 3x3
    kernel for the single im2col matmul, and cast MXU operands to bf16."""
    w1 = (params["w1"] * params["s1"]).astype(mxu_dtype)               # (Cin, Cmid)
    w2 = params["w2"] * params["s2"].reshape(1, 1, 1, -1)              # fold into out ch
    kh, kw, ci, co = w2.shape
    w2 = w2.reshape(kh * kw * ci, co).astype(mxu_dtype)                # (9*Cmid, Cmid)
    w3 = (params["w3"] * params["s3"]).astype(mxu_dtype)               # (Cmid, Cout)
    return {"w1": w1, "b1": params["b1"], "w2": w2, "b2": params["b2"],
            "w3": w3, "b3": params["b3"]}


# --------------------------------------------------------------------------- #
# References                                                                   #
# --------------------------------------------------------------------------- #
def ref_forward_nhwc(x, params, dilation):
    """Pure-JAX f32 reference of the module forward (inference-mode BN)."""
    y = jnp.einsum("nhwc,cd->nhwd", x, params["w1"]) * params["s1"] + params["b1"]
    y = jnp.maximum(y, 0.0)
    y = lax.conv_general_dilated(
        y, params["w2"], window_strides=(1, 1),
        padding=[(dilation, dilation), (dilation, dilation)],
        rhs_dilation=(dilation, dilation),
        dimension_numbers=("NHWC", "HWIO", "NHWC"))
    y = jnp.maximum(y * params["s2"] + params["b2"], 0.0)
    y = jnp.einsum("nhwc,cd->nhwd", y, params["w3"]) * params["s3"] + params["b3"]
    return jnp.maximum(y + x, 0.0)


def ref_forward_nhwc_packed(x, packed, dilation):
    """Mirrors the kernel's folded-weight / bf16-operand math (tight check)."""
    N, H, W, Cin = x.shape
    Cmid = packed["w1"].shape[1]
    Cout = packed["w3"].shape[1]
    d = dilation
    mxu = packed["w1"].dtype
    M = N * H * W
    y1 = jnp.dot(x.reshape(M, Cin).astype(mxu), packed["w1"],
                 preferred_element_type=jnp.float32)
    y1 = jnp.maximum(y1 + packed["b1"], 0.0).reshape(N, H, W, Cmid)
    yp = jnp.pad(y1, ((0, 0), (d, d), (d, d), (0, 0)))
    col = jnp.concatenate(
        [yp[:, ky * d:ky * d + H, kx * d:kx * d + W, :].reshape(M, Cmid)
         for ky in range(3) for kx in range(3)], axis=-1)
    y2 = jnp.dot(col.astype(mxu), packed["w2"], preferred_element_type=jnp.float32)
    y2 = jnp.maximum(y2 + packed["b2"], 0.0)
    y3 = jnp.dot(y2.astype(mxu), packed["w3"], preferred_element_type=jnp.float32)
    y3 = y3 + packed["b3"]
    return jnp.maximum(y3.reshape(N, H, W, Cout) + x, 0.0)


# --------------------------------------------------------------------------- #
# Self-test                                                                    #
# --------------------------------------------------------------------------- #
if __name__ == "__main__":
    key = jax.random.PRNGKey(0)
    k_x, k_p = jax.random.split(key)

    # Bottleneck(inplanes=64, planes=16): width=16, output=planes*4=64 == inplanes,
    # so downsample=None and the identity residual applies (module defaults).
    N, Cin, H, W = 2, 64, 16, 16
    planes = 16
    x_nchw = jax.random.normal(k_x, (N, Cin, H, W), jnp.float32)
    params = make_params(k_p, Cin, planes)
    packed = pack_params(params)
    x_nhwc = jnp.transpose(x_nchw, (0, 2, 3, 1))

    ref32_d1 = None
    for dilation in (1, 2):
        out = jax.block_until_ready(bottleneck_nhwc(x_nhwc, packed, dilation=dilation))
        assert out.shape == (N, H, W, Cin)

        # Tight check: same folded bf16 math in pure JAX.
        ref16 = ref_forward_nhwc_packed(x_nhwc, packed, dilation)
        tight = float(jnp.max(jnp.abs(out - ref16)))
        assert tight < 1e-3, f"dilation={dilation}: vs bf16 mirror max_err={tight}"

        # Loose check: f32 module semantics (bf16 weight quantization tolerance).
        ref32 = ref_forward_nhwc(x_nhwc, params, dilation)
        if dilation == 1:
            ref32_d1 = ref32
        scale = float(jnp.max(jnp.abs(ref32))) + 1e-6
        loose = float(jnp.max(jnp.abs(out - ref32)))
        assert loose <= 5e-2 * scale + 1e-3, (
            f"dilation={dilation}: vs f32 reference max_err={loose}")

    # PyTorch-interface (NCHW) parity wrapper.
    out_nchw = jax.block_until_ready(bottleneck_nchw(x_nchw, packed, dilation=1))
    assert out_nchw.shape == (N, Cin, H, W)
    ref_nchw = jnp.transpose(ref32_d1, (0, 3, 1, 2))
    scale = float(jnp.max(jnp.abs(ref_nchw))) + 1e-6
    err = float(jnp.max(jnp.abs(out_nchw - ref_nchw)))
    assert err <= 5e-2 * scale + 1e-3, f"NCHW wrapper max_err={err}"

    print("KERNEL_OK")
</pallas_src>

<mosaic_0001>
module attributes {stable_mosaic.version = 11 : i64} {
  func.func @_bottleneck_kernel(%arg0: i32, %arg1: memref<1x16x16x64xf32, #tpu.memory_space<vmem>>, %arg2: memref<64x16xbf16, #tpu.memory_space<vmem>>, %arg3: memref<1x16xf32, #tpu.memory_space<vmem>>, %arg4: memref<144x16xbf16, #tpu.memory_space<vmem>>, %arg5: memref<1x16xf32, #tpu.memory_space<vmem>>, %arg6: memref<16x64xbf16, #tpu.memory_space<vmem>>, %arg7: memref<1x64xf32, #tpu.memory_space<vmem>>, %arg8: memref<1x16x16x64xf32, #tpu.memory_space<vmem>>, %arg9: memref<1x18x18x16xf32, #tpu.memory_space<vmem>>) attributes {dimension_semantics = [#tpu.dimension_semantics<parallel>], iteration_bounds = array<i64: 2>, scalar_prefetch = 0 : i64, scratch_operands = 1 : i64, tpu.core_type = #tpu.core_type<tc>, window_params = [{transform_indices = @transform_0, window_bounds = array<i64: 1, 16, 16, 64>}, {pipeline_mode = #tpu.pipeline_mode<synchronous>, transform_indices = @transform_1, window_bounds = array<i64: 64, 16>}, {pipeline_mode = #tpu.pipeline_mode<synchronous>, transform_indices = @transform_2, window_bounds = array<i64: 1, 16>}, {pipeline_mode = #tpu.pipeline_mode<synchronous>, transform_indices = @transform_3, window_bounds = array<i64: 144, 16>}, {pipeline_mode = #tpu.pipeline_mode<synchronous>, transform_indices = @transform_4, window_bounds = array<i64: 1, 16>}, {pipeline_mode = #tpu.pipeline_mode<synchronous>, transform_indices = @transform_5, window_bounds = array<i64: 16, 64>}, {pipeline_mode = #tpu.pipeline_mode<synchronous>, transform_indices = @transform_6, window_bounds = array<i64: 1, 64>}, {transform_indices = @transform_7, window_bounds = array<i64: 1, 16, 16, 64>}]} {
    %c0 = arith.constant 0 : index
    %c0_0 = arith.constant 0 : index
    %c0_1 = arith.constant 0 : index
    %c0_2 = arith.constant 0 : index
    %0 = vector.load %arg1[%c0, %c0_0, %c0_1, %c0_2] : memref<1x16x16x64xf32, #tpu.memory_space<vmem>>, vector<1x16x16x64xf32>
    %1 = vector.shape_cast %0 : vector<1x16x16x64xf32> to vector<256x64xf32>
    %2 = arith.truncf %1 : vector<256x64xf32> to vector<256x64xbf16>
    %c0_3 = arith.constant 0 : index
    %c0_4 = arith.constant 0 : index
    %3 = vector.load %arg2[%c0_3, %c0_4] : memref<64x16xbf16, #tpu.memory_space<vmem>>, vector<64x16xbf16>
    %cst = arith.constant dense<0.000000e+00> : vector<256x16xf32>
    %4 = tpu.matmul %2, %3, %cst {dimension_numbers = #tpu.dot_dimension_numbers<[1], [0], [0], [1], [0, 0, 1, 1], [], []>} : vector<256x64xbf16>, vector<64x16xbf16>, vector<256x16xf32> -> vector<256x16xf32>
    %c0_5 = arith.constant 0 : index
    %c0_6 = arith.constant 0 : index
    %5 = vector.load %arg3[%c0_5, %c0_6] : memref<1x16xf32, #tpu.memory_space<vmem>>, vector<1x16xf32>
    %6 = vector.broadcast %5 : vector<1x16xf32> to vector<256x16xf32>
    %7 = arith.addf %4, %6 : vector<256x16xf32>
    %cst_7 = arith.constant 0.000000e+00 : f32
    %8 = vector.broadcast %cst_7 : f32 to vector<256x16xf32>
    %9 = arith.maximumf %7, %8 : vector<256x16xf32>
    %cst_8 = arith.constant 0.000000e+00 : f32
    %10 = vector.broadcast %cst_8 : f32 to vector<1x1x18x16xf32>
    %c0_9 = arith.constant 0 : index
    %c0_10 = arith.constant 0 : index
    %c0_11 = arith.constant 0 : index
    %c0_12 = arith.constant 0 : index
    %11 = vector.load %arg9[%c0_9, %c0_10, %c0_11, %c0_12] : memref<1x18x18x16xf32, #tpu.memory_space<vmem>>, vector<1x1x18x16xf32>
    tpu.vector_store %arg9[%c0_9, %c0_10, %c0_11, %c0_12], %10 {strides = array<i32>} : memref<1x18x18x16xf32, #tpu.memory_space<vmem>>, vector<1x1x18x16xf32>,
    %cst_13 = arith.constant 0.000000e+00 : f32
    %12 = vector.broadcast %cst_13 : f32 to vector<1x1x18x16xf32>
    %c0_14 = arith.constant 0 : index
    %c17 = arith.constant 17 : index
    %c0_15 = arith.constant 0 : index
    %c0_16 = arith.constant 0 : index
    %13 = vector.load %arg9[%c0_14, %c17, %c0_15, %c0_16] : memref<1x18x18x16xf32, #tpu.memory_space<vmem>>, vector<1x1x18x16xf32>
    tpu.vector_store %arg9[%c0_14, %c17, %c0_15, %c0_16], %12 {strides = array<i32>} : memref<1x18x18x16xf32, #tpu.memory_space<vmem>>, vector<1x1x18x16xf32>,
    %cst_17 = arith.constant 0.000000e+00 : f32
    %14 = vector.broadcast %cst_17 : f32 to vector<1x16x1x16xf32>
    %c0_18 = arith.constant 0 : index
    %c1 = arith.constant 1 : index
    %c0_19 = arith.constant 0 : index
    %c0_20 = arith.constant 0 : index
    %15 = vector.load %arg9[%c0_18, %c1, %c0_19, %c0_20] : memref<1x18x18x16xf32, #tpu.memory_space<vmem>>, vector<1x16x1x16xf32>
    tpu.vector_store %arg9[%c0_18, %c1, %c0_19, %c0_20], %14 {strides = array<i32>} : memref<1x18x18x16xf32, #tpu.memory_space<vmem>>, vector<1x16x1x16xf32>,
    %cst_21 = arith.constant 0.000000e+00 : f32
    %16 = vector.broadcast %cst_21 : f32 to vector<1x16x1x16xf32>
    %c0_22 = arith.constant 0 : index
    %c1_23 = arith.constant 1 : index
    %c17_24 = arith.constant 17 : index
    %c0_25 = arith.constant 0 : index
    %17 = vector.load %arg9[%c0_22, %c1_23, %c17_24, %c0_25] : memref<1x18x18x16xf32, #tpu.memory_space<vmem>>, vector<1x16x1x16xf32>
    tpu.vector_store %arg9[%c0_22, %c1_23, %c17_24, %c0_25], %16 {strides = array<i32>} : memref<1x18x18x16xf32, #tpu.memory_space<vmem>>, vector<1x16x1x16xf32>,
    %18 = vector.shape_cast %9 : vector<256x16xf32> to vector<1x16x16x16xf32>
    %c0_26 = arith.constant 0 : index
    %c1_27 = arith.constant 1 : index
    %c1_28 = arith.constant 1 : index
    %c0_29 = arith.constant 0 : index
    %19 = vector.load %arg9[%c0_26, %c1_27, %c1_28, %c0_29] : memref<1x18x18x16xf32, #tpu.memory_space<vmem>>, vector<1x16x16x16xf32>
    tpu.vector_store %arg9[%c0_26, %c1_27, %c1_28, %c0_29], %18 {strides = array<i32>} : memref<1x18x18x16xf32, #tpu.memory_space<vmem>>, vector<1x16x16x16xf32>,
    %c0_30 = arith.constant 0 : index
    %c0_31 = arith.constant 0 : index
    %c0_32 = arith.constant 0 : index
    %c0_33 = arith.constant 0 : index
    %20 = vector.load %arg9[%c0_30, %c0_31, %c0_32, %c0_33] : memref<1x18x18x16xf32, #tpu.memory_space<vmem>>, vector<1x16x16x16xf32>
    %21 = vector.shape_cast %20 : vector<1x16x16x16xf32> to vector<256x16xf32>
    %c0_34 = arith.constant 0 : index
    %c0_35 = arith.constant 0 : index
    %c1_36 = arith.constant 1 : index
    %c0_37 = arith.constant 0 : index
    %22 = vector.load %arg9[%c0_34, %c0_35, %c1_36, %c0_37] : memref<1x18x18x16xf32, #tpu.memory_space<vmem>>, vector<1x16x16x16xf32>
    %23 = vector.shape_cast %22 : vector<1x16x16x16xf32> to vector<256x16xf32>
    %c0_38 = arith.constant 0 : index
    %c0_39 = arith.constant 0 : index
    %c2 = arith.constant 2 : index
    %c0_40 = arith.constant 0 : index
    %24 = vector.load %arg9[%c0_38, %c0_39, %c2, %c0_40] : memref<1x18x18x16xf32, #tpu.memory_space<vmem>>, vector<1x16x16x16xf32>
    %25 = vector.shape_cast %24 : vector<1x16x16x16xf32> to vector<256x16xf32>
    %c0_41 = arith.constant 0 : index
    %c1_42 = arith.constant 1 : index
    %c0_43 = arith.constant 0 : index
    %c0_44 = arith.constant 0 : index
    %26 = vector.load %arg9[%c0_41, %c1_42, %c0_43, %c0_44] : memref<1x18x18x16xf32, #tpu.memory_space<vmem>>, vector<1x16x16x16xf32>
    %27 = vector.shape_cast %26 : vector<1x16x16x16xf32> to vector<256x16xf32>
    %c0_45 = arith.constant 0 : index
    %c1_46 = arith.constant 1 : index
    %c1_47 = arith.constant 1 : index
    %c0_48 = arith.constant 0 : index
    %28 = vector.load %arg9[%c0_45, %c1_46, %c1_47, %c0_48] : memref<1x18x18x16xf32, #tpu.memory_space<vmem>>, vector<1x16x16x16xf32>
    %29 = vector.shape_cast %28 : vector<1x16x16x16xf32> to vector<256x16xf32>
    %c0_49 = arith.constant 0 : index
    %c1_50 = arith.constant 1 : index
    %c2_51 = arith.constant 2 : index
    %c0_52 = arith.constant 0 : index
    %30 = vector.load %arg9[%c0_49, %c1_50, %c2_51, %c0_52] : memref<1x18x18x16xf32, #tpu.memory_space<vmem>>, vector<1x16x16x16xf32>
    %31 = vector.shape_cast %30 : vector<1x16x16x16xf32> to vector<256x16xf32>
    %c0_53 = arith.constant 0 : index
    %c2_54 = arith.constant 2 : index
    %c0_55 = arith.constant 0 : index
    %c0_56 = arith.constant 0 : index
    %32 = vector.load %arg9[%c0_53, %c2_54, %c0_55, %c0_56] : memref<1x18x18x16xf32, #tpu.memory_space<vmem>>, vector<1x16x16x16xf32>
    %33 = vector.shape_cast %32 : vector<1x16x16x16xf32> to vector<256x16xf32>
    %c0_57 = arith.constant 0 : index
    %c2_58 = arith.constant 2 : index
    %c1_59 = arith.constant 1 : index
    %c0_60 = arith.constant 0 : index
    %34 = vector.load %arg9[%c0_57, %c2_58, %c1_59, %c0_60] : memref<1x18x18x16xf32, #tpu.memory_space<vmem>>, vector<1x16x16x16xf32>
    %35 = vector.shape_cast %34 : vector<1x16x16x16xf32> to vector<256x16xf32>
    %c0_61 = arith.constant 0 : index
    %c2_62 = arith.constant 2 : index
    %c2_63 = arith.constant 2 : index
    %c0_64 = arith.constant 0 : index
    %36 = vector.load %arg9[%c0_61, %c2_62, %c2_63, %c0_64] : memref<1x18x18x16xf32, #tpu.memory_space<vmem>>, vector<1x16x16x16xf32>
    %37 = vector.shape_cast %36 : vector<1x16x16x16xf32> to vector<256x16xf32>
    %38 = tpu.concatenate %21, %23, %25, %27, %29, %31, %33, %35, %37 in 1 : vector<256x16xf32>, vector<256x16xf32>, vector<256x16xf32>, vector<256x16xf32>, vector<256x16xf32>, vector<256x16xf32>, vector<256x16xf32>, vector<256x16xf32>, vector<256x16xf32> -> vector<256x144xf32>
    %39 = arith.truncf %38 : vector<256x144xf32> to vector<256x144xbf16>
    %c0_65 = arith.constant 0 : index
    %c0_66 = arith.constant 0 : index
    %40 = vector.load %arg4[%c0_65, %c0_66] : memref<144x16xbf16, #tpu.memory_space<vmem>>, vector<144x16xbf16>
    %cst_67 = arith.constant dense<0.000000e+00> : vector<256x16xf32>
    %41 = tpu.matmul %39, %40, %cst_67 {dimension_numbers = #tpu.dot_dimension_numbers<[1], [0], [0], [1], [0, 0, 1, 1], [], []>} : vector<256x144xbf16>, vector<144x16xbf16>, vector<256x16xf32> -> vector<256x16xf32>
    %c0_68 = arith.constant 0 : index
    %c0_69 = arith.constant 0 : index
    %42 = vector.load %arg5[%c0_68, %c0_69] : memref<1x16xf32, #tpu.memory_space<vmem>>, vector<1x16xf32>
    %43 = vector.broadcast %42 : vector<1x16xf32> to vector<256x16xf32>
    %44 = arith.addf %41, %43 : vector<256x16xf32>
    %cst_70 = arith.constant 0.000000e+00 : f32
    %45 = vector.broadcast %cst_70 : f32 to vector<256x16xf32>
    %46 = arith.maximumf %44, %45 : vector<256x16xf32>
    %47 = arith.truncf %46 : vector<256x16xf32> to vector<256x16xbf16>
    %c0_71 = arith.constant 0 : index
    %c0_72 = arith.constant 0 : index
    %48 = vector.load %arg6[%c0_71, %c0_72] : memref<16x64xbf16, #tpu.memory_space<vmem>>, vector<16x64xbf16>
    %cst_73 = arith.constant dense<0.000000e+00> : vector<256x64xf32>
    %49 = tpu.matmul %47, %48, %cst_73 {dimension_numbers = #tpu.dot_dimension_numbers<[1], [0], [0], [1], [0, 0, 1, 1], [], []>} : vector<256x16xbf16>, vector<16x64xbf16>, vector<256x64xf32> -> vector<256x64xf32>
    %c0_74 = arith.constant 0 : index
    %c0_75 = arith.constant 0 : index
    %50 = vector.load %arg7[%c0_74, %c0_75] : memref<1x64xf32, #tpu.memory_space<vmem>>, vector<1x64xf32>
    %51 = vector.broadcast %50 : vector<1x64xf32> to vector<256x64xf32>
    %52 = arith.addf %49, %51 : vector<256x64xf32>
    %c0_76 = arith.constant 0 : index
    %c0_77 = arith.constant 0 : index
    %c0_78 = arith.constant 0 : index
    %c0_79 = arith.constant 0 : index
    %53 = vector.load %arg1[%c0_76, %c0_77, %c0_78, %c0_79] : memref<1x16x16x64xf32, #tpu.memory_space<vmem>>, vector<1x16x16x64xf32>
    %54 = vector.shape_cast %53 : vector<1x16x16x64xf32> to vector<256x64xf32>
    %55 = arith.addf %52, %54 : vector<256x64xf32>
    %cst_80 = arith.constant 0.000000e+00 : f32
    %56 = vector.broadcast %cst_80 : f32 to vector<256x64xf32>
    %57 = arith.maximumf %55, %56 : vector<256x64xf32>
    %58 = vector.shape_cast %57 : vector<256x64xf32> to vector<1x16x16x64xf32>
    %c0_81 = arith.constant 0 : index
    %c0_82 = arith.constant 0 : index
    %c0_83 = arith.constant 0 : index
    %c0_84 = arith.constant 0 : index
    %59 = vector.load %arg8[%c0_81, %c0_82, %c0_83, %c0_84] : memref<1x16x16x64xf32, #tpu.memory_space<vmem>>, vector<1x16x16x64xf32>
    tpu.vector_store %arg8[%c0_81, %c0_82, %c0_83, %c0_84], %58 {strides = array<i32>} : memref<1x16x16x64xf32, #tpu.memory_space<vmem>>, vector<1x16x16x64xf32>,
    return
  }
  func.func @transform_0(%arg0: i32) -> (i32, i32, i32, i32) {
    %c0_i32 = arith.constant 0 : i32
    %c0_i32_0 = arith.constant 0 : i32
    %c0_i32_1 = arith.constant 0 : i32
    %c0_i32_2 = arith.constant 0 : i32
    return %arg0, %c0_i32, %c0_i32_0, %c0_i32_1 : i32, i32, i32, i32
  }
  func.func @transform_1(%arg0: i32) -> (i32, i32) {
    %c0_i32 = arith.constant 0 : i32
    %c0_i32_0 = arith.constant 0 : i32
    %c0_i32_1 = arith.constant 0 : i32
    return %c0_i32, %c0_i32_0 : i32, i32
  }
  func.func @transform_2(%arg0: i32) -> (i32, i32) {
    %c0_i32 = arith.constant 0 : i32
    %c0_i32_0 = arith.constant 0 : i32
    %c0_i32_1 = arith.constant 0 : i32
    return %c0_i32, %c0_i32_0 : i32, i32
  }
  func.func @transform_3(%arg0: i32) -> (i32, i32) {
    %c0_i32 = arith.constant 0 : i32
    %c0_i32_0 = arith.constant 0 : i32
    %c0_i32_1 = arith.constant 0 : i32
    return %c0_i32, %c0_i32_0 : i32, i32
  }
  func.func @transform_4(%arg0: i32) -> (i32, i32) {
    %c0_i32 = arith.constant 0 : i32
    %c0_i32_0 = arith.constant 0 : i32
    %c0_i32_1 = arith.constant 0 : i32
    return %c0_i32, %c0_i32_0 : i32, i32
  }
  func.func @transform_5(%arg0: i32) -> (i32, i32) {
    %c0_i32 = arith.constant 0 : i32
    %c0_i32_0 = arith.constant 0 : i32
    %c0_i32_1 = arith.constant 0 : i32
    return %c0_i32, %c0_i32_0 : i32, i32
  }
  func.func @transform_6(%arg0: i32) -> (i32, i32) {
    %c0_i32 = arith.constant 0 : i32
    %c0_i32_0 = arith.constant 0 : i32
    %c0_i32_1 = arith.constant 0 : i32
    return %c0_i32, %c0_i32_0 : i32, i32
  }
  func.func @transform_7(%arg0: i32) -> (i32, i32, i32, i32) {
    %c0_i32 = arith.constant 0 : i32
    %c0_i32_0 = arith.constant 0 : i32
    %c0_i32_1 = arith.constant 0 : i32
    %c0_i32_2 = arith.constant 0 : i32
    return %arg0, %c0_i32, %c0_i32_0, %c0_i32_1 : i32, i32, i32, i32
  }
}

module attributes {stable_mosaic.version = 11 : i64} {
  func.func @_bottleneck_kernel(%arg0: i32, %arg1: memref<1x16x16x64xf32, #tpu.memory_space<vmem>>, %arg2: memref<64x16xbf16, #tpu.memory_space<vmem>>, %arg3: memref<1x16xf32, #tpu.memory_space<vmem>>, %arg4: memref<144x16xbf16, #tpu.memory_space<vmem>>, %arg5: memref<1x16xf32, #tpu.memory_space<vmem>>, %arg6: memref<16x64xbf16, #tpu.memory_space<vmem>>, %arg7: memref<1x64xf32, #tpu.memory_space<vmem>>, %arg8: memref<1x16x16x64xf32, #tpu.memory_space<vmem>>, %arg9: memref<1x18x18x16xf32, #tpu.memory_space<vmem>>) attributes {dimension_semantics = [#tpu.dimension_semantics<parallel>], iteration_bounds = array<i64: 2>, scalar_prefetch = 0 : i64, scratch_operands = 1 : i64, tpu.core_type = #tpu.core_type<tc>, window_params = [{transform_indices = @transform_0, window_bounds = array<i64: 1, 16, 16, 64>}, {pipeline_mode = #tpu.pipeline_mode<synchronous>, transform_indices = @transform_1, window_bounds = array<i64: 64, 16>}, {pipeline_mode = #tpu.pipeline_mode<synchronous>, transform_indices = @transform_2, window_bounds = array<i64: 1, 16>}, {pipeline_mode = #tpu.pipeline_mode<synchronous>, transform_indices = @transform_3, window_bounds = array<i64: 144, 16>}, {pipeline_mode = #tpu.pipeline_mode<synchronous>, transform_indices = @transform_4, window_bounds = array<i64: 1, 16>}, {pipeline_mode = #tpu.pipeline_mode<synchronous>, transform_indices = @transform_5, window_bounds = array<i64: 16, 64>}, {pipeline_mode = #tpu.pipeline_mode<synchronous>, transform_indices = @transform_6, window_bounds = array<i64: 1, 64>}, {transform_indices = @transform_7, window_bounds = array<i64: 1, 16, 16, 64>}]} {
    %c0 = arith.constant 0 : index
    %c0_0 = arith.constant 0 : index
    %c0_1 = arith.constant 0 : index
    %c0_2 = arith.constant 0 : index
    %0 = vector.load %arg1[%c0, %c0_0, %c0_1, %c0_2] : memref<1x16x16x64xf32, #tpu.memory_space<vmem>>, vector<1x16x16x64xf32>
    %1 = vector.shape_cast %0 : vector<1x16x16x64xf32> to vector<256x64xf32>
    %2 = arith.truncf %1 : vector<256x64xf32> to vector<256x64xbf16>
    %c0_3 = arith.constant 0 : index
    %c0_4 = arith.constant 0 : index
    %3 = vector.load %arg2[%c0_3, %c0_4] : memref<64x16xbf16, #tpu.memory_space<vmem>>, vector<64x16xbf16>
    %cst = arith.constant dense<0.000000e+00> : vector<256x16xf32>
    %4 = tpu.matmul %2, %3, %cst {dimension_numbers = #tpu.dot_dimension_numbers<[1], [0], [0], [1], [0, 0, 1, 1], [], []>} : vector<256x64xbf16>, vector<64x16xbf16>, vector<256x16xf32> -> vector<256x16xf32>
    %c0_5 = arith.constant 0 : index
    %c0_6 = arith.constant 0 : index
    %5 = vector.load %arg3[%c0_5, %c0_6] : memref<1x16xf32, #tpu.memory_space<vmem>>, vector<1x16xf32>
    %6 = vector.broadcast %5 : vector<1x16xf32> to vector<256x16xf32>
    %7 = arith.addf %4, %6 : vector<256x16xf32>
    %cst_7 = arith.constant 0.000000e+00 : f32
    %8 = vector.broadcast %cst_7 : f32 to vector<256x16xf32>
    %9 = arith.maximumf %7, %8 : vector<256x16xf32>
    %cst_8 = arith.constant 0.000000e+00 : f32
    %10 = vector.broadcast %cst_8 : f32 to vector<1x1x18x16xf32>
    %c0_9 = arith.constant 0 : index
    %c0_10 = arith.constant 0 : index
    %c0_11 = arith.constant 0 : index
    %c0_12 = arith.constant 0 : index
    %11 = vector.load %arg9[%c0_9, %c0_10, %c0_11, %c0_12] : memref<1x18x18x16xf32, #tpu.memory_space<vmem>>, vector<1x1x18x16xf32>
    tpu.vector_store %arg9[%c0_9, %c0_10, %c0_11, %c0_12], %10 {strides = array<i32>} : memref<1x18x18x16xf32, #tpu.memory_space<vmem>>, vector<1x1x18x16xf32>,
    %cst_13 = arith.constant 0.000000e+00 : f32
    %12 = vector.broadcast %cst_13 : f32 to vector<1x1x18x16xf32>
    %c0_14 = arith.constant 0 : index
    %c17 = arith.constant 17 : index
    %c0_15 = arith.constant 0 : index
    %c0_16 = arith.constant 0 : index
    %13 = vector.load %arg9[%c0_14, %c17, %c0_15, %c0_16] : memref<1x18x18x16xf32, #tpu.memory_space<vmem>>, vector<1x1x18x16xf32>
    tpu.vector_store %arg9[%c0_14, %c17, %c0_15, %c0_16], %12 {strides = array<i32>} : memref<1x18x18x16xf32, #tpu.memory_space<vmem>>, vector<1x1x18x16xf32>,
    %cst_17 = arith.constant 0.000000e+00 : f32
    %14 = vector.broadcast %cst_17 : f32 to vector<1x16x1x16xf32>
    %c0_18 = arith.constant 0 : index
    %c1 = arith.constant 1 : index
    %c0_19 = arith.constant 0 : index
    %c0_20 = arith.constant 0 : index
    %15 = vector.load %arg9[%c0_18, %c1, %c0_19, %c0_20] : memref<1x18x18x16xf32, #tpu.memory_space<vmem>>, vector<1x16x1x16xf32>
    tpu.vector_store %arg9[%c0_18, %c1, %c0_19, %c0_20], %14 {strides = array<i32>} : memref<1x18x18x16xf32, #tpu.memory_space<vmem>>, vector<1x16x1x16xf32>,
    %cst_21 = arith.constant 0.000000e+00 : f32
    %16 = vector.broadcast %cst_21 : f32 to vector<1x16x1x16xf32>
    %c0_22 = arith.constant 0 : index
    %c1_23 = arith.constant 1 : index
    %c17_24 = arith.constant 17 : index
    %c0_25 = arith.constant 0 : index
    %17 = vector.load %arg9[%c0_22, %c1_23, %c17_24, %c0_25] : memref<1x18x18x16xf32, #tpu.memory_space<vmem>>, vector<1x16x1x16xf32>
    tpu.vector_store %arg9[%c0_22, %c1_23, %c17_24, %c0_25], %16 {strides = array<i32>} : memref<1x18x18x16xf32, #tpu.memory_space<vmem>>, vector<1x16x1x16xf32>,
    %18 = vector.shape_cast %9 : vector<256x16xf32> to vector<1x16x16x16xf32>
    %c0_26 = arith.constant 0 : index
    %c1_27 = arith.constant 1 : index
    %c1_28 = arith.constant 1 : index
    %c0_29 = arith.constant 0 : index
    %19 = vector.load %arg9[%c0_26, %c1_27, %c1_28, %c0_29] : memref<1x18x18x16xf32, #tpu.memory_space<vmem>>, vector<1x16x16x16xf32>
    tpu.vector_store %arg9[%c0_26, %c1_27, %c1_28, %c0_29], %18 {strides = array<i32>} : memref<1x18x18x16xf32, #tpu.memory_space<vmem>>, vector<1x16x16x16xf32>,
    %c0_30 = arith.constant 0 : index
    %c0_31 = arith.constant 0 : index
    %c0_32 = arith.constant 0 : index
    %c0_33 = arith.constant 0 : index
    %20 = vector.load %arg9[%c0_30, %c0_31, %c0_32, %c0_33] : memref<1x18x18x16xf32, #tpu.memory_space<vmem>>, vector<1x16x16x16xf32>
    %21 = vector.shape_cast %20 : vector<1x16x16x16xf32> to vector<256x16xf32>
    %c0_34 = arith.constant 0 : index
    %c0_35 = arith.constant 0 : index
    %c1_36 = arith.constant 1 : index
    %c0_37 = arith.constant 0 : index
    %22 = vector.load %arg9[%c0_34, %c0_35, %c1_36, %c0_37] : memref<1x18x18x16xf32, #tpu.memory_space<vmem>>, vector<1x16x16x16xf32>
    %23 = vector.shape_cast %22 : vector<1x16x16x16xf32> to vector<256x16xf32>
    %c0_38 = arith.constant 0 : index
    %c0_39 = arith.constant 0 : index
    %c2 = arith.constant 2 : index
    %c0_40 = arith.constant 0 : index
    %24 = vector.load %arg9[%c0_38, %c0_39, %c2, %c0_40] : memref<1x18x18x16xf32, #tpu.memory_space<vmem>>, vector<1x16x16x16xf32>
    %25 = vector.shape_cast %24 : vector<1x16x16x16xf32> to vector<256x16xf32>
    %c0_41 = arith.constant 0 : index
    %c1_42 = arith.constant 1 : index
    %c0_43 = arith.constant 0 : index
    %c0_44 = arith.constant 0 : index
    %26 = vector.load %arg9[%c0_41, %c1_42, %c0_43, %c0_44] : memref<1x18x18x16xf32, #tpu.memory_space<vmem>>, vector<1x16x16x16xf32>
    %27 = vector.shape_cast %26 : vector<1x16x16x16xf32> to vector<256x16xf32>
    %c0_45 = arith.constant 0 : index
    %c1_46 = arith.constant 1 : index
    %c1_47 = arith.constant 1 : index
    %c0_48 = arith.constant 0 : index
    %28 = vector.load %arg9[%c0_45, %c1_46, %c1_47, %c0_48] : memref<1x18x18x16xf32, #tpu.memory_space<vmem>>, vector<1x16x16x16xf32>
    %29 = vector.shape_cast %28 : vector<1x16x16x16xf32> to vector<256x16xf32>
    %c0_49 = arith.constant 0 : index
    %c1_50 = arith.constant 1 : index
    %c2_51 = arith.constant 2 : index
    %c0_52 = arith.constant 0 : index
    %30 = vector.load %arg9[%c0_49, %c1_50, %c2_51, %c0_52] : memref<1x18x18x16xf32, #tpu.memory_space<vmem>>, vector<1x16x16x16xf32>
    %31 = vector.shape_cast %30 : vector<1x16x16x16xf32> to vector<256x16xf32>
    %c0_53 = arith.constant 0 : index
    %c2_54 = arith.constant 2 : index
    %c0_55 = arith.constant 0 : index
    %c0_56 = arith.constant 0 : index
    %32 = vector.load %arg9[%c0_53, %c2_54, %c0_55, %c0_56] : memref<1x18x18x16xf32, #tpu.memory_space<vmem>>, vector<1x16x16x16xf32>
    %33 = vector.shape_cast %32 : vector<1x16x16x16xf32> to vector<256x16xf32>
    %c0_57 = arith.constant 0 : index
    %c2_58 = arith.constant 2 : index
    %c1_59 = arith.constant 1 : index
    %c0_60 = arith.constant 0 : index
    %34 = vector.load %arg9[%c0_57, %c2_58, %c1_59, %c0_60] : memref<1x18x18x16xf32, #tpu.memory_space<vmem>>, vector<1x16x16x16xf32>
    %35 = vector.shape_cast %34 : vector<1x16x16x16xf32> to vector<256x16xf32>
    %c0_61 = arith.constant 0 : index
    %c2_62 = arith.constant 2 : index
    %c2_63 = arith.constant 2 : index
    %c0_64 = arith.constant 0 : index
    %36 = vector.load %arg9[%c0_61, %c2_62, %c2_63, %c0_64] : memref<1x18x18x16xf32, #tpu.memory_space<vmem>>, vector<1x16x16x16xf32>
    %37 = vector.shape_cast %36 : vector<1x16x16x16xf32> to vector<256x16xf32>
    %cst_65 = arith.constant 0.000000e+00 : f32
    %38 = vector.broadcast %cst_65 : f32 to vector<256x16xf32>
    %39 = arith.truncf %21 : vector<256x16xf32> to vector<256x16xbf16>
    %c0_66 = arith.constant 0 : index
    %c0_67 = arith.constant 0 : index
    %40 = vector.load %arg4[%c0_66, %c0_67] : memref<144x16xbf16, #tpu.memory_space<vmem>>, vector<16x16xbf16>
    %cst_68 = arith.constant dense<0.000000e+00> : vector<256x16xf32>
    %41 = tpu.matmul %39, %40, %cst_68 {dimension_numbers = #tpu.dot_dimension_numbers<[1], [0], [0], [1], [0, 0, 1, 1], [], []>} : vector<256x16xbf16>, vector<16x16xbf16>, vector<256x16xf32> -> vector<256x16xf32>
    %42 = arith.addf %38, %41 : vector<256x16xf32>
    %43 = arith.truncf %23 : vector<256x16xf32> to vector<256x16xbf16>
    %c16 = arith.constant 16 : index
    %c0_69 = arith.constant 0 : index
    %44 = vector.load %arg4[%c16, %c0_69] : memref<144x16xbf16, #tpu.memory_space<vmem>>, vector<16x16xbf16>
    %cst_70 = arith.constant dense<0.000000e+00> : vector<256x16xf32>
    %45 = tpu.matmul %43, %44, %cst_70 {dimension_numbers = #tpu.dot_dimension_numbers<[1], [0], [0], [1], [0, 0, 1, 1], [], []>} : vector<256x16xbf16>, vector<16x16xbf16>, vector<256x16xf32> -> vector<256x16xf32>
    %46 = arith.addf %42, %45 : vector<256x16xf32>
    %47 = arith.truncf %25 : vector<256x16xf32> to vector<256x16xbf16>
    %c32 = arith.constant 32 : index
    %c0_71 = arith.constant 0 : index
    %48 = vector.load %arg4[%c32, %c0_71] : memref<144x16xbf16, #tpu.memory_space<vmem>>, vector<16x16xbf16>
    %cst_72 = arith.constant dense<0.000000e+00> : vector<256x16xf32>
    %49 = tpu.matmul %47, %48, %cst_72 {dimension_numbers = #tpu.dot_dimension_numbers<[1], [0], [0], [1], [0, 0, 1, 1], [], []>} : vector<256x16xbf16>, vector<16x16xbf16>, vector<256x16xf32> -> vector<256x16xf32>
    %50 = arith.addf %46, %49 : vector<256x16xf32>
    %51 = arith.truncf %27 : vector<256x16xf32> to vector<256x16xbf16>
    %c48 = arith.constant 48 : index
    %c0_73 = arith.constant 0 : index
    %52 = vector.load %arg4[%c48, %c0_73] : memref<144x16xbf16, #tpu.memory_space<vmem>>, vector<16x16xbf16>
    %cst_74 = arith.constant dense<0.000000e+00> : vector<256x16xf32>
    %53 = tpu.matmul %51, %52, %cst_74 {dimension_numbers = #tpu.dot_dimension_numbers<[1], [0], [0], [1], [0, 0, 1, 1], [], []>} : vector<256x16xbf16>, vector<16x16xbf16>, vector<256x16xf32> -> vector<256x16xf32>
    %54 = arith.addf %50, %53 : vector<256x16xf32>
    %55 = arith.truncf %29 : vector<256x16xf32> to vector<256x16xbf16>
    %c64 = arith.constant 64 : index
    %c0_75 = arith.constant 0 : index
    %56 = vector.load %arg4[%c64, %c0_75] : memref<144x16xbf16, #tpu.memory_space<vmem>>, vector<16x16xbf16>
    %cst_76 = arith.constant dense<0.000000e+00> : vector<256x16xf32>
    %57 = tpu.matmul %55, %56, %cst_76 {dimension_numbers = #tpu.dot_dimension_numbers<[1], [0], [0], [1], [0, 0, 1, 1], [], []>} : vector<256x16xbf16>, vector<16x16xbf16>, vector<256x16xf32> -> vector<256x16xf32>
    %58 = arith.addf %54, %57 : vector<256x16xf32>
    %59 = arith.truncf %31 : vector<256x16xf32> to vector<256x16xbf16>
    %c80 = arith.constant 80 : index
    %c0_77 = arith.constant 0 : index
    %60 = vector.load %arg4[%c80, %c0_77] : memref<144x16xbf16, #tpu.memory_space<vmem>>, vector<16x16xbf16>
    %cst_78 = arith.constant dense<0.000000e+00> : vector<256x16xf32>
    %61 = tpu.matmul %59, %60, %cst_78 {dimension_numbers = #tpu.dot_dimension_numbers<[1], [0], [0], [1], [0, 0, 1, 1], [], []>} : vector<256x16xbf16>, vector<16x16xbf16>, vector<256x16xf32> -> vector<256x16xf32>
    %62 = arith.addf %58, %61 : vector<256x16xf32>
    %63 = arith.truncf %33 : vector<256x16xf32> to vector<256x16xbf16>
    %c96 = arith.constant 96 : index
    %c0_79 = arith.constant 0 : index
    %64 = vector.load %arg4[%c96, %c0_79] : memref<144x16xbf16, #tpu.memory_space<vmem>>, vector<16x16xbf16>
    %cst_80 = arith.constant dense<0.000000e+00> : vector<256x16xf32>
    %65 = tpu.matmul %63, %64, %cst_80 {dimension_numbers = #tpu.dot_dimension_numbers<[1], [0], [0], [1], [0, 0, 1, 1], [], []>} : vector<256x16xbf16>, vector<16x16xbf16>, vector<256x16xf32> -> vector<256x16xf32>
    %66 = arith.addf %62, %65 : vector<256x16xf32>
    %67 = arith.truncf %35 : vector<256x16xf32> to vector<256x16xbf16>
    %c112 = arith.constant 112 : index
    %c0_81 = arith.constant 0 : index
    %68 = vector.load %arg4[%c112, %c0_81] : memref<144x16xbf16, #tpu.memory_space<vmem>>, vector<16x16xbf16>
    %cst_82 = arith.constant dense<0.000000e+00> : vector<256x16xf32>
    %69 = tpu.matmul %67, %68, %cst_82 {dimension_numbers = #tpu.dot_dimension_numbers<[1], [0], [0], [1], [0, 0, 1, 1], [], []>} : vector<256x16xbf16>, vector<16x16xbf16>, vector<256x16xf32> -> vector<256x16xf32>
    %70 = arith.addf %66, %69 : vector<256x16xf32>
    %71 = arith.truncf %37 : vector<256x16xf32> to vector<256x16xbf16>
    %c128 = arith.constant 128 : index
    %c0_83 = arith.constant 0 : index
    %72 = vector.load %arg4[%c128, %c0_83] : memref<144x16xbf16, #tpu.memory_space<vmem>>, vector<16x16xbf16>
    %cst_84 = arith.constant dense<0.000000e+00> : vector<256x16xf32>
    %73 = tpu.matmul %71, %72, %cst_84 {dimension_numbers = #tpu.dot_dimension_numbers<[1], [0], [0], [1], [0, 0, 1, 1], [], []>} : vector<256x16xbf16>, vector<16x16xbf16>, vector<256x16xf32> -> vector<256x16xf32>
    %74 = arith.addf %70, %73 : vector<256x16xf32>
    %c0_85 = arith.constant 0 : index
    %c0_86 = arith.constant 0 : index
    %75 = vector.load %arg5[%c0_85, %c0_86] : memref<1x16xf32, #tpu.memory_space<vmem>>, vector<1x16xf32>
    %76 = vector.broadcast %75 : vector<1x16xf32> to vector<256x16xf32>
    %77 = arith.addf %74, %76 : vector<256x16xf32>
    %cst_87 = arith.constant 0.000000e+00 : f32
    %78 = vector.broadcast %cst_87 : f32 to vector<256x16xf32>
    %79 = arith.maximumf %77, %78 : vector<256x16xf32>
    %80 = arith.truncf %79 : vector<256x16xf32> to vector<256x16xbf16>
    %c0_88 = arith.constant 0 : index
    %c0_89 = arith.constant 0 : index
    %81 = vector.load %arg6[%c0_88, %c0_89] : memref<16x64xbf16, #tpu.memory_space<vmem>>, vector<16x64xbf16>
    %cst_90 = arith.constant dense<0.000000e+00> : vector<256x64xf32>
    %82 = tpu.matmul %80, %81, %cst_90 {dimension_numbers = #tpu.dot_dimension_numbers<[1], [0], [0], [1], [0, 0, 1, 1], [], []>} : vector<256x16xbf16>, vector<16x64xbf16>, vector<256x64xf32> -> vector<256x64xf32>
    %c0_91 = arith.constant 0 : index
    %c0_92 = arith.constant 0 : index
    %83 = vector.load %arg7[%c0_91, %c0_92] : memref<1x64xf32, #tpu.memory_space<vmem>>, vector<1x64xf32>
    %84 = vector.broadcast %83 : vector<1x64xf32> to vector<256x64xf32>
    %85 = arith.addf %82, %84 : vector<256x64xf32>
    %c0_93 = arith.constant 0 : index
    %c0_94 = arith.constant 0 : index
    %c0_95 = arith.constant 0 : index
    %c0_96 = arith.constant 0 : index
    %86 = vector.load %arg1[%c0_93, %c0_94, %c0_95, %c0_96] : memref<1x16x16x64xf32, #tpu.memory_space<vmem>>, vector<1x16x16x64xf32>
    %87 = vector.shape_cast %86 : vector<1x16x16x64xf32> to vector<256x64xf32>
    %88 = arith.addf %85, %87 : vector<256x64xf32>
    %cst_97 = arith.constant 0.000000e+00 : f32
    %89 = vector.broadcast %cst_97 : f32 to vector<256x64xf32>
    %90 = arith.maximumf %88, %89 : vector<256x64xf32>
    %91 = vector.shape_cast %90 : vector<256x64xf32> to vector<1x16x16x64xf32>
    %c0_98 = arith.constant 0 : index
    %c0_99 = arith.constant 0 : index
    %c0_100 = arith.constant 0 : index
    %c0_101 = arith.constant 0 : index
    %92 = vector.load %arg8[%c0_98, %c0_99, %c0_100, %c0_101] : memref<1x16x16x64xf32, #tpu.memory_space<vmem>>, vector<1x16x16x64xf32>
    tpu.vector_store %arg8[%c0_98, %c0_99, %c0_100, %c0_101], %91 {strides = array<i32>} : memref<1x16x16x64xf32, #tpu.memory_space<vmem>>, vector<1x16x16x64xf32>,
    return
  }
  func.func @transform_0(%arg0: i32) -> (i32, i32, i32, i32) {
    %c0_i32 = arith.constant 0 : i32
    %c0_i32_0 = arith.constant 0 : i32
    %c0_i32_1 = arith.constant 0 : i32
    %c0_i32_2 = arith.constant 0 : i32
    return %arg0, %c0_i32, %c0_i32_0, %c0_i32_1 : i32, i32, i32, i32
  }
  func.func @transform_1(%arg0: i32) -> (i32, i32) {
    %c0_i32 = arith.constant 0 : i32
    %c0_i32_0 = arith.constant 0 : i32
    %c0_i32_1 = arith.constant 0 : i32
    return %c0_i32, %c0_i32_0 : i32, i32
  }
  func.func @transform_2(%arg0: i32) -> (i32, i32) {
    %c0_i32 = arith.constant 0 : i32
    %c0_i32_0 = arith.constant 0 : i32
    %c0_i32_1 = arith.constant 0 : i32
    return %c0_i32, %c0_i32_0 : i32, i32
  }
  func.func @transform_3(%arg0: i32) -> (i32, i32) {
    %c0_i32 = arith.constant 0 : i32
    %c0_i32_0 = arith.constant 0 : i32
    %c0_i32_1 = arith.constant 0 : i32
    return %c0_i32, %c0_i32_0 : i32, i32
  }
  func.func @transform_4(%arg0: i32) -> (i32, i32) {
    %c0_i32 = arith.constant 0 : i32
    %c0_i32_0 = arith.constant 0 : i32
    %c0_i32_1 = arith.constant 0 : i32
    return %c0_i32, %c0_i32_0 : i32, i32
  }
  func.func @transform_5(%arg0: i32) -> (i32, i32) {
    %c0_i32 = arith.constant 0 : i32
    %c0_i32_0 = arith.constant 0 : i32
    %c0_i32_1 = arith.constant 0 : i32
    return %c0_i32, %c0_i32_0 : i32, i32
  }
  func.func @transform_6(%arg0: i32) -> (i32, i32) {
    %c0_i32 = arith.constant 0 : i32
    %c0_i32_0 = arith.constant 0 : i32
    %c0_i32_1 = arith.constant 0 : i32
    return %c0_i32, %c0_i32_0 : i32, i32
  }
  func.func @transform_7(%arg0: i32) -> (i32, i32, i32, i32) {
    %c0_i32 = arith.constant 0 : i32
    %c0_i32_0 = arith.constant 0 : i32
    %c0_i32_1 = arith.constant 0 : i32
    %c0_i32_2 = arith.constant 0 : i32
    return %arg0, %c0_i32, %c0_i32_0, %c0_i32_1 : i32, i32, i32, i32
  }
}

</mosaic_0001>

<llo_original>
// kernel: tpu_custom_call.1
$region0: #{tpu_custom_call.1}
  #allocation0 [shape = 'u32[]', space=smem, size = 0x4, offset = 0x4, fixed_abs, tag = 'smem constant byte address 0x4 - core index']
  #allocation1 [shape = 'u32[144,128]{1,0:T(1,128)}', space=vmem, size = 0x12000, scoped, tag = 'internal scratch']
  #allocation2 [shape = 'f32[1,18,18,16]{3,2,1,0:T(8,128)}', space=vmem, size = 0x36000, scoped, tag = 'scratch operand']
  %s0 = inlined_call_operand.hbm [shape: f32[2,16,16,64], index: 0, kind: input, shape index: {}]
  %s1 = inlined_call_operand.vmem [shape: bf16[64,16], index: 1, kind: input, shape index: {}]
  %s2 = inlined_call_operand.vmem [shape: f32[1,16], index: 2, kind: input, shape index: {}]
  %s3 = inlined_call_operand.vmem [shape: bf16[144,16], index: 3, kind: input, shape index: {}]
  %s4 = inlined_call_operand.vmem [shape: f32[1,16], index: 4, kind: input, shape index: {}]
  %s5 = inlined_call_operand.vmem [shape: bf16[16,64], index: 5, kind: input, shape index: {}]
  %s6 = inlined_call_operand.vmem [shape: f32[1,64], index: 6, kind: input, shape index: {}]
  %s7 = inlined_call_operand.hbm [shape: f32[2,16,16,64], index: 7, kind: output, shape index: {}]
  %s8 = sld [smem:[#allocation0]]
  $region65: #{tpu_custom_call.1} parent=0
    _
  %s10 = ssub.s32 1, %s8
  %s11 = scalar_select 0, %s10, %s8
  $region1: #{tpu_custom_call.1} parent=0
    #allocation3 [shape = 'u8[262144]{0}', space=vmem, size = 0x40000, scoped, tag = 'input window, operand 0']
    #allocation4 [shape = 's32[2]{0}', space=sflag, size = 0x8, scoped, tag = 'scoped memory for tpu_custom_call.1']
    #allocation5 [shape = 's32[2]{0}', space=sflag, size = 0x8, scoped, tag = 'scoped memory for tpu_custom_call.1']
    #allocation6 [shape = 'u8[262144]{0}', space=vmem, size = 0x40000, scoped, tag = 'output window, operand 0']
    %12 = vsyncpa [#allocation4], 0
    %s13 = scalar_lea.sflag [#allocation4], 1
    %14 = vsyncpa %s13, 0
    %15 = vsyncpa [#allocation5], 0
    %s16 = scalar_lea.sflag [#allocation5], 1
    %17 = vsyncpa %s16, 0
    loop: start=0, step=1, limit=4
    $region2: #{tpu_custom_call.1} parent=1 // loop_pre_header
      _
    $region3: #{tpu_custom_call.1} parent=1 // loop_header
      %s19 = sphi 0, %s23
      %p20 = scmp.ge.s32.totalorder %s19, 4
      %s29 = sphi 0, %s31
      %s32 = sphi 0, %s29
      %s33 = sphi 0, %s32
      %s49 = sphi 0, %s33
      %s53 = sphi 0, %s53
      %s55 = sphi 0, %s53
      %s56 = sphi 0, %s55
      %s70 = sphi 0, %s56
      %s74 = sphi 0, %s74
      %s76 = sphi 0, %s74
      %s77 = sphi 0, %s76
      %s91 = sphi 0, %s77
      %s95 = sphi 0, %s95
      %s97 = sphi 0, %s95
      %s98 = sphi 0, %s97
      %s112 = sphi 0, %s98
      %s116 = sphi 0, %s116
      %s118 = sphi 0, %s116
      %s119 = sphi 0, %s118
      %s133 = sphi 0, %s119
      %s137 = sphi 0, %s137
      %s139 = sphi 0, %s137
      %s140 = sphi 0, %s139
      %s154 = sphi 0, %s140
      %s158 = sphi 0, %s158
      %s160 = sphi 0, %s158
      %s161 = sphi 0, %s160
      %s175 = sphi 0, %s161
      %s181 = sphi 0, %s183
      %s184 = sphi 0, %s181
      %s185 = sphi 0, %s184
      %s201 = sphi 0, %s185
    $region4: #{tpu_custom_call.1} parent=1 // loop_header_branch
      %22 = sbr.rel (%p20) target = $region8
    $region5: #{tpu_custom_call.1} parent=1 // loop_body
      %s24 = ssub.s32 %s19, 1
      %s25 = ssub.s32 %s19, 2
      %s26 = sadd.s32 %s19, 1
      %s27 = ssub.s32 %s19, %s26
      %p28 = scmp.eq.s32.totalorder %s27, 0
      %s30 = sadd.s32 %s29, 1
      %s31 = scalar_select %p28, %s29, %s30
      %p34 = pneg %p28
      %p35 = scmp.eq.s32.totalorder %s19, 1
      %p36 = por %p34, %p35
      %p37 = scmp.ne.s32.totalorder %s29, %s32
      %p38 = scmp.eq.s32.totalorder %s19, 0
      %p39 = por %p37, %p38
      %p40 = scmp.ne.s32.totalorder %s29, %s32
      %p41 = scmp.eq.s32.totalorder %s24, 1
      %p42 = por %p40, %p41
      %p43 = scmp.ne.s32.totalorder %s32, %s33
      %p44 = scmp.eq.s32.totalorder %s24, 0
      %p45 = por %p43, %p44
      %p46 = scmp.ne.s32.totalorder %s32, %s33
      %p47 = scmp.eq.s32.totalorder %s25, 1
      %p48 = por %p46, %p47
      %p50 = scmp.ne.s32.totalorder %s33, %s49
      %p51 = scmp.eq.s32.totalorder %s25, 0
      %p52 = por %p50, %p51
      %s54 = sadd.s32 %s53, 1
      %p57 = scmp.eq.s32.totalorder %s19, 1
      %p58 = scmp.ne.s32.totalorder %s53, %s55
      %p59 = scmp.eq.s32.totalorder %s19, 0
      %p60 = por %p58, %p59
      %p61 = scmp.ne.s32.totalorder %s53, %s55
      %p62 = scmp.eq.s32.totalorder %s24, 1
      %p63 = por %p61, %p62
      %p64 = scmp.ne.s32.totalorder %s55, %s56
      %p65 = scmp.eq.s32.totalorder %s24, 0
      %p66 = por %p64, %p65
      %p67 = scmp.ne.s32.totalorder %s55, %s56
      %p68 = scmp.eq.s32.totalorder %s25, 1
      %p69 = por %p67, %p68
      %p71 = scmp.ne.s32.totalorder %s56, %s70
      %p72 = scmp.eq.s32.totalorder %s25, 0
      %p73 = por %p71, %p72
      %s75 = sadd.s32 %s74, 1
      %p78 = scmp.eq.s32.totalorder %s19, 1
      %p79 = scmp.ne.s32.totalorder %s74, %s76
      %p80 = scmp.eq.s32.totalorder %s19, 0
      %p81 = por %p79, %p80
      %p82 = scmp.ne.s32.totalorder %s74, %s76
      %p83 = scmp.eq.s32.totalorder %s24, 1
      %p84 = por %p82, %p83
      %p85 = scmp.ne.s32.totalorder %s76, %s77
      %p86 = scmp.eq.s32.totalorder %s24, 0
      %p87 = por %p85, %p86
      %p88 = scmp.ne.s32.totalorder %s76, %s77
      %p89 = scmp.eq.s32.totalorder %s25, 1
      %p90 = por %p88, %p89
      %p92 = scmp.ne.s32.totalorder %s77, %s91
      %p93 = scmp.eq.s32.totalorder %s25, 0
      %p94 = por %p92, %p93
      %s96 = sadd.s32 %s95, 1
      %p99 = scmp.eq.s32.totalorder %s19, 1
      %p100 = scmp.ne.s32.totalorder %s95, %s97
      %p101 = scmp.eq.s32.totalorder %s19, 0
      %p102 = por %p100, %p101
      %p103 = scmp.ne.s32.totalorder %s95, %s97
      %p104 = scmp.eq.s32.totalorder %s24, 1
      %p105 = por %p103, %p104
      %p106 = scmp.ne.s32.totalorder %s97, %s98
      %p107 = scmp.eq.s32.totalorder %s24, 0
      %p108 = por %p106, %p107
      %p109 = scmp.ne.s32.totalorder %s97, %s98
      %p110 = scmp.eq.s32.totalorder %s25, 1
      %p111 = por %p109, %p110
      %p113 = scmp.ne.s32.totalorder %s98, %s112
      %p114 = scmp.eq.s32.totalorder %s25, 0
      %p115 = por %p113, %p114
      %s117 = sadd.s32 %s116, 1
      %p120 = scmp.eq.s32.totalorder %s19, 1
      %p121 = scmp.ne.s32.totalorder %s116, %s118
      %p122 = scmp.eq.s32.totalorder %s19, 0
      %p123 = por %p121, %p122
      %p124 = scmp.ne.s32.totalorder %s116, %s118
      %p125 = scmp.eq.s32.totalorder %s24, 1
      %p126 = por %p124, %p125
      %p127 = scmp.ne.s32.totalorder %s118, %s119
      %p128 = scmp.eq.s32.totalorder %s24, 0
      %p129 = por %p127, %p128
      %p130 = scmp.ne.s32.totalorder %s118, %s119
      %p131 = scmp.eq.s32.totalorder %s25, 1
      %p132 = por %p130, %p131
      %p134 = scmp.ne.s32.totalorder %s119, %s133
      %p135 = scmp.eq.s32.totalorder %s25, 0
      %p136 = por %p134, %p135
      %s138 = sadd.s32 %s137, 1
      %p141 = scmp.eq.s32.totalorder %s19, 1
      %p142 = scmp.ne.s32.totalorder %s137, %s139
      %p143 = scmp.eq.s32.totalorder %s19, 0
      %p144 = por %p142, %p143
      %p145 = scmp.ne.s32.totalorder %s137, %s139
      %p146 = scmp.eq.s32.totalorder %s24, 1
      %p147 = por %p145, %p146
      %p148 = scmp.ne.s32.totalorder %s139, %s140
      %p149 = scmp.eq.s32.totalorder %s24, 0
      %p150 = por %p148, %p149
      %p151 = scmp.ne.s32.totalorder %s139, %s140
      %p152 = scmp.eq.s32.totalorder %s25, 1
      %p153 = por %p151, %p152
      %p155 = scmp.ne.s32.totalorder %s140, %s154
      %p156 = scmp.eq.s32.totalorder %s25, 0
      %p157 = por %p155, %p156
      %s159 = sadd.s32 %s158, 1
      %p162 = scmp.eq.s32.totalorder %s19, 1
      %p163 = scmp.ne.s32.totalorder %s158, %s160
      %p164 = scmp.eq.s32.totalorder %s19, 0
      %p165 = por %p163, %p164
      %p166 = scmp.ne.s32.totalorder %s158, %s160
      %p167 = scmp.eq.s32.totalorder %s24, 1
      %p168 = por %p166, %p167
      %p169 = scmp.ne.s32.totalorder %s160, %s161
      %p170 = scmp.eq.s32.totalorder %s24, 0
      %p171 = por %p169, %p170
      %p172 = scmp.ne.s32.totalorder %s160, %s161
      %p173 = scmp.eq.s32.totalorder %s25, 1
      %p174 = por %p172, %p173
      %p176 = scmp.ne.s32.totalorder %s161, %s175
      %p177 = scmp.eq.s32.totalorder %s25, 0
      %p178 = por %p176, %p177
      %s179 = ssub.s32 %s19, %s26
      %p180 = scmp.eq.s32.totalorder %s179, 0
      %s182 = sadd.s32 %s181, 1
      %s183 = scalar_select %p180, %s181, %s182
      %p186 = pneg %p180
      %p187 = scmp.eq.s32.totalorder %s19, 1
      %p188 = por %p186, %p187
      %p189 = scmp.ne.s32.totalorder %s181, %s184
      %p190 = scmp.eq.s32.totalorder %s19, 0
      %p191 = por %p189, %p190
      %p192 = scmp.ne.s32.totalorder %s181, %s184
      %p193 = scmp.eq.s32.totalorder %s24, 1
      %p194 = por %p192, %p193
      %p195 = scmp.ne.s32.totalorder %s184, %s185
      %p196 = scmp.eq.s32.totalorder %s24, 0
      %p197 = por %p195, %p196
      %p198 = scmp.ne.s32.totalorder %s184, %s185
      %p199 = scmp.eq.s32.totalorder %s25, 1
      %p200 = por %p198, %p199
      %p202 = scmp.ne.s32.totalorder %s185, %s201
      %p203 = scmp.eq.s32.totalorder %s25, 0
      %p204 = por %p202, %p203
      %p205 = scmp.le.s32.totalorder 1, %s19
      %p206 = scmp.lt.s32.totalorder %s19, 3
      %p207 = pnand %p205, %p206
      %p208 = pneg %p207
      // Predicated region
      $region9: #{tpu_custom_call.1} parent=5 // pred_check
        _
      $region10: #{tpu_custom_call.1} parent=5 // pred_check_branch
        %210 = sbr.rel (%p207) target = $region12
      $region11: #{tpu_custom_call.1} parent=5 // pred_region
        %s211 = ssub.s32 %s19, 1
        // Predicated region
        $region13: #{tpu_custom_call.1} parent=11 // pred_check
          %p212 = pneg %p66
        $region14: #{tpu_custom_call.1} parent=11 // pred_check_branch
          %214 = sbr.rel (%p212) target = $region16
        $region15: #{tpu_custom_call.1} parent=11 // pred_region
          _
        $region16: #{tpu_custom_call.1} parent=11 // pred_fallthru
          _
        // Predicated region
        $region17: #{tpu_custom_call.1} parent=11 // pred_check
          %p215 = pneg %p87
        $region18: #{tpu_custom_call.1} parent=11 // pred_check_branch
          %217 = sbr.rel (%p215) target = $region20
        $region19: #{tpu_custom_call.1} parent=11 // pred_region
          _
        $region20: #{tpu_custom_call.1} parent=11 // pred_fallthru
          _
        // Predicated region
        $region21: #{tpu_custom_call.1} parent=11 // pred_check
          %p218 = pneg %p108
        $region22: #{tpu_custom_call.1} parent=11 // pred_check_branch
          %220 = sbr.rel (%p218) target = $region24
        $region23: #{tpu_custom_call.1} parent=11 // pred_region
          _
        $region24: #{tpu_custom_call.1} parent=11 // pred_fallthru
          _
        // Predicated region
        $region25: #{tpu_custom_call.1} parent=11 // pred_check
          %p221 = pneg %p129
        $region26: #{tpu_custom_call.1} parent=11 // pred_check_branch
          %223 = sbr.rel (%p221) target = $region28
        $region27: #{tpu_custom_call.1} parent=11 // pred_region
          _
        $region28: #{tpu_custom_call.1} parent=11 // pred_fallthru
          _
        // Predicated region
        $region29: #{tpu_custom_call.1} parent=11 // pred_check
          %p224 = pneg %p150
        $region30: #{tpu_custom_call.1} parent=11 // pred_check_branch
          %226 = sbr.rel (%p224) target = $region32
        $region31: #{tpu_custom_call.1} parent=11 // pred_region
          _
        $region32: #{tpu_custom_call.1} parent=11 // pred_fallthru
          _
        // Predicated region
        $region33: #{tpu_custom_call.1} parent=11 // pred_check
          %p227 = pneg %p171
        $region34: #{tpu_custom_call.1} parent=11 // pred_check_branch
          %229 = sbr.rel (%p227) target = $region36
        $region35: #{tpu_custom_call.1} parent=11 // pred_region
          _
        $region36: #{tpu_custom_call.1} parent=11 // pred_fallthru
          _
      $region12: #{tpu_custom_call.1} parent=5 // pred_fallthru
        _
      %p230 = scmp.lt.s32.totalorder %s19, 2
      // Predicated region
      $region37: #{tpu_custom_call.1} parent=5 // pred_check
        %p231 = pneg %p230
      $region38: #{tpu_custom_call.1} parent=5 // pred_check_branch
        %233 = sbr.rel (%p231) target = $region40
      $region39: #{tpu_custom_call.1} parent=5 // pred_region
        // Predicated region
        $region41: #{tpu_custom_call.1} parent=39 // pred_check
          %p234 = pneg %p39
        $region42: #{tpu_custom_call.1} parent=39 // pred_check_branch
          %236 = sbr.rel (%p234) target = $region44
        $region43: #{tpu_custom_call.1} parent=39 // pred_region
          %s237 = sand.u32 %s29, 1
          %s238 = scalar_lea.sflag [#allocation4], %s237
          %s239 = sand.u32 %s29, 1
          %s240 = smul.addr %s239, 256
          %s241 = scalar_lea.vmem [#allocation3], %s240
          %s243 = ssub.s32 4096, 4096
          %244 = vsyncadd %s238, %s243
          %s245 = smul.addr %s19, 32
          %s246 = smul.addr %s245, 128
          %s247 = scalar_lea.hbm %s0, %s246
          %s248 = sshll.u32 %s241, 4
          %s249 = int_to_ptr.vmem [resolvable:$true] %s248
          %254 = dma.hbm_to_vmem [thread:$0]  %s247, 4096, %s249, %s238, 128, 128, 8
        $region44: #{tpu_custom_call.1} parent=39 // pred_fallthru
          _
      $region40: #{tpu_custom_call.1} parent=5 // pred_fallthru
        _
      %p255 = scmp.le.s32.totalorder 1, %s19
      %p256 = scmp.lt.s32.totalorder %s19, 3
      %p257 = pnand %p255, %p256
      %p258 = pneg %p257
      // Predicated region
      $region45: #{tpu_custom_call.1} parent=5 // pred_check
        _
      $region46: #{tpu_custom_call.1} parent=5 // pred_check_branch
        %260 = sbr.rel (%p257) target = $region48
      $region47: #{tpu_custom_call.1} parent=5 // pred_region
        %s261 = ssub.s32 %s19, 1
        %s262 = sand.u32 %s32, 1
        %s263 = scalar_lea.sflag [#allocation4], %s262
        %s264 = sand.u32 %s32, 1
        %s265 = smul.addr %s264, 256
        %s266 = scalar_lea.vmem [#allocation3], %s265
        // Predicated region
        $region49: #{tpu_custom_call.1} parent=47 // pred_check
          %p267 = pneg %p45
        $region50: #{tpu_custom_call.1} parent=47 // pred_check_branch
          %269 = sbr.rel (%p267) target = $region52
        $region51: #{tpu_custom_call.1} parent=47 // pred_region
          %270 = dma.done %s263, 4096
        $region52: #{tpu_custom_call.1} parent=47 // pred_fallthru
          _
        %s271 = sand.u32 %s32, 1
        %s272 = scalar_lea.sflag [#allocation4], %s271
        %s273 = sand.u32 %s32, 1
        %s274 = smul.addr %s273, 256
        %s275 = scalar_lea.vmem [#allocation3], %s274
        %p276 = pneg %p45
        %p277 = pneg %p42
        %p278 = pneg %p66
        %p279 = pneg %p63
        %p280 = pneg %p87
        %p281 = pneg %p84
        %p282 = pneg %p108
        %p283 = pneg %p105
        %p284 = pneg %p129
        %p285 = pneg %p126
        %p286 = pneg %p150
        %p287 = pneg %p147
        %p288 = pneg %p171
        %p289 = pneg %p168
        %p290 = pneg %p197
        %p291 = pneg %p194
        %s292 = sand.u32 %s184, 1
        %s293 = scalar_lea.sflag [#allocation5], %s292
        %s294 = sand.u32 %s184, 1
        %s295 = smul.addr %s294, 256
        %s296 = scalar_lea.vmem [#allocation6], %s295
        %v298 = vld [vmem:[%s266] sm:$0xff]
        %v299 = vld [vmem:[%s266 + $0x8] sm:$0xff]
        %v300 = vld [vmem:[%s266 + $0x10] sm:$0xff]
        %v301 = vld [vmem:[%s266 + $0x18] sm:$0xff]
        %v302 = vld [vmem:[%s266 + $0x20] sm:$0xff]
        %v303 = vld [vmem:[%s266 + $0x28] sm:$0xff]
        %v304 = vld [vmem:[%s266 + $0x30] sm:$0xff]
        %v305 = vld [vmem:[%s266 + $0x38] sm:$0xff]
        %v306 = vld [vmem:[%s266 + $0x40] sm:$0xff]
        %v307 = vld [vmem:[%s266 + $0x48] sm:$0xff]
        %v308 = vld [vmem:[%s266 + $0x50] sm:$0xff]
        %v309 = vld [vmem:[%s266 + $0x58] sm:$0xff]
        %v310 = vld [vmem:[%s266 + $0x60] sm:$0xff]
        %v311 = vld [vmem:[%s266 + $0x68] sm:$0xff]
        %v312 = vld [vmem:[%s266 + $0x70] sm:$0xff]
        %v313 = vld [vmem:[%s266 + $0x78] sm:$0xff]
        %v314 = vld [vmem:[%s266 + $0x80] sm:$0xff]
        %v315 = vld [vmem:[%s266 + $0x88] sm:$0xff]
        %v316 = vld [vmem:[%s266 + $0x90] sm:$0xff]
        %v317 = vld [vmem:[%s266 + $0x98] sm:$0xff]
        %v318 = vld [vmem:[%s266 + $0xa0] sm:$0xff]
        %v319 = vld [vmem:[%s266 + $0xa8] sm:$0xff]
        %v320 = vld [vmem:[%s266 + $0xb0] sm:$0xff]
        %v321 = vld [vmem:[%s266 + $0xb8] sm:$0xff]
        %v322 = vld [vmem:[%s266 + $0xc0] sm:$0xff]
        %v323 = vld [vmem:[%s266 + $0xc8] sm:$0xff]
        %v324 = vld [vmem:[%s266 + $0xd0] sm:$0xff]
        %v325 = vld [vmem:[%s266 + $0xd8] sm:$0xff]
        %v326 = vld [vmem:[%s266 + $0xe0] sm:$0xff]
        %v327 = vld [vmem:[%s266 + $0xe8] sm:$0xff]
        %v328 = vld [vmem:[%s266 + $0xf0] sm:$0xff]
        %v329 = vld [vmem:[%s266 + $0xf8] sm:$0xff]
        %v330 = vpack.c.bf16 %v299, %v298
        %v331 = vpack.c.bf16 %v301, %v300
        %v332 = vpack.c.bf16 %v303, %v302
        %v333 = vpack.c.bf16 %v305, %v304
        %v334 = vpack.c.bf16 %v307, %v306
        %v335 = vpack.c.bf16 %v309, %v308
        %v336 = vpack.c.bf16 %v311, %v310
        %v337 = vpack.c.bf16 %v313, %v312
        %v338 = vpack.c.bf16 %v315, %v314
        %v339 = vpack.c.bf16 %v317, %v316
        %v340 = vpack.c.bf16 %v319, %v318
        %v341 = vpack.c.bf16 %v321, %v320
        %v342 = vpack.c.bf16 %v323, %v322
        %v343 = vpack.c.bf16 %v325, %v324
        %v344 = vpack.c.bf16 %v327, %v326
        %v345 = vpack.c.bf16 %v329, %v328
        %v346 = vld [vmem:[%s1] sm:$0xf]
        %v347 = vld [vmem:[%s1 + $0x4] sm:$0xf]
        %v348 = vld [vmem:[%s1 + $0x8] sm:$0xf]
        %v349 = vld [vmem:[%s1 + $0xc] sm:$0xf]
        %v350 = vld [vmem:[%s1 + $0x10] sm:$0xf]
        %v351 = vld [vmem:[%s1 + $0x14] sm:$0xf]
        %v352 = vld [vmem:[%s1 + $0x18] sm:$0xf]
        %v353 = vld [vmem:[%s1 + $0x1c] sm:$0xf]
        %v354 = vld [vmem:[%s2] sm:$0x1]
        %v356 = vlaneseq
        %v357 = vshrl.u32 %v356, 7
        %v358 = vsub.s32 0, %v357
        %v359 = vrot.slane %v354, %v358
        %v369 = vunpack.c.l.b16 %v346
        %v370 = vunpack.c.l.b16 %v347
        %v371 = vunpack.c.l.b16 %v348
        %v372 = vunpack.c.l.b16 %v349
        %v373 = vunpack.c.l.b16 %v350
        %v374 = vunpack.c.l.b16 %v351
        %v375 = vunpack.c.l.b16 %v352
        %v376 = vunpack.c.l.b16 %v353
        %v377 = vpack.c.b16 %v370, %v369
        %v378 = vpack.c.b16 %v372, %v371
        %v379 = vpack.c.b16 %v374, %v373
        %v380 = vpack.c.b16 %v376, %v375
        %vm385 = vcmask 523264
        %v387 = vsel %vm385, %v330, 0
        %v390 = vsel %vm385, %v331, 0
        %v393 = vsel %vm385, %v332, 0
        %v396 = vsel %vm385, %v333, 0
        %v399 = vsel %vm385, %v334, 0
        %v402 = vsel %vm385, %v335, 0
        %v405 = vsel %vm385, %v336, 0
        %v408 = vsel %vm385, %v337, 0
        %v411 = vsel %vm385, %v338, 0
        %v414 = vsel %vm385, %v339, 0
        %v417 = vsel %vm385, %v340, 0
        %v420 = vsel %vm385, %v341, 0
        %v423 = vsel %vm385, %v342, 0
        %v426 = vsel %vm385, %v343, 0
        %v429 = vsel %vm385, %v344, 0
        %v432 = vsel %vm385, %v345, 0
        %434 = vmatprep.subr.bf16.mxu0 0
        %435 = vmatpush1.bf16.msra.mxu0 0
        %436 = vmatprep.subr.bf16.mxu0 0
        %437 = vmatpush1.bf16.msra.mxu0 0
        %438 = vmatprep.subr.bf16.mxu0 0
        %439 = vmatpush1.bf16.msra.mxu0 0
        %440 = vmatprep.subr.bf16.mxu0 0
        %441 = vmatpush1.bf16.msra.mxu0 0
        %442 = vmatprep.subr.bf16.mxu0 0
        %443 = vmatpush1.bf16.msra.mxu0 %v380
        %444 = vmatprep.subr.bf16.mxu0 0
        %445 = vmatpush1.bf16.msra.mxu0 %v379
        %446 = vmatprep.subr.bf16.mxu0 0
        %447 = vmatpush1.bf16.msra.mxu0 %v378
        %448 = vmatprep.subr.bf16.mxu0 0
        %449 = vmatpush1.bf16.msra.mxu0 %v377
        %450 = vmatprep.subr.bf16.mxu0 0
        %451 = vmatpush2.bf16.msra.mxu0 0
        %452 = vmatprep.subr.bf16.mxu0 0
        %453 = vmatpush2.bf16.msra.mxu0 0
        %454 = vmatprep.subr.bf16.mxu0 0
        %455 = vmatpush2.bf16.msra.mxu0 0
        %456 = vmatprep.subr.bf16.mxu0 0
        %457 = vmatpush2.bf16.msra.mxu0 0
        %458 = vmatprep.subr.bf16.mxu0 0
        %459 = vmatpush2.bf16.msra.mxu0 0
        %460 = vmatprep.subr.bf16.mxu0 0
        %461 = vmatpush2.bf16.msra.mxu0 0
        %462 = vmatprep.subr.bf16.mxu0 0
        %463 = vmatpush2.bf16.msra.mxu0 0
        %464 = vmatprep.subr.bf16.mxu0 0
        %465 = vmatpush2.bf16.msra.mxu0 0
        %466 = vmatprep.mubr.bf16.mxu0 0
        %467 = vmatmul.mubr.bf16.gmra.mxu0 %v387
        %v468 = vpop.f32.mrf.mxu0
        %v469 = vadd.f32 %v359, %v468
        %v470 = vpop.f32.mrf.mxu0
        %v471 = vpop.f32.mrf.mxu0
        %v472 = vadd.f32 %v359, %v471
        %v473 = vpop.f32.mrf.mxu0
        %474 = vmatprep.mubr.bf16.mxu0 0
        %475 = vmatmul.mubr.bf16.gmra.mxu0 %v390
        %v476 = vpop.f32.mrf.mxu0
        %v477 = vadd.f32 %v359, %v476
        %v478 = vpop.f32.mrf.mxu0
        %v479 = vpop.f32.mrf.mxu0
        %v480 = vadd.f32 %v359, %v479
        %v481 = vpop.f32.mrf.mxu0
        %482 = vmatprep.mubr.bf16.mxu0 0
        %483 = vmatmul.mubr.bf16.gmra.mxu0 %v393
        %v484 = vpop.f32.mrf.mxu0
        %v485 = vadd.f32 %v359, %v484
        %v486 = vpop.f32.mrf.mxu0
        %v487 = vpop.f32.mrf.mxu0
        %v488 = vadd.f32 %v359, %v487
        %v489 = vpop.f32.mrf.mxu0
        %490 = vmatprep.mubr.bf16.mxu0 0
        %491 = vmatmul.mubr.bf16.gmra.mxu0 %v396
        %v492 = vpop.f32.mrf.mxu0
        %v493 = vadd.f32 %v359, %v492
        %v494 = vpop.f32.mrf.mxu0
        %v495 = vpop.f32.mrf.mxu0
        %v496 = vadd.f32 %v359, %v495
        %v497 = vpop.f32.mrf.mxu0
        %498 = vmatprep.mubr.bf16.mxu0 0
        %499 = vmatmul.mubr.bf16.gmra.mxu0 %v399
        %v500 = vpop.f32.mrf.mxu0
        %v501 = vadd.f32 %v359, %v500
        %v502 = vpop.f32.mrf.mxu0
        %v503 = vpop.f32.mrf.mxu0
        %v504 = vadd.f32 %v359, %v503
        %v505 = vpop.f32.mrf.mxu0
        %506 = vmatprep.mubr.bf16.mxu0 0
        %507 = vmatmul.mubr.bf16.gmra.mxu0 %v402
        %v508 = vpop.f32.mrf.mxu0
        %v509 = vadd.f32 %v359, %v508
        %v510 = vpop.f32.mrf.mxu0
        %v511 = vpop.f32.mrf.mxu0
        %v512 = vadd.f32 %v359, %v511
        %v513 = vpop.f32.mrf.mxu0
        %514 = vmatprep.mubr.bf16.mxu0 0
        %515 = vmatmul.mubr.bf16.gmra.mxu0 %v405
        %v516 = vpop.f32.mrf.mxu0
        %v517 = vadd.f32 %v359, %v516
        %v518 = vpop.f32.mrf.mxu0
        %v519 = vpop.f32.mrf.mxu0
        %v520 = vadd.f32 %v359, %v519
        %v521 = vpop.f32.mrf.mxu0
        %522 = vmatprep.mubr.bf16.mxu0 0
        %523 = vmatmul.mubr.bf16.gmra.mxu0 %v408
        %v524 = vpop.f32.mrf.mxu0
        %v525 = vadd.f32 %v359, %v524
        %v526 = vpop.f32.mrf.mxu0
        %v527 = vpop.f32.mrf.mxu0
        %v528 = vadd.f32 %v359, %v527
        %v529 = vpop.f32.mrf.mxu0
        %530 = vmatprep.mubr.bf16.mxu0 0
        %531 = vmatmul.mubr.bf16.gmra.mxu0 %v411
        %v532 = vpop.f32.mrf.mxu0
        %v533 = vadd.f32 %v359, %v532
        %v534 = vpop.f32.mrf.mxu0
        %v535 = vpop.f32.mrf.mxu0
        %v536 = vadd.f32 %v359, %v535
        %v537 = vpop.f32.mrf.mxu0
        %538 = vmatprep.mubr.bf16.mxu0 0
        %539 = vmatmul.mubr.bf16.gmra.mxu0 %v414
        %v540 = vpop.f32.mrf.mxu0
        %v541 = vadd.f32 %v359, %v540
        %v542 = vpop.f32.mrf.mxu0
        %v543 = vpop.f32.mrf.mxu0
        %v544 = vadd.f32 %v359, %v543
        %v545 = vpop.f32.mrf.mxu0
        %546 = vmatprep.mubr.bf16.mxu0 0
        %547 = vmatmul.mubr.bf16.gmra.mxu0 %v417
        %v548 = vpop.f32.mrf.mxu0
        %v549 = vadd.f32 %v359, %v548
        %v550 = vpop.f32.mrf.mxu0
        %v551 = vpop.f32.mrf.mxu0
        %v552 = vadd.f32 %v359, %v551
        %v553 = vpop.f32.mrf.mxu0
        %554 = vmatprep.mubr.bf16.mxu0 0
        %555 = vmatmul.mubr.bf16.gmra.mxu0 %v420
        %v556 = vpop.f32.mrf.mxu0
        %v557 = vadd.f32 %v359, %v556
        %v558 = vpop.f32.mrf.mxu0
        %v559 = vpop.f32.mrf.mxu0
        %v560 = vadd.f32 %v359, %v559
        %v561 = vpop.f32.mrf.mxu0
        %562 = vmatprep.mubr.bf16.mxu0 0
        %563 = vmatmul.mubr.bf16.gmra.mxu0 %v423
        %v564 = vpop.f32.mrf.mxu0
        %v565 = vadd.f32 %v359, %v564
        %v566 = vpop.f32.mrf.mxu0
        %v567 = vpop.f32.mrf.mxu0
        %v568 = vadd.f32 %v359, %v567
        %v569 = vpop.f32.mrf.mxu0
        %570 = vmatprep.mubr.bf16.mxu0 0
        %571 = vmatmul.mubr.bf16.gmra.mxu0 %v426
        %v572 = vpop.f32.mrf.mxu0
        %v573 = vadd.f32 %v359, %v572
        %v574 = vpop.f32.mrf.mxu0
        %v575 = vpop.f32.mrf.mxu0
        %v576 = vadd.f32 %v359, %v575
        %v577 = vpop.f32.mrf.mxu0
        %578 = vmatprep.mubr.bf16.mxu0 0
        %579 = vmatmul.mubr.bf16.gmra.mxu0 %v429
        %v580 = vpop.f32.mrf.mxu0
        %v581 = vadd.f32 %v359, %v580
        %v582 = vpop.f32.mrf.mxu0
        %v583 = vpop.f32.mrf.mxu0
        %v584 = vadd.f32 %v359, %v583
        %v585 = vpop.f32.mrf.mxu0
        %586 = vmatprep.mubr.bf16.mxu0 0
        %587 = vmatmul.mubr.bf16.gmra.mxu0 %v432
        %v588 = vpop.f32.mrf.mxu0
        %v589 = vadd.f32 %v359, %v588
        %v590 = vpop.f32.mrf.mxu0
        %v591 = vpop.f32.mrf.mxu0
        %v592 = vadd.f32 %v359, %v591
        %v593 = vpop.f32.mrf.mxu0
        %594 = vdwg.mxu0
        %v595 = vmax.f32 %v469, 0.0
        %v596 = vmax.f32 %v472, 0.0
        %v597 = vmax.f32 %v477, 0.0
        %v598 = vmax.f32 %v480, 0.0
        %v599 = vmax.f32 %v485, 0.0
        %v600 = vmax.f32 %v488, 0.0
        %v601 = vmax.f32 %v493, 0.0
        %v602 = vmax.f32 %v496, 0.0
        %v603 = vmax.f32 %v501, 0.0
        %v604 = vmax.f32 %v504, 0.0
        %v605 = vmax.f32 %v509, 0.0
        %v606 = vmax.f32 %v512, 0.0
        %v607 = vmax.f32 %v517, 0.0
        %v608 = vmax.f32 %v520, 0.0
        %v609 = vmax.f32 %v525, 0.0
        %v610 = vmax.f32 %v528, 0.0
        %v611 = vmax.f32 %v533, 0.0
        %v612 = vmax.f32 %v536, 0.0
        %v613 = vmax.f32 %v541, 0.0
        %v614 = vmax.f32 %v544, 0.0
        %v615 = vmax.f32 %v549, 0.0
        %v616 = vmax.f32 %v552, 0.0
        %v617 = vmax.f32 %v557, 0.0
        %v618 = vmax.f32 %v560, 0.0
        %v619 = vmax.f32 %v565, 0.0
        %v620 = vmax.f32 %v568, 0.0
        %v621 = vmax.f32 %v573, 0.0
        %v622 = vmax.f32 %v576, 0.0
        %v623 = vmax.f32 %v581, 0.0
        %v624 = vmax.f32 %v584, 0.0
        %v625 = vmax.f32 %v589, 0.0
        %v626 = vmax.f32 %v592, 0.0
        %vm627 = vcmask 130048
        %628 = vst.msk [vmem:[#allocation2] sm:$0xff] %vm627, 0.0
        %629 = vst.msk [vmem:[#allocation2 + $0x8] sm:$0xff] %vm627, 0.0
        %vm630 = vcmask 123904
        %631 = vst.msk [vmem:[#allocation2 + $0x10] sm:$0x3] %vm630, 0.0
        %s632 = scalar_lea.vmem [#allocation2], 408
        %633 = vst.msk [vmem:[%s632] sm:$0xff] %vm627, 0.0
        %634 = vst.msk [vmem:[%s632 + $0x8] sm:$0xff] %vm627, 0.0
        %635 = vst.msk [vmem:[%s632 + $0x10] sm:$0x3] %vm630, 0.0
        %s636 = scalar_lea.vmem [#allocation2], 24
        %vm637 = vcmask 122880
        %638 = vst.msk [vmem:[%s636] sm:$0x1] %vm637, 0.0
        %639 = vst.msk [vmem:[%s636 + $0x18] sm:$0x1] %vm637, 0.0
        %640 = vst.msk [vmem:[%s636 + $0x30] sm:$0x1] %vm637, 0.0
        %641 = vst.msk [vmem:[%s636 + $0x48] sm:$0x1] %vm637, 0.0
        %642 = vst.msk [vmem:[%s636 + $0x60] sm:$0x1] %vm637, 0.0
        %643 = vst.msk [vmem:[%s636 + $0x78] sm:$0x1] %vm637, 0.0
        %644 = vst.msk [vmem:[%s636 + $0x90] sm:$0x1] %vm637, 0.0
        %645 = vst.msk [vmem:[%s636 + $0xa8] sm:$0x1] %vm637, 0.0
        %646 = vst.msk [vmem:[%s636 + $0xc0] sm:$0x1] %vm637, 0.0
        %647 = vst.msk [vmem:[%s636 + $0xd8] sm:$0x1] %vm637, 0.0
        %648 = vst.msk [vmem:[%s636 + $0xf0] sm:$0x1] %vm637, 0.0
        %649 = vst.msk [vmem:[%s636 + $0x108] sm:$0x1] %vm637, 0.0
        %650 = vst.msk [vmem:[%s636 + $0x120] sm:$0x1] %vm637, 0.0
        %651 = vst.msk [vmem:[%s636 + $0x138] sm:$0x1] %vm637, 0.0
        %652 = vst.msk [vmem:[%s636 + $0x150] sm:$0x1] %vm637, 0.0
        %653 = vst.msk [vmem:[%s636 + $0x168] sm:$0x1] %vm637, 0.0
        %654 = vst.msk [vmem:[%s636 + $0x11] sm:$0x1] %vm637, 0.0
        %655 = vst.msk [vmem:[%s636 + $0x29] sm:$0x1] %vm637, 0.0
        %656 = vst.msk [vmem:[%s636 + $0x41] sm:$0x1] %vm637, 0.0
        %657 = vst.msk [vmem:[%s636 + $0x59] sm:$0x1] %vm637, 0.0
        %658 = vst.msk [vmem:[%s636 + $0x71] sm:$0x1] %vm637, 0.0
        %659 = vst.msk [vmem:[%s636 + $0x89] sm:$0x1] %vm637, 0.0
        %660 = vst.msk [vmem:[%s636 + $0xa1] sm:$0x1] %vm637, 0.0
        %661 = vst.msk [vmem:[%s636 + $0xb9] sm:$0x1] %vm637, 0.0
        %662 = vst.msk [vmem:[%s636 + $0xd1] sm:$0x1] %vm637, 0.0
        %663 = vst.msk [vmem:[%s636 + $0xe9] sm:$0x1] %vm637, 0.0
        %664 = vst.msk [vmem:[%s636 + $0x101] sm:$0x1] %vm637, 0.0
        %665 = vst.msk [vmem:[%s636 + $0x119] sm:$0x1] %vm637, 0.0
        %666 = vst.msk [vmem:[%s636 + $0x131] sm:$0x1] %vm637, 0.0
        %667 = vst.msk [vmem:[%s636 + $0x149] sm:$0x1] %vm637, 0.0
        %668 = vst.msk [vmem:[%s636 + $0x161] sm:$0x1] %vm637, 0.0
        %669 = vst.msk [vmem:[%s636 + $0x179] sm:$0x1] %vm637, 0.0
        %670 = vst.msk [vmem:[%s636 + $0x1] sm:$0xff] %vm627, %v595
        %671 = vst.msk [vmem:[%s636 + $0x9] sm:$0xff] %vm627, %v596
        %672 = vst.msk [vmem:[%s636 + $0x19] sm:$0xff] %vm627, %v597
        %673 = vst.msk [vmem:[%s636 + $0x21] sm:$0xff] %vm627, %v598
        %674 = vst.msk [vmem:[%s636 + $0x31] sm:$0xff] %vm627, %v599
        %675 = vst.msk [vmem:[%s636 + $0x39] sm:$0xff] %vm627, %v600
        %676 = vst.msk [vmem:[%s636 + $0x49] sm:$0xff] %vm627, %v601
        %677 = vst.msk [vmem:[%s636 + $0x51] sm:$0xff] %vm627, %v602
        %678 = vst.msk [vmem:[%s636 + $0x61] sm:$0xff] %vm627, %v603
        %679 = vst.msk [vmem:[%s636 + $0x69] sm:$0xff] %vm627, %v604
        %680 = vst.msk [vmem:[%s636 + $0x79] sm:$0xff] %vm627, %v605
        %681 = vst.msk [vmem:[%s636 + $0x81] sm:$0xff] %vm627, %v606
        %682 = vst.msk [vmem:[%s636 + $0x91] sm:$0xff] %vm627, %v607
        %683 = vst.msk [vmem:[%s636 + $0x99] sm:$0xff] %vm627, %v608
        %684 = vst.msk [vmem:[%s636 + $0xa9] sm:$0xff] %vm627, %v609
        %685 = vst.msk [vmem:[%s636 + $0xb1] sm:$0xff] %vm627, %v610
        %686 = vst.msk [vmem:[%s636 + $0xc1] sm:$0xff] %vm627, %v611
        %687 = vst.msk [vmem:[%s636 + $0xc9] sm:$0xff] %vm627, %v612
        %688 = vst.msk [vmem:[%s636 + $0xd9] sm:$0xff] %vm627, %v613
        %689 = vst.msk [vmem:[%s636 + $0xe1] sm:$0xff] %vm627, %v614
        %690 = vst.msk [vmem:[%s636 + $0xf1] sm:$0xff] %vm627, %v615
        %691 = vst.msk [vmem:[%s636 + $0xf9] sm:$0xff] %vm627, %v616
        %692 = vst.msk [vmem:[%s636 + $0x109] sm:$0xff] %vm627, %v617
        %693 = vst.msk [vmem:[%s636 + $0x111] sm:$0xff] %vm627, %v618
        %694 = vst.msk [vmem:[%s636 + $0x121] sm:$0xff] %vm627, %v619
        %695 = vst.msk [vmem:[%s636 + $0x129] sm:$0xff] %vm627, %v620
        %696 = vst.msk [vmem:[%s636 + $0x139] sm:$0xff] %vm627, %v621
        %697 = vst.msk [vmem:[%s636 + $0x141] sm:$0xff] %vm627, %v622
        %698 = vst.msk [vmem:[%s636 + $0x151] sm:$0xff] %vm627, %v623
        %699 = vst.msk [vmem:[%s636 + $0x159] sm:$0xff] %vm627, %v624
        %700 = vst.msk [vmem:[%s636 + $0x169] sm:$0xff] %vm627, %v625
        %701 = vst.msk [vmem:[%s636 + $0x171] sm:$0xff] %vm627, %v626
        %v702 = vld [vmem:[#allocation2] sm:$0xff]
        %v703 = vld [vmem:[#allocation2 + $0x8] sm:$0xff]
        %v704 = vld [vmem:[#allocation2 + $0x18] sm:$0xff]
        %v705 = vld [vmem:[#allocation2 + $0x20] sm:$0xff]
        %v706 = vld [vmem:[#allocation2 + $0x30] sm:$0xff]
        %v707 = vld [vmem:[#allocation2 + $0x38] sm:$0xff]
        %v708 = vld [vmem:[#allocation2 + $0x48] sm:$0xff]
        %v709 = vld [vmem:[#allocation2 + $0x50] sm:$0xff]
        %v710 = vld [vmem:[#allocation2 + $0x60] sm:$0xff]
        %v711 = vld [vmem:[#allocation2 + $0x68] sm:$0xff]
        %v712 = vld [vmem:[#allocation2 + $0x78] sm:$0xff]
        %v713 = vld [vmem:[#allocation2 + $0x80] sm:$0xff]
        %v714 = vld [vmem:[#allocation2 + $0x90] sm:$0xff]
        %v715 = vld [vmem:[#allocation2 + $0x98] sm:$0xff]
        %v716 = vld [vmem:[#allocation2 + $0xa8] sm:$0xff]
        %v717 = vld [vmem:[#allocation2 + $0xb0] sm:$0xff]
        %v718 = vld [vmem:[#allocation2 + $0xc0] sm:$0xff]
        %v719 = vld [vmem:[#allocation2 + $0xc8] sm:$0xff]
        %v720 = vld [vmem:[#allocation2 + $0xd8] sm:$0xff]
        %v721 = vld [vmem:[#allocation2 + $0xe0] sm:$0xff]
        %v722 = vld [vmem:[#allocation2 + $0xf0] sm:$0xff]
        %v723 = vld [vmem:[#allocation2 + $0xf8] sm:$0xff]
        %v724 = vld [vmem:[#allocation2 + $0x108] sm:$0xff]
        %v725 = vld [vmem:[#allocation2 + $0x110] sm:$0xff]
        %v726 = vld [vmem:[#allocation2 + $0x120] sm:$0xff]
        %v727 = vld [vmem:[#allocation2 + $0x128] sm:$0xff]
        %v728 = vld [vmem:[#allocation2 + $0x138] sm:$0xff]
        %v729 = vld [vmem:[#allocation2 + $0x140] sm:$0xff]
        %v730 = vld [vmem:[#allocation2 + $0x150] sm:$0xff]
        %v731 = vld [vmem:[#allocation2 + $0x158] sm:$0xff]
        %v732 = vld [vmem:[#allocation2 + $0x168] sm:$0xff]
        %v733 = vld [vmem:[#allocation2 + $0x170] sm:$0xff]
        %v734 = vld [vmem:[#allocation2 + $0x1] sm:$0xff]
        %v735 = vld [vmem:[#allocation2 + $0x9] sm:$0xff]
        %v736 = vld [vmem:[#allocation2 + $0x19] sm:$0xff]
        %v737 = vld [vmem:[#allocation2 + $0x21] sm:$0xff]
        %v738 = vld [vmem:[#allocation2 + $0x31] sm:$0xff]
        %v739 = vld [vmem:[#allocation2 + $0x39] sm:$0xff]
        %v740 = vld [vmem:[#allocation2 + $0x49] sm:$0xff]
        %v741 = vld [vmem:[#allocation2 + $0x51] sm:$0xff]
        %v742 = vld [vmem:[#allocation2 + $0x61] sm:$0xff]
        %v743 = vld [vmem:[#allocation2 + $0x69] sm:$0xff]
        %v744 = vld [vmem:[#allocation2 + $0x79] sm:$0xff]
        %v745 = vld [vmem:[#allocation2 + $0x81] sm:$0xff]
        %v746 = vld [vmem:[#allocation2 + $0x91] sm:$0xff]
        %v747 = vld [vmem:[#allocation2 + $0x99] sm:$0xff]
        %v748 = vld [vmem:[#allocation2 + $0xa9] sm:$0xff]
        %v749 = vld [vmem:[#allocation2 + $0xb1] sm:$0xff]
        %v750 = vld [vmem:[#allocation2 + $0xc1] sm:$0xff]
        %v751 = vld [vmem:[#allocation2 + $0xc9] sm:$0xff]
        %v752 = vld [vmem:[#allocation2 + $0xd9] sm:$0xff]
        %v753 = vld [vmem:[#allocation2 + $0xe1] sm:$0xff]
        %v754 = vld [vmem:[#allocation2 + $0xf1] sm:$0xff]
        %v755 = vld [vmem:[#allocation2 + $0xf9] sm:$0xff]
        %v756 = vld [vmem:[#allocation2 + $0x109] sm:$0xff]
        %v757 = vld [vmem:[#allocation2 + $0x111] sm:$0xff]
        %v758 = vld [vmem:[#allocation2 + $0x121] sm:$0xff]
        %v759 = vld [vmem:[#allocation2 + $0x129] sm:$0xff]
        %v760 = vld [vmem:[#allocation2 + $0x139] sm:$0xff]
        %v761 = vld [vmem:[#allocation2 + $0x141] sm:$0xff]
        %v762 = vld [vmem:[#allocation2 + $0x151] sm:$0xff]
        %v763 = vld [vmem:[#allocation2 + $0x159] sm:$0xff]
        %v764 = vld [vmem:[#allocation2 + $0x169] sm:$0xff]
        %v765 = vld [vmem:[#allocation2 + $0x171] sm:$0xff]
        %v766 = vld [vmem:[#allocation2 + $0x2] sm:$0xff]
        %v767 = vld [vmem:[#allocation2 + $0xa] sm:$0xff]
        %v768 = vld [vmem:[#allocation2 + $0x1a] sm:$0xff]
        %v769 = vld [vmem:[#allocation2 + $0x22] sm:$0xff]
        %v770 = vld [vmem:[#allocation2 + $0x32] sm:$0xff]
        %v771 = vld [vmem:[#allocation2 + $0x3a] sm:$0xff]
        %v772 = vld [vmem:[#allocation2 + $0x4a] sm:$0xff]
        %v773 = vld [vmem:[#allocation2 + $0x52] sm:$0xff]
        %v774 = vld [vmem:[#allocation2 + $0x62] sm:$0xff]
        %v775 = vld [vmem:[#allocation2 + $0x6a] sm:$0xff]
        %v776 = vld [vmem:[#allocation2 + $0x7a] sm:$0xff]
        %v777 = vld [vmem:[#allocation2 + $0x82] sm:$0xff]
        %v778 = vld [vmem:[#allocation2 + $0x92] sm:$0xff]
        %v779 = vld [vmem:[#allocation2 + $0x9a] sm:$0xff]
        %v780 = vld [vmem:[#allocation2 + $0xaa] sm:$0xff]
        %v781 = vld [vmem:[#allocation2 + $0xb2] sm:$0xff]
        %v782 = vld [vmem:[#allocation2 + $0xc2] sm:$0xff]
        %v783 = vld [vmem:[#allocation2 + $0xca] sm:$0xff]
        %v784 = vld [vmem:[#allocation2 + $0xda] sm:$0xff]
        %v785 = vld [vmem:[#allocation2 + $0xe2] sm:$0xff]
        %v786 = vld [vmem:[#allocation2 + $0xf2] sm:$0xff]
        %v787 = vld [vmem:[#allocation2 + $0xfa] sm:$0xff]
        %v788 = vld [vmem:[#allocation2 + $0x10a] sm:$0xff]
        %v789 = vld [vmem:[#allocation2 + $0x112] sm:$0xff]
        %v790 = vld [vmem:[#allocation2 + $0x122] sm:$0xff]
        %v791 = vld [vmem:[#allocation2 + $0x12a] sm:$0xff]
        %v792 = vld [vmem:[#allocation2 + $0x13a] sm:$0xff]
        %v793 = vld [vmem:[#allocation2 + $0x142] sm:$0xff]
        %v794 = vld [vmem:[#allocation2 + $0x152] sm:$0xff]
        %v795 = vld [vmem:[#allocation2 + $0x15a] sm:$0xff]
        %v796 = vld [vmem:[#allocation2 + $0x16a] sm:$0xff]
        %v797 = vld [vmem:[#allocation2 + $0x172] sm:$0xff]
        %v798 = vld [vmem:[%s636] sm:$0xff]
        %v799 = vld [vmem:[%s636 + $0x8] sm:$0xff]
        %v800 = vld [vmem:[%s636 + $0x18] sm:$0xff]
        %v801 = vld [vmem:[%s636 + $0x20] sm:$0xff]
        %v802 = vld [vmem:[%s636 + $0x30] sm:$0xff]
        %v803 = vld [vmem:[%s636 + $0x38] sm:$0xff]
        %v804 = vld [vmem:[%s636 + $0x48] sm:$0xff]
        %v805 = vld [vmem:[%s636 + $0x50] sm:$0xff]
        %v806 = vld [vmem:[%s636 + $0x60] sm:$0xff]
        %v807 = vld [vmem:[%s636 + $0x68] sm:$0xff]
        %v808 = vld [vmem:[%s636 + $0x78] sm:$0xff]
        %v809 = vld [vmem:[%s636 + $0x80] sm:$0xff]
        %v810 = vld [vmem:[%s636 + $0x90] sm:$0xff]
        %v811 = vld [vmem:[%s636 + $0x98] sm:$0xff]
        %v812 = vld [vmem:[%s636 + $0xa8] sm:$0xff]
        %v813 = vld [vmem:[%s636 + $0xb0] sm:$0xff]
        %v814 = vld [vmem:[%s636 + $0xc0] sm:$0xff]
        %v815 = vld [vmem:[%s636 + $0xc8] sm:$0xff]
        %v816 = vld [vmem:[%s636 + $0xd8] sm:$0xff]
        %v817 = vld [vmem:[%s636 + $0xe0] sm:$0xff]
        %v818 = vld [vmem:[%s636 + $0xf0] sm:$0xff]
        %v819 = vld [vmem:[%s636 + $0xf8] sm:$0xff]
        %v820 = vld [vmem:[%s636 + $0x108] sm:$0xff]
        %v821 = vld [vmem:[%s636 + $0x110] sm:$0xff]
        %v822 = vld [vmem:[%s636 + $0x120] sm:$0xff]
        %v823 = vld [vmem:[%s636 + $0x128] sm:$0xff]
        %v824 = vld [vmem:[%s636 + $0x138] sm:$0xff]
        %v825 = vld [vmem:[%s636 + $0x140] sm:$0xff]
        %v826 = vld [vmem:[%s636 + $0x150] sm:$0xff]
        %v827 = vld [vmem:[%s636 + $0x158] sm:$0xff]
        %v828 = vld [vmem:[%s636 + $0x168] sm:$0xff]
        %v829 = vld [vmem:[%s636 + $0x170] sm:$0xff]
        %v830 = vld [vmem:[%s636 + $0x1] sm:$0xff]
        %v831 = vld [vmem:[%s636 + $0x9] sm:$0xff]
        %v832 = vld [vmem:[%s636 + $0x19] sm:$0xff]
        %v833 = vld [vmem:[%s636 + $0x21] sm:$0xff]
        %v834 = vld [vmem:[%s636 + $0x31] sm:$0xff]
        %v835 = vld [vmem:[%s636 + $0x39] sm:$0xff]
        %v836 = vld [vmem:[%s636 + $0x49] sm:$0xff]
        %v837 = vld [vmem:[%s636 + $0x51] sm:$0xff]
        %v838 = vld [vmem:[%s636 + $0x61] sm:$0xff]
        %v839 = vld [vmem:[%s636 + $0x69] sm:$0xff]
        %v840 = vld [vmem:[%s636 + $0x79] sm:$0xff]
        %v841 = vld [vmem:[%s636 + $0x81] sm:$0xff]
        %v842 = vld [vmem:[%s636 + $0x91] sm:$0xff]
        %v843 = vld [vmem:[%s636 + $0x99] sm:$0xff]
        %v844 = vld [vmem:[%s636 + $0xa9] sm:$0xff]
        %v845 = vld [vmem:[%s636 + $0xb1] sm:$0xff]
        %v846 = vld [vmem:[%s636 + $0xc1] sm:$0xff]
        %v847 = vld [vmem:[%s636 + $0xc9] sm:$0xff]
        %v848 = vld [vmem:[%s636 + $0xd9] sm:$0xff]
        %v849 = vld [vmem:[%s636 + $0xe1] sm:$0xff]
        %v850 = vld [vmem:[%s636 + $0xf1] sm:$0xff]
        %v851 = vld [vmem:[%s636 + $0xf9] sm:$0xff]
        %v852 = vld [vmem:[%s636 + $0x109] sm:$0xff]
        %v853 = vld [vmem:[%s636 + $0x111] sm:$0xff]
        %v854 = vld [vmem:[%s636 + $0x121] sm:$0xff]
        %v855 = vld [vmem:[%s636 + $0x129] sm:$0xff]
        %v856 = vld [vmem:[%s636 + $0x139] sm:$0xff]
        %v857 = vld [vmem:[%s636 + $0x141] sm:$0xff]
        %v858 = vld [vmem:[%s636 + $0x151] sm:$0xff]
        %v859 = vld [vmem:[%s636 + $0x159] sm:$0xff]
        %v860 = vld [vmem:[%s636 + $0x169] sm:$0xff]
        %v861 = vld [vmem:[%s636 + $0x171] sm:$0xff]
        %v862 = vld [vmem:[%s636 + $0x2] sm:$0xff]
        %v863 = vld [vmem:[%s636 + $0xa] sm:$0xff]
        %v864 = vld [vmem:[%s636 + $0x1a] sm:$0xff]
        %v865 = vld [vmem:[%s636 + $0x22] sm:$0xff]
        %v866 = vld [vmem:[%s636 + $0x32] sm:$0xff]
        %v867 = vld [vmem:[%s636 + $0x3a] sm:$0xff]
        %v868 = vld [vmem:[%s636 + $0x4a] sm:$0xff]
        %v869 = vld [vmem:[%s636 + $0x52] sm:$0xff]
        %v870 = vld [vmem:[%s636 + $0x62] sm:$0xff]
        %v871 = vld [vmem:[%s636 + $0x6a] sm:$0xff]
        %v872 = vld [vmem:[%s636 + $0x7a] sm:$0xff]
        %v873 = vld [vmem:[%s636 + $0x82] sm:$0xff]
        %v874 = vld [vmem:[%s636 + $0x92] sm:$0xff]
        %v875 = vld [vmem:[%s636 + $0x9a] sm:$0xff]
        %v876 = vld [vmem:[%s636 + $0xaa] sm:$0xff]
        %v877 = vld [vmem:[%s636 + $0xb2] sm:$0xff]
        %v878 = vld [vmem:[%s636 + $0xc2] sm:$0xff]
        %v879 = vld [vmem:[%s636 + $0xca] sm:$0xff]
        %v880 = vld [vmem:[%s636 + $0xda] sm:$0xff]
        %v881 = vld [vmem:[%s636 + $0xe2] sm:$0xff]
        %v882 = vld [vmem:[%s636 + $0xf2] sm:$0xff]
        %v883 = vld [vmem:[%s636 + $0xfa] sm:$0xff]
        %v884 = vld [vmem:[%s636 + $0x10a] sm:$0xff]
        %v885 = vld [vmem:[%s636 + $0x112] sm:$0xff]
        %v886 = vld [vmem:[%s636 + $0x122] sm:$0xff]
        %v887 = vld [vmem:[%s636 + $0x12a] sm:$0xff]
        %v888 = vld [vmem:[%s636 + $0x13a] sm:$0xff]
        %v889 = vld [vmem:[%s636 + $0x142] sm:$0xff]
        %v890 = vld [vmem:[%s636 + $0x152] sm:$0xff]
        %v891 = vld [vmem:[%s636 + $0x15a] sm:$0xff]
        %v892 = vld [vmem:[%s636 + $0x16a] sm:$0xff]
        %v893 = vld [vmem:[%s636 + $0x172] sm:$0xff]
        %s894 = scalar_lea.vmem [#allocation2], 48
        %v895 = vld [vmem:[%s894] sm:$0xff]
        %v896 = vld [vmem:[%s894 + $0x8] sm:$0xff]
        %v897 = vld [vmem:[%s894 + $0x18] sm:$0xff]
        %v898 = vld [vmem:[%s894 + $0x20] sm:$0xff]
        %v899 = vld [vmem:[%s894 + $0x30] sm:$0xff]
        %v900 = vld [vmem:[%s894 + $0x38] sm:$0xff]
        %v901 = vld [vmem:[%s894 + $0x48] sm:$0xff]
        %v902 = vld [vmem:[%s894 + $0x50] sm:$0xff]
        %v903 = vld [vmem:[%s894 + $0x60] sm:$0xff]
        %v904 = vld [vmem:[%s894 + $0x68] sm:$0xff]
        %v905 = vld [vmem:[%s894 + $0x78] sm:$0xff]
        %v906 = vld [vmem:[%s894 + $0x80] sm:$0xff]
        %v907 = vld [vmem:[%s894 + $0x90] sm:$0xff]
        %v908 = vld [vmem:[%s894 + $0x98] sm:$0xff]
        %v909 = vld [vmem:[%s894 + $0xa8] sm:$0xff]
        %v910 = vld [vmem:[%s894 + $0xb0] sm:$0xff]
        %v911 = vld [vmem:[%s894 + $0xc0] sm:$0xff]
        %v912 = vld [vmem:[%s894 + $0xc8] sm:$0xff]
        %v913 = vld [vmem:[%s894 + $0xd8] sm:$0xff]
        %v914 = vld [vmem:[%s894 + $0xe0] sm:$0xff]
        %v915 = vld [vmem:[%s894 + $0xf0] sm:$0xff]
        %v916 = vld [vmem:[%s894 + $0xf8] sm:$0xff]
        %v917 = vld [vmem:[%s894 + $0x108] sm:$0xff]
        %v918 = vld [vmem:[%s894 + $0x110] sm:$0xff]
        %v919 = vld [vmem:[%s894 + $0x120] sm:$0xff]
        %v920 = vld [vmem:[%s894 + $0x128] sm:$0xff]
        %v921 = vld [vmem:[%s894 + $0x138] sm:$0xff]
        %v922 = vld [vmem:[%s894 + $0x140] sm:$0xff]
        %v923 = vld [vmem:[%s894 + $0x150] sm:$0xff]
        %v924 = vld [vmem:[%s894 + $0x158] sm:$0xff]
        %v925 = vld [vmem:[%s894 + $0x168] sm:$0xff]
        %v926 = vld [vmem:[%s894 + $0x170] sm:$0xff]
        %v927 = vld [vmem:[%s894 + $0x1] sm:$0xff]
        %v928 = vld [vmem:[%s894 + $0x9] sm:$0xff]
        %v929 = vld [vmem:[%s894 + $0x19] sm:$0xff]
        %v930 = vld [vmem:[%s894 + $0x21] sm:$0xff]
        %v931 = vld [vmem:[%s894 + $0x31] sm:$0xff]
        %v932 = vld [vmem:[%s894 + $0x39] sm:$0xff]
        %v933 = vld [vmem:[%s894 + $0x49] sm:$0xff]
        %v934 = vld [vmem:[%s894 + $0x51] sm:$0xff]
        %v935 = vld [vmem:[%s894 + $0x61] sm:$0xff]
        %v936 = vld [vmem:[%s894 + $0x69] sm:$0xff]
        %v937 = vld [vmem:[%s894 + $0x79] sm:$0xff]
        %v938 = vld [vmem:[%s894 + $0x81] sm:$0xff]
        %v939 = vld [vmem:[%s894 + $0x91] sm:$0xff]
        %v940 = vld [vmem:[%s894 + $0x99] sm:$0xff]
        %v941 = vld [vmem:[%s894 + $0xa9] sm:$0xff]
        %v942 = vld [vmem:[%s894 + $0xb1] sm:$0xff]
        %v943 = vld [vmem:[%s894 + $0xc1] sm:$0xff]
        %v944 = vld [vmem:[%s894 + $0xc9] sm:$0xff]
        %v945 = vld [vmem:[%s894 + $0xd9] sm:$0xff]
        %v946 = vld [vmem:[%s894 + $0xe1] sm:$0xff]
        %v947 = vld [vmem:[%s894 + $0xf1] sm:$0xff]
        %v948 = vld [vmem:[%s894 + $0xf9] sm:$0xff]
        %v949 = vld [vmem:[%s894 + $0x109] sm:$0xff]
        %v950 = vld [vmem:[%s894 + $0x111] sm:$0xff]
        %v951 = vld [vmem:[%s894 + $0x121] sm:$0xff]
        %v952 = vld [vmem:[%s894 + $0x129] sm:$0xff]
        %v953 = vld [vmem:[%s894 + $0x139] sm:$0xff]
        %v954 = vld [vmem:[%s894 + $0x141] sm:$0xff]
        %v955 = vld [vmem:[%s894 + $0x151] sm:$0xff]
        %v956 = vld [vmem:[%s894 + $0x159] sm:$0xff]
        %v957 = vld [vmem:[%s894 + $0x169] sm:$0xff]
        %v958 = vld [vmem:[%s894 + $0x171] sm:$0xff]
        %v959 = vld [vmem:[%s894 + $0x2] sm:$0xff]
        %v960 = vld [vmem:[%s894 + $0xa] sm:$0xff]
        %v961 = vld [vmem:[%s894 + $0x1a] sm:$0xff]
        %v962 = vld [vmem:[%s894 + $0x22] sm:$0xff]
        %v963 = vld [vmem:[%s894 + $0x32] sm:$0xff]
        %v964 = vld [vmem:[%s894 + $0x3a] sm:$0xff]
        %v965 = vld [vmem:[%s894 + $0x4a] sm:$0xff]
        %v966 = vld [vmem:[%s894 + $0x52] sm:$0xff]
        %v967 = vld [vmem:[%s894 + $0x62] sm:$0xff]
        %v968 = vld [vmem:[%s894 + $0x6a] sm:$0xff]
        %v969 = vld [vmem:[%s894 + $0x7a] sm:$0xff]
        %v970 = vld [vmem:[%s894 + $0x82] sm:$0xff]
        %v971 = vld [vmem:[%s894 + $0x92] sm:$0xff]
        %v972 = vld [vmem:[%s894 + $0x9a] sm:$0xff]
        %v973 = vld [vmem:[%s894 + $0xaa] sm:$0xff]
        %v974 = vld [vmem:[%s894 + $0xb2] sm:$0xff]
        %v975 = vld [vmem:[%s894 + $0xc2] sm:$0xff]
        %v976 = vld [vmem:[%s894 + $0xca] sm:$0xff]
        %v977 = vld [vmem:[%s894 + $0xda] sm:$0xff]
        %v978 = vld [vmem:[%s894 + $0xe2] sm:$0xff]
        %v979 = vld [vmem:[%s894 + $0xf2] sm:$0xff]
        %v980 = vld [vmem:[%s894 + $0xfa] sm:$0xff]
        %v981 = vld [vmem:[%s894 + $0x10a] sm:$0xff]
        %v982 = vld [vmem:[%s894 + $0x112] sm:$0xff]
        %v983 = vld [vmem:[%s894 + $0x122] sm:$0xff]
        %v984 = vld [vmem:[%s894 + $0x12a] sm:$0xff]
        %v985 = vld [vmem:[%s894 + $0x13a] sm:$0xff]
        %v986 = vld [vmem:[%s894 + $0x142] sm:$0xff]
        %v987 = vld [vmem:[%s894 + $0x152] sm:$0xff]
        %v988 = vld [vmem:[%s894 + $0x15a] sm:$0xff]
        %v989 = vld [vmem:[%s894 + $0x16a] sm:$0xff]
        %v990 = vld [vmem:[%s894 + $0x172] sm:$0xff]
        %1023 = vrot.lane.b32.xlu0 %v734, 16
        %v1024 = vpop.permute.xlu0 %1023
        %1025 = vrot.lane.b32.xlu0 %v735, 16
        %v1026 = vpop.permute.xlu0 %1025
        %1027 = vrot.lane.b32.xlu0 %v736, 16
        %v1028 = vpop.permute.xlu0 %1027
        %1029 = vrot.lane.b32.xlu0 %v737, 16
        %v1030 = vpop.permute.xlu0 %1029
        %1031 = vrot.lane.b32.xlu0 %v738, 16
        %v1032 = vpop.permute.xlu0 %1031
        %1033 = vrot.lane.b32.xlu0 %v739, 16
        %v1034 = vpop.permute.xlu0 %1033
        %1035 = vrot.lane.b32.xlu0 %v740, 16
        %v1036 = vpop.permute.xlu0 %1035
        %1037 = vrot.lane.b32.xlu0 %v741, 16
        %v1038 = vpop.permute.xlu0 %1037
        %1039 = vrot.lane.b32.xlu0 %v742, 16
        %v1040 = vpop.permute.xlu0 %1039
        %1041 = vrot.lane.b32.xlu0 %v743, 16
        %v1042 = vpop.permute.xlu0 %1041
        %1043 = vrot.lane.b32.xlu0 %v744, 16
        %v1044 = vpop.permute.xlu0 %1043
        %1045 = vrot.lane.b32.xlu0 %v745, 16
        %v1046 = vpop.permute.xlu0 %1045
        %1047 = vrot.lane.b32.xlu0 %v746, 16
        %v1048 = vpop.permute.xlu0 %1047
        %1049 = vrot.lane.b32.xlu0 %v747, 16
        %v1050 = vpop.permute.xlu0 %1049
        %1051 = vrot.lane.b32.xlu0 %v748, 16
        %v1052 = vpop.permute.xlu0 %1051
        %1053 = vrot.lane.b32.xlu0 %v749, 16
        %v1054 = vpop.permute.xlu0 %1053
        %1055 = vrot.lane.b32.xlu0 %v750, 16
        %v1056 = vpop.permute.xlu0 %1055
        %1057 = vrot.lane.b32.xlu0 %v751, 16
        %v1058 = vpop.permute.xlu0 %1057
        %1059 = vrot.lane.b32.xlu0 %v752, 16
        %v1060 = vpop.permute.xlu0 %1059
        %1061 = vrot.lane.b32.xlu0 %v753, 16
        %v1062 = vpop.permute.xlu0 %1061
        %1063 = vrot.lane.b32.xlu0 %v754, 16
        %v1064 = vpop.permute.xlu0 %1063
        %1065 = vrot.lane.b32.xlu0 %v755, 16
        %v1066 = vpop.permute.xlu0 %1065
        %1067 = vrot.lane.b32.xlu0 %v756, 16
        %v1068 = vpop.permute.xlu0 %1067
        %1069 = vrot.lane.b32.xlu0 %v757, 16
        %v1070 = vpop.permute.xlu0 %1069
        %1071 = vrot.lane.b32.xlu0 %v758, 16
        %v1072 = vpop.permute.xlu0 %1071
        %1073 = vrot.lane.b32.xlu0 %v759, 16
        %v1074 = vpop.permute.xlu0 %1073
        %1075 = vrot.lane.b32.xlu0 %v760, 16
        %v1076 = vpop.permute.xlu0 %1075
        %1077 = vrot.lane.b32.xlu0 %v761, 16
        %v1078 = vpop.permute.xlu0 %1077
        %1079 = vrot.lane.b32.xlu0 %v762, 16
        %v1080 = vpop.permute.xlu0 %1079
        %1081 = vrot.lane.b32.xlu0 %v763, 16
        %v1082 = vpop.permute.xlu0 %1081
        %1083 = vrot.lane.b32.xlu0 %v764, 16
        %v1084 = vpop.permute.xlu0 %1083
        %1085 = vrot.lane.b32.xlu0 %v765, 16
        %v1086 = vpop.permute.xlu0 %1085
        %1151 = vrot.lane.b32.xlu0 %v766, 32
        %v1152 = vpop.permute.xlu0 %1151
        %1153 = vrot.lane.b32.xlu0 %v767, 32
        %v1154 = vpop.permute.xlu0 %1153
        %1155 = vrot.lane.b32.xlu0 %v768, 32
        %v1156 = vpop.permute.xlu0 %1155
        %1157 = vrot.lane.b32.xlu0 %v769, 32
        %v1158 = vpop.permute.xlu0 %1157
        %1159 = vrot.lane.b32.xlu0 %v770, 32
        %v1160 = vpop.permute.xlu0 %1159
        %1161 = vrot.lane.b32.xlu0 %v771, 32
        %v1162 = vpop.permute.xlu0 %1161
        %1163 = vrot.lane.b32.xlu0 %v772, 32
        %v1164 = vpop.permute.xlu0 %1163
        %1165 = vrot.lane.b32.xlu0 %v773, 32
        %v1166 = vpop.permute.xlu0 %1165
        %1167 = vrot.lane.b32.xlu0 %v774, 32
        %v1168 = vpop.permute.xlu0 %1167
        %1169 = vrot.lane.b32.xlu0 %v775, 32
        %v1170 = vpop.permute.xlu0 %1169
        %1171 = vrot.lane.b32.xlu0 %v776, 32
        %v1172 = vpop.permute.xlu0 %1171
        %1173 = vrot.lane.b32.xlu0 %v777, 32
        %v1174 = vpop.permute.xlu0 %1173
        %1175 = vrot.lane.b32.xlu0 %v778, 32
        %v1176 = vpop.permute.xlu0 %1175
        %1177 = vrot.lane.b32.xlu0 %v779, 32
        %v1178 = vpop.permute.xlu0 %1177
        %1179 = vrot.lane.b32.xlu0 %v780, 32
        %v1180 = vpop.permute.xlu0 %1179
        %1181 = vrot.lane.b32.xlu0 %v781, 32
        %v1182 = vpop.permute.xlu0 %1181
        %1183 = vrot.lane.b32.xlu0 %v782, 32
        %v1184 = vpop.permute.xlu0 %1183
        %1185 = vrot.lane.b32.xlu0 %v783, 32
        %v1186 = vpop.permute.xlu0 %1185
        %1187 = vrot.lane.b32.xlu0 %v784, 32
        %v1188 = vpop.permute.xlu0 %1187
        %1189 = vrot.lane.b32.xlu0 %v785, 32
        %v1190 = vpop.permute.xlu0 %1189
        %1191 = vrot.lane.b32.xlu0 %v786, 32
        %v1192 = vpop.permute.xlu0 %1191
        %1193 = vrot.lane.b32.xlu0 %v787, 32
        %v1194 = vpop.permute.xlu0 %1193
        %1195 = vrot.lane.b32.xlu0 %v788, 32
        %v1196 = vpop.permute.xlu0 %1195
        %1197 = vrot.lane.b32.xlu0 %v789, 32
        %v1198 = vpop.permute.xlu0 %1197
        %1199 = vrot.lane.b32.xlu0 %v790, 32
        %v1200 = vpop.permute.xlu0 %1199
        %1201 = vrot.lane.b32.xlu0 %v791, 32
        %v1202 = vpop.permute.xlu0 %1201
        %1203 = vrot.lane.b32.xlu0 %v792, 32
        %v1204 = vpop.permute.xlu0 %1203
        %1205 = vrot.lane.b32.xlu0 %v793, 32
        %v1206 = vpop.permute.xlu0 %1205
        %1207 = vrot.lane.b32.xlu0 %v794, 32
        %v1208 = vpop.permute.xlu0 %1207
        %1209 = vrot.lane.b32.xlu0 %v795, 32
        %v1210 = vpop.permute.xlu0 %1209
        %1211 = vrot.lane.b32.xlu0 %v796, 32
        %v1212 = vpop.permute.xlu0 %1211
        %1213 = vrot.lane.b32.xlu0 %v797, 32
        %v1214 = vpop.permute.xlu0 %1213
        %1279 = vrot.lane.b32.xlu0 %v798, 48
        %v1280 = vpop.permute.xlu0 %1279
        %1281 = vrot.lane.b32.xlu0 %v799, 48
        %v1282 = vpop.permute.xlu0 %1281
        %1283 = vrot.lane.b32.xlu0 %v800, 48
        %v1284 = vpop.permute.xlu0 %1283
        %1285 = vrot.lane.b32.xlu0 %v801, 48
        %v1286 = vpop.permute.xlu0 %1285
        %1287 = vrot.lane.b32.xlu0 %v802, 48
        %v1288 = vpop.permute.xlu0 %1287
        %1289 = vrot.lane.b32.xlu0 %v803, 48
        %v1290 = vpop.permute.xlu0 %1289
        %1291 = vrot.lane.b32.xlu0 %v804, 48
        %v1292 = vpop.permute.xlu0 %1291
        %1293 = vrot.lane.b32.xlu0 %v805, 48
        %v1294 = vpop.permute.xlu0 %1293
        %1295 = vrot.lane.b32.xlu0 %v806, 48
        %v1296 = vpop.permute.xlu0 %1295
        %1297 = vrot.lane.b32.xlu0 %v807, 48
        %v1298 = vpop.permute.xlu0 %1297
        %1299 = vrot.lane.b32.xlu0 %v808, 48
        %v1300 = vpop.permute.xlu0 %1299
        %1301 = vrot.lane.b32.xlu0 %v809, 48
        %v1302 = vpop.permute.xlu0 %1301
        %1303 = vrot.lane.b32.xlu0 %v810, 48
        %v1304 = vpop.permute.xlu0 %1303
        %1305 = vrot.lane.b32.xlu0 %v811, 48
        %v1306 = vpop.permute.xlu0 %1305
        %1307 = vrot.lane.b32.xlu0 %v812, 48
        %v1308 = vpop.permute.xlu0 %1307
        %1309 = vrot.lane.b32.xlu0 %v813, 48
        %v1310 = vpop.permute.xlu0 %1309
        %1311 = vrot.lane.b32.xlu0 %v814, 48
        %v1312 = vpop.permute.xlu0 %1311
        %1313 = vrot.lane.b32.xlu0 %v815, 48
        %v1314 = vpop.permute.xlu0 %1313
        %1315 = vrot.lane.b32.xlu0 %v816, 48
        %v1316 = vpop.permute.xlu0 %1315
        %1317 = vrot.lane.b32.xlu0 %v817, 48
        %v1318 = vpop.permute.xlu0 %1317
        %1319 = vrot.lane.b32.xlu0 %v818, 48
        %v1320 = vpop.permute.xlu0 %1319
        %1321 = vrot.lane.b32.xlu0 %v819, 48
        %v1322 = vpop.permute.xlu0 %1321
        %1323 = vrot.lane.b32.xlu0 %v820, 48
        %v1324 = vpop.permute.xlu0 %1323
        %1325 = vrot.lane.b32.xlu0 %v821, 48
        %v1326 = vpop.permute.xlu0 %1325
        %1327 = vrot.lane.b32.xlu0 %v822, 48
        %v1328 = vpop.permute.xlu0 %1327
        %1329 = vrot.lane.b32.xlu0 %v823, 48
        %v1330 = vpop.permute.xlu0 %1329
        %1331 = vrot.lane.b32.xlu0 %v824, 48
        %v1332 = vpop.permute.xlu0 %1331
        %1333 = vrot.lane.b32.xlu0 %v825, 48
        %v1334 = vpop.permute.xlu0 %1333
        %1335 = vrot.lane.b32.xlu0 %v826, 48
        %v1336 = vpop.permute.xlu0 %1335
        %1337 = vrot.lane.b32.xlu0 %v827, 48
        %v1338 = vpop.permute.xlu0 %1337
        %1339 = vrot.lane.b32.xlu0 %v828, 48
        %v1340 = vpop.permute.xlu0 %1339
        %1341 = vrot.lane.b32.xlu0 %v829, 48
        %v1342 = vpop.permute.xlu0 %1341
        %1407 = vrot.lane.b32.xlu0 %v830, 64
        %v1408 = vpop.permute.xlu0 %1407
        %1409 = vrot.lane.b32.xlu0 %v831, 64
        %v1410 = vpop.permute.xlu0 %1409
        %1411 = vrot.lane.b32.xlu0 %v832, 64
        %v1412 = vpop.permute.xlu0 %1411
        %1413 = vrot.lane.b32.xlu0 %v833, 64
        %v1414 = vpop.permute.xlu0 %1413
        %1415 = vrot.lane.b32.xlu0 %v834, 64
        %v1416 = vpop.permute.xlu0 %1415
        %1417 = vrot.lane.b32.xlu0 %v835, 64
        %v1418 = vpop.permute.xlu0 %1417
        %1419 = vrot.lane.b32.xlu0 %v836, 64
        %v1420 = vpop.permute.xlu0 %1419
        %1421 = vrot.lane.b32.xlu0 %v837, 64
        %v1422 = vpop.permute.xlu0 %1421
        %1423 = vrot.lane.b32.xlu0 %v838, 64
        %v1424 = vpop.permute.xlu0 %1423
        %1425 = vrot.lane.b32.xlu0 %v839, 64
        %v1426 = vpop.permute.xlu0 %1425
        %1427 = vrot.lane.b32.xlu0 %v840, 64
        %v1428 = vpop.permute.xlu0 %1427
        %1429 = vrot.lane.b32.xlu0 %v841, 64
        %v1430 = vpop.permute.xlu0 %1429
        %1431 = vrot.lane.b32.xlu0 %v842, 64
        %v1432 = vpop.permute.xlu0 %1431
        %1433 = vrot.lane.b32.xlu0 %v843, 64
        %v1434 = vpop.permute.xlu0 %1433
        %1435 = vrot.lane.b32.xlu0 %v844, 64
        %v1436 = vpop.permute.xlu0 %1435
        %1437 = vrot.lane.b32.xlu0 %v845, 64
        %v1438 = vpop.permute.xlu0 %1437
        %1439 = vrot.lane.b32.xlu0 %v846, 64
        %v1440 = vpop.permute.xlu0 %1439
        %1441 = vrot.lane.b32.xlu0 %v847, 64
        %v1442 = vpop.permute.xlu0 %1441
        %1443 = vrot.lane.b32.xlu0 %v848, 64
        %v1444 = vpop.permute.xlu0 %1443
        %1445 = vrot.lane.b32.xlu0 %v849, 64
        %v1446 = vpop.permute.xlu0 %1445
        %1447 = vrot.lane.b32.xlu0 %v850, 64
        %v1448 = vpop.permute.xlu0 %1447
        %1449 = vrot.lane.b32.xlu0 %v851, 64
        %v1450 = vpop.permute.xlu0 %1449
        %1451 = vrot.lane.b32.xlu0 %v852, 64
        %v1452 = vpop.permute.xlu0 %1451
        %1453 = vrot.lane.b32.xlu0 %v853, 64
        %v1454 = vpop.permute.xlu0 %1453
        %1455 = vrot.lane.b32.xlu0 %v854, 64
        %v1456 = vpop.permute.xlu0 %1455
        %1457 = vrot.lane.b32.xlu0 %v855, 64
        %v1458 = vpop.permute.xlu0 %1457
        %1459 = vrot.lane.b32.xlu0 %v856, 64
        %v1460 = vpop.permute.xlu0 %1459
        %1461 = vrot.lane.b32.xlu0 %v857, 64
        %v1462 = vpop.permute.xlu0 %1461
        %1463 = vrot.lane.b32.xlu0 %v858, 64
        %v1464 = vpop.permute.xlu0 %1463
        %1465 = vrot.lane.b32.xlu0 %v859, 64
        %v1466 = vpop.permute.xlu0 %1465
        %1467 = vrot.lane.b32.xlu0 %v860, 64
        %v1468 = vpop.permute.xlu0 %1467
        %1469 = vrot.lane.b32.xlu0 %v861, 64
        %v1470 = vpop.permute.xlu0 %1469
        %1535 = vrot.lane.b32.xlu0 %v862, 80
        %v1536 = vpop.permute.xlu0 %1535
        %1537 = vrot.lane.b32.xlu0 %v863, 80
        %v1538 = vpop.permute.xlu0 %1537
        %1539 = vrot.lane.b32.xlu0 %v864, 80
        %v1540 = vpop.permute.xlu0 %1539
        %1541 = vrot.lane.b32.xlu0 %v865, 80
        %v1542 = vpop.permute.xlu0 %1541
        %1543 = vrot.lane.b32.xlu0 %v866, 80
        %v1544 = vpop.permute.xlu0 %1543
        %1545 = vrot.lane.b32.xlu0 %v867, 80
        %v1546 = vpop.permute.xlu0 %1545
        %1547 = vrot.lane.b32.xlu0 %v868, 80
        %v1548 = vpop.permute.xlu0 %1547
        %1549 = vrot.lane.b32.xlu0 %v869, 80
        %v1550 = vpop.permute.xlu0 %1549
        %1551 = vrot.lane.b32.xlu0 %v870, 80
        %v1552 = vpop.permute.xlu0 %1551
        %1553 = vrot.lane.b32.xlu0 %v871, 80
        %v1554 = vpop.permute.xlu0 %1553
        %1555 = vrot.lane.b32.xlu0 %v872, 80
        %v1556 = vpop.permute.xlu0 %1555
        %1557 = vrot.lane.b32.xlu0 %v873, 80
        %v1558 = vpop.permute.xlu0 %1557
        %1559 = vrot.lane.b32.xlu0 %v874, 80
        %v1560 = vpop.permute.xlu0 %1559
        %1561 = vrot.lane.b32.xlu0 %v875, 80
        %v1562 = vpop.permute.xlu0 %1561
        %1563 = vrot.lane.b32.xlu0 %v876, 80
        %v1564 = vpop.permute.xlu0 %1563
        %1565 = vrot.lane.b32.xlu0 %v877, 80
        %v1566 = vpop.permute.xlu0 %1565
        %1567 = vrot.lane.b32.xlu0 %v878, 80
        %v1568 = vpop.permute.xlu0 %1567
        %1569 = vrot.lane.b32.xlu0 %v879, 80
        %v1570 = vpop.permute.xlu0 %1569
        %1571 = vrot.lane.b32.xlu0 %v880, 80
        %v1572 = vpop.permute.xlu0 %1571
        %1573 = vrot.lane.b32.xlu0 %v881, 80
        %v1574 = vpop.permute.xlu0 %1573
        %1575 = vrot.lane.b32.xlu0 %v882, 80
        %v1576 = vpop.permute.xlu0 %1575
        %1577 = vrot.lane.b32.xlu0 %v883, 80
        %v1578 = vpop.permute.xlu0 %1577
        %1579 = vrot.lane.b32.xlu0 %v884, 80
        %v1580 = vpop.permute.xlu0 %1579
        %1581 = vrot.lane.b32.xlu0 %v885, 80
        %v1582 = vpop.permute.xlu0 %1581
        %1583 = vrot.lane.b32.xlu0 %v886, 80
        %v1584 = vpop.permute.xlu0 %1583
        %1585 = vrot.lane.b32.xlu0 %v887, 80
        %v1586 = vpop.permute.xlu0 %1585
        %1587 = vrot.lane.b32.xlu0 %v888, 80
        %v1588 = vpop.permute.xlu0 %1587
        %1589 = vrot.lane.b32.xlu0 %v889, 80
        %v1590 = vpop.permute.xlu0 %1589
        %1591 = vrot.lane.b32.xlu0 %v890, 80
        %v1592 = vpop.permute.xlu0 %1591
        %1593 = vrot.lane.b32.xlu0 %v891, 80
        %v1594 = vpop.permute.xlu0 %1593
        %1595 = vrot.lane.b32.xlu0 %v892, 80
        %v1596 = vpop.permute.xlu0 %1595
        %1597 = vrot.lane.b32.xlu0 %v893, 80
        %v1598 = vpop.permute.xlu0 %1597
        %1663 = vrot.lane.b32.xlu0 %v895, 96
        %v1664 = vpop.permute.xlu0 %1663
        %1665 = vrot.lane.b32.xlu0 %v896, 96
        %v1666 = vpop.permute.xlu0 %1665
        %1667 = vrot.lane.b32.xlu0 %v897, 96
        %v1668 = vpop.permute.xlu0 %1667
        %1669 = vrot.lane.b32.xlu0 %v898, 96
        %v1670 = vpop.permute.xlu0 %1669
        %1671 = vrot.lane.b32.xlu0 %v899, 96
        %v1672 = vpop.permute.xlu0 %1671
        %1673 = vrot.lane.b32.xlu0 %v900, 96
        %v1674 = vpop.permute.xlu0 %1673
        %1675 = vrot.lane.b32.xlu0 %v901, 96
        %v1676 = vpop.permute.xlu0 %1675
        %1677 = vrot.lane.b32.xlu0 %v902, 96
        %v1678 = vpop.permute.xlu0 %1677
        %1679 = vrot.lane.b32.xlu0 %v903, 96
        %v1680 = vpop.permute.xlu0 %1679
        %1681 = vrot.lane.b32.xlu0 %v904, 96
        %v1682 = vpop.permute.xlu0 %1681
        %1683 = vrot.lane.b32.xlu0 %v905, 96
        %v1684 = vpop.permute.xlu0 %1683
        %1685 = vrot.lane.b32.xlu0 %v906, 96
        %v1686 = vpop.permute.xlu0 %1685
        %1687 = vrot.lane.b32.xlu0 %v907, 96
        %v1688 = vpop.permute.xlu0 %1687
        %1689 = vrot.lane.b32.xlu0 %v908, 96
        %v1690 = vpop.permute.xlu0 %1689
        %1691 = vrot.lane.b32.xlu0 %v909, 96
        %v1692 = vpop.permute.xlu0 %1691
        %1693 = vrot.lane.b32.xlu0 %v910, 96
        %v1694 = vpop.permute.xlu0 %1693
        %1695 = vrot.lane.b32.xlu0 %v911, 96
        %v1696 = vpop.permute.xlu0 %1695
        %1697 = vrot.lane.b32.xlu0 %v912, 96
        %v1698 = vpop.permute.xlu0 %1697
        %1699 = vrot.lane.b32.xlu0 %v913, 96
        %v1700 = vpop.permute.xlu0 %1699
        %1701 = vrot.lane.b32.xlu0 %v914, 96
        %v1702 = vpop.permute.xlu0 %1701
        %1703 = vrot.lane.b32.xlu0 %v915, 96
        %v1704 = vpop.permute.xlu0 %1703
        %1705 = vrot.lane.b32.xlu0 %v916, 96
        %v1706 = vpop.permute.xlu0 %1705
        %1707 = vrot.lane.b32.xlu0 %v917, 96
        %v1708 = vpop.permute.xlu0 %1707
        %1709 = vrot.lane.b32.xlu0 %v918, 96
        %v1710 = vpop.permute.xlu0 %1709
        %1711 = vrot.lane.b32.xlu0 %v919, 96
        %v1712 = vpop.permute.xlu0 %1711
        %1713 = vrot.lane.b32.xlu0 %v920, 96
        %v1714 = vpop.permute.xlu0 %1713
        %1715 = vrot.lane.b32.xlu0 %v921, 96
        %v1716 = vpop.permute.xlu0 %1715
        %1717 = vrot.lane.b32.xlu0 %v922, 96
        %v1718 = vpop.permute.xlu0 %1717
        %1719 = vrot.lane.b32.xlu0 %v923, 96
        %v1720 = vpop.permute.xlu0 %1719
        %1721 = vrot.lane.b32.xlu0 %v924, 96
        %v1722 = vpop.permute.xlu0 %1721
        %1723 = vrot.lane.b32.xlu0 %v925, 96
        %v1724 = vpop.permute.xlu0 %1723
        %1725 = vrot.lane.b32.xlu0 %v926, 96
        %v1726 = vpop.permute.xlu0 %1725
        %1791 = vrot.lane.b32.xlu0 %v927, 112
        %v1792 = vpop.permute.xlu0 %1791
        %1793 = vrot.lane.b32.xlu0 %v928, 112
        %v1794 = vpop.permute.xlu0 %1793
        %1795 = vrot.lane.b32.xlu0 %v929, 112
        %v1796 = vpop.permute.xlu0 %1795
        %1797 = vrot.lane.b32.xlu0 %v930, 112
        %v1798 = vpop.permute.xlu0 %1797
        %1799 = vrot.lane.b32.xlu0 %v931, 112
        %v1800 = vpop.permute.xlu0 %1799
        %1801 = vrot.lane.b32.xlu0 %v932, 112
        %v1802 = vpop.permute.xlu0 %1801
        %1803 = vrot.lane.b32.xlu0 %v933, 112
        %v1804 = vpop.permute.xlu0 %1803
        %1805 = vrot.lane.b32.xlu0 %v934, 112
        %v1806 = vpop.permute.xlu0 %1805
        %1807 = vrot.lane.b32.xlu0 %v935, 112
        %v1808 = vpop.permute.xlu0 %1807
        %1809 = vrot.lane.b32.xlu0 %v936, 112
        %v1810 = vpop.permute.xlu0 %1809
        %1811 = vrot.lane.b32.xlu0 %v937, 112
        %v1812 = vpop.permute.xlu0 %1811
        %1813 = vrot.lane.b32.xlu0 %v938, 112
        %v1814 = vpop.permute.xlu0 %1813
        %1815 = vrot.lane.b32.xlu0 %v939, 112
        %v1816 = vpop.permute.xlu0 %1815
        %1817 = vrot.lane.b32.xlu0 %v940, 112
        %v1818 = vpop.permute.xlu0 %1817
        %1819 = vrot.lane.b32.xlu0 %v941, 112
        %v1820 = vpop.permute.xlu0 %1819
        %1821 = vrot.lane.b32.xlu0 %v942, 112
        %v1822 = vpop.permute.xlu0 %1821
        %1823 = vrot.lane.b32.xlu0 %v943, 112
        %v1824 = vpop.permute.xlu0 %1823
        %1825 = vrot.lane.b32.xlu0 %v944, 112
        %v1826 = vpop.permute.xlu0 %1825
        %1827 = vrot.lane.b32.xlu0 %v945, 112
        %v1828 = vpop.permute.xlu0 %1827
        %1829 = vrot.lane.b32.xlu0 %v946, 112
        %v1830 = vpop.permute.xlu0 %1829
        %1831 = vrot.lane.b32.xlu0 %v947, 112
        %v1832 = vpop.permute.xlu0 %1831
        %1833 = vrot.lane.b32.xlu0 %v948, 112
        %v1834 = vpop.permute.xlu0 %1833
        %1835 = vrot.lane.b32.xlu0 %v949, 112
        %v1836 = vpop.permute.xlu0 %1835
        %1837 = vrot.lane.b32.xlu0 %v950, 112
        %v1838 = vpop.permute.xlu0 %1837
        %1839 = vrot.lane.b32.xlu0 %v951, 112
        %v1840 = vpop.permute.xlu0 %1839
        %1841 = vrot.lane.b32.xlu0 %v952, 112
        %v1842 = vpop.permute.xlu0 %1841
        %1843 = vrot.lane.b32.xlu0 %v953, 112
        %v1844 = vpop.permute.xlu0 %1843
        %1845 = vrot.lane.b32.xlu0 %v954, 112
        %v1846 = vpop.permute.xlu0 %1845
        %1847 = vrot.lane.b32.xlu0 %v955, 112
        %v1848 = vpop.permute.xlu0 %1847
        %1849 = vrot.lane.b32.xlu0 %v956, 112
        %v1850 = vpop.permute.xlu0 %1849
        %1851 = vrot.lane.b32.xlu0 %v957, 112
        %v1852 = vpop.permute.xlu0 %1851
        %1853 = vrot.lane.b32.xlu0 %v958, 112
        %v1854 = vpop.permute.xlu0 %1853
        %v1887 = vsel %vm627, %v702, %v1024
        %v1888 = vsel %vm627, %v703, %v1026
        %v1889 = vsel %vm627, %v704, %v1028
        %v1890 = vsel %vm627, %v705, %v1030
        %v1891 = vsel %vm627, %v706, %v1032
        %v1892 = vsel %vm627, %v707, %v1034
        %v1893 = vsel %vm627, %v708, %v1036
        %v1894 = vsel %vm627, %v709, %v1038
        %v1895 = vsel %vm627, %v710, %v1040
        %v1896 = vsel %vm627, %v711, %v1042
        %v1897 = vsel %vm627, %v712, %v1044
        %v1898 = vsel %vm627, %v713, %v1046
        %v1899 = vsel %vm627, %v714, %v1048
        %v1900 = vsel %vm627, %v715, %v1050
        %v1901 = vsel %vm627, %v716, %v1052
        %v1902 = vsel %vm627, %v717, %v1054
        %v1903 = vsel %vm627, %v718, %v1056
        %v1904 = vsel %vm627, %v719, %v1058
        %v1905 = vsel %vm627, %v720, %v1060
        %v1906 = vsel %vm627, %v721, %v1062
        %v1907 = vsel %vm627, %v722, %v1064
        %v1908 = vsel %vm627, %v723, %v1066
        %v1909 = vsel %vm627, %v724, %v1068
        %v1910 = vsel %vm627, %v725, %v1070
        %v1911 = vsel %vm627, %v726, %v1072
        %v1912 = vsel %vm627, %v727, %v1074
        %v1913 = vsel %vm627, %v728, %v1076
        %v1914 = vsel %vm627, %v729, %v1078
        %v1915 = vsel %vm627, %v730, %v1080
        %v1916 = vsel %vm627, %v731, %v1082
        %v1917 = vsel %vm627, %v732, %v1084
        %v1918 = vsel %vm627, %v733, %v1086
        %vm1919 = vcmask 261120
        %v1920 = vsel %vm1919, %v1887, %v1152
        %v1921 = vsel %vm1919, %v1888, %v1154
        %v1922 = vsel %vm1919, %v1889, %v1156
        %v1923 = vsel %vm1919, %v1890, %v1158
        %v1924 = vsel %vm1919, %v1891, %v1160
        %v1925 = vsel %vm1919, %v1892, %v1162
        %v1926 = vsel %vm1919, %v1893, %v1164
        %v1927 = vsel %vm1919, %v1894, %v1166
        %v1928 = vsel %vm1919, %v1895, %v1168
        %v1929 = vsel %vm1919, %v1896, %v1170
        %v1930 = vsel %vm1919, %v1897, %v1172
        %v1931 = vsel %vm1919, %v1898, %v1174
        %v1932 = vsel %vm1919, %v1899, %v1176
        %v1933 = vsel %vm1919, %v1900, %v1178
        %v1934 = vsel %vm1919, %v1901, %v1180
        %v1935 = vsel %vm1919, %v1902, %v1182
        %v1936 = vsel %vm1919, %v1903, %v1184
        %v1937 = vsel %vm1919, %v1904, %v1186
        %v1938 = vsel %vm1919, %v1905, %v1188
        %v1939 = vsel %vm1919, %v1906, %v1190
        %v1940 = vsel %vm1919, %v1907, %v1192
        %v1941 = vsel %vm1919, %v1908, %v1194
        %v1942 = vsel %vm1919, %v1909, %v1196
        %v1943 = vsel %vm1919, %v1910, %v1198
        %v1944 = vsel %vm1919, %v1911, %v1200
        %v1945 = vsel %vm1919, %v1912, %v1202
        %v1946 = vsel %vm1919, %v1913, %v1204
        %v1947 = vsel %vm1919, %v1914, %v1206
        %v1948 = vsel %vm1919, %v1915, %v1208
        %v1949 = vsel %vm1919, %v1916, %v1210
        %v1950 = vsel %vm1919, %v1917, %v1212
        %v1951 = vsel %vm1919, %v1918, %v1214
        %vm1952 = vcmask 392192
        %v1953 = vsel %vm1952, %v1920, %v1280
        %v1954 = vsel %vm1952, %v1921, %v1282
        %v1955 = vsel %vm1952, %v1922, %v1284
        %v1956 = vsel %vm1952, %v1923, %v1286
        %v1957 = vsel %vm1952, %v1924, %v1288
        %v1958 = vsel %vm1952, %v1925, %v1290
        %v1959 = vsel %vm1952, %v1926, %v1292
        %v1960 = vsel %vm1952, %v1927, %v1294
        %v1961 = vsel %vm1952, %v1928, %v1296
        %v1962 = vsel %vm1952, %v1929, %v1298
        %v1963 = vsel %vm1952, %v1930, %v1300
        %v1964 = vsel %vm1952, %v1931, %v1302
        %v1965 = vsel %vm1952, %v1932, %v1304
        %v1966 = vsel %vm1952, %v1933, %v1306
        %v1967 = vsel %vm1952, %v1934, %v1308
        %v1968 = vsel %vm1952, %v1935, %v1310
        %v1969 = vsel %vm1952, %v1936, %v1312
        %v1970 = vsel %vm1952, %v1937, %v1314
        %v1971 = vsel %vm1952, %v1938, %v1316
        %v1972 = vsel %vm1952, %v1939, %v1318
        %v1973 = vsel %vm1952, %v1940, %v1320
        %v1974 = vsel %vm1952, %v1941, %v1322
        %v1975 = vsel %vm1952, %v1942, %v1324
        %v1976 = vsel %vm1952, %v1943, %v1326
        %v1977 = vsel %vm1952, %v1944, %v1328
        %v1978 = vsel %vm1952, %v1945, %v1330
        %v1979 = vsel %vm1952, %v1946, %v1332
        %v1980 = vsel %vm1952, %v1947, %v1334
        %v1981 = vsel %vm1952, %v1948, %v1336
        %v1982 = vsel %vm1952, %v1949, %v1338
        %v1983 = vsel %vm1952, %v1950, %v1340
        %v1984 = vsel %vm1952, %v1951, %v1342
        %v1985 = vsel %vm385, %v1953, %v1408
        %v1986 = vsel %vm385, %v1954, %v1410
        %v1987 = vsel %vm385, %v1955, %v1412
        %v1988 = vsel %vm385, %v1956, %v1414
        %v1989 = vsel %vm385, %v1957, %v1416
        %v1990 = vsel %vm385, %v1958, %v1418
        %v1991 = vsel %vm385, %v1959, %v1420
        %v1992 = vsel %vm385, %v1960, %v1422
        %v1993 = vsel %vm385, %v1961, %v1424
        %v1994 = vsel %vm385, %v1962, %v1426
        %v1995 = vsel %vm385, %v1963, %v1428
        %v1996 = vsel %vm385, %v1964, %v1430
        %v1997 = vsel %vm385, %v1965, %v1432
        %v1998 = vsel %vm385, %v1966, %v1434
        %v1999 = vsel %vm385, %v1967, %v1436
        %v2000 = vsel %vm385, %v1968, %v1438
        %v2001 = vsel %vm385, %v1969, %v1440
        %v2002 = vsel %vm385, %v1970, %v1442
        %v2003 = vsel %vm385, %v1971, %v1444
        %v2004 = vsel %vm385, %v1972, %v1446
        %v2005 = vsel %vm385, %v1973, %v1448
        %v2006 = vsel %vm385, %v1974, %v1450
        %v2007 = vsel %vm385, %v1975, %v1452
        %v2008 = vsel %vm385, %v1976, %v1454
        %v2009 = vsel %vm385, %v1977, %v1456
        %v2010 = vsel %vm385, %v1978, %v1458
        %v2011 = vsel %vm385, %v1979, %v1460
        %v2012 = vsel %vm385, %v1980, %v1462
        %v2013 = vsel %vm385, %v1981, %v1464
        %v2014 = vsel %vm385, %v1982, %v1466
        %v2015 = vsel %vm385, %v1983, %v1468
        %v2016 = vsel %vm385, %v1984, %v1470
        %vm2017 = vcmask 654336
        %v2018 = vsel %vm2017, %v1985, %v1536
        %v2019 = vsel %vm2017, %v1986, %v1538
        %v2020 = vsel %vm2017, %v1987, %v1540
        %v2021 = vsel %vm2017, %v1988, %v1542
        %v2022 = vsel %vm2017, %v1989, %v1544
        %v2023 = vsel %vm2017, %v1990, %v1546
        %v2024 = vsel %vm2017, %v1991, %v1548
        %v2025 = vsel %vm2017, %v1992, %v1550
        %v2026 = vsel %vm2017, %v1993, %v1552
        %v2027 = vsel %vm2017, %v1994, %v1554
        %v2028 = vsel %vm2017, %v1995, %v1556
        %v2029 = vsel %vm2017, %v1996, %v1558
        %v2030 = vsel %vm2017, %v1997, %v1560
        %v2031 = vsel %vm2017, %v1998, %v1562
        %v2032 = vsel %vm2017, %v1999, %v1564
        %v2033 = vsel %vm2017, %v2000, %v1566
        %v2034 = vsel %vm2017, %v2001, %v1568
        %v2035 = vsel %vm2017, %v2002, %v1570
        %v2036 = vsel %vm2017, %v2003, %v1572
        %v2037 = vsel %vm2017, %v2004, %v1574
        %v2038 = vsel %vm2017, %v2005, %v1576
        %v2039 = vsel %vm2017, %v2006, %v1578
        %v2040 = vsel %vm2017, %v2007, %v1580
        %v2041 = vsel %vm2017, %v2008, %v1582
        %v2042 = vsel %vm2017, %v2009, %v1584
        %v2043 = vsel %vm2017, %v2010, %v1586
        %v2044 = vsel %vm2017, %v2011, %v1588
        %v2045 = vsel %vm2017, %v2012, %v1590
        %v2046 = vsel %vm2017, %v2013, %v1592
        %v2047 = vsel %vm2017, %v2014, %v1594
        %v2048 = vsel %vm2017, %v2015, %v1596
        %v2049 = vsel %vm2017, %v2016, %v1598
        %vm2050 = vcmask 785408
        %v2051 = vsel %vm2050, %v2018, %v1664
        %v2052 = vsel %vm2050, %v2019, %v1666
        %v2053 = vsel %vm2050, %v2020, %v1668
        %v2054 = vsel %vm2050, %v2021, %v1670
        %v2055 = vsel %vm2050, %v2022, %v1672
        %v2056 = vsel %vm2050, %v2023, %v1674
        %v2057 = vsel %vm2050, %v2024, %v1676
        %v2058 = vsel %vm2050, %v2025, %v1678
        %v2059 = vsel %vm2050, %v2026, %v1680
        %v2060 = vsel %vm2050, %v2027, %v1682
        %v2061 = vsel %vm2050, %v2028, %v1684
        %v2062 = vsel %vm2050, %v2029, %v1686
        %v2063 = vsel %vm2050, %v2030, %v1688
        %v2064 = vsel %vm2050, %v2031, %v1690
        %v2065 = vsel %vm2050, %v2032, %v1692
        %v2066 = vsel %vm2050, %v2033, %v1694
        %v2067 = vsel %vm2050, %v2034, %v1696
        %v2068 = vsel %vm2050, %v2035, %v1698
        %v2069 = vsel %vm2050, %v2036, %v1700
        %v2070 = vsel %vm2050, %v2037, %v1702
        %v2071 = vsel %vm2050, %v2038, %v1704
        %v2072 = vsel %vm2050, %v2039, %v1706
        %v2073 = vsel %vm2050, %v2040, %v1708
        %v2074 = vsel %vm2050, %v2041, %v1710
        %v2075 = vsel %vm2050, %v2042, %v1712
        %v2076 = vsel %vm2050, %v2043, %v1714
        %v2077 = vsel %vm2050, %v2044, %v1716
        %v2078 = vsel %vm2050, %v2045, %v1718
        %v2079 = vsel %vm2050, %v2046, %v1720
        %v2080 = vsel %vm2050, %v2047, %v1722
        %v2081 = vsel %vm2050, %v2048, %v1724
        %v2082 = vsel %vm2050, %v2049, %v1726
        %vm2083 = vcmask 916480
        %v2084 = vsel %vm2083, %v2051, %v1792
        %v2085 = vsel %vm2083, %v2052, %v1794
        %v2086 = vsel %vm2083, %v2053, %v1796
        %v2087 = vsel %vm2083, %v2054, %v1798
        %v2088 = vsel %vm2083, %v2055, %v1800
        %v2089 = vsel %vm2083, %v2056, %v1802
        %v2090 = vsel %vm2083, %v2057, %v1804
        %v2091 = vsel %vm2083, %v2058, %v1806
        %v2092 = vsel %vm2083, %v2059, %v1808
        %v2093 = vsel %vm2083, %v2060, %v1810
        %v2094 = vsel %vm2083, %v2061, %v1812
        %v2095 = vsel %vm2083, %v2062, %v1814
        %v2096 = vsel %vm2083, %v2063, %v1816
        %v2097 = vsel %vm2083, %v2064, %v1818
        %v2098 = vsel %vm2083, %v2065, %v1820
        %v2099 = vsel %vm2083, %v2066, %v1822
        %v2100 = vsel %vm2083, %v2067, %v1824
        %v2101 = vsel %vm2083, %v2068, %v1826
        %v2102 = vsel %vm2083, %v2069, %v1828
        %v2103 = vsel %vm2083, %v2070, %v1830
        %v2104 = vsel %vm2083, %v2071, %v1832
        %v2105 = vsel %vm2083, %v2072, %v1834
        %v2106 = vsel %vm2083, %v2073, %v1836
        %v2107 = vsel %vm2083, %v2074, %v1838
        %v2108 = vsel %vm2083, %v2075, %v1840
        %v2109 = vsel %vm2083, %v2076, %v1842
        %v2110 = vsel %vm2083, %v2077, %v1844
        %v2111 = vsel %vm2083, %v2078, %v1846
        %v2112 = vsel %vm2083, %v2079, %v1848
        %v2113 = vsel %vm2083, %v2080, %v1850
        %v2114 = vsel %vm2083, %v2081, %v1852
        %v2115 = vsel %vm2083, %v2082, %v1854
        %v2116 = vpack.c.bf16 %v2085, %v2084
        %v2117 = vpack.c.bf16 %v960, %v959
        %v2118 = vpack.c.bf16 %v2087, %v2086
        %v2119 = vpack.c.bf16 %v962, %v961
        %v2120 = vpack.c.bf16 %v2089, %v2088
        %v2121 = vpack.c.bf16 %v964, %v963
        %v2122 = vpack.c.bf16 %v2091, %v2090
        %v2123 = vpack.c.bf16 %v966, %v965
        %v2124 = vpack.c.bf16 %v2093, %v2092
        %v2125 = vpack.c.bf16 %v968, %v967
        %v2126 = vpack.c.bf16 %v2095, %v2094
        %v2127 = vpack.c.bf16 %v970, %v969
        %v2128 = vpack.c.bf16 %v2097, %v2096
        %v2129 = vpack.c.bf16 %v972, %v971
        %v2130 = vpack.c.bf16 %v2099, %v2098
        %v2131 = vpack.c.bf16 %v974, %v973
        %v2132 = vpack.c.bf16 %v2101, %v2100
        %v2133 = vpack.c.bf16 %v976, %v975
        %v2134 = vpack.c.bf16 %v2103, %v2102
        %v2135 = vpack.c.bf16 %v978, %v977
        %v2136 = vpack.c.bf16 %v2105, %v2104
        %v2137 = vpack.c.bf16 %v980, %v979
        %v2138 = vpack.c.bf16 %v2107, %v2106
        %v2139 = vpack.c.bf16 %v982, %v981
        %v2140 = vpack.c.bf16 %v2109, %v2108
        %v2141 = vpack.c.bf16 %v984, %v983
        %v2142 = vpack.c.bf16 %v2111, %v2110
        %v2143 = vpack.c.bf16 %v986, %v985
        %v2144 = vpack.c.bf16 %v2113, %v2112
        %v2145 = vpack.c.bf16 %v988, %v987
        %v2146 = vpack.c.bf16 %v2115, %v2114
        %v2147 = vpack.c.bf16 %v990, %v989
        %v2148 = vld [vmem:[%s3] sm:$0xf]
        %v2149 = vld [vmem:[%s3 + $0x4] sm:$0xf]
        %v2150 = vld [vmem:[%s3 + $0x8] sm:$0xf]
        %v2151 = vld [vmem:[%s3 + $0xc] sm:$0xf]
        %v2152 = vld [vmem:[%s3 + $0x10] sm:$0xf]
        %v2153 = vld [vmem:[%s3 + $0x14] sm:$0xf]
        %v2154 = vld [vmem:[%s3 + $0x18] sm:$0xf]
        %v2155 = vld [vmem:[%s3 + $0x1c] sm:$0xf]
        %v2156 = vld [vmem:[%s3 + $0x20] sm:$0xf]
        %v2157 = vld [vmem:[%s3 + $0x24] sm:$0xf]
        %v2158 = vld [vmem:[%s3 + $0x28] sm:$0xf]
        %v2159 = vld [vmem:[%s3 + $0x2c] sm:$0xf]
        %v2160 = vld [vmem:[%s3 + $0x30] sm:$0xf]
        %v2161 = vld [vmem:[%s3 + $0x34] sm:$0xf]
        %v2162 = vld [vmem:[%s3 + $0x38] sm:$0xf]
        %v2163 = vld [vmem:[%s3 + $0x3c] sm:$0xf]
        %v2164 = vld [vmem:[%s3 + $0x40] sm:$0xf]
        %v2165 = vld [vmem:[%s3 + $0x44] sm:$0xf]
        %v2166 = vld [vmem:[%s4] sm:$0x1]
        %v2168 = vlaneseq
        %v2169 = vshrl.u32 %v2168, 7
        %v2170 = vsub.s32 0, %v2169
        %v2171 = vrot.slane %v2166, %v2170
        %v2191 = vunpack.c.l.b16 %v2148
        %v2192 = vunpack.c.l.b16 %v2149
        %v2193 = vunpack.c.l.b16 %v2150
        %v2194 = vunpack.c.l.b16 %v2151
        %v2195 = vunpack.c.l.b16 %v2152
        %v2196 = vunpack.c.l.b16 %v2153
        %v2197 = vunpack.c.l.b16 %v2154
        %v2198 = vunpack.c.l.b16 %v2155
        %v2199 = vunpack.c.l.b16 %v2156
        %v2200 = vunpack.c.l.b16 %v2157
        %v2201 = vunpack.c.l.b16 %v2158
        %v2202 = vunpack.c.l.b16 %v2159
        %v2203 = vunpack.c.l.b16 %v2160
        %v2204 = vunpack.c.l.b16 %v2161
        %v2205 = vunpack.c.l.b16 %v2162
        %v2206 = vunpack.c.l.b16 %v2163
        %v2207 = vunpack.c.l.b16 %v2164
        %v2208 = vunpack.c.l.b16 %v2165
        %v2209 = vpack.c.b16 %v2192, %v2191
        %v2210 = vpack.c.b16 %v2194, %v2193
        %v2211 = vpack.c.b16 %v2196, %v2195
        %v2212 = vpack.c.b16 %v2198, %v2197
        %v2213 = vpack.c.b16 %v2200, %v2199
        %v2214 = vpack.c.b16 %v2202, %v2201
        %v2215 = vpack.c.b16 %v2204, %v2203
        %v2216 = vpack.c.b16 %v2206, %v2205
        %v2217 = vpack.c.b16 %v2208, %v2207
        %v2228 = vsel %vm627, %v2117, 0
        %v2231 = vsel %vm627, %v2119, 0
        %v2234 = vsel %vm627, %v2121, 0
        %v2237 = vsel %vm627, %v2123, 0
        %v2240 = vsel %vm627, %v2125, 0
        %v2243 = vsel %vm627, %v2127, 0
        %v2246 = vsel %vm627, %v2129, 0
        %v2249 = vsel %vm627, %v2131, 0
        %v2252 = vsel %vm627, %v2133, 0
        %v2255 = vsel %vm627, %v2135, 0
        %v2258 = vsel %vm627, %v2137, 0
        %v2261 = vsel %vm627, %v2139, 0
        %v2264 = vsel %vm627, %v2141, 0
        %v2267 = vsel %vm627, %v2143, 0
        %v2270 = vsel %vm627, %v2145, 0
        %v2273 = vsel %vm627, %v2147, 0
        %2275 = vmatprep.subr.bf16.mxu0 0
        %2276 = vmatpush1.bf16.msra.mxu0 %v2216
        %2277 = vmatprep.subr.bf16.mxu0 0
        %2278 = vmatpush1.bf16.msra.mxu0 %v2215
        %2279 = vmatprep.subr.bf16.mxu0 0
        %2280 = vmatpush1.bf16.msra.mxu0 %v2214
        %2281 = vmatprep.subr.bf16.mxu0 0
        %2282 = vmatpush1.bf16.msra.mxu0 %v2213
        %2283 = vmatprep.subr.bf16.mxu0 0
        %2284 = vmatpush1.bf16.msra.mxu0 %v2212
        %2285 = vmatprep.subr.bf16.mxu0 0
        %2286 = vmatpush1.bf16.msra.mxu0 %v2211
        %2287 = vmatprep.subr.bf16.mxu0 0
        %2288 = vmatpush1.bf16.msra.mxu0 %v2210
        %2289 = vmatprep.subr.bf16.mxu0 0
        %2290 = vmatpush1.bf16.msra.mxu0 %v2209
        %2291 = vmatprep.subr.bf16.mxu0 0
        %2292 = vmatpush2.bf16.msra.mxu0 0
        %2293 = vmatprep.subr.bf16.mxu0 0
        %2294 = vmatpush2.bf16.msra.mxu0 0
        %2295 = vmatprep.subr.bf16.mxu0 0
        %2296 = vmatpush2.bf16.msra.mxu0 0
        %2297 = vmatprep.subr.bf16.mxu0 0
        %2298 = vmatpush2.bf16.msra.mxu0 0
        %2299 = vmatprep.subr.bf16.mxu0 0
        %2300 = vmatpush2.bf16.msra.mxu0 0
        %2301 = vmatprep.subr.bf16.mxu0 0
        %2302 = vmatpush2.bf16.msra.mxu0 0
        %2303 = vmatprep.subr.bf16.mxu0 0
        %2304 = vmatpush2.bf16.msra.mxu0 0
        %2305 = vmatprep.subr.bf16.mxu0 0
        %2306 = vmatpush2.bf16.msra.mxu0 %v2217
        %2307 = vmatprep.mubr.bf16.mxu0 %v2228
        %2308 = vmatmul.mubr.bf16.gmra.mxu0 %v2116
        %v2309 = vpop.f32.mrf.mxu0
        %v2310 = vadd.f32 %v2171, %v2309
        %v2311 = vpop.f32.mrf.mxu0
        %v2312 = vpop.f32.mrf.mxu0
        %v2313 = vadd.f32 %v2171, %v2312
        %v2314 = vpop.f32.mrf.mxu0
        %2315 = vmatprep.mubr.bf16.mxu0 %v2231
        %2316 = vmatmul.mubr.bf16.gmra.mxu0 %v2118
        %v2317 = vpop.f32.mrf.mxu0
        %v2318 = vadd.f32 %v2171, %v2317
        %v2319 = vpop.f32.mrf.mxu0
        %v2320 = vpop.f32.mrf.mxu0
        %v2321 = vadd.f32 %v2171, %v2320
        %v2322 = vpop.f32.mrf.mxu0
        %2323 = vmatprep.mubr.bf16.mxu0 %v2234
        %2324 = vmatmul.mubr.bf16.gmra.mxu0 %v2120
        %v2325 = vpop.f32.mrf.mxu0
        %v2326 = vadd.f32 %v2171, %v2325
        %v2327 = vpop.f32.mrf.mxu0
        %v2328 = vpop.f32.mrf.mxu0
        %v2329 = vadd.f32 %v2171, %v2328
        %v2330 = vpop.f32.mrf.mxu0
        %2331 = vmatprep.mubr.bf16.mxu0 %v2237
        %2332 = vmatmul.mubr.bf16.gmra.mxu0 %v2122
        %v2333 = vpop.f32.mrf.mxu0
        %v2334 = vadd.f32 %v2171, %v2333
        %v2335 = vpop.f32.mrf.mxu0
        %v2336 = vpop.f32.mrf.mxu0
        %v2337 = vadd.f32 %v2171, %v2336
        %v2338 = vpop.f32.mrf.mxu0
        %2339 = vmatprep.mubr.bf16.mxu0 %v2240
        %2340 = vmatmul.mubr.bf16.gmra.mxu0 %v2124
        %v2341 = vpop.f32.mrf.mxu0
        %v2342 = vadd.f32 %v2171, %v2341
        %v2343 = vpop.f32.mrf.mxu0
        %v2344 = vpop.f32.mrf.mxu0
        %v2345 = vadd.f32 %v2171, %v2344
        %v2346 = vpop.f32.mrf.mxu0
        %2347 = vmatprep.mubr.bf16.mxu0 %v2243
        %2348 = vmatmul.mubr.bf16.gmra.mxu0 %v2126
        %v2349 = vpop.f32.mrf.mxu0
        %v2350 = vadd.f32 %v2171, %v2349
        %v2351 = vpop.f32.mrf.mxu0
        %v2352 = vpop.f32.mrf.mxu0
        %v2353 = vadd.f32 %v2171, %v2352
        %v2354 = vpop.f32.mrf.mxu0
        %2355 = vmatprep.mubr.bf16.mxu0 %v2246
        %2356 = vmatmul.mubr.bf16.gmra.mxu0 %v2128
        %v2357 = vpop.f32.mrf.mxu0
        %v2358 = vadd.f32 %v2171, %v2357
        %v2359 = vpop.f32.mrf.mxu0
        %v2360 = vpop.f32.mrf.mxu0
        %v2361 = vadd.f32 %v2171, %v2360
        %v2362 = vpop.f32.mrf.mxu0
        %2363 = vmatprep.mubr.bf16.mxu0 %v2249
        %2364 = vmatmul.mubr.bf16.gmra.mxu0 %v2130
        %v2365 = vpop.f32.mrf.mxu0
        %v2366 = vadd.f32 %v2171, %v2365
        %v2367 = vpop.f32.mrf.mxu0
        %v2368 = vpop.f32.mrf.mxu0
        %v2369 = vadd.f32 %v2171, %v2368
        %v2370 = vpop.f32.mrf.mxu0
        %2371 = vmatprep.mubr.bf16.mxu0 %v2252
        %2372 = vmatmul.mubr.bf16.gmra.mxu0 %v2132
        %v2373 = vpop.f32.mrf.mxu0
        %v2374 = vadd.f32 %v2171, %v2373
        %v2375 = vpop.f32.mrf.mxu0
        %v2376 = vpop.f32.mrf.mxu0
        %v2377 = vadd.f32 %v2171, %v2376
        %v2378 = vpop.f32.mrf.mxu0
        %2379 = vmatprep.mubr.bf16.mxu0 %v2255
        %2380 = vmatmul.mubr.bf16.gmra.mxu0 %v2134
        %v2381 = vpop.f32.mrf.mxu0
        %v2382 = vadd.f32 %v2171, %v2381
        %v2383 = vpop.f32.mrf.mxu0
        %v2384 = vpop.f32.mrf.mxu0
        %v2385 = vadd.f32 %v2171, %v2384
        %v2386 = vpop.f32.mrf.mxu0
        %2387 = vmatprep.mubr.bf16.mxu0 %v2258
        %2388 = vmatmul.mubr.bf16.gmra.mxu0 %v2136
        %v2389 = vpop.f32.mrf.mxu0
        %v2390 = vadd.f32 %v2171, %v2389
        %v2391 = vpop.f32.mrf.mxu0
        %v2392 = vpop.f32.mrf.mxu0
        %v2393 = vadd.f32 %v2171, %v2392
        %v2394 = vpop.f32.mrf.mxu0
        %2395 = vmatprep.mubr.bf16.mxu0 %v2261
        %2396 = vmatmul.mubr.bf16.gmra.mxu0 %v2138
        %v2397 = vpop.f32.mrf.mxu0
        %v2398 = vadd.f32 %v2171, %v2397
        %v2399 = vpop.f32.mrf.mxu0
        %v2400 = vpop.f32.mrf.mxu0
        %v2401 = vadd.f32 %v2171, %v2400
        %v2402 = vpop.f32.mrf.mxu0
        %2403 = vmatprep.mubr.bf16.mxu0 %v2264
        %2404 = vmatmul.mubr.bf16.gmra.mxu0 %v2140
        %v2405 = vpop.f32.mrf.mxu0
        %v2406 = vadd.f32 %v2171, %v2405
        %v2407 = vpop.f32.mrf.mxu0
        %v2408 = vpop.f32.mrf.mxu0
        %v2409 = vadd.f32 %v2171, %v2408
        %v2410 = vpop.f32.mrf.mxu0
        %2411 = vmatprep.mubr.bf16.mxu0 %v2267
        %2412 = vmatmul.mubr.bf16.gmra.mxu0 %v2142
        %v2413 = vpop.f32.mrf.mxu0
        %v2414 = vadd.f32 %v2171, %v2413
        %v2415 = vpop.f32.mrf.mxu0
        %v2416 = vpop.f32.mrf.mxu0
        %v2417 = vadd.f32 %v2171, %v2416
        %v2418 = vpop.f32.mrf.mxu0
        %2419 = vmatprep.mubr.bf16.mxu0 %v2270
        %2420 = vmatmul.mubr.bf16.gmra.mxu0 %v2144
        %v2421 = vpop.f32.mrf.mxu0
        %v2422 = vadd.f32 %v2171, %v2421
        %v2423 = vpop.f32.mrf.mxu0
        %v2424 = vpop.f32.mrf.mxu0
        %v2425 = vadd.f32 %v2171, %v2424
        %v2426 = vpop.f32.mrf.mxu0
        %2427 = vmatprep.mubr.bf16.mxu0 %v2273
        %2428 = vmatmul.mubr.bf16.gmra.mxu0 %v2146
        %v2429 = vpop.f32.mrf.mxu0
        %v2430 = vadd.f32 %v2171, %v2429
        %v2431 = vpop.f32.mrf.mxu0
        %v2432 = vpop.f32.mrf.mxu0
        %v2433 = vadd.f32 %v2171, %v2432
        %v2434 = vpop.f32.mrf.mxu0
        %2435 = vdwg.mxu0
        %v2436 = vmax.f32 %v2310, 0.0
        %v2437 = vmax.f32 %v2313, 0.0
        %v2438 = vmax.f32 %v2318, 0.0
        %v2439 = vmax.f32 %v2321, 0.0
        %v2440 = vmax.f32 %v2326, 0.0
        %v2441 = vmax.f32 %v2329, 0.0
        %v2442 = vmax.f32 %v2334, 0.0
        %v2443 = vmax.f32 %v2337, 0.0
        %v2444 = vmax.f32 %v2342, 0.0
        %v2445 = vmax.f32 %v2345, 0.0
        %v2446 = vmax.f32 %v2350, 0.0
        %v2447 = vmax.f32 %v2353, 0.0
        %v2448 = vmax.f32 %v2358, 0.0
        %v2449 = vmax.f32 %v2361, 0.0
        %v2450 = vmax.f32 %v2366, 0.0
        %v2451 = vmax.f32 %v2369, 0.0
        %v2452 = vmax.f32 %v2374, 0.0
        %v2453 = vmax.f32 %v2377, 0.0
        %v2454 = vmax.f32 %v2382, 0.0
        %v2455 = vmax.f32 %v2385, 0.0
        %v2456 = vmax.f32 %v2390, 0.0
        %v2457 = vmax.f32 %v2393, 0.0
        %v2458 = vmax.f32 %v2398, 0.0
        %v2459 = vmax.f32 %v2401, 0.0
        %v2460 = vmax.f32 %v2406, 0.0
        %v2461 = vmax.f32 %v2409, 0.0
        %v2462 = vmax.f32 %v2414, 0.0
        %v2463 = vmax.f32 %v2417, 0.0
        %v2464 = vmax.f32 %v2422, 0.0
        %v2465 = vmax.f32 %v2425, 0.0
        %v2466 = vmax.f32 %v2430, 0.0
        %v2467 = vmax.f32 %v2433, 0.0
        %v2468 = vpack.c.bf16 %v2437, %v2436
        %v2469 = vpack.c.bf16 %v2439, %v2438
        %v2470 = vpack.c.bf16 %v2441, %v2440
        %v2471 = vpack.c.bf16 %v2443, %v2442
        %v2472 = vpack.c.bf16 %v2445, %v2444
        %v2473 = vpack.c.bf16 %v2447, %v2446
        %v2474 = vpack.c.bf16 %v2449, %v2448
        %v2475 = vpack.c.bf16 %v2451, %v2450
        %v2476 = vpack.c.bf16 %v2453, %v2452
        %v2477 = vpack.c.bf16 %v2455, %v2454
        %v2478 = vpack.c.bf16 %v2457, %v2456
        %v2479 = vpack.c.bf16 %v2459, %v2458
        %v2480 = vpack.c.bf16 %v2461, %v2460
        %v2481 = vpack.c.bf16 %v2463, %v2462
        %v2482 = vpack.c.bf16 %v2465, %v2464
        %v2483 = vpack.c.bf16 %v2467, %v2466
        %v2484 = vld [vmem:[%s5] sm:$0xf]
        %v2485 = vld [vmem:[%s5 + $0x4] sm:$0xf]
        %v2486 = vld [vmem:[%s6] sm:$0x1]
        %v2488 = vlaneseq
        %v2489 = vshrl.u32 %v2488, 7
        %v2490 = vsub.s32 0, %v2489
        %v2491 = vrot.slane %v2486, %v2490
        %v2495 = vunpack.c.l.b16 %v2484
        %v2496 = vunpack.c.l.b16 %v2485
        %v2497 = vpack.c.b16 %v2496, %v2495
        %v2500 = vsel %vm627, %v2468, 0
        %v2503 = vsel %vm627, %v2469, 0
        %v2506 = vsel %vm627, %v2470, 0
        %v2509 = vsel %vm627, %v2471, 0
        %v2512 = vsel %vm627, %v2472, 0
        %v2515 = vsel %vm627, %v2473, 0
        %v2518 = vsel %vm627, %v2474, 0
        %v2521 = vsel %vm627, %v2475, 0
        %v2524 = vsel %vm627, %v2476, 0
        %v2527 = vsel %vm627, %v2477, 0
        %v2530 = vsel %vm627, %v2478, 0
        %v2533 = vsel %vm627, %v2479, 0
        %v2536 = vsel %vm627, %v2480, 0
        %v2539 = vsel %vm627, %v2481, 0
        %v2542 = vsel %vm627, %v2482, 0
        %v2545 = vsel %vm627, %v2483, 0
        %2547 = vmatprep.subr.bf16.mxu0 0
        %2548 = vmatpush1.bf16.msra.mxu0 0
        %2549 = vmatprep.subr.bf16.mxu0 0
        %2550 = vmatpush1.bf16.msra.mxu0 0
        %2551 = vmatprep.subr.bf16.mxu0 0
        %2552 = vmatpush1.bf16.msra.mxu0 0
        %2553 = vmatprep.subr.bf16.mxu0 0
        %2554 = vmatpush1.bf16.msra.mxu0 0
        %2555 = vmatprep.subr.bf16.mxu0 0
        %2556 = vmatpush1.bf16.msra.mxu0 0
        %2557 = vmatprep.subr.bf16.mxu0 0
        %2558 = vmatpush1.bf16.msra.mxu0 0
        %2559 = vmatprep.subr.bf16.mxu0 0
        %2560 = vmatpush1.bf16.msra.mxu0 0
        %2561 = vmatprep.subr.bf16.mxu0 0
        %2562 = vmatpush1.bf16.msra.mxu0 %v2497
        %2563 = vmatprep.subr.bf16.mxu0 0
        %2564 = vmatpush2.bf16.msra.mxu0 0
        %2565 = vmatprep.subr.bf16.mxu0 0
        %2566 = vmatpush2.bf16.msra.mxu0 0
        %2567 = vmatprep.subr.bf16.mxu0 0
        %2568 = vmatpush2.bf16.msra.mxu0 0
        %2569 = vmatprep.subr.bf16.mxu0 0
        %2570 = vmatpush2.bf16.msra.mxu0 0
        %2571 = vmatprep.subr.bf16.mxu0 0
        %2572 = vmatpush2.bf16.msra.mxu0 0
        %2573 = vmatprep.subr.bf16.mxu0 0
        %2574 = vmatpush2.bf16.msra.mxu0 0
        %2575 = vmatprep.subr.bf16.mxu0 0
        %2576 = vmatpush2.bf16.msra.mxu0 0
        %2577 = vmatprep.subr.bf16.mxu0 0
        %2578 = vmatpush2.bf16.msra.mxu0 0
        %2579 = vmatprep.mubr.bf16.mxu0 0
        %2580 = vmatmul.mubr.bf16.gmra.mxu0 %v2500
        %v2581 = vpop.f32.mrf.mxu0
        %v2582 = vadd.f32 %v2491, %v2581
        %v2583 = vpop.f32.mrf.mxu0
        %v2584 = vpop.f32.mrf.mxu0
        %v2585 = vadd.f32 %v2491, %v2584
        %v2586 = vpop.f32.mrf.mxu0
        %2587 = vmatprep.mubr.bf16.mxu0 0
        %2588 = vmatmul.mubr.bf16.gmra.mxu0 %v2503
        %v2589 = vpop.f32.mrf.mxu0
        %v2590 = vadd.f32 %v2491, %v2589
        %v2591 = vpop.f32.mrf.mxu0
        %v2592 = vpop.f32.mrf.mxu0
        %v2593 = vadd.f32 %v2491, %v2592
        %v2594 = vpop.f32.mrf.mxu0
        %2595 = vmatprep.mubr.bf16.mxu0 0
        %2596 = vmatmul.mubr.bf16.gmra.mxu0 %v2506
        %v2597 = vpop.f32.mrf.mxu0
        %v2598 = vadd.f32 %v2491, %v2597
        %v2599 = vpop.f32.mrf.mxu0
        %v2600 = vpop.f32.mrf.mxu0
        %v2601 = vadd.f32 %v2491, %v2600
        %v2602 = vpop.f32.mrf.mxu0
        %2603 = vmatprep.mubr.bf16.mxu0 0
        %2604 = vmatmul.mubr.bf16.gmra.mxu0 %v2509
        %v2605 = vpop.f32.mrf.mxu0
        %v2606 = vadd.f32 %v2491, %v2605
        %v2607 = vpop.f32.mrf.mxu0
        %v2608 = vpop.f32.mrf.mxu0
        %v2609 = vadd.f32 %v2491, %v2608
        %v2610 = vpop.f32.mrf.mxu0
        %2611 = vmatprep.mubr.bf16.mxu0 0
        %2612 = vmatmul.mubr.bf16.gmra.mxu0 %v2512
        %v2613 = vpop.f32.mrf.mxu0
        %v2614 = vadd.f32 %v2491, %v2613
        %v2615 = vpop.f32.mrf.mxu0
        %v2616 = vpop.f32.mrf.mxu0
        %v2617 = vadd.f32 %v2491, %v2616
        %v2618 = vpop.f32.mrf.mxu0
        %2619 = vmatprep.mubr.bf16.mxu0 0
        %2620 = vmatmul.mubr.bf16.gmra.mxu0 %v2515
        %v2621 = vpop.f32.mrf.mxu0
        %v2622 = vadd.f32 %v2491, %v2621
        %v2623 = vpop.f32.mrf.mxu0
        %v2624 = vpop.f32.mrf.mxu0
        %v2625 = vadd.f32 %v2491, %v2624
        %v2626 = vpop.f32.mrf.mxu0
        %2627 = vmatprep.mubr.bf16.mxu0 0
        %2628 = vmatmul.mubr.bf16.gmra.mxu0 %v2518
        %v2629 = vpop.f32.mrf.mxu0
        %v2630 = vadd.f32 %v2491, %v2629
        %v2631 = vpop.f32.mrf.mxu0
        %v2632 = vpop.f32.mrf.mxu0
        %v2633 = vadd.f32 %v2491, %v2632
        %v2634 = vpop.f32.mrf.mxu0
        %2635 = vmatprep.mubr.bf16.mxu0 0
        %2636 = vmatmul.mubr.bf16.gmra.mxu0 %v2521
        %v2637 = vpop.f32.mrf.mxu0
        %v2638 = vadd.f32 %v2491, %v2637
        %v2639 = vpop.f32.mrf.mxu0
        %v2640 = vpop.f32.mrf.mxu0
        %v2641 = vadd.f32 %v2491, %v2640
        %v2642 = vpop.f32.mrf.mxu0
        %2643 = vmatprep.mubr.bf16.mxu0 0
        %2644 = vmatmul.mubr.bf16.gmra.mxu0 %v2524
        %v2645 = vpop.f32.mrf.mxu0
        %v2646 = vadd.f32 %v2491, %v2645
        %v2647 = vpop.f32.mrf.mxu0
        %v2648 = vpop.f32.mrf.mxu0
        %v2649 = vadd.f32 %v2491, %v2648
        %v2650 = vpop.f32.mrf.mxu0
        %2651 = vmatprep.mubr.bf16.mxu0 0
        %2652 = vmatmul.mubr.bf16.gmra.mxu0 %v2527
        %v2653 = vpop.f32.mrf.mxu0
        %v2654 = vadd.f32 %v2491, %v2653
        %v2655 = vpop.f32.mrf.mxu0
        %v2656 = vpop.f32.mrf.mxu0
        %v2657 = vadd.f32 %v2491, %v2656
        %v2658 = vpop.f32.mrf.mxu0
        %2659 = vmatprep.mubr.bf16.mxu0 0
        %2660 = vmatmul.mubr.bf16.gmra.mxu0 %v2530
        %v2661 = vpop.f32.mrf.mxu0
        %v2662 = vadd.f32 %v2491, %v2661
        %v2663 = vpop.f32.mrf.mxu0
        %v2664 = vpop.f32.mrf.mxu0
        %v2665 = vadd.f32 %v2491, %v2664
        %v2666 = vpop.f32.mrf.mxu0
        %2667 = vmatprep.mubr.bf16.mxu0 0
        %2668 = vmatmul.mubr.bf16.gmra.mxu0 %v2533
        %v2669 = vpop.f32.mrf.mxu0
        %v2670 = vadd.f32 %v2491, %v2669
        %v2671 = vpop.f32.mrf.mxu0
        %v2672 = vpop.f32.mrf.mxu0
        %v2673 = vadd.f32 %v2491, %v2672
        %v2674 = vpop.f32.mrf.mxu0
        %2675 = vmatprep.mubr.bf16.mxu0 0
        %2676 = vmatmul.mubr.bf16.gmra.mxu0 %v2536
        %v2677 = vpop.f32.mrf.mxu0
        %v2678 = vadd.f32 %v2491, %v2677
        %v2679 = vpop.f32.mrf.mxu0
        %v2680 = vpop.f32.mrf.mxu0
        %v2681 = vadd.f32 %v2491, %v2680
        %v2682 = vpop.f32.mrf.mxu0
        %2683 = vmatprep.mubr.bf16.mxu0 0
        %2684 = vmatmul.mubr.bf16.gmra.mxu0 %v2539
        %v2685 = vpop.f32.mrf.mxu0
        %v2686 = vadd.f32 %v2491, %v2685
        %v2687 = vpop.f32.mrf.mxu0
        %v2688 = vpop.f32.mrf.mxu0
        %v2689 = vadd.f32 %v2491, %v2688
        %v2690 = vpop.f32.mrf.mxu0
        %2691 = vmatprep.mubr.bf16.mxu0 0
        %2692 = vmatmul.mubr.bf16.gmra.mxu0 %v2542
        %v2693 = vpop.f32.mrf.mxu0
        %v2694 = vadd.f32 %v2491, %v2693
        %v2695 = vpop.f32.mrf.mxu0
        %v2696 = vpop.f32.mrf.mxu0
        %v2697 = vadd.f32 %v2491, %v2696
        %v2698 = vpop.f32.mrf.mxu0
        %2699 = vmatprep.mubr.bf16.mxu0 0
        %2700 = vmatmul.mubr.bf16.gmra.mxu0 %v2545
        %v2701 = vpop.f32.mrf.mxu0
        %v2702 = vadd.f32 %v2491, %v2701
        %v2703 = vpop.f32.mrf.mxu0
        %v2704 = vpop.f32.mrf.mxu0
        %v2705 = vadd.f32 %v2491, %v2704
        %v2706 = vpop.f32.mrf.mxu0
        %2707 = vdwg.mxu0
        %v2708 = vld [vmem:[%s266] sm:$0xff]
        %v2709 = vld [vmem:[%s266 + $0x8] sm:$0xff]
        %v2710 = vld [vmem:[%s266 + $0x10] sm:$0xff]
        %v2711 = vld [vmem:[%s266 + $0x18] sm:$0xff]
        %v2712 = vld [vmem:[%s266 + $0x20] sm:$0xff]
        %v2713 = vld [vmem:[%s266 + $0x28] sm:$0xff]
        %v2714 = vld [vmem:[%s266 + $0x30] sm:$0xff]
        %v2715 = vld [vmem:[%s266 + $0x38] sm:$0xff]
        %v2716 = vld [vmem:[%s266 + $0x40] sm:$0xff]
        %v2717 = vld [vmem:[%s266 + $0x48] sm:$0xff]
        %v2718 = vld [vmem:[%s266 + $0x50] sm:$0xff]
        %v2719 = vld [vmem:[%s266 + $0x58] sm:$0xff]
        %v2720 = vld [vmem:[%s266 + $0x60] sm:$0xff]
        %v2721 = vld [vmem:[%s266 + $0x68] sm:$0xff]
        %v2722 = vld [vmem:[%s266 + $0x70] sm:$0xff]
        %v2723 = vld [vmem:[%s266 + $0x78] sm:$0xff]
        %v2724 = vld [vmem:[%s266 + $0x80] sm:$0xff]
        %v2725 = vld [vmem:[%s266 + $0x88] sm:$0xff]
        %v2726 = vld [vmem:[%s266 + $0x90] sm:$0xff]
        %v2727 = vld [vmem:[%s266 + $0x98] sm:$0xff]
        %v2728 = vld [vmem:[%s266 + $0xa0] sm:$0xff]
        %v2729 = vld [vmem:[%s266 + $0xa8] sm:$0xff]
        %v2730 = vld [vmem:[%s266 + $0xb0] sm:$0xff]
        %v2731 = vld [vmem:[%s266 + $0xb8] sm:$0xff]
        %v2732 = vld [vmem:[%s266 + $0xc0] sm:$0xff]
        %v2733 = vld [vmem:[%s266 + $0xc8] sm:$0xff]
        %v2734 = vld [vmem:[%s266 + $0xd0] sm:$0xff]
        %v2735 = vld [vmem:[%s266 + $0xd8] sm:$0xff]
        %v2736 = vld [vmem:[%s266 + $0xe0] sm:$0xff]
        %v2737 = vld [vmem:[%s266 + $0xe8] sm:$0xff]
        %v2738 = vld [vmem:[%s266 + $0xf0] sm:$0xff]
        %v2739 = vld [vmem:[%s266 + $0xf8] sm:$0xff]
        %v2740 = vadd.f32 %v2582, %v2708
        %v2741 = vadd.f32 %v2585, %v2709
        %v2742 = vadd.f32 %v2590, %v2710
        %v2743 = vadd.f32 %v2593, %v2711
        %v2744 = vadd.f32 %v2598, %v2712
        %v2745 = vadd.f32 %v2601, %v2713
        %v2746 = vadd.f32 %v2606, %v2714
        %v2747 = vadd.f32 %v2609, %v2715
        %v2748 = vadd.f32 %v2614, %v2716
        %v2749 = vadd.f32 %v2617, %v2717
        %v2750 = vadd.f32 %v2622, %v2718
        %v2751 = vadd.f32 %v2625, %v2719
        %v2752 = vadd.f32 %v2630, %v2720
        %v2753 = vadd.f32 %v2633, %v2721
        %v2754 = vadd.f32 %v2638, %v2722
        %v2755 = vadd.f32 %v2641, %v2723
        %v2756 = vadd.f32 %v2646, %v2724
        %v2757 = vadd.f32 %v2649, %v2725
        %v2758 = vadd.f32 %v2654, %v2726
        %v2759 = vadd.f32 %v2657, %v2727
        %v2760 = vadd.f32 %v2662, %v2728
        %v2761 = vadd.f32 %v2665, %v2729
        %v2762 = vadd.f32 %v2670, %v2730
        %v2763 = vadd.f32 %v2673, %v2731
        %v2764 = vadd.f32 %v2678, %v2732
        %v2765 = vadd.f32 %v2681, %v2733
        %v2766 = vadd.f32 %v2686, %v2734
        %v2767 = vadd.f32 %v2689, %v2735
        %v2768 = vadd.f32 %v2694, %v2736
        %v2769 = vadd.f32 %v2697, %v2737
        %v2770 = vadd.f32 %v2702, %v2738
        %v2771 = vadd.f32 %v2705, %v2739
        %v2772 = vmax.f32 %v2740, 0.0
        %v2773 = vmax.f32 %v2741, 0.0
        %v2774 = vmax.f32 %v2742, 0.0
        %v2775 = vmax.f32 %v2743, 0.0
        %v2776 = vmax.f32 %v2744, 0.0
        %v2777 = vmax.f32 %v2745, 0.0
        %v2778 = vmax.f32 %v2746, 0.0
        %v2779 = vmax.f32 %v2747, 0.0
        %v2780 = vmax.f32 %v2748, 0.0
        %v2781 = vmax.f32 %v2749, 0.0
        %v2782 = vmax.f32 %v2750, 0.0
        %v2783 = vmax.f32 %v2751, 0.0
        %v2784 = vmax.f32 %v2752, 0.0
        %v2785 = vmax.f32 %v2753, 0.0
        %v2786 = vmax.f32 %v2754, 0.0
        %v2787 = vmax.f32 %v2755, 0.0
        %v2788 = vmax.f32 %v2756, 0.0
        %v2789 = vmax.f32 %v2757, 0.0
        %v2790 = vmax.f32 %v2758, 0.0
        %v2791 = vmax.f32 %v2759, 0.0
        %v2792 = vmax.f32 %v2760, 0.0
        %v2793 = vmax.f32 %v2761, 0.0
        %v2794 = vmax.f32 %v2762, 0.0
        %v2795 = vmax.f32 %v2763, 0.0
        %v2796 = vmax.f32 %v2764, 0.0
        %v2797 = vmax.f32 %v2765, 0.0
        %v2798 = vmax.f32 %v2766, 0.0
        %v2799 = vmax.f32 %v2767, 0.0
        %v2800 = vmax.f32 %v2768, 0.0
        %v2801 = vmax.f32 %v2769, 0.0
        %v2802 = vmax.f32 %v2770, 0.0
        %v2803 = vmax.f32 %v2771, 0.0
        %2804 = vst.msk [vmem:[%s296] sm:$0xff] %vm385, %v2772
        %2805 = vst.msk [vmem:[%s296 + $0x8] sm:$0xff] %vm385, %v2773
        %2806 = vst.msk [vmem:[%s296 + $0x10] sm:$0xff] %vm385, %v2774
        %2807 = vst.msk [vmem:[%s296 + $0x18] sm:$0xff] %vm385, %v2775
        %2808 = vst.msk [vmem:[%s296 + $0x20] sm:$0xff] %vm385, %v2776
        %2809 = vst.msk [vmem:[%s296 + $0x28] sm:$0xff] %vm385, %v2777
        %2810 = vst.msk [vmem:[%s296 + $0x30] sm:$0xff] %vm385, %v2778
        %2811 = vst.msk [vmem:[%s296 + $0x38] sm:$0xff] %vm385, %v2779
        %2812 = vst.msk [vmem:[%s296 + $0x40] sm:$0xff] %vm385, %v2780
        %2813 = vst.msk [vmem:[%s296 + $0x48] sm:$0xff] %vm385, %v2781
        %2814 = vst.msk [vmem:[%s296 + $0x50] sm:$0xff] %vm385, %v2782
        %2815 = vst.msk [vmem:[%s296 + $0x58] sm:$0xff] %vm385, %v2783
        %2816 = vst.msk [vmem:[%s296 + $0x60] sm:$0xff] %vm385, %v2784
        %2817 = vst.msk [vmem:[%s296 + $0x68] sm:$0xff] %vm385, %v2785
        %2818 = vst.msk [vmem:[%s296 + $0x70] sm:$0xff] %vm385, %v2786
        %2819 = vst.msk [vmem:[%s296 + $0x78] sm:$0xff] %vm385, %v2787
        %2820 = vst.msk [vmem:[%s296 + $0x80] sm:$0xff] %vm385, %v2788
        %2821 = vst.msk [vmem:[%s296 + $0x88] sm:$0xff] %vm385, %v2789
        %2822 = vst.msk [vmem:[%s296 + $0x90] sm:$0xff] %vm385, %v2790
        %2823 = vst.msk [vmem:[%s296 + $0x98] sm:$0xff] %vm385, %v2791
        %2824 = vst.msk [vmem:[%s296 + $0xa0] sm:$0xff] %vm385, %v2792
        %2825 = vst.msk [vmem:[%s296 + $0xa8] sm:$0xff] %vm385, %v2793
        %2826 = vst.msk [vmem:[%s296 + $0xb0] sm:$0xff] %vm385, %v2794
        %2827 = vst.msk [vmem:[%s296 + $0xb8] sm:$0xff] %vm385, %v2795
        %2828 = vst.msk [vmem:[%s296 + $0xc0] sm:$0xff] %vm385, %v2796
        %2829 = vst.msk [vmem:[%s296 + $0xc8] sm:$0xff] %vm385, %v2797
        %2830 = vst.msk [vmem:[%s296 + $0xd0] sm:$0xff] %vm385, %v2798
        %2831 = vst.msk [vmem:[%s296 + $0xd8] sm:$0xff] %vm385, %v2799
        %2832 = vst.msk [vmem:[%s296 + $0xe0] sm:$0xff] %vm385, %v2800
        %2833 = vst.msk [vmem:[%s296 + $0xe8] sm:$0xff] %vm385, %v2801
        %2834 = vst.msk [vmem:[%s296 + $0xf0] sm:$0xff] %vm385, %v2802
        %2835 = vst.msk [vmem:[%s296 + $0xf8] sm:$0xff] %vm385, %v2803
        %s2836 = sand.u32 %s184, 1
        %s2837 = scalar_lea.sflag [#allocation5], %s2836
        %s2838 = sand.u32 %s184, 1
        %s2839 = smul.addr %s2838, 256
        %s2840 = scalar_lea.vmem [#allocation6], %s2839
        // Predicated region
        $region53: #{tpu_custom_call.1} parent=47 // pred_check
          %p2841 = pneg %p194
        $region54: #{tpu_custom_call.1} parent=47 // pred_check_branch
          %2843 = sbr.rel (%p2841) target = $region56
        $region55: #{tpu_custom_call.1} parent=47 // pred_region
          %s2845 = ssub.s32 4096, 4096
          %2846 = vsyncadd %s2837, %s2845
          %s2847 = smul.addr %s24, 32
          %s2848 = smul.addr %s2847, 128
          %s2849 = scalar_lea.hbm %s7, %s2848
          %s2850 = sshll.u32 %s2840, 4
          %s2851 = int_to_ptr.vmem [resolvable:$true] %s2850
          %2856 = dma.vmem_to_hbm [thread:$0]  %s2851, 4096, %s2849, %s2837, 128, 128, 8
        $region56: #{tpu_custom_call.1} parent=47 // pred_fallthru
          _
      $region48: #{tpu_custom_call.1} parent=5 // pred_fallthru
        _
      %p2857 = scmp.le.s32.totalorder 2, %s19
      // Predicated region
      $region57: #{tpu_custom_call.1} parent=5 // pred_check
        %p2858 = pneg %p2857
      $region58: #{tpu_custom_call.1} parent=5 // pred_check_branch
        %2860 = sbr.rel (%p2858) target = $region60
      $region59: #{tpu_custom_call.1} parent=5 // pred_region
        %s2861 = ssub.s32 %s19, 2
        // Predicated region
        $region61: #{tpu_custom_call.1} parent=59 // pred_check
          %p2862 = pneg %p200
        $region62: #{tpu_custom_call.1} parent=59 // pred_check_branch
          %2864 = sbr.rel (%p2862) target = $region64
        $region63: #{tpu_custom_call.1} parent=59 // pred_region
          %s2865 = sand.u32 %s185, 1
          %s2866 = scalar_lea.sflag [#allocation5], %s2865
          %s2867 = sand.u32 %s185, 1
          %s2868 = smul.addr %s2867, 256
          %s2869 = scalar_lea.vmem [#allocation6], %s2868
          %2870 = dma.done %s2866, 4096
        $region64: #{tpu_custom_call.1} parent=59 // pred_fallthru
          _
      $region60: #{tpu_custom_call.1} parent=5 // pred_fallthru
        _
    $region6: #{tpu_custom_call.1} parent=1 // loop_footer
      %s23 = sadd.s32 1, %s19
    $region7: #{tpu_custom_call.1} parent=1 // loop_footer_branch
      %18 = sbr.rel target = $region3
    $region8: #{tpu_custom_call.1} parent=1 // loop_exit
      _
    %2871 = vsyncpa [#allocation4], 1
    %s2872 = scalar_lea.sflag [#allocation4], 1
    %2873 = vsyncpa %s2872, 1
    %2874 = vsyncpa [#allocation5], 1
    %s2875 = scalar_lea.sflag [#allocation5], 1
    %2876 = vsyncpa %s2875, 1

// kernel: tpu_custom_call.1
$region0: #{tpu_custom_call.1}
  #allocation0 [shape = 'u32[]', space=smem, size = 0x4, offset = 0x4, fixed_abs, tag = 'smem constant byte address 0x4 - core index']
  #allocation1 [shape = 'u32[144,128]{1,0:T(1,128)}', space=vmem, size = 0x12000, scoped, tag = 'internal scratch']
  #allocation2 [shape = 'f32[1,18,18,16]{3,2,1,0:T(8,128)}', space=vmem, size = 0x36000, scoped, tag = 'scratch operand']
  %s0 = inlined_call_operand.hbm [shape: f32[2,16,16,64], index: 0, kind: input, shape index: {}]
  %s1 = inlined_call_operand.vmem [shape: bf16[64,16], index: 1, kind: input, shape index: {}]
  %s2 = inlined_call_operand.vmem [shape: f32[1,16], index: 2, kind: input, shape index: {}]
  %s3 = inlined_call_operand.vmem [shape: bf16[144,16], index: 3, kind: input, shape index: {}]
  %s4 = inlined_call_operand.vmem [shape: f32[1,16], index: 4, kind: input, shape index: {}]
  %s5 = inlined_call_operand.vmem [shape: bf16[16,64], index: 5, kind: input, shape index: {}]
  %s6 = inlined_call_operand.vmem [shape: f32[1,64], index: 6, kind: input, shape index: {}]
  %s7 = inlined_call_operand.hbm [shape: f32[2,16,16,64], index: 7, kind: output, shape index: {}]
  %s8 = sld [smem:[#allocation0]]
  $region65: #{tpu_custom_call.1} parent=0
    _
  %s10 = ssub.s32 1, %s8
  %s11 = scalar_select 0, %s10, %s8
  $region1: #{tpu_custom_call.1} parent=0
    #allocation3 [shape = 'u8[262144]{0}', space=vmem, size = 0x40000, scoped, tag = 'input window, operand 0']
    #allocation4 [shape = 's32[2]{0}', space=sflag, size = 0x8, scoped, tag = 'scoped memory for tpu_custom_call.1']
    #allocation5 [shape = 's32[2]{0}', space=sflag, size = 0x8, scoped, tag = 'scoped memory for tpu_custom_call.1']
    #allocation6 [shape = 'u8[262144]{0}', space=vmem, size = 0x40000, scoped, tag = 'output window, operand 0']
    %12 = vsyncpa [#allocation4], 0
    %s13 = scalar_lea.sflag [#allocation4], 1
    %14 = vsyncpa %s13, 0
    %15 = vsyncpa [#allocation5], 0
    %s16 = scalar_lea.sflag [#allocation5], 1
    %17 = vsyncpa %s16, 0
    loop: start=0, step=1, limit=4
    $region2: #{tpu_custom_call.1} parent=1 // loop_pre_header
      _
    $region3: #{tpu_custom_call.1} parent=1 // loop_header
      %s19 = sphi 0, %s23
      %p20 = scmp.ge.s32.totalorder %s19, 4
      %s29 = sphi 0, %s31
      %s32 = sphi 0, %s29
      %s33 = sphi 0, %s32
      %s49 = sphi 0, %s33
      %s53 = sphi 0, %s53
      %s55 = sphi 0, %s53
      %s56 = sphi 0, %s55
      %s70 = sphi 0, %s56
      %s74 = sphi 0, %s74
      %s76 = sphi 0, %s74
      %s77 = sphi 0, %s76
      %s91 = sphi 0, %s77
      %s95 = sphi 0, %s95
      %s97 = sphi 0, %s95
      %s98 = sphi 0, %s97
      %s112 = sphi 0, %s98
      %s116 = sphi 0, %s116
      %s118 = sphi 0, %s116
      %s119 = sphi 0, %s118
      %s133 = sphi 0, %s119
      %s137 = sphi 0, %s137
      %s139 = sphi 0, %s137
      %s140 = sphi 0, %s139
      %s154 = sphi 0, %s140
      %s158 = sphi 0, %s158
      %s160 = sphi 0, %s158
      %s161 = sphi 0, %s160
      %s175 = sphi 0, %s161
      %s181 = sphi 0, %s183
      %s184 = sphi 0, %s181
      %s185 = sphi 0, %s184
      %s201 = sphi 0, %s185
    $region4: #{tpu_custom_call.1} parent=1 // loop_header_branch
      %22 = sbr.rel (%p20) target = $region8
    $region5: #{tpu_custom_call.1} parent=1 // loop_body
      %s24 = ssub.s32 %s19, 1
      %s25 = ssub.s32 %s19, 2
      %s26 = sadd.s32 %s19, 1
      %s27 = ssub.s32 %s19, %s26
      %p28 = scmp.eq.s32.totalorder %s27, 0
      %s30 = sadd.s32 %s29, 1
      %s31 = scalar_select %p28, %s29, %s30
      %p34 = pneg %p28
      %p35 = scmp.eq.s32.totalorder %s19, 1
      %p36 = por %p34, %p35
      %p37 = scmp.ne.s32.totalorder %s29, %s32
      %p38 = scmp.eq.s32.totalorder %s19, 0
      %p39 = por %p37, %p38
      %p40 = scmp.ne.s32.totalorder %s29, %s32
      %p41 = scmp.eq.s32.totalorder %s24, 1
      %p42 = por %p40, %p41
      %p43 = scmp.ne.s32.totalorder %s32, %s33
      %p44 = scmp.eq.s32.totalorder %s24, 0
      %p45 = por %p43, %p44
      %p46 = scmp.ne.s32.totalorder %s32, %s33
      %p47 = scmp.eq.s32.totalorder %s25, 1
      %p48 = por %p46, %p47
      %p50 = scmp.ne.s32.totalorder %s33, %s49
      %p51 = scmp.eq.s32.totalorder %s25, 0
      %p52 = por %p50, %p51
      %s54 = sadd.s32 %s53, 1
      %p57 = scmp.eq.s32.totalorder %s19, 1
      %p58 = scmp.ne.s32.totalorder %s53, %s55
      %p59 = scmp.eq.s32.totalorder %s19, 0
      %p60 = por %p58, %p59
      %p61 = scmp.ne.s32.totalorder %s53, %s55
      %p62 = scmp.eq.s32.totalorder %s24, 1
      %p63 = por %p61, %p62
      %p64 = scmp.ne.s32.totalorder %s55, %s56
      %p65 = scmp.eq.s32.totalorder %s24, 0
      %p66 = por %p64, %p65
      %p67 = scmp.ne.s32.totalorder %s55, %s56
      %p68 = scmp.eq.s32.totalorder %s25, 1
      %p69 = por %p67, %p68
      %p71 = scmp.ne.s32.totalorder %s56, %s70
      %p72 = scmp.eq.s32.totalorder %s25, 0
      %p73 = por %p71, %p72
      %s75 = sadd.s32 %s74, 1
      %p78 = scmp.eq.s32.totalorder %s19, 1
      %p79 = scmp.ne.s32.totalorder %s74, %s76
      %p80 = scmp.eq.s32.totalorder %s19, 0
      %p81 = por %p79, %p80
      %p82 = scmp.ne.s32.totalorder %s74, %s76
      %p83 = scmp.eq.s32.totalorder %s24, 1
      %p84 = por %p82, %p83
      %p85 = scmp.ne.s32.totalorder %s76, %s77
      %p86 = scmp.eq.s32.totalorder %s24, 0
      %p87 = por %p85, %p86
      %p88 = scmp.ne.s32.totalorder %s76, %s77
      %p89 = scmp.eq.s32.totalorder %s25, 1
      %p90 = por %p88, %p89
      %p92 = scmp.ne.s32.totalorder %s77, %s91
      %p93 = scmp.eq.s32.totalorder %s25, 0
      %p94 = por %p92, %p93
      %s96 = sadd.s32 %s95, 1
      %p99 = scmp.eq.s32.totalorder %s19, 1
      %p100 = scmp.ne.s32.totalorder %s95, %s97
      %p101 = scmp.eq.s32.totalorder %s19, 0
      %p102 = por %p100, %p101
      %p103 = scmp.ne.s32.totalorder %s95, %s97
      %p104 = scmp.eq.s32.totalorder %s24, 1
      %p105 = por %p103, %p104
      %p106 = scmp.ne.s32.totalorder %s97, %s98
      %p107 = scmp.eq.s32.totalorder %s24, 0
      %p108 = por %p106, %p107
      %p109 = scmp.ne.s32.totalorder %s97, %s98
      %p110 = scmp.eq.s32.totalorder %s25, 1
      %p111 = por %p109, %p110
      %p113 = scmp.ne.s32.totalorder %s98, %s112
      %p114 = scmp.eq.s32.totalorder %s25, 0
      %p115 = por %p113, %p114
      %s117 = sadd.s32 %s116, 1
      %p120 = scmp.eq.s32.totalorder %s19, 1
      %p121 = scmp.ne.s32.totalorder %s116, %s118
      %p122 = scmp.eq.s32.totalorder %s19, 0
      %p123 = por %p121, %p122
      %p124 = scmp.ne.s32.totalorder %s116, %s118
      %p125 = scmp.eq.s32.totalorder %s24, 1
      %p126 = por %p124, %p125
      %p127 = scmp.ne.s32.totalorder %s118, %s119
      %p128 = scmp.eq.s32.totalorder %s24, 0
      %p129 = por %p127, %p128
      %p130 = scmp.ne.s32.totalorder %s118, %s119
      %p131 = scmp.eq.s32.totalorder %s25, 1
      %p132 = por %p130, %p131
      %p134 = scmp.ne.s32.totalorder %s119, %s133
      %p135 = scmp.eq.s32.totalorder %s25, 0
      %p136 = por %p134, %p135
      %s138 = sadd.s32 %s137, 1
      %p141 = scmp.eq.s32.totalorder %s19, 1
      %p142 = scmp.ne.s32.totalorder %s137, %s139
      %p143 = scmp.eq.s32.totalorder %s19, 0
      %p144 = por %p142, %p143
      %p145 = scmp.ne.s32.totalorder %s137, %s139
      %p146 = scmp.eq.s32.totalorder %s24, 1
      %p147 = por %p145, %p146
      %p148 = scmp.ne.s32.totalorder %s139, %s140
      %p149 = scmp.eq.s32.totalorder %s24, 0
      %p150 = por %p148, %p149
      %p151 = scmp.ne.s32.totalorder %s139, %s140
      %p152 = scmp.eq.s32.totalorder %s25, 1
      %p153 = por %p151, %p152
      %p155 = scmp.ne.s32.totalorder %s140, %s154
      %p156 = scmp.eq.s32.totalorder %s25, 0
      %p157 = por %p155, %p156
      %s159 = sadd.s32 %s158, 1
      %p162 = scmp.eq.s32.totalorder %s19, 1
      %p163 = scmp.ne.s32.totalorder %s158, %s160
      %p164 = scmp.eq.s32.totalorder %s19, 0
      %p165 = por %p163, %p164
      %p166 = scmp.ne.s32.totalorder %s158, %s160
      %p167 = scmp.eq.s32.totalorder %s24, 1
      %p168 = por %p166, %p167
      %p169 = scmp.ne.s32.totalorder %s160, %s161
      %p170 = scmp.eq.s32.totalorder %s24, 0
      %p171 = por %p169, %p170
      %p172 = scmp.ne.s32.totalorder %s160, %s161
      %p173 = scmp.eq.s32.totalorder %s25, 1
      %p174 = por %p172, %p173
      %p176 = scmp.ne.s32.totalorder %s161, %s175
      %p177 = scmp.eq.s32.totalorder %s25, 0
      %p178 = por %p176, %p177
      %s179 = ssub.s32 %s19, %s26
      %p180 = scmp.eq.s32.totalorder %s179, 0
      %s182 = sadd.s32 %s181, 1
      %s183 = scalar_select %p180, %s181, %s182
      %p186 = pneg %p180
      %p187 = scmp.eq.s32.totalorder %s19, 1
      %p188 = por %p186, %p187
      %p189 = scmp.ne.s32.totalorder %s181, %s184
      %p190 = scmp.eq.s32.totalorder %s19, 0
      %p191 = por %p189, %p190
      %p192 = scmp.ne.s32.totalorder %s181, %s184
      %p193 = scmp.eq.s32.totalorder %s24, 1
      %p194 = por %p192, %p193
      %p195 = scmp.ne.s32.totalorder %s184, %s185
      %p196 = scmp.eq.s32.totalorder %s24, 0
      %p197 = por %p195, %p196
      %p198 = scmp.ne.s32.totalorder %s184, %s185
      %p199 = scmp.eq.s32.totalorder %s25, 1
      %p200 = por %p198, %p199
      %p202 = scmp.ne.s32.totalorder %s185, %s201
      %p203 = scmp.eq.s32.totalorder %s25, 0
      %p204 = por %p202, %p203
      %p205 = scmp.le.s32.totalorder 1, %s19
      %p206 = scmp.lt.s32.totalorder %s19, 3
      %p207 = pnand %p205, %p206
      %p208 = pneg %p207
      // Predicated region
      $region9: #{tpu_custom_call.1} parent=5 // pred_check
        _
      $region10: #{tpu_custom_call.1} parent=5 // pred_check_branch
        %210 = sbr.rel (%p207) target = $region12
      $region11: #{tpu_custom_call.1} parent=5 // pred_region
        %s211 = ssub.s32 %s19, 1
        // Predicated region
        $region13: #{tpu_custom_call.1} parent=11 // pred_check
          %p212 = pneg %p66
        $region14: #{tpu_custom_call.1} parent=11 // pred_check_branch
          %214 = sbr.rel (%p212) target = $region16
        $region15: #{tpu_custom_call.1} parent=11 // pred_region
          _
        $region16: #{tpu_custom_call.1} parent=11 // pred_fallthru
          _
        // Predicated region
        $region17: #{tpu_custom_call.1} parent=11 // pred_check
          %p215 = pneg %p87
        $region18: #{tpu_custom_call.1} parent=11 // pred_check_branch
          %217 = sbr.rel (%p215) target = $region20
        $region19: #{tpu_custom_call.1} parent=11 // pred_region
          _
        $region20: #{tpu_custom_call.1} parent=11 // pred_fallthru
          _
        // Predicated region
        $region21: #{tpu_custom_call.1} parent=11 // pred_check
          %p218 = pneg %p108
        $region22: #{tpu_custom_call.1} parent=11 // pred_check_branch
          %220 = sbr.rel (%p218) target = $region24
        $region23: #{tpu_custom_call.1} parent=11 // pred_region
          _
        $region24: #{tpu_custom_call.1} parent=11 // pred_fallthru
          _
        // Predicated region
        $region25: #{tpu_custom_call.1} parent=11 // pred_check
          %p221 = pneg %p129
        $region26: #{tpu_custom_call.1} parent=11 // pred_check_branch
          %223 = sbr.rel (%p221) target = $region28
        $region27: #{tpu_custom_call.1} parent=11 // pred_region
          _
        $region28: #{tpu_custom_call.1} parent=11 // pred_fallthru
          _
        // Predicated region
        $region29: #{tpu_custom_call.1} parent=11 // pred_check
          %p224 = pneg %p150
        $region30: #{tpu_custom_call.1} parent=11 // pred_check_branch
          %226 = sbr.rel (%p224) target = $region32
        $region31: #{tpu_custom_call.1} parent=11 // pred_region
          _
        $region32: #{tpu_custom_call.1} parent=11 // pred_fallthru
          _
        // Predicated region
        $region33: #{tpu_custom_call.1} parent=11 // pred_check
          %p227 = pneg %p171
        $region34: #{tpu_custom_call.1} parent=11 // pred_check_branch
          %229 = sbr.rel (%p227) target = $region36
        $region35: #{tpu_custom_call.1} parent=11 // pred_region
          _
        $region36: #{tpu_custom_call.1} parent=11 // pred_fallthru
          _
      $region12: #{tpu_custom_call.1} parent=5 // pred_fallthru
        _
      %p230 = scmp.lt.s32.totalorder %s19, 2
      // Predicated region
      $region37: #{tpu_custom_call.1} parent=5 // pred_check
        %p231 = pneg %p230
      $region38: #{tpu_custom_call.1} parent=5 // pred_check_branch
        %233 = sbr.rel (%p231) target = $region40
      $region39: #{tpu_custom_call.1} parent=5 // pred_region
        // Predicated region
        $region41: #{tpu_custom_call.1} parent=39 // pred_check
          %p234 = pneg %p39
        $region42: #{tpu_custom_call.1} parent=39 // pred_check_branch
          %236 = sbr.rel (%p234) target = $region44
        $region43: #{tpu_custom_call.1} parent=39 // pred_region
          %s237 = sand.u32 %s29, 1
          %s238 = scalar_lea.sflag [#allocation4], %s237
          %s239 = sand.u32 %s29, 1
          %s240 = smul.addr %s239, 256
          %s241 = scalar_lea.vmem [#allocation3], %s240
          %s243 = ssub.s32 4096, 4096
          %244 = vsyncadd %s238, %s243
          %s245 = smul.addr %s19, 32
          %s246 = smul.addr %s245, 128
          %s247 = scalar_lea.hbm %s0, %s246
          %s248 = sshll.u32 %s241, 4
          %s249 = int_to_ptr.vmem [resolvable:$true] %s248
          %254 = dma.hbm_to_vmem [thread:$0]  %s247, 4096, %s249, %s238, 128, 128, 8
        $region44: #{tpu_custom_call.1} parent=39 // pred_fallthru
          _
      $region40: #{tpu_custom_call.1} parent=5 // pred_fallthru
        _
      %p255 = scmp.le.s32.totalorder 1, %s19
      %p256 = scmp.lt.s32.totalorder %s19, 3
      %p257 = pnand %p255, %p256
      %p258 = pneg %p257
      // Predicated region
      $region45: #{tpu_custom_call.1} parent=5 // pred_check
        _
      $region46: #{tpu_custom_call.1} parent=5 // pred_check_branch
        %260 = sbr.rel (%p257) target = $region48
      $region47: #{tpu_custom_call.1} parent=5 // pred_region
        %s261 = ssub.s32 %s19, 1
        %s262 = sand.u32 %s32, 1
        %s263 = scalar_lea.sflag [#allocation4], %s262
        %s264 = sand.u32 %s32, 1
        %s265 = smul.addr %s264, 256
        %s266 = scalar_lea.vmem [#allocation3], %s265
        // Predicated region
        $region49: #{tpu_custom_call.1} parent=47 // pred_check
          %p267 = pneg %p45
        $region50: #{tpu_custom_call.1} parent=47 // pred_check_branch
          %269 = sbr.rel (%p267) target = $region52
        $region51: #{tpu_custom_call.1} parent=47 // pred_region
          %270 = dma.done %s263, 4096
        $region52: #{tpu_custom_call.1} parent=47 // pred_fallthru
          _
        %s271 = sand.u32 %s32, 1
        %s272 = scalar_lea.sflag [#allocation4], %s271
        %s273 = sand.u32 %s32, 1
        %s274 = smul.addr %s273, 256
        %s275 = scalar_lea.vmem [#allocation3], %s274
        %p276 = pneg %p45
        %p277 = pneg %p42
        %p278 = pneg %p66
        %p279 = pneg %p63
        %p280 = pneg %p87
        %p281 = pneg %p84
        %p282 = pneg %p108
        %p283 = pneg %p105
        %p284 = pneg %p129
        %p285 = pneg %p126
        %p286 = pneg %p150
        %p287 = pneg %p147
        %p288 = pneg %p171
        %p289 = pneg %p168
        %p290 = pneg %p197
        %p291 = pneg %p194
        %s292 = sand.u32 %s184, 1
        %s293 = scalar_lea.sflag [#allocation5], %s292
        %s294 = sand.u32 %s184, 1
        %s295 = smul.addr %s294, 256
        %s296 = scalar_lea.vmem [#allocation6], %s295
        %v298 = vld [vmem:[%s266] sm:$0xff]
        %v299 = vld [vmem:[%s266 + $0x8] sm:$0xff]
        %v300 = vld [vmem:[%s266 + $0x10] sm:$0xff]
        %v301 = vld [vmem:[%s266 + $0x18] sm:$0xff]
        %v302 = vld [vmem:[%s266 + $0x20] sm:$0xff]
        %v303 = vld [vmem:[%s266 + $0x28] sm:$0xff]
        %v304 = vld [vmem:[%s266 + $0x30] sm:$0xff]
        %v305 = vld [vmem:[%s266 + $0x38] sm:$0xff]
        %v306 = vld [vmem:[%s266 + $0x40] sm:$0xff]
        %v307 = vld [vmem:[%s266 + $0x48] sm:$0xff]
        %v308 = vld [vmem:[%s266 + $0x50] sm:$0xff]
        %v309 = vld [vmem:[%s266 + $0x58] sm:$0xff]
        %v310 = vld [vmem:[%s266 + $0x60] sm:$0xff]
        %v311 = vld [vmem:[%s266 + $0x68] sm:$0xff]
        %v312 = vld [vmem:[%s266 + $0x70] sm:$0xff]
        %v313 = vld [vmem:[%s266 + $0x78] sm:$0xff]
        %v314 = vld [vmem:[%s266 + $0x80] sm:$0xff]
        %v315 = vld [vmem:[%s266 + $0x88] sm:$0xff]
        %v316 = vld [vmem:[%s266 + $0x90] sm:$0xff]
        %v317 = vld [vmem:[%s266 + $0x98] sm:$0xff]
        %v318 = vld [vmem:[%s266 + $0xa0] sm:$0xff]
        %v319 = vld [vmem:[%s266 + $0xa8] sm:$0xff]
        %v320 = vld [vmem:[%s266 + $0xb0] sm:$0xff]
        %v321 = vld [vmem:[%s266 + $0xb8] sm:$0xff]
        %v322 = vld [vmem:[%s266 + $0xc0] sm:$0xff]
        %v323 = vld [vmem:[%s266 + $0xc8] sm:$0xff]
        %v324 = vld [vmem:[%s266 + $0xd0] sm:$0xff]
        %v325 = vld [vmem:[%s266 + $0xd8] sm:$0xff]
        %v326 = vld [vmem:[%s266 + $0xe0] sm:$0xff]
        %v327 = vld [vmem:[%s266 + $0xe8] sm:$0xff]
        %v328 = vld [vmem:[%s266 + $0xf0] sm:$0xff]
        %v329 = vld [vmem:[%s266 + $0xf8] sm:$0xff]
        %v330 = vpack.c.bf16 %v299, %v298
        %v331 = vpack.c.bf16 %v301, %v300
        %v332 = vpack.c.bf16 %v303, %v302
        %v333 = vpack.c.bf16 %v305, %v304
        %v334 = vpack.c.bf16 %v307, %v306
        %v335 = vpack.c.bf16 %v309, %v308
        %v336 = vpack.c.bf16 %v311, %v310
        %v337 = vpack.c.bf16 %v313, %v312
        %v338 = vpack.c.bf16 %v315, %v314
        %v339 = vpack.c.bf16 %v317, %v316
        %v340 = vpack.c.bf16 %v319, %v318
        %v341 = vpack.c.bf16 %v321, %v320
        %v342 = vpack.c.bf16 %v323, %v322
        %v343 = vpack.c.bf16 %v325, %v324
        %v344 = vpack.c.bf16 %v327, %v326
        %v345 = vpack.c.bf16 %v329, %v328
        %v346 = vld [vmem:[%s1] sm:$0xf]
        %v347 = vld [vmem:[%s1 + $0x4] sm:$0xf]
        %v348 = vld [vmem:[%s1 + $0x8] sm:$0xf]
        %v349 = vld [vmem:[%s1 + $0xc] sm:$0xf]
        %v350 = vld [vmem:[%s1 + $0x10] sm:$0xf]
        %v351 = vld [vmem:[%s1 + $0x14] sm:$0xf]
        %v352 = vld [vmem:[%s1 + $0x18] sm:$0xf]
        %v353 = vld [vmem:[%s1 + $0x1c] sm:$0xf]
        %v354 = vld [vmem:[%s2] sm:$0x1]
        %v356 = vlaneseq
        %v357 = vshrl.u32 %v356, 7
        %v358 = vsub.s32 0, %v357
        %v359 = vrot.slane %v354, %v358
        %v369 = vunpack.c.l.b16 %v346
        %v370 = vunpack.c.l.b16 %v347
        %v371 = vunpack.c.l.b16 %v348
        %v372 = vunpack.c.l.b16 %v349
        %v373 = vunpack.c.l.b16 %v350
        %v374 = vunpack.c.l.b16 %v351
        %v375 = vunpack.c.l.b16 %v352
        %v376 = vunpack.c.l.b16 %v353
        %v377 = vpack.c.b16 %v370, %v369
        %v378 = vpack.c.b16 %v372, %v371
        %v379 = vpack.c.b16 %v374, %v373
        %v380 = vpack.c.b16 %v376, %v375
        %vm385 = vcmask 523264
        %v387 = vsel %vm385, %v330, 0
        %v390 = vsel %vm385, %v331, 0
        %v393 = vsel %vm385, %v332, 0
        %v396 = vsel %vm385, %v333, 0
        %v399 = vsel %vm385, %v334, 0
        %v402 = vsel %vm385, %v335, 0
        %v405 = vsel %vm385, %v336, 0
        %v408 = vsel %vm385, %v337, 0
        %v411 = vsel %vm385, %v338, 0
        %v414 = vsel %vm385, %v339, 0
        %v417 = vsel %vm385, %v340, 0
        %v420 = vsel %vm385, %v341, 0
        %v423 = vsel %vm385, %v342, 0
        %v426 = vsel %vm385, %v343, 0
        %v429 = vsel %vm385, %v344, 0
        %v432 = vsel %vm385, %v345, 0
        %434 = vmatprep.subr.bf16.mxu0 0
        %435 = vmatpush1.bf16.msra.mxu0 0
        %436 = vmatprep.subr.bf16.mxu0 0
        %437 = vmatpush1.bf16.msra.mxu0 0
        %438 = vmatprep.subr.bf16.mxu0 0
        %439 = vmatpush1.bf16.msra.mxu0 0
        %440 = vmatprep.subr.bf16.mxu0 0
        %441 = vmatpush1.bf16.msra.mxu0 0
        %442 = vmatprep.subr.bf16.mxu0 0
        %443 = vmatpush1.bf16.msra.mxu0 %v380
        %444 = vmatprep.subr.bf16.mxu0 0
        %445 = vmatpush1.bf16.msra.mxu0 %v379
        %446 = vmatprep.subr.bf16.mxu0 0
        %447 = vmatpush1.bf16.msra.mxu0 %v378
        %448 = vmatprep.subr.bf16.mxu0 0
        %449 = vmatpush1.bf16.msra.mxu0 %v377
        %450 = vmatprep.subr.bf16.mxu0 0
        %451 = vmatpush2.bf16.msra.mxu0 0
        %452 = vmatprep.subr.bf16.mxu0 0
        %453 = vmatpush2.bf16.msra.mxu0 0
        %454 = vmatprep.subr.bf16.mxu0 0
        %455 = vmatpush2.bf16.msra.mxu0 0
        %456 = vmatprep.subr.bf16.mxu0 0
        %457 = vmatpush2.bf16.msra.mxu0 0
        %458 = vmatprep.subr.bf16.mxu0 0
        %459 = vmatpush2.bf16.msra.mxu0 0
        %460 = vmatprep.subr.bf16.mxu0 0
        %461 = vmatpush2.bf16.msra.mxu0 0
        %462 = vmatprep.subr.bf16.mxu0 0
        %463 = vmatpush2.bf16.msra.mxu0 0
        %464 = vmatprep.subr.bf16.mxu0 0
        %465 = vmatpush2.bf16.msra.mxu0 0
        %466 = vmatprep.mubr.bf16.mxu0 0
        %467 = vmatmul.mubr.bf16.gmra.mxu0 %v387
        %v468 = vpop.f32.mrf.mxu0
        %v469 = vadd.f32 %v359, %v468
        %v470 = vpop.f32.mrf.mxu0
        %v471 = vpop.f32.mrf.mxu0
        %v472 = vadd.f32 %v359, %v471
        %v473 = vpop.f32.mrf.mxu0
        %474 = vmatprep.mubr.bf16.mxu0 0
        %475 = vmatmul.mubr.bf16.gmra.mxu0 %v390
        %v476 = vpop.f32.mrf.mxu0
        %v477 = vadd.f32 %v359, %v476
        %v478 = vpop.f32.mrf.mxu0
        %v479 = vpop.f32.mrf.mxu0
        %v480 = vadd.f32 %v359, %v479
        %v481 = vpop.f32.mrf.mxu0
        %482 = vmatprep.mubr.bf16.mxu0 0
        %483 = vmatmul.mubr.bf16.gmra.mxu0 %v393
        %v484 = vpop.f32.mrf.mxu0
        %v485 = vadd.f32 %v359, %v484
        %v486 = vpop.f32.mrf.mxu0
        %v487 = vpop.f32.mrf.mxu0
        %v488 = vadd.f32 %v359, %v487
        %v489 = vpop.f32.mrf.mxu0
        %490 = vmatprep.mubr.bf16.mxu0 0
        %491 = vmatmul.mubr.bf16.gmra.mxu0 %v396
        %v492 = vpop.f32.mrf.mxu0
        %v493 = vadd.f32 %v359, %v492
        %v494 = vpop.f32.mrf.mxu0
        %v495 = vpop.f32.mrf.mxu0
        %v496 = vadd.f32 %v359, %v495
        %v497 = vpop.f32.mrf.mxu0
        %498 = vmatprep.mubr.bf16.mxu0 0
        %499 = vmatmul.mubr.bf16.gmra.mxu0 %v399
        %v500 = vpop.f32.mrf.mxu0
        %v501 = vadd.f32 %v359, %v500
        %v502 = vpop.f32.mrf.mxu0
        %v503 = vpop.f32.mrf.mxu0
        %v504 = vadd.f32 %v359, %v503
        %v505 = vpop.f32.mrf.mxu0
        %506 = vmatprep.mubr.bf16.mxu0 0
        %507 = vmatmul.mubr.bf16.gmra.mxu0 %v402
        %v508 = vpop.f32.mrf.mxu0
        %v509 = vadd.f32 %v359, %v508
        %v510 = vpop.f32.mrf.mxu0
        %v511 = vpop.f32.mrf.mxu0
        %v512 = vadd.f32 %v359, %v511
        %v513 = vpop.f32.mrf.mxu0
        %514 = vmatprep.mubr.bf16.mxu0 0
        %515 = vmatmul.mubr.bf16.gmra.mxu0 %v405
        %v516 = vpop.f32.mrf.mxu0
        %v517 = vadd.f32 %v359, %v516
        %v518 = vpop.f32.mrf.mxu0
        %v519 = vpop.f32.mrf.mxu0
        %v520 = vadd.f32 %v359, %v519
        %v521 = vpop.f32.mrf.mxu0
        %522 = vmatprep.mubr.bf16.mxu0 0
        %523 = vmatmul.mubr.bf16.gmra.mxu0 %v408
        %v524 = vpop.f32.mrf.mxu0
        %v525 = vadd.f32 %v359, %v524
        %v526 = vpop.f32.mrf.mxu0
        %v527 = vpop.f32.mrf.mxu0
        %v528 = vadd.f32 %v359, %v527
        %v529 = vpop.f32.mrf.mxu0
        %530 = vmatprep.mubr.bf16.mxu0 0
        %531 = vmatmul.mubr.bf16.gmra.mxu0 %v411
        %v532 = vpop.f32.mrf.mxu0
        %v533 = vadd.f32 %v359, %v532
        %v534 = vpop.f32.mrf.mxu0
        %v535 = vpop.f32.mrf.mxu0
        %v536 = vadd.f32 %v359, %v535
        %v537 = vpop.f32.mrf.mxu0
        %538 = vmatprep.mubr.bf16.mxu0 0
        %539 = vmatmul.mubr.bf16.gmra.mxu0 %v414
        %v540 = vpop.f32.mrf.mxu0
        %v541 = vadd.f32 %v359, %v540
        %v542 = vpop.f32.mrf.mxu0
        %v543 = vpop.f32.mrf.mxu0
        %v544 = vadd.f32 %v359, %v543
        %v545 = vpop.f32.mrf.mxu0
        %546 = vmatprep.mubr.bf16.mxu0 0
        %547 = vmatmul.mubr.bf16.gmra.mxu0 %v417
        %v548 = vpop.f32.mrf.mxu0
        %v549 = vadd.f32 %v359, %v548
        %v550 = vpop.f32.mrf.mxu0
        %v551 = vpop.f32.mrf.mxu0
        %v552 = vadd.f32 %v359, %v551
        %v553 = vpop.f32.mrf.mxu0
        %554 = vmatprep.mubr.bf16.mxu0 0
        %555 = vmatmul.mubr.bf16.gmra.mxu0 %v420
        %v556 = vpop.f32.mrf.mxu0
        %v557 = vadd.f32 %v359, %v556
        %v558 = vpop.f32.mrf.mxu0
        %v559 = vpop.f32.mrf.mxu0
        %v560 = vadd.f32 %v359, %v559
        %v561 = vpop.f32.mrf.mxu0
        %562 = vmatprep.mubr.bf16.mxu0 0
        %563 = vmatmul.mubr.bf16.gmra.mxu0 %v423
        %v564 = vpop.f32.mrf.mxu0
        %v565 = vadd.f32 %v359, %v564
        %v566 = vpop.f32.mrf.mxu0
        %v567 = vpop.f32.mrf.mxu0
        %v568 = vadd.f32 %v359, %v567
        %v569 = vpop.f32.mrf.mxu0
        %570 = vmatprep.mubr.bf16.mxu0 0
        %571 = vmatmul.mubr.bf16.gmra.mxu0 %v426
        %v572 = vpop.f32.mrf.mxu0
        %v573 = vadd.f32 %v359, %v572
        %v574 = vpop.f32.mrf.mxu0
        %v575 = vpop.f32.mrf.mxu0
        %v576 = vadd.f32 %v359, %v575
        %v577 = vpop.f32.mrf.mxu0
        %578 = vmatprep.mubr.bf16.mxu0 0
        %579 = vmatmul.mubr.bf16.gmra.mxu0 %v429
        %v580 = vpop.f32.mrf.mxu0
        %v581 = vadd.f32 %v359, %v580
        %v582 = vpop.f32.mrf.mxu0
        %v583 = vpop.f32.mrf.mxu0
        %v584 = vadd.f32 %v359, %v583
        %v585 = vpop.f32.mrf.mxu0
        %586 = vmatprep.mubr.bf16.mxu0 0
        %587 = vmatmul.mubr.bf16.gmra.mxu0 %v432
        %v588 = vpop.f32.mrf.mxu0
        %v589 = vadd.f32 %v359, %v588
        %v590 = vpop.f32.mrf.mxu0
        %v591 = vpop.f32.mrf.mxu0
        %v592 = vadd.f32 %v359, %v591
        %v593 = vpop.f32.mrf.mxu0
        %594 = vdwg.mxu0
        %v595 = vmax.f32 %v469, 0.0
        %v596 = vmax.f32 %v472, 0.0
        %v597 = vmax.f32 %v477, 0.0
        %v598 = vmax.f32 %v480, 0.0
        %v599 = vmax.f32 %v485, 0.0
        %v600 = vmax.f32 %v488, 0.0
        %v601 = vmax.f32 %v493, 0.0
        %v602 = vmax.f32 %v496, 0.0
        %v603 = vmax.f32 %v501, 0.0
        %v604 = vmax.f32 %v504, 0.0
        %v605 = vmax.f32 %v509, 0.0
        %v606 = vmax.f32 %v512, 0.0
        %v607 = vmax.f32 %v517, 0.0
        %v608 = vmax.f32 %v520, 0.0
        %v609 = vmax.f32 %v525, 0.0
        %v610 = vmax.f32 %v528, 0.0
        %v611 = vmax.f32 %v533, 0.0
        %v612 = vmax.f32 %v536, 0.0
        %v613 = vmax.f32 %v541, 0.0
        %v614 = vmax.f32 %v544, 0.0
        %v615 = vmax.f32 %v549, 0.0
        %v616 = vmax.f32 %v552, 0.0
        %v617 = vmax.f32 %v557, 0.0
        %v618 = vmax.f32 %v560, 0.0
        %v619 = vmax.f32 %v565, 0.0
        %v620 = vmax.f32 %v568, 0.0
        %v621 = vmax.f32 %v573, 0.0
        %v622 = vmax.f32 %v576, 0.0
        %v623 = vmax.f32 %v581, 0.0
        %v624 = vmax.f32 %v584, 0.0
        %v625 = vmax.f32 %v589, 0.0
        %v626 = vmax.f32 %v592, 0.0
        %vm627 = vcmask 130048
        %628 = vst.msk [vmem:[#allocation2] sm:$0xff] %vm627, 0.0
        %629 = vst.msk [vmem:[#allocation2 + $0x8] sm:$0xff] %vm627, 0.0
        %vm630 = vcmask 123904
        %631 = vst.msk [vmem:[#allocation2 + $0x10] sm:$0x3] %vm630, 0.0
        %s632 = scalar_lea.vmem [#allocation2], 408
        %633 = vst.msk [vmem:[%s632] sm:$0xff] %vm627, 0.0
        %634 = vst.msk [vmem:[%s632 + $0x8] sm:$0xff] %vm627, 0.0
        %635 = vst.msk [vmem:[%s632 + $0x10] sm:$0x3] %vm630, 0.0
        %s636 = scalar_lea.vmem [#allocation2], 24
        %vm637 = vcmask 122880
        %638 = vst.msk [vmem:[%s636] sm:$0x1] %vm637, 0.0
        %639 = vst.msk [vmem:[%s636 + $0x18] sm:$0x1] %vm637, 0.0
        %640 = vst.msk [vmem:[%s636 + $0x30] sm:$0x1] %vm637, 0.0
        %641 = vst.msk [vmem:[%s636 + $0x48] sm:$0x1] %vm637, 0.0
        %642 = vst.msk [vmem:[%s636 + $0x60] sm:$0x1] %vm637, 0.0
        %643 = vst.msk [vmem:[%s636 + $0x78] sm:$0x1] %vm637, 0.0
        %644 = vst.msk [vmem:[%s636 + $0x90] sm:$0x1] %vm637, 0.0
        %645 = vst.msk [vmem:[%s636 + $0xa8] sm:$0x1] %vm637, 0.0
        %646 = vst.msk [vmem:[%s636 + $0xc0] sm:$0x1] %vm637, 0.0
        %647 = vst.msk [vmem:[%s636 + $0xd8] sm:$0x1] %vm637, 0.0
        %648 = vst.msk [vmem:[%s636 + $0xf0] sm:$0x1] %vm637, 0.0
        %649 = vst.msk [vmem:[%s636 + $0x108] sm:$0x1] %vm637, 0.0
        %650 = vst.msk [vmem:[%s636 + $0x120] sm:$0x1] %vm637, 0.0
        %651 = vst.msk [vmem:[%s636 + $0x138] sm:$0x1] %vm637, 0.0
        %652 = vst.msk [vmem:[%s636 + $0x150] sm:$0x1] %vm637, 0.0
        %653 = vst.msk [vmem:[%s636 + $0x168] sm:$0x1] %vm637, 0.0
        %654 = vst.msk [vmem:[%s636 + $0x11] sm:$0x1] %vm637, 0.0
        %655 = vst.msk [vmem:[%s636 + $0x29] sm:$0x1] %vm637, 0.0
        %656 = vst.msk [vmem:[%s636 + $0x41] sm:$0x1] %vm637, 0.0
        %657 = vst.msk [vmem:[%s636 + $0x59] sm:$0x1] %vm637, 0.0
        %658 = vst.msk [vmem:[%s636 + $0x71] sm:$0x1] %vm637, 0.0
        %659 = vst.msk [vmem:[%s636 + $0x89] sm:$0x1] %vm637, 0.0
        %660 = vst.msk [vmem:[%s636 + $0xa1] sm:$0x1] %vm637, 0.0
        %661 = vst.msk [vmem:[%s636 + $0xb9] sm:$0x1] %vm637, 0.0
        %662 = vst.msk [vmem:[%s636 + $0xd1] sm:$0x1] %vm637, 0.0
        %663 = vst.msk [vmem:[%s636 + $0xe9] sm:$0x1] %vm637, 0.0
        %664 = vst.msk [vmem:[%s636 + $0x101] sm:$0x1] %vm637, 0.0
        %665 = vst.msk [vmem:[%s636 + $0x119] sm:$0x1] %vm637, 0.0
        %666 = vst.msk [vmem:[%s636 + $0x131] sm:$0x1] %vm637, 0.0
        %667 = vst.msk [vmem:[%s636 + $0x149] sm:$0x1] %vm637, 0.0
        %668 = vst.msk [vmem:[%s636 + $0x161] sm:$0x1] %vm637, 0.0
        %669 = vst.msk [vmem:[%s636 + $0x179] sm:$0x1] %vm637, 0.0
        %670 = vst.msk [vmem:[%s636 + $0x1] sm:$0xff] %vm627, %v595
        %671 = vst.msk [vmem:[%s636 + $0x9] sm:$0xff] %vm627, %v596
        %672 = vst.msk [vmem:[%s636 + $0x19] sm:$0xff] %vm627, %v597
        %673 = vst.msk [vmem:[%s636 + $0x21] sm:$0xff] %vm627, %v598
        %674 = vst.msk [vmem:[%s636 + $0x31] sm:$0xff] %vm627, %v599
        %675 = vst.msk [vmem:[%s636 + $0x39] sm:$0xff] %vm627, %v600
        %676 = vst.msk [vmem:[%s636 + $0x49] sm:$0xff] %vm627, %v601
        %677 = vst.msk [vmem:[%s636 + $0x51] sm:$0xff] %vm627, %v602
        %678 = vst.msk [vmem:[%s636 + $0x61] sm:$0xff] %vm627, %v603
        %679 = vst.msk [vmem:[%s636 + $0x69] sm:$0xff] %vm627, %v604
        %680 = vst.msk [vmem:[%s636 + $0x79] sm:$0xff] %vm627, %v605
        %681 = vst.msk [vmem:[%s636 + $0x81] sm:$0xff] %vm627, %v606
        %682 = vst.msk [vmem:[%s636 + $0x91] sm:$0xff] %vm627, %v607
        %683 = vst.msk [vmem:[%s636 + $0x99] sm:$0xff] %vm627, %v608
        %684 = vst.msk [vmem:[%s636 + $0xa9] sm:$0xff] %vm627, %v609
        %685 = vst.msk [vmem:[%s636 + $0xb1] sm:$0xff] %vm627, %v610
        %686 = vst.msk [vmem:[%s636 + $0xc1] sm:$0xff] %vm627, %v611
        %687 = vst.msk [vmem:[%s636 + $0xc9] sm:$0xff] %vm627, %v612
        %688 = vst.msk [vmem:[%s636 + $0xd9] sm:$0xff] %vm627, %v613
        %689 = vst.msk [vmem:[%s636 + $0xe1] sm:$0xff] %vm627, %v614
        %690 = vst.msk [vmem:[%s636 + $0xf1] sm:$0xff] %vm627, %v615
        %691 = vst.msk [vmem:[%s636 + $0xf9] sm:$0xff] %vm627, %v616
        %692 = vst.msk [vmem:[%s636 + $0x109] sm:$0xff] %vm627, %v617
        %693 = vst.msk [vmem:[%s636 + $0x111] sm:$0xff] %vm627, %v618
        %694 = vst.msk [vmem:[%s636 + $0x121] sm:$0xff] %vm627, %v619
        %695 = vst.msk [vmem:[%s636 + $0x129] sm:$0xff] %vm627, %v620
        %696 = vst.msk [vmem:[%s636 + $0x139] sm:$0xff] %vm627, %v621
        %697 = vst.msk [vmem:[%s636 + $0x141] sm:$0xff] %vm627, %v622
        %698 = vst.msk [vmem:[%s636 + $0x151] sm:$0xff] %vm627, %v623
        %699 = vst.msk [vmem:[%s636 + $0x159] sm:$0xff] %vm627, %v624
        %700 = vst.msk [vmem:[%s636 + $0x169] sm:$0xff] %vm627, %v625
        %701 = vst.msk [vmem:[%s636 + $0x171] sm:$0xff] %vm627, %v626
        %v702 = vld [vmem:[#allocation2] sm:$0xff]
        %v703 = vld [vmem:[#allocation2 + $0x8] sm:$0xff]
        %v704 = vld [vmem:[#allocation2 + $0x18] sm:$0xff]
        %v705 = vld [vmem:[#allocation2 + $0x20] sm:$0xff]
        %v706 = vld [vmem:[#allocation2 + $0x30] sm:$0xff]
        %v707 = vld [vmem:[#allocation2 + $0x38] sm:$0xff]
        %v708 = vld [vmem:[#allocation2 + $0x48] sm:$0xff]
        %v709 = vld [vmem:[#allocation2 + $0x50] sm:$0xff]
        %v710 = vld [vmem:[#allocation2 + $0x60] sm:$0xff]
        %v711 = vld [vmem:[#allocation2 + $0x68] sm:$0xff]
        %v712 = vld [vmem:[#allocation2 + $0x78] sm:$0xff]
        %v713 = vld [vmem:[#allocation2 + $0x80] sm:$0xff]
        %v714 = vld [vmem:[#allocation2 + $0x90] sm:$0xff]
        %v715 = vld [vmem:[#allocation2 + $0x98] sm:$0xff]
        %v716 = vld [vmem:[#allocation2 + $0xa8] sm:$0xff]
        %v717 = vld [vmem:[#allocation2 + $0xb0] sm:$0xff]
        %v718 = vld [vmem:[#allocation2 + $0xc0] sm:$0xff]
        %v719 = vld [vmem:[#allocation2 + $0xc8] sm:$0xff]
        %v720 = vld [vmem:[#allocation2 + $0xd8] sm:$0xff]
        %v721 = vld [vmem:[#allocation2 + $0xe0] sm:$0xff]
        %v722 = vld [vmem:[#allocation2 + $0xf0] sm:$0xff]
        %v723 = vld [vmem:[#allocation2 + $0xf8] sm:$0xff]
        %v724 = vld [vmem:[#allocation2 + $0x108] sm:$0xff]
        %v725 = vld [vmem:[#allocation2 + $0x110] sm:$0xff]
        %v726 = vld [vmem:[#allocation2 + $0x120] sm:$0xff]
        %v727 = vld [vmem:[#allocation2 + $0x128] sm:$0xff]
        %v728 = vld [vmem:[#allocation2 + $0x138] sm:$0xff]
        %v729 = vld [vmem:[#allocation2 + $0x140] sm:$0xff]
        %v730 = vld [vmem:[#allocation2 + $0x150] sm:$0xff]
        %v731 = vld [vmem:[#allocation2 + $0x158] sm:$0xff]
        %v732 = vld [vmem:[#allocation2 + $0x168] sm:$0xff]
        %v733 = vld [vmem:[#allocation2 + $0x170] sm:$0xff]
        %v734 = vld [vmem:[#allocation2 + $0x1] sm:$0xff]
        %v735 = vld [vmem:[#allocation2 + $0x9] sm:$0xff]
        %v736 = vld [vmem:[#allocation2 + $0x19] sm:$0xff]
        %v737 = vld [vmem:[#allocation2 + $0x21] sm:$0xff]
        %v738 = vld [vmem:[#allocation2 + $0x31] sm:$0xff]
        %v739 = vld [vmem:[#allocation2 + $0x39] sm:$0xff]
        %v740 = vld [vmem:[#allocation2 + $0x49] sm:$0xff]
        %v741 = vld [vmem:[#allocation2 + $0x51] sm:$0xff]
        %v742 = vld [vmem:[#allocation2 + $0x61] sm:$0xff]
        %v743 = vld [vmem:[#allocation2 + $0x69] sm:$0xff]
        %v744 = vld [vmem:[#allocation2 + $0x79] sm:$0xff]
        %v745 = vld [vmem:[#allocation2 + $0x81] sm:$0xff]
        %v746 = vld [vmem:[#allocation2 + $0x91] sm:$0xff]
        %v747 = vld [vmem:[#allocation2 + $0x99] sm:$0xff]
        %v748 = vld [vmem:[#allocation2 + $0xa9] sm:$0xff]
        %v749 = vld [vmem:[#allocation2 + $0xb1] sm:$0xff]
        %v750 = vld [vmem:[#allocation2 + $0xc1] sm:$0xff]
        %v751 = vld [vmem:[#allocation2 + $0xc9] sm:$0xff]
        %v752 = vld [vmem:[#allocation2 + $0xd9] sm:$0xff]
        %v753 = vld [vmem:[#allocation2 + $0xe1] sm:$0xff]
        %v754 = vld [vmem:[#allocation2 + $0xf1] sm:$0xff]
        %v755 = vld [vmem:[#allocation2 + $0xf9] sm:$0xff]
        %v756 = vld [vmem:[#allocation2 + $0x109] sm:$0xff]
        %v757 = vld [vmem:[#allocation2 + $0x111] sm:$0xff]
        %v758 = vld [vmem:[#allocation2 + $0x121] sm:$0xff]
        %v759 = vld [vmem:[#allocation2 + $0x129] sm:$0xff]
        %v760 = vld [vmem:[#allocation2 + $0x139] sm:$0xff]
        %v761 = vld [vmem:[#allocation2 + $0x141] sm:$0xff]
        %v762 = vld [vmem:[#allocation2 + $0x151] sm:$0xff]
        %v763 = vld [vmem:[#allocation2 + $0x159] sm:$0xff]
        %v764 = vld [vmem:[#allocation2 + $0x169] sm:$0xff]
        %v765 = vld [vmem:[#allocation2 + $0x171] sm:$0xff]
        %v766 = vld [vmem:[#allocation2 + $0x2] sm:$0xff]
        %v767 = vld [vmem:[#allocation2 + $0xa] sm:$0xff]
        %v768 = vld [vmem:[#allocation2 + $0x1a] sm:$0xff]
        %v769 = vld [vmem:[#allocation2 + $0x22] sm:$0xff]
        %v770 = vld [vmem:[#allocation2 + $0x32] sm:$0xff]
        %v771 = vld [vmem:[#allocation2 + $0x3a] sm:$0xff]
        %v772 = vld [vmem:[#allocation2 + $0x4a] sm:$0xff]
        %v773 = vld [vmem:[#allocation2 + $0x52] sm:$0xff]
        %v774 = vld [vmem:[#allocation2 + $0x62] sm:$0xff]
        %v775 = vld [vmem:[#allocation2 + $0x6a] sm:$0xff]
        %v776 = vld [vmem:[#allocation2 + $0x7a] sm:$0xff]
        %v777 = vld [vmem:[#allocation2 + $0x82] sm:$0xff]
        %v778 = vld [vmem:[#allocation2 + $0x92] sm:$0xff]
        %v779 = vld [vmem:[#allocation2 + $0x9a] sm:$0xff]
        %v780 = vld [vmem:[#allocation2 + $0xaa] sm:$0xff]
        %v781 = vld [vmem:[#allocation2 + $0xb2] sm:$0xff]
        %v782 = vld [vmem:[#allocation2 + $0xc2] sm:$0xff]
        %v783 = vld [vmem:[#allocation2 + $0xca] sm:$0xff]
        %v784 = vld [vmem:[#allocation2 + $0xda] sm:$0xff]
        %v785 = vld [vmem:[#allocation2 + $0xe2] sm:$0xff]
        %v786 = vld [vmem:[#allocation2 + $0xf2] sm:$0xff]
        %v787 = vld [vmem:[#allocation2 + $0xfa] sm:$0xff]
        %v788 = vld [vmem:[#allocation2 + $0x10a] sm:$0xff]
        %v789 = vld [vmem:[#allocation2 + $0x112] sm:$0xff]
        %v790 = vld [vmem:[#allocation2 + $0x122] sm:$0xff]
        %v791 = vld [vmem:[#allocation2 + $0x12a] sm:$0xff]
        %v792 = vld [vmem:[#allocation2 + $0x13a] sm:$0xff]
        %v793 = vld [vmem:[#allocation2 + $0x142] sm:$0xff]
        %v794 = vld [vmem:[#allocation2 + $0x152] sm:$0xff]
        %v795 = vld [vmem:[#allocation2 + $0x15a] sm:$0xff]
        %v796 = vld [vmem:[#allocation2 + $0x16a] sm:$0xff]
        %v797 = vld [vmem:[#allocation2 + $0x172] sm:$0xff]
        %v798 = vld [vmem:[%s636] sm:$0xff]
        %v799 = vld [vmem:[%s636 + $0x8] sm:$0xff]
        %v800 = vld [vmem:[%s636 + $0x18] sm:$0xff]
        %v801 = vld [vmem:[%s636 + $0x20] sm:$0xff]
        %v802 = vld [vmem:[%s636 + $0x30] sm:$0xff]
        %v803 = vld [vmem:[%s636 + $0x38] sm:$0xff]
        %v804 = vld [vmem:[%s636 + $0x48] sm:$0xff]
        %v805 = vld [vmem:[%s636 + $0x50] sm:$0xff]
        %v806 = vld [vmem:[%s636 + $0x60] sm:$0xff]
        %v807 = vld [vmem:[%s636 + $0x68] sm:$0xff]
        %v808 = vld [vmem:[%s636 + $0x78] sm:$0xff]
        %v809 = vld [vmem:[%s636 + $0x80] sm:$0xff]
        %v810 = vld [vmem:[%s636 + $0x90] sm:$0xff]
        %v811 = vld [vmem:[%s636 + $0x98] sm:$0xff]
        %v812 = vld [vmem:[%s636 + $0xa8] sm:$0xff]
        %v813 = vld [vmem:[%s636 + $0xb0] sm:$0xff]
        %v814 = vld [vmem:[%s636 + $0xc0] sm:$0xff]
        %v815 = vld [vmem:[%s636 + $0xc8] sm:$0xff]
        %v816 = vld [vmem:[%s636 + $0xd8] sm:$0xff]
        %v817 = vld [vmem:[%s636 + $0xe0] sm:$0xff]
        %v818 = vld [vmem:[%s636 + $0xf0] sm:$0xff]
        %v819 = vld [vmem:[%s636 + $0xf8] sm:$0xff]
        %v820 = vld [vmem:[%s636 + $0x108] sm:$0xff]
        %v821 = vld [vmem:[%s636 + $0x110] sm:$0xff]
        %v822 = vld [vmem:[%s636 + $0x120] sm:$0xff]
        %v823 = vld [vmem:[%s636 + $0x128] sm:$0xff]
        %v824 = vld [vmem:[%s636 + $0x138] sm:$0xff]
        %v825 = vld [vmem:[%s636 + $0x140] sm:$0xff]
        %v826 = vld [vmem:[%s636 + $0x150] sm:$0xff]
        %v827 = vld [vmem:[%s636 + $0x158] sm:$0xff]
        %v828 = vld [vmem:[%s636 + $0x168] sm:$0xff]
        %v829 = vld [vmem:[%s636 + $0x170] sm:$0xff]
        %v830 = vld [vmem:[%s636 + $0x1] sm:$0xff]
        %v831 = vld [vmem:[%s636 + $0x9] sm:$0xff]
        %v832 = vld [vmem:[%s636 + $0x19] sm:$0xff]
        %v833 = vld [vmem:[%s636 + $0x21] sm:$0xff]
        %v834 = vld [vmem:[%s636 + $0x31] sm:$0xff]
        %v835 = vld [vmem:[%s636 + $0x39] sm:$0xff]
        %v836 = vld [vmem:[%s636 + $0x49] sm:$0xff]
        %v837 = vld [vmem:[%s636 + $0x51] sm:$0xff]
        %v838 = vld [vmem:[%s636 + $0x61] sm:$0xff]
        %v839 = vld [vmem:[%s636 + $0x69] sm:$0xff]
        %v840 = vld [vmem:[%s636 + $0x79] sm:$0xff]
        %v841 = vld [vmem:[%s636 + $0x81] sm:$0xff]
        %v842 = vld [vmem:[%s636 + $0x91] sm:$0xff]
        %v843 = vld [vmem:[%s636 + $0x99] sm:$0xff]
        %v844 = vld [vmem:[%s636 + $0xa9] sm:$0xff]
        %v845 = vld [vmem:[%s636 + $0xb1] sm:$0xff]
        %v846 = vld [vmem:[%s636 + $0xc1] sm:$0xff]
        %v847 = vld [vmem:[%s636 + $0xc9] sm:$0xff]
        %v848 = vld [vmem:[%s636 + $0xd9] sm:$0xff]
        %v849 = vld [vmem:[%s636 + $0xe1] sm:$0xff]
        %v850 = vld [vmem:[%s636 + $0xf1] sm:$0xff]
        %v851 = vld [vmem:[%s636 + $0xf9] sm:$0xff]
        %v852 = vld [vmem:[%s636 + $0x109] sm:$0xff]
        %v853 = vld [vmem:[%s636 + $0x111] sm:$0xff]
        %v854 = vld [vmem:[%s636 + $0x121] sm:$0xff]
        %v855 = vld [vmem:[%s636 + $0x129] sm:$0xff]
        %v856 = vld [vmem:[%s636 + $0x139] sm:$0xff]
        %v857 = vld [vmem:[%s636 + $0x141] sm:$0xff]
        %v858 = vld [vmem:[%s636 + $0x151] sm:$0xff]
        %v859 = vld [vmem:[%s636 + $0x159] sm:$0xff]
        %v860 = vld [vmem:[%s636 + $0x169] sm:$0xff]
        %v861 = vld [vmem:[%s636 + $0x171] sm:$0xff]
        %v862 = vld [vmem:[%s636 + $0x2] sm:$0xff]
        %v863 = vld [vmem:[%s636 + $0xa] sm:$0xff]
        %v864 = vld [vmem:[%s636 + $0x1a] sm:$0xff]
        %v865 = vld [vmem:[%s636 + $0x22] sm:$0xff]
        %v866 = vld [vmem:[%s636 + $0x32] sm:$0xff]
        %v867 = vld [vmem:[%s636 + $0x3a] sm:$0xff]
        %v868 = vld [vmem:[%s636 + $0x4a] sm:$0xff]
        %v869 = vld [vmem:[%s636 + $0x52] sm:$0xff]
        %v870 = vld [vmem:[%s636 + $0x62] sm:$0xff]
        %v871 = vld [vmem:[%s636 + $0x6a] sm:$0xff]
        %v872 = vld [vmem:[%s636 + $0x7a] sm:$0xff]
        %v873 = vld [vmem:[%s636 + $0x82] sm:$0xff]
        %v874 = vld [vmem:[%s636 + $0x92] sm:$0xff]
        %v875 = vld [vmem:[%s636 + $0x9a] sm:$0xff]
        %v876 = vld [vmem:[%s636 + $0xaa] sm:$0xff]
        %v877 = vld [vmem:[%s636 + $0xb2] sm:$0xff]
        %v878 = vld [vmem:[%s636 + $0xc2] sm:$0xff]
        %v879 = vld [vmem:[%s636 + $0xca] sm:$0xff]
        %v880 = vld [vmem:[%s636 + $0xda] sm:$0xff]
        %v881 = vld [vmem:[%s636 + $0xe2] sm:$0xff]
        %v882 = vld [vmem:[%s636 + $0xf2] sm:$0xff]
        %v883 = vld [vmem:[%s636 + $0xfa] sm:$0xff]
        %v884 = vld [vmem:[%s636 + $0x10a] sm:$0xff]
        %v885 = vld [vmem:[%s636 + $0x112] sm:$0xff]
        %v886 = vld [vmem:[%s636 + $0x122] sm:$0xff]
        %v887 = vld [vmem:[%s636 + $0x12a] sm:$0xff]
        %v888 = vld [vmem:[%s636 + $0x13a] sm:$0xff]
        %v889 = vld [vmem:[%s636 + $0x142] sm:$0xff]
        %v890 = vld [vmem:[%s636 + $0x152] sm:$0xff]
        %v891 = vld [vmem:[%s636 + $0x15a] sm:$0xff]
        %v892 = vld [vmem:[%s636 + $0x16a] sm:$0xff]
        %v893 = vld [vmem:[%s636 + $0x172] sm:$0xff]
        %s894 = scalar_lea.vmem [#allocation2], 48
        %v895 = vld [vmem:[%s894] sm:$0xff]
        %v896 = vld [vmem:[%s894 + $0x8] sm:$0xff]
        %v897 = vld [vmem:[%s894 + $0x18] sm:$0xff]
        %v898 = vld [vmem:[%s894 + $0x20] sm:$0xff]
        %v899 = vld [vmem:[%s894 + $0x30] sm:$0xff]
        %v900 = vld [vmem:[%s894 + $0x38] sm:$0xff]
        %v901 = vld [vmem:[%s894 + $0x48] sm:$0xff]
        %v902 = vld [vmem:[%s894 + $0x50] sm:$0xff]
        %v903 = vld [vmem:[%s894 + $0x60] sm:$0xff]
        %v904 = vld [vmem:[%s894 + $0x68] sm:$0xff]
        %v905 = vld [vmem:[%s894 + $0x78] sm:$0xff]
        %v906 = vld [vmem:[%s894 + $0x80] sm:$0xff]
        %v907 = vld [vmem:[%s894 + $0x90] sm:$0xff]
        %v908 = vld [vmem:[%s894 + $0x98] sm:$0xff]
        %v909 = vld [vmem:[%s894 + $0xa8] sm:$0xff]
        %v910 = vld [vmem:[%s894 + $0xb0] sm:$0xff]
        %v911 = vld [vmem:[%s894 + $0xc0] sm:$0xff]
        %v912 = vld [vmem:[%s894 + $0xc8] sm:$0xff]
        %v913 = vld [vmem:[%s894 + $0xd8] sm:$0xff]
        %v914 = vld [vmem:[%s894 + $0xe0] sm:$0xff]
        %v915 = vld [vmem:[%s894 + $0xf0] sm:$0xff]
        %v916 = vld [vmem:[%s894 + $0xf8] sm:$0xff]
        %v917 = vld [vmem:[%s894 + $0x108] sm:$0xff]
        %v918 = vld [vmem:[%s894 + $0x110] sm:$0xff]
        %v919 = vld [vmem:[%s894 + $0x120] sm:$0xff]
        %v920 = vld [vmem:[%s894 + $0x128] sm:$0xff]
        %v921 = vld [vmem:[%s894 + $0x138] sm:$0xff]
        %v922 = vld [vmem:[%s894 + $0x140] sm:$0xff]
        %v923 = vld [vmem:[%s894 + $0x150] sm:$0xff]
        %v924 = vld [vmem:[%s894 + $0x158] sm:$0xff]
        %v925 = vld [vmem:[%s894 + $0x168] sm:$0xff]
        %v926 = vld [vmem:[%s894 + $0x170] sm:$0xff]
        %v927 = vld [vmem:[%s894 + $0x1] sm:$0xff]
        %v928 = vld [vmem:[%s894 + $0x9] sm:$0xff]
        %v929 = vld [vmem:[%s894 + $0x19] sm:$0xff]
        %v930 = vld [vmem:[%s894 + $0x21] sm:$0xff]
        %v931 = vld [vmem:[%s894 + $0x31] sm:$0xff]
        %v932 = vld [vmem:[%s894 + $0x39] sm:$0xff]
        %v933 = vld [vmem:[%s894 + $0x49] sm:$0xff]
        %v934 = vld [vmem:[%s894 + $0x51] sm:$0xff]
        %v935 = vld [vmem:[%s894 + $0x61] sm:$0xff]
        %v936 = vld [vmem:[%s894 + $0x69] sm:$0xff]
        %v937 = vld [vmem:[%s894 + $0x79] sm:$0xff]
        %v938 = vld [vmem:[%s894 + $0x81] sm:$0xff]
        %v939 = vld [vmem:[%s894 + $0x91] sm:$0xff]
        %v940 = vld [vmem:[%s894 + $0x99] sm:$0xff]
        %v941 = vld [vmem:[%s894 + $0xa9] sm:$0xff]
        %v942 = vld [vmem:[%s894 + $0xb1] sm:$0xff]
        %v943 = vld [vmem:[%s894 + $0xc1] sm:$0xff]
        %v944 = vld [vmem:[%s894 + $0xc9] sm:$0xff]
        %v945 = vld [vmem:[%s894 + $0xd9] sm:$0xff]
        %v946 = vld [vmem:[%s894 + $0xe1] sm:$0xff]
        %v947 = vld [vmem:[%s894 + $0xf1] sm:$0xff]
        %v948 = vld [vmem:[%s894 + $0xf9] sm:$0xff]
        %v949 = vld [vmem:[%s894 + $0x109] sm:$0xff]
        %v950 = vld [vmem:[%s894 + $0x111] sm:$0xff]
        %v951 = vld [vmem:[%s894 + $0x121] sm:$0xff]
        %v952 = vld [vmem:[%s894 + $0x129] sm:$0xff]
        %v953 = vld [vmem:[%s894 + $0x139] sm:$0xff]
        %v954 = vld [vmem:[%s894 + $0x141] sm:$0xff]
        %v955 = vld [vmem:[%s894 + $0x151] sm:$0xff]
        %v956 = vld [vmem:[%s894 + $0x159] sm:$0xff]
        %v957 = vld [vmem:[%s894 + $0x169] sm:$0xff]
        %v958 = vld [vmem:[%s894 + $0x171] sm:$0xff]
        %v959 = vld [vmem:[%s894 + $0x2] sm:$0xff]
        %v960 = vld [vmem:[%s894 + $0xa] sm:$0xff]
        %v961 = vld [vmem:[%s894 + $0x1a] sm:$0xff]
        %v962 = vld [vmem:[%s894 + $0x22] sm:$0xff]
        %v963 = vld [vmem:[%s894 + $0x32] sm:$0xff]
        %v964 = vld [vmem:[%s894 + $0x3a] sm:$0xff]
        %v965 = vld [vmem:[%s894 + $0x4a] sm:$0xff]
        %v966 = vld [vmem:[%s894 + $0x52] sm:$0xff]
        %v967 = vld [vmem:[%s894 + $0x62] sm:$0xff]
        %v968 = vld [vmem:[%s894 + $0x6a] sm:$0xff]
        %v969 = vld [vmem:[%s894 + $0x7a] sm:$0xff]
        %v970 = vld [vmem:[%s894 + $0x82] sm:$0xff]
        %v971 = vld [vmem:[%s894 + $0x92] sm:$0xff]
        %v972 = vld [vmem:[%s894 + $0x9a] sm:$0xff]
        %v973 = vld [vmem:[%s894 + $0xaa] sm:$0xff]
        %v974 = vld [vmem:[%s894 + $0xb2] sm:$0xff]
        %v975 = vld [vmem:[%s894 + $0xc2] sm:$0xff]
        %v976 = vld [vmem:[%s894 + $0xca] sm:$0xff]
        %v977 = vld [vmem:[%s894 + $0xda] sm:$0xff]
        %v978 = vld [vmem:[%s894 + $0xe2] sm:$0xff]
        %v979 = vld [vmem:[%s894 + $0xf2] sm:$0xff]
        %v980 = vld [vmem:[%s894 + $0xfa] sm:$0xff]
        %v981 = vld [vmem:[%s894 + $0x10a] sm:$0xff]
        %v982 = vld [vmem:[%s894 + $0x112] sm:$0xff]
        %v983 = vld [vmem:[%s894 + $0x122] sm:$0xff]
        %v984 = vld [vmem:[%s894 + $0x12a] sm:$0xff]
        %v985 = vld [vmem:[%s894 + $0x13a] sm:$0xff]
        %v986 = vld [vmem:[%s894 + $0x142] sm:$0xff]
        %v987 = vld [vmem:[%s894 + $0x152] sm:$0xff]
        %v988 = vld [vmem:[%s894 + $0x15a] sm:$0xff]
        %v989 = vld [vmem:[%s894 + $0x16a] sm:$0xff]
        %v990 = vld [vmem:[%s894 + $0x172] sm:$0xff]
        %v991 = vpack.c.bf16 %v703, %v702
        %v992 = vpack.c.bf16 %v705, %v704
        %v993 = vpack.c.bf16 %v707, %v706
        %v994 = vpack.c.bf16 %v709, %v708
        %v995 = vpack.c.bf16 %v711, %v710
        %v996 = vpack.c.bf16 %v713, %v712
        %v997 = vpack.c.bf16 %v715, %v714
        %v998 = vpack.c.bf16 %v717, %v716
        %v999 = vpack.c.bf16 %v719, %v718
        %v1000 = vpack.c.bf16 %v721, %v720
        %v1001 = vpack.c.bf16 %v723, %v722
        %v1002 = vpack.c.bf16 %v725, %v724
        %v1003 = vpack.c.bf16 %v727, %v726
        %v1004 = vpack.c.bf16 %v729, %v728
        %v1005 = vpack.c.bf16 %v731, %v730
        %v1006 = vpack.c.bf16 %v733, %v732
        %v1007 = vld [vmem:[%s3] sm:$0xf]
        %v1008 = vld [vmem:[%s3 + $0x4] sm:$0xf]
        %v1009 = vpack.c.bf16 %v735, %v734
        %v1010 = vpack.c.bf16 %v737, %v736
        %v1011 = vpack.c.bf16 %v739, %v738
        %v1012 = vpack.c.bf16 %v741, %v740
        %v1013 = vpack.c.bf16 %v743, %v742
        %v1014 = vpack.c.bf16 %v745, %v744
        %v1015 = vpack.c.bf16 %v747, %v746
        %v1016 = vpack.c.bf16 %v749, %v748
        %v1017 = vpack.c.bf16 %v751, %v750
        %v1018 = vpack.c.bf16 %v753, %v752
        %v1019 = vpack.c.bf16 %v755, %v754
        %v1020 = vpack.c.bf16 %v757, %v756
        %v1021 = vpack.c.bf16 %v759, %v758
        %v1022 = vpack.c.bf16 %v761, %v760
        %v1023 = vpack.c.bf16 %v763, %v762
        %v1024 = vpack.c.bf16 %v765, %v764
        %v1025 = vld [vmem:[%s3 + $0x8] sm:$0xf]
        %v1026 = vld [vmem:[%s3 + $0xc] sm:$0xf]
        %v1029 = vunpack.c.l.b16 %v1025
        %v1030 = vunpack.c.l.b16 %v1026
        %v1031 = vpack.c.b16 %v1030, %v1029
        %v1034 = vsel %vm627, %v1009, 0
        %v1037 = vsel %vm627, %v1010, 0
        %v1040 = vsel %vm627, %v1011, 0
        %v1043 = vsel %vm627, %v1012, 0
        %v1046 = vsel %vm627, %v1013, 0
        %v1049 = vsel %vm627, %v1014, 0
        %v1052 = vsel %vm627, %v1015, 0
        %v1055 = vsel %vm627, %v1016, 0
        %v1058 = vsel %vm627, %v1017, 0
        %v1061 = vsel %vm627, %v1018, 0
        %v1064 = vsel %vm627, %v1019, 0
        %v1067 = vsel %vm627, %v1020, 0
        %v1070 = vsel %vm627, %v1021, 0
        %v1073 = vsel %vm627, %v1022, 0
        %v1076 = vsel %vm627, %v1023, 0
        %v1079 = vsel %vm627, %v1024, 0
        %1081 = vmatprep.subr.bf16.mxu0 0
        %1082 = vmatpush1.bf16.msra.mxu0 0
        %1083 = vmatprep.subr.bf16.mxu0 0
        %1084 = vmatpush1.bf16.msra.mxu0 0
        %1085 = vmatprep.subr.bf16.mxu0 0
        %1086 = vmatpush1.bf16.msra.mxu0 0
        %1087 = vmatprep.subr.bf16.mxu0 0
        %1088 = vmatpush1.bf16.msra.mxu0 0
        %1089 = vmatprep.subr.bf16.mxu0 0
        %1090 = vmatpush1.bf16.msra.mxu0 0
        %1091 = vmatprep.subr.bf16.mxu0 0
        %1092 = vmatpush1.bf16.msra.mxu0 0
        %1093 = vmatprep.subr.bf16.mxu0 0
        %1094 = vmatpush1.bf16.msra.mxu0 0
        %1095 = vmatprep.subr.bf16.mxu0 0
        %1096 = vmatpush1.bf16.msra.mxu0 %v1031
        %1097 = vmatprep.subr.bf16.mxu0 0
        %1098 = vmatpush2.bf16.msra.mxu0 0
        %1099 = vmatprep.subr.bf16.mxu0 0
        %1100 = vmatpush2.bf16.msra.mxu0 0
        %1101 = vmatprep.subr.bf16.mxu0 0
        %1102 = vmatpush2.bf16.msra.mxu0 0
        %1103 = vmatprep.subr.bf16.mxu0 0
        %1104 = vmatpush2.bf16.msra.mxu0 0
        %1105 = vmatprep.subr.bf16.mxu0 0
        %1106 = vmatpush2.bf16.msra.mxu0 0
        %1107 = vmatprep.subr.bf16.mxu0 0
        %1108 = vmatpush2.bf16.msra.mxu0 0
        %1109 = vmatprep.subr.bf16.mxu0 0
        %1110 = vmatpush2.bf16.msra.mxu0 0
        %1111 = vmatprep.subr.bf16.mxu0 0
        %1112 = vmatpush2.bf16.msra.mxu0 0
        %1113 = vmatprep.mubr.bf16.mxu0 0
        %1114 = vmatmul.mubr.bf16.gmra.mxu0 %v1034
        %v1115 = vpop.f32.mrf.mxu0
        %v1116 = vadd.f32 0.0, %v1115
        %v1117 = vpop.f32.mrf.mxu0
        %v1118 = vpop.f32.mrf.mxu0
        %v1119 = vadd.f32 0.0, %v1118
        %v1120 = vpop.f32.mrf.mxu0
        %1121 = vmatprep.mubr.bf16.mxu0 0
        %1122 = vmatmul.mubr.bf16.gmra.mxu0 %v1037
        %v1123 = vpop.f32.mrf.mxu0
        %v1124 = vadd.f32 0.0, %v1123
        %v1125 = vpop.f32.mrf.mxu0
        %v1126 = vpop.f32.mrf.mxu0
        %v1127 = vadd.f32 0.0, %v1126
        %v1128 = vpop.f32.mrf.mxu0
        %1129 = vmatprep.mubr.bf16.mxu0 0
        %1130 = vmatmul.mubr.bf16.gmra.mxu0 %v1040
        %v1131 = vpop.f32.mrf.mxu0
        %v1132 = vadd.f32 0.0, %v1131
        %v1133 = vpop.f32.mrf.mxu0
        %v1134 = vpop.f32.mrf.mxu0
        %v1135 = vadd.f32 0.0, %v1134
        %v1136 = vpop.f32.mrf.mxu0
        %1137 = vmatprep.mubr.bf16.mxu0 0
        %1138 = vmatmul.mubr.bf16.gmra.mxu0 %v1043
        %v1139 = vpop.f32.mrf.mxu0
        %v1140 = vadd.f32 0.0, %v1139
        %v1141 = vpop.f32.mrf.mxu0
        %v1142 = vpop.f32.mrf.mxu0
        %v1143 = vadd.f32 0.0, %v1142
        %v1144 = vpop.f32.mrf.mxu0
        %1145 = vmatprep.mubr.bf16.mxu0 0
        %1146 = vmatmul.mubr.bf16.gmra.mxu0 %v1046
        %v1147 = vpop.f32.mrf.mxu0
        %v1148 = vadd.f32 0.0, %v1147
        %v1149 = vpop.f32.mrf.mxu0
        %v1150 = vpop.f32.mrf.mxu0
        %v1151 = vadd.f32 0.0, %v1150
        %v1152 = vpop.f32.mrf.mxu0
        %1153 = vmatprep.mubr.bf16.mxu0 0
        %1154 = vmatmul.mubr.bf16.gmra.mxu0 %v1049
        %v1155 = vpop.f32.mrf.mxu0
        %v1156 = vadd.f32 0.0, %v1155
        %v1157 = vpop.f32.mrf.mxu0
        %v1158 = vpop.f32.mrf.mxu0
        %v1159 = vadd.f32 0.0, %v1158
        %v1160 = vpop.f32.mrf.mxu0
        %1161 = vmatprep.mubr.bf16.mxu0 0
        %1162 = vmatmul.mubr.bf16.gmra.mxu0 %v1052
        %v1163 = vpop.f32.mrf.mxu0
        %v1164 = vadd.f32 0.0, %v1163
        %v1165 = vpop.f32.mrf.mxu0
        %v1166 = vpop.f32.mrf.mxu0
        %v1167 = vadd.f32 0.0, %v1166
        %v1168 = vpop.f32.mrf.mxu0
        %1169 = vmatprep.mubr.bf16.mxu0 0
        %1170 = vmatmul.mubr.bf16.gmra.mxu0 %v1055
        %v1171 = vpop.f32.mrf.mxu0
        %v1172 = vadd.f32 0.0, %v1171
        %v1173 = vpop.f32.mrf.mxu0
        %v1174 = vpop.f32.mrf.mxu0
        %v1175 = vadd.f32 0.0, %v1174
        %v1176 = vpop.f32.mrf.mxu0
        %1177 = vmatprep.mubr.bf16.mxu0 0
        %1178 = vmatmul.mubr.bf16.gmra.mxu0 %v1058
        %v1179 = vpop.f32.mrf.mxu0
        %v1180 = vadd.f32 0.0, %v1179
        %v1181 = vpop.f32.mrf.mxu0
        %v1182 = vpop.f32.mrf.mxu0
        %v1183 = vadd.f32 0.0, %v1182
        %v1184 = vpop.f32.mrf.mxu0
        %1185 = vmatprep.mubr.bf16.mxu0 0
        %1186 = vmatmul.mubr.bf16.gmra.mxu0 %v1061
        %v1187 = vpop.f32.mrf.mxu0
        %v1188 = vadd.f32 0.0, %v1187
        %v1189 = vpop.f32.mrf.mxu0
        %v1190 = vpop.f32.mrf.mxu0
        %v1191 = vadd.f32 0.0, %v1190
        %v1192 = vpop.f32.mrf.mxu0
        %1193 = vmatprep.mubr.bf16.mxu0 0
        %1194 = vmatmul.mubr.bf16.gmra.mxu0 %v1064
        %v1195 = vpop.f32.mrf.mxu0
        %v1196 = vadd.f32 0.0, %v1195
        %v1197 = vpop.f32.mrf.mxu0
        %v1198 = vpop.f32.mrf.mxu0
        %v1199 = vadd.f32 0.0, %v1198
        %v1200 = vpop.f32.mrf.mxu0
        %1201 = vmatprep.mubr.bf16.mxu0 0
        %1202 = vmatmul.mubr.bf16.gmra.mxu0 %v1067
        %v1203 = vpop.f32.mrf.mxu0
        %v1204 = vadd.f32 0.0, %v1203
        %v1205 = vpop.f32.mrf.mxu0
        %v1206 = vpop.f32.mrf.mxu0
        %v1207 = vadd.f32 0.0, %v1206
        %v1208 = vpop.f32.mrf.mxu0
        %1209 = vmatprep.mubr.bf16.mxu0 0
        %1210 = vmatmul.mubr.bf16.gmra.mxu0 %v1070
        %v1211 = vpop.f32.mrf.mxu0
        %v1212 = vadd.f32 0.0, %v1211
        %v1213 = vpop.f32.mrf.mxu0
        %v1214 = vpop.f32.mrf.mxu0
        %v1215 = vadd.f32 0.0, %v1214
        %v1216 = vpop.f32.mrf.mxu0
        %1217 = vmatprep.mubr.bf16.mxu0 0
        %1218 = vmatmul.mubr.bf16.gmra.mxu0 %v1073
        %v1219 = vpop.f32.mrf.mxu0
        %v1220 = vadd.f32 0.0, %v1219
        %v1221 = vpop.f32.mrf.mxu0
        %v1222 = vpop.f32.mrf.mxu0
        %v1223 = vadd.f32 0.0, %v1222
        %v1224 = vpop.f32.mrf.mxu0
        %1225 = vmatprep.mubr.bf16.mxu0 0
        %1226 = vmatmul.mubr.bf16.gmra.mxu0 %v1076
        %v1227 = vpop.f32.mrf.mxu0
        %v1228 = vadd.f32 0.0, %v1227
        %v1229 = vpop.f32.mrf.mxu0
        %v1230 = vpop.f32.mrf.mxu0
        %v1231 = vadd.f32 0.0, %v1230
        %v1232 = vpop.f32.mrf.mxu0
        %1233 = vmatprep.mubr.bf16.mxu0 0
        %1234 = vmatmul.mubr.bf16.gmra.mxu0 %v1079
        %v1235 = vpop.f32.mrf.mxu0
        %v1236 = vadd.f32 0.0, %v1235
        %v1237 = vpop.f32.mrf.mxu0
        %v1238 = vpop.f32.mrf.mxu0
        %v1239 = vadd.f32 0.0, %v1238
        %v1240 = vpop.f32.mrf.mxu0
        %1241 = vdwg.mxu0
        %v1244 = vunpack.c.l.b16 %v1007
        %v1245 = vunpack.c.l.b16 %v1008
        %v1246 = vpack.c.b16 %v1245, %v1244
        %v1249 = vsel %vm627, %v991, 0
        %v1252 = vsel %vm627, %v992, 0
        %v1255 = vsel %vm627, %v993, 0
        %v1258 = vsel %vm627, %v994, 0
        %v1261 = vsel %vm627, %v995, 0
        %v1264 = vsel %vm627, %v996, 0
        %v1267 = vsel %vm627, %v997, 0
        %v1270 = vsel %vm627, %v998, 0
        %v1273 = vsel %vm627, %v999, 0
        %v1276 = vsel %vm627, %v1000, 0
        %v1279 = vsel %vm627, %v1001, 0
        %v1282 = vsel %vm627, %v1002, 0
        %v1285 = vsel %vm627, %v1003, 0
        %v1288 = vsel %vm627, %v1004, 0
        %v1291 = vsel %vm627, %v1005, 0
        %v1294 = vsel %vm627, %v1006, 0
        %1296 = vmatprep.subr.bf16.mxu0 0
        %1297 = vmatpush1.bf16.msra.mxu0 0
        %1298 = vmatprep.subr.bf16.mxu0 0
        %1299 = vmatpush1.bf16.msra.mxu0 0
        %1300 = vmatprep.subr.bf16.mxu0 0
        %1301 = vmatpush1.bf16.msra.mxu0 0
        %1302 = vmatprep.subr.bf16.mxu0 0
        %1303 = vmatpush1.bf16.msra.mxu0 0
        %1304 = vmatprep.subr.bf16.mxu0 0
        %1305 = vmatpush1.bf16.msra.mxu0 0
        %1306 = vmatprep.subr.bf16.mxu0 0
        %1307 = vmatpush1.bf16.msra.mxu0 0
        %1308 = vmatprep.subr.bf16.mxu0 0
        %1309 = vmatpush1.bf16.msra.mxu0 0
        %1310 = vmatprep.subr.bf16.mxu0 0
        %1311 = vmatpush1.bf16.msra.mxu0 %v1246
        %1312 = vmatprep.subr.bf16.mxu0 0
        %1313 = vmatpush2.bf16.msra.mxu0 0
        %1314 = vmatprep.subr.bf16.mxu0 0
        %1315 = vmatpush2.bf16.msra.mxu0 0
        %1316 = vmatprep.subr.bf16.mxu0 0
        %1317 = vmatpush2.bf16.msra.mxu0 0
        %1318 = vmatprep.subr.bf16.mxu0 0
        %1319 = vmatpush2.bf16.msra.mxu0 0
        %1320 = vmatprep.subr.bf16.mxu0 0
        %1321 = vmatpush2.bf16.msra.mxu0 0
        %1322 = vmatprep.subr.bf16.mxu0 0
        %1323 = vmatpush2.bf16.msra.mxu0 0
        %1324 = vmatprep.subr.bf16.mxu0 0
        %1325 = vmatpush2.bf16.msra.mxu0 0
        %1326 = vmatprep.subr.bf16.mxu0 0
        %1327 = vmatpush2.bf16.msra.mxu0 0
        %1328 = vmatprep.mubr.bf16.mxu0 0
        %1329 = vmatmul.mubr.bf16.gmra.mxu0 %v1249
        %v1330 = vpop.f32.mrf.mxu0
        %v1331 = vadd.f32 %v1116, %v1330
        %v1332 = vpop.f32.mrf.mxu0
        %v1333 = vpop.f32.mrf.mxu0
        %v1334 = vadd.f32 %v1119, %v1333
        %v1335 = vpop.f32.mrf.mxu0
        %1336 = vmatprep.mubr.bf16.mxu0 0
        %1337 = vmatmul.mubr.bf16.gmra.mxu0 %v1252
        %v1338 = vpop.f32.mrf.mxu0
        %v1339 = vadd.f32 %v1124, %v1338
        %v1340 = vpop.f32.mrf.mxu0
        %v1341 = vpop.f32.mrf.mxu0
        %v1342 = vadd.f32 %v1127, %v1341
        %v1343 = vpop.f32.mrf.mxu0
        %1344 = vmatprep.mubr.bf16.mxu0 0
        %1345 = vmatmul.mubr.bf16.gmra.mxu0 %v1255
        %v1346 = vpop.f32.mrf.mxu0
        %v1347 = vadd.f32 %v1132, %v1346
        %v1348 = vpop.f32.mrf.mxu0
        %v1349 = vpop.f32.mrf.mxu0
        %v1350 = vadd.f32 %v1135, %v1349
        %v1351 = vpop.f32.mrf.mxu0
        %1352 = vmatprep.mubr.bf16.mxu0 0
        %1353 = vmatmul.mubr.bf16.gmra.mxu0 %v1258
        %v1354 = vpop.f32.mrf.mxu0
        %v1355 = vadd.f32 %v1140, %v1354
        %v1356 = vpop.f32.mrf.mxu0
        %v1357 = vpop.f32.mrf.mxu0
        %v1358 = vadd.f32 %v1143, %v1357
        %v1359 = vpop.f32.mrf.mxu0
        %1360 = vmatprep.mubr.bf16.mxu0 0
        %1361 = vmatmul.mubr.bf16.gmra.mxu0 %v1261
        %v1362 = vpop.f32.mrf.mxu0
        %v1363 = vadd.f32 %v1148, %v1362
        %v1364 = vpop.f32.mrf.mxu0
        %v1365 = vpop.f32.mrf.mxu0
        %v1366 = vadd.f32 %v1151, %v1365
        %v1367 = vpop.f32.mrf.mxu0
        %1368 = vmatprep.mubr.bf16.mxu0 0
        %1369 = vmatmul.mubr.bf16.gmra.mxu0 %v1264
        %v1370 = vpop.f32.mrf.mxu0
        %v1371 = vadd.f32 %v1156, %v1370
        %v1372 = vpop.f32.mrf.mxu0
        %v1373 = vpop.f32.mrf.mxu0
        %v1374 = vadd.f32 %v1159, %v1373
        %v1375 = vpop.f32.mrf.mxu0
        %1376 = vmatprep.mubr.bf16.mxu0 0
        %1377 = vmatmul.mubr.bf16.gmra.mxu0 %v1267
        %v1378 = vpop.f32.mrf.mxu0
        %v1379 = vadd.f32 %v1164, %v1378
        %v1380 = vpop.f32.mrf.mxu0
        %v1381 = vpop.f32.mrf.mxu0
        %v1382 = vadd.f32 %v1167, %v1381
        %v1383 = vpop.f32.mrf.mxu0
        %1384 = vmatprep.mubr.bf16.mxu0 0
        %1385 = vmatmul.mubr.bf16.gmra.mxu0 %v1270
        %v1386 = vpop.f32.mrf.mxu0
        %v1387 = vadd.f32 %v1172, %v1386
        %v1388 = vpop.f32.mrf.mxu0
        %v1389 = vpop.f32.mrf.mxu0
        %v1390 = vadd.f32 %v1175, %v1389
        %v1391 = vpop.f32.mrf.mxu0
        %1392 = vmatprep.mubr.bf16.mxu0 0
        %1393 = vmatmul.mubr.bf16.gmra.mxu0 %v1273
        %v1394 = vpop.f32.mrf.mxu0
        %v1395 = vadd.f32 %v1180, %v1394
        %v1396 = vpop.f32.mrf.mxu0
        %v1397 = vpop.f32.mrf.mxu0
        %v1398 = vadd.f32 %v1183, %v1397
        %v1399 = vpop.f32.mrf.mxu0
        %1400 = vmatprep.mubr.bf16.mxu0 0
        %1401 = vmatmul.mubr.bf16.gmra.mxu0 %v1276
        %v1402 = vpop.f32.mrf.mxu0
        %v1403 = vadd.f32 %v1188, %v1402
        %v1404 = vpop.f32.mrf.mxu0
        %v1405 = vpop.f32.mrf.mxu0
        %v1406 = vadd.f32 %v1191, %v1405
        %v1407 = vpop.f32.mrf.mxu0
        %1408 = vmatprep.mubr.bf16.mxu0 0
        %1409 = vmatmul.mubr.bf16.gmra.mxu0 %v1279
        %v1410 = vpop.f32.mrf.mxu0
        %v1411 = vadd.f32 %v1196, %v1410
        %v1412 = vpop.f32.mrf.mxu0
        %v1413 = vpop.f32.mrf.mxu0
        %v1414 = vadd.f32 %v1199, %v1413
        %v1415 = vpop.f32.mrf.mxu0
        %1416 = vmatprep.mubr.bf16.mxu0 0
        %1417 = vmatmul.mubr.bf16.gmra.mxu0 %v1282
        %v1418 = vpop.f32.mrf.mxu0
        %v1419 = vadd.f32 %v1204, %v1418
        %v1420 = vpop.f32.mrf.mxu0
        %v1421 = vpop.f32.mrf.mxu0
        %v1422 = vadd.f32 %v1207, %v1421
        %v1423 = vpop.f32.mrf.mxu0
        %1424 = vmatprep.mubr.bf16.mxu0 0
        %1425 = vmatmul.mubr.bf16.gmra.mxu0 %v1285
        %v1426 = vpop.f32.mrf.mxu0
        %v1427 = vadd.f32 %v1212, %v1426
        %v1428 = vpop.f32.mrf.mxu0
        %v1429 = vpop.f32.mrf.mxu0
        %v1430 = vadd.f32 %v1215, %v1429
        %v1431 = vpop.f32.mrf.mxu0
        %1432 = vmatprep.mubr.bf16.mxu0 0
        %1433 = vmatmul.mubr.bf16.gmra.mxu0 %v1288
        %v1434 = vpop.f32.mrf.mxu0
        %v1435 = vadd.f32 %v1220, %v1434
        %v1436 = vpop.f32.mrf.mxu0
        %v1437 = vpop.f32.mrf.mxu0
        %v1438 = vadd.f32 %v1223, %v1437
        %v1439 = vpop.f32.mrf.mxu0
        %1440 = vmatprep.mubr.bf16.mxu0 0
        %1441 = vmatmul.mubr.bf16.gmra.mxu0 %v1291
        %v1442 = vpop.f32.mrf.mxu0
        %v1443 = vadd.f32 %v1228, %v1442
        %v1444 = vpop.f32.mrf.mxu0
        %v1445 = vpop.f32.mrf.mxu0
        %v1446 = vadd.f32 %v1231, %v1445
        %v1447 = vpop.f32.mrf.mxu0
        %1448 = vmatprep.mubr.bf16.mxu0 0
        %1449 = vmatmul.mubr.bf16.gmra.mxu0 %v1294
        %v1450 = vpop.f32.mrf.mxu0
        %v1451 = vadd.f32 %v1236, %v1450
        %v1452 = vpop.f32.mrf.mxu0
        %v1453 = vpop.f32.mrf.mxu0
        %v1454 = vadd.f32 %v1239, %v1453
        %v1455 = vpop.f32.mrf.mxu0
        %1456 = vdwg.mxu0
        %v1457 = vpack.c.bf16 %v767, %v766
        %v1458 = vpack.c.bf16 %v769, %v768
        %v1459 = vpack.c.bf16 %v771, %v770
        %v1460 = vpack.c.bf16 %v773, %v772
        %v1461 = vpack.c.bf16 %v775, %v774
        %v1462 = vpack.c.bf16 %v777, %v776
        %v1463 = vpack.c.bf16 %v779, %v778
        %v1464 = vpack.c.bf16 %v781, %v780
        %v1465 = vpack.c.bf16 %v783, %v782
        %v1466 = vpack.c.bf16 %v785, %v784
        %v1467 = vpack.c.bf16 %v787, %v786
        %v1468 = vpack.c.bf16 %v789, %v788
        %v1469 = vpack.c.bf16 %v791, %v790
        %v1470 = vpack.c.bf16 %v793, %v792
        %v1471 = vpack.c.bf16 %v795, %v794
        %v1472 = vpack.c.bf16 %v797, %v796
        %v1473 = vld [vmem:[%s3 + $0x10] sm:$0xf]
        %v1474 = vld [vmem:[%s3 + $0x14] sm:$0xf]
        %v1477 = vunpack.c.l.b16 %v1473
        %v1478 = vunpack.c.l.b16 %v1474
        %v1479 = vpack.c.b16 %v1478, %v1477
        %v1482 = vsel %vm627, %v1457, 0
        %v1485 = vsel %vm627, %v1458, 0
        %v1488 = vsel %vm627, %v1459, 0
        %v1491 = vsel %vm627, %v1460, 0
        %v1494 = vsel %vm627, %v1461, 0
        %v1497 = vsel %vm627, %v1462, 0
        %v1500 = vsel %vm627, %v1463, 0
        %v1503 = vsel %vm627, %v1464, 0
        %v1506 = vsel %vm627, %v1465, 0
        %v1509 = vsel %vm627, %v1466, 0
        %v1512 = vsel %vm627, %v1467, 0
        %v1515 = vsel %vm627, %v1468, 0
        %v1518 = vsel %vm627, %v1469, 0
        %v1521 = vsel %vm627, %v1470, 0
        %v1524 = vsel %vm627, %v1471, 0
        %v1527 = vsel %vm627, %v1472, 0
        %1529 = vmatprep.subr.bf16.mxu0 0
        %1530 = vmatpush1.bf16.msra.mxu0 0
        %1531 = vmatprep.subr.bf16.mxu0 0
        %1532 = vmatpush1.bf16.msra.mxu0 0
        %1533 = vmatprep.subr.bf16.mxu0 0
        %1534 = vmatpush1.bf16.msra.mxu0 0
        %1535 = vmatprep.subr.bf16.mxu0 0
        %1536 = vmatpush1.bf16.msra.mxu0 0
        %1537 = vmatprep.subr.bf16.mxu0 0
        %1538 = vmatpush1.bf16.msra.mxu0 0
        %1539 = vmatprep.subr.bf16.mxu0 0
        %1540 = vmatpush1.bf16.msra.mxu0 0
        %1541 = vmatprep.subr.bf16.mxu0 0
        %1542 = vmatpush1.bf16.msra.mxu0 0
        %1543 = vmatprep.subr.bf16.mxu0 0
        %1544 = vmatpush1.bf16.msra.mxu0 %v1479
        %1545 = vmatprep.subr.bf16.mxu0 0
        %1546 = vmatpush2.bf16.msra.mxu0 0
        %1547 = vmatprep.subr.bf16.mxu0 0
        %1548 = vmatpush2.bf16.msra.mxu0 0
        %1549 = vmatprep.subr.bf16.mxu0 0
        %1550 = vmatpush2.bf16.msra.mxu0 0
        %1551 = vmatprep.subr.bf16.mxu0 0
        %1552 = vmatpush2.bf16.msra.mxu0 0
        %1553 = vmatprep.subr.bf16.mxu0 0
        %1554 = vmatpush2.bf16.msra.mxu0 0
        %1555 = vmatprep.subr.bf16.mxu0 0
        %1556 = vmatpush2.bf16.msra.mxu0 0
        %1557 = vmatprep.subr.bf16.mxu0 0
        %1558 = vmatpush2.bf16.msra.mxu0 0
        %1559 = vmatprep.subr.bf16.mxu0 0
        %1560 = vmatpush2.bf16.msra.mxu0 0
        %1561 = vmatprep.mubr.bf16.mxu0 0
        %1562 = vmatmul.mubr.bf16.gmra.mxu0 %v1482
        %v1563 = vpop.f32.mrf.mxu0
        %v1564 = vadd.f32 0.0, %v1563
        %v1565 = vpop.f32.mrf.mxu0
        %v1566 = vpop.f32.mrf.mxu0
        %v1567 = vadd.f32 0.0, %v1566
        %v1568 = vpop.f32.mrf.mxu0
        %1569 = vmatprep.mubr.bf16.mxu0 0
        %1570 = vmatmul.mubr.bf16.gmra.mxu0 %v1485
        %v1571 = vpop.f32.mrf.mxu0
        %v1572 = vadd.f32 0.0, %v1571
        %v1573 = vpop.f32.mrf.mxu0
        %v1574 = vpop.f32.mrf.mxu0
        %v1575 = vadd.f32 0.0, %v1574
        %v1576 = vpop.f32.mrf.mxu0
        %1577 = vmatprep.mubr.bf16.mxu0 0
        %1578 = vmatmul.mubr.bf16.gmra.mxu0 %v1488
        %v1579 = vpop.f32.mrf.mxu0
        %v1580 = vadd.f32 0.0, %v1579
        %v1581 = vpop.f32.mrf.mxu0
        %v1582 = vpop.f32.mrf.mxu0
        %v1583 = vadd.f32 0.0, %v1582
        %v1584 = vpop.f32.mrf.mxu0
        %1585 = vmatprep.mubr.bf16.mxu0 0
        %1586 = vmatmul.mubr.bf16.gmra.mxu0 %v1491
        %v1587 = vpop.f32.mrf.mxu0
        %v1588 = vadd.f32 0.0, %v1587
        %v1589 = vpop.f32.mrf.mxu0
        %v1590 = vpop.f32.mrf.mxu0
        %v1591 = vadd.f32 0.0, %v1590
        %v1592 = vpop.f32.mrf.mxu0
        %1593 = vmatprep.mubr.bf16.mxu0 0
        %1594 = vmatmul.mubr.bf16.gmra.mxu0 %v1494
        %v1595 = vpop.f32.mrf.mxu0
        %v1596 = vadd.f32 0.0, %v1595
        %v1597 = vpop.f32.mrf.mxu0
        %v1598 = vpop.f32.mrf.mxu0
        %v1599 = vadd.f32 0.0, %v1598
        %v1600 = vpop.f32.mrf.mxu0
        %1601 = vmatprep.mubr.bf16.mxu0 0
        %1602 = vmatmul.mubr.bf16.gmra.mxu0 %v1497
        %v1603 = vpop.f32.mrf.mxu0
        %v1604 = vadd.f32 0.0, %v1603
        %v1605 = vpop.f32.mrf.mxu0
        %v1606 = vpop.f32.mrf.mxu0
        %v1607 = vadd.f32 0.0, %v1606
        %v1608 = vpop.f32.mrf.mxu0
        %1609 = vmatprep.mubr.bf16.mxu0 0
        %1610 = vmatmul.mubr.bf16.gmra.mxu0 %v1500
        %v1611 = vpop.f32.mrf.mxu0
        %v1612 = vadd.f32 0.0, %v1611
        %v1613 = vpop.f32.mrf.mxu0
        %v1614 = vpop.f32.mrf.mxu0
        %v1615 = vadd.f32 0.0, %v1614
        %v1616 = vpop.f32.mrf.mxu0
        %1617 = vmatprep.mubr.bf16.mxu0 0
        %1618 = vmatmul.mubr.bf16.gmra.mxu0 %v1503
        %v1619 = vpop.f32.mrf.mxu0
        %v1620 = vadd.f32 0.0, %v1619
        %v1621 = vpop.f32.mrf.mxu0
        %v1622 = vpop.f32.mrf.mxu0
        %v1623 = vadd.f32 0.0, %v1622
        %v1624 = vpop.f32.mrf.mxu0
        %1625 = vmatprep.mubr.bf16.mxu0 0
        %1626 = vmatmul.mubr.bf16.gmra.mxu0 %v1506
        %v1627 = vpop.f32.mrf.mxu0
        %v1628 = vadd.f32 0.0, %v1627
        %v1629 = vpop.f32.mrf.mxu0
        %v1630 = vpop.f32.mrf.mxu0
        %v1631 = vadd.f32 0.0, %v1630
        %v1632 = vpop.f32.mrf.mxu0
        %1633 = vmatprep.mubr.bf16.mxu0 0
        %1634 = vmatmul.mubr.bf16.gmra.mxu0 %v1509
        %v1635 = vpop.f32.mrf.mxu0
        %v1636 = vadd.f32 0.0, %v1635
        %v1637 = vpop.f32.mrf.mxu0
        %v1638 = vpop.f32.mrf.mxu0
        %v1639 = vadd.f32 0.0, %v1638
        %v1640 = vpop.f32.mrf.mxu0
        %1641 = vmatprep.mubr.bf16.mxu0 0
        %1642 = vmatmul.mubr.bf16.gmra.mxu0 %v1512
        %v1643 = vpop.f32.mrf.mxu0
        %v1644 = vadd.f32 0.0, %v1643
        %v1645 = vpop.f32.mrf.mxu0
        %v1646 = vpop.f32.mrf.mxu0
        %v1647 = vadd.f32 0.0, %v1646
        %v1648 = vpop.f32.mrf.mxu0
        %1649 = vmatprep.mubr.bf16.mxu0 0
        %1650 = vmatmul.mubr.bf16.gmra.mxu0 %v1515
        %v1651 = vpop.f32.mrf.mxu0
        %v1652 = vadd.f32 0.0, %v1651
        %v1653 = vpop.f32.mrf.mxu0
        %v1654 = vpop.f32.mrf.mxu0
        %v1655 = vadd.f32 0.0, %v1654
        %v1656 = vpop.f32.mrf.mxu0
        %1657 = vmatprep.mubr.bf16.mxu0 0
        %1658 = vmatmul.mubr.bf16.gmra.mxu0 %v1518
        %v1659 = vpop.f32.mrf.mxu0
        %v1660 = vadd.f32 0.0, %v1659
        %v1661 = vpop.f32.mrf.mxu0
        %v1662 = vpop.f32.mrf.mxu0
        %v1663 = vadd.f32 0.0, %v1662
        %v1664 = vpop.f32.mrf.mxu0
        %1665 = vmatprep.mubr.bf16.mxu0 0
        %1666 = vmatmul.mubr.bf16.gmra.mxu0 %v1521
        %v1667 = vpop.f32.mrf.mxu0
        %v1668 = vadd.f32 0.0, %v1667
        %v1669 = vpop.f32.mrf.mxu0
        %v1670 = vpop.f32.mrf.mxu0
        %v1671 = vadd.f32 0.0, %v1670
        %v1672 = vpop.f32.mrf.mxu0
        %1673 = vmatprep.mubr.bf16.mxu0 0
        %1674 = vmatmul.mubr.bf16.gmra.mxu0 %v1524
        %v1675 = vpop.f32.mrf.mxu0
        %v1676 = vadd.f32 0.0, %v1675
        %v1677 = vpop.f32.mrf.mxu0
        %v1678 = vpop.f32.mrf.mxu0
        %v1679 = vadd.f32 0.0, %v1678
        %v1680 = vpop.f32.mrf.mxu0
        %1681 = vmatprep.mubr.bf16.mxu0 0
        %1682 = vmatmul.mubr.bf16.gmra.mxu0 %v1527
        %v1683 = vpop.f32.mrf.mxu0
        %v1684 = vadd.f32 0.0, %v1683
        %v1685 = vpop.f32.mrf.mxu0
        %v1686 = vpop.f32.mrf.mxu0
        %v1687 = vadd.f32 0.0, %v1686
        %v1688 = vpop.f32.mrf.mxu0
        %1689 = vdwg.mxu0
        %v1690 = vadd.f32 %v1331, %v1564
        %v1691 = vadd.f32 %v1334, %v1567
        %v1692 = vadd.f32 %v1339, %v1572
        %v1693 = vadd.f32 %v1342, %v1575
        %v1694 = vadd.f32 %v1347, %v1580
        %v1695 = vadd.f32 %v1350, %v1583
        %v1696 = vadd.f32 %v1355, %v1588
        %v1697 = vadd.f32 %v1358, %v1591
        %v1698 = vadd.f32 %v1363, %v1596
        %v1699 = vadd.f32 %v1366, %v1599
        %v1700 = vadd.f32 %v1371, %v1604
        %v1701 = vadd.f32 %v1374, %v1607
        %v1702 = vadd.f32 %v1379, %v1612
        %v1703 = vadd.f32 %v1382, %v1615
        %v1704 = vadd.f32 %v1387, %v1620
        %v1705 = vadd.f32 %v1390, %v1623
        %v1706 = vadd.f32 %v1395, %v1628
        %v1707 = vadd.f32 %v1398, %v1631
        %v1708 = vadd.f32 %v1403, %v1636
        %v1709 = vadd.f32 %v1406, %v1639
        %v1710 = vadd.f32 %v1411, %v1644
        %v1711 = vadd.f32 %v1414, %v1647
        %v1712 = vadd.f32 %v1419, %v1652
        %v1713 = vadd.f32 %v1422, %v1655
        %v1714 = vadd.f32 %v1427, %v1660
        %v1715 = vadd.f32 %v1430, %v1663
        %v1716 = vadd.f32 %v1435, %v1668
        %v1717 = vadd.f32 %v1438, %v1671
        %v1718 = vadd.f32 %v1443, %v1676
        %v1719 = vadd.f32 %v1446, %v1679
        %v1720 = vadd.f32 %v1451, %v1684
        %v1721 = vadd.f32 %v1454, %v1687
        %v1722 = vpack.c.bf16 %v799, %v798
        %v1723 = vpack.c.bf16 %v801, %v800
        %v1724 = vpack.c.bf16 %v803, %v802
        %v1725 = vpack.c.bf16 %v805, %v804
        %v1726 = vpack.c.bf16 %v807, %v806
        %v1727 = vpack.c.bf16 %v809, %v808
        %v1728 = vpack.c.bf16 %v811, %v810
        %v1729 = vpack.c.bf16 %v813, %v812
        %v1730 = vpack.c.bf16 %v815, %v814
        %v1731 = vpack.c.bf16 %v817, %v816
        %v1732 = vpack.c.bf16 %v819, %v818
        %v1733 = vpack.c.bf16 %v821, %v820
        %v1734 = vpack.c.bf16 %v823, %v822
        %v1735 = vpack.c.bf16 %v825, %v824
        %v1736 = vpack.c.bf16 %v827, %v826
        %v1737 = vpack.c.bf16 %v829, %v828
        %v1738 = vld [vmem:[%s3 + $0x18] sm:$0xf]
        %v1739 = vld [vmem:[%s3 + $0x1c] sm:$0xf]
        %v1742 = vunpack.c.l.b16 %v1738
        %v1743 = vunpack.c.l.b16 %v1739
        %v1744 = vpack.c.b16 %v1743, %v1742
        %v1747 = vsel %vm627, %v1722, 0
        %v1750 = vsel %vm627, %v1723, 0
        %v1753 = vsel %vm627, %v1724, 0
        %v1756 = vsel %vm627, %v1725, 0
        %v1759 = vsel %vm627, %v1726, 0
        %v1762 = vsel %vm627, %v1727, 0
        %v1765 = vsel %vm627, %v1728, 0
        %v1768 = vsel %vm627, %v1729, 0
        %v1771 = vsel %vm627, %v1730, 0
        %v1774 = vsel %vm627, %v1731, 0
        %v1777 = vsel %vm627, %v1732, 0
        %v1780 = vsel %vm627, %v1733, 0
        %v1783 = vsel %vm627, %v1734, 0
        %v1786 = vsel %vm627, %v1735, 0
        %v1789 = vsel %vm627, %v1736, 0
        %v1792 = vsel %vm627, %v1737, 0
        %1794 = vmatprep.subr.bf16.mxu0 0
        %1795 = vmatpush1.bf16.msra.mxu0 0
        %1796 = vmatprep.subr.bf16.mxu0 0
        %1797 = vmatpush1.bf16.msra.mxu0 0
        %1798 = vmatprep.subr.bf16.mxu0 0
        %1799 = vmatpush1.bf16.msra.mxu0 0
        %1800 = vmatprep.subr.bf16.mxu0 0
        %1801 = vmatpush1.bf16.msra.mxu0 0
        %1802 = vmatprep.subr.bf16.mxu0 0
        %1803 = vmatpush1.bf16.msra.mxu0 0
        %1804 = vmatprep.subr.bf16.mxu0 0
        %1805 = vmatpush1.bf16.msra.mxu0 0
        %1806 = vmatprep.subr.bf16.mxu0 0
        %1807 = vmatpush1.bf16.msra.mxu0 0
        %1808 = vmatprep.subr.bf16.mxu0 0
        %1809 = vmatpush1.bf16.msra.mxu0 %v1744
        %1810 = vmatprep.subr.bf16.mxu0 0
        %1811 = vmatpush2.bf16.msra.mxu0 0
        %1812 = vmatprep.subr.bf16.mxu0 0
        %1813 = vmatpush2.bf16.msra.mxu0 0
        %1814 = vmatprep.subr.bf16.mxu0 0
        %1815 = vmatpush2.bf16.msra.mxu0 0
        %1816 = vmatprep.subr.bf16.mxu0 0
        %1817 = vmatpush2.bf16.msra.mxu0 0
        %1818 = vmatprep.subr.bf16.mxu0 0
        %1819 = vmatpush2.bf16.msra.mxu0 0
        %1820 = vmatprep.subr.bf16.mxu0 0
        %1821 = vmatpush2.bf16.msra.mxu0 0
        %1822 = vmatprep.subr.bf16.mxu0 0
        %1823 = vmatpush2.bf16.msra.mxu0 0
        %1824 = vmatprep.subr.bf16.mxu0 0
        %1825 = vmatpush2.bf16.msra.mxu0 0
        %1826 = vmatprep.mubr.bf16.mxu0 0
        %1827 = vmatmul.mubr.bf16.gmra.mxu0 %v1747
        %v1828 = vpop.f32.mrf.mxu0
        %v1829 = vadd.f32 0.0, %v1828
        %v1830 = vpop.f32.mrf.mxu0
        %v1831 = vpop.f32.mrf.mxu0
        %v1832 = vadd.f32 0.0, %v1831
        %v1833 = vpop.f32.mrf.mxu0
        %1834 = vmatprep.mubr.bf16.mxu0 0
        %1835 = vmatmul.mubr.bf16.gmra.mxu0 %v1750
        %v1836 = vpop.f32.mrf.mxu0
        %v1837 = vadd.f32 0.0, %v1836
        %v1838 = vpop.f32.mrf.mxu0
        %v1839 = vpop.f32.mrf.mxu0
        %v1840 = vadd.f32 0.0, %v1839
        %v1841 = vpop.f32.mrf.mxu0
        %1842 = vmatprep.mubr.bf16.mxu0 0
        %1843 = vmatmul.mubr.bf16.gmra.mxu0 %v1753
        %v1844 = vpop.f32.mrf.mxu0
        %v1845 = vadd.f32 0.0, %v1844
        %v1846 = vpop.f32.mrf.mxu0
        %v1847 = vpop.f32.mrf.mxu0
        %v1848 = vadd.f32 0.0, %v1847
        %v1849 = vpop.f32.mrf.mxu0
        %1850 = vmatprep.mubr.bf16.mxu0 0
        %1851 = vmatmul.mubr.bf16.gmra.mxu0 %v1756
        %v1852 = vpop.f32.mrf.mxu0
        %v1853 = vadd.f32 0.0, %v1852
        %v1854 = vpop.f32.mrf.mxu0
        %v1855 = vpop.f32.mrf.mxu0
        %v1856 = vadd.f32 0.0, %v1855
        %v1857 = vpop.f32.mrf.mxu0
        %1858 = vmatprep.mubr.bf16.mxu0 0
        %1859 = vmatmul.mubr.bf16.gmra.mxu0 %v1759
        %v1860 = vpop.f32.mrf.mxu0
        %v1861 = vadd.f32 0.0, %v1860
        %v1862 = vpop.f32.mrf.mxu0
        %v1863 = vpop.f32.mrf.mxu0
        %v1864 = vadd.f32 0.0, %v1863
        %v1865 = vpop.f32.mrf.mxu0
        %1866 = vmatprep.mubr.bf16.mxu0 0
        %1867 = vmatmul.mubr.bf16.gmra.mxu0 %v1762
        %v1868 = vpop.f32.mrf.mxu0
        %v1869 = vadd.f32 0.0, %v1868
        %v1870 = vpop.f32.mrf.mxu0
        %v1871 = vpop.f32.mrf.mxu0
        %v1872 = vadd.f32 0.0, %v1871
        %v1873 = vpop.f32.mrf.mxu0
        %1874 = vmatprep.mubr.bf16.mxu0 0
        %1875 = vmatmul.mubr.bf16.gmra.mxu0 %v1765
        %v1876 = vpop.f32.mrf.mxu0
        %v1877 = vadd.f32 0.0, %v1876
        %v1878 = vpop.f32.mrf.mxu0
        %v1879 = vpop.f32.mrf.mxu0
        %v1880 = vadd.f32 0.0, %v1879
        %v1881 = vpop.f32.mrf.mxu0
        %1882 = vmatprep.mubr.bf16.mxu0 0
        %1883 = vmatmul.mubr.bf16.gmra.mxu0 %v1768
        %v1884 = vpop.f32.mrf.mxu0
        %v1885 = vadd.f32 0.0, %v1884
        %v1886 = vpop.f32.mrf.mxu0
        %v1887 = vpop.f32.mrf.mxu0
        %v1888 = vadd.f32 0.0, %v1887
        %v1889 = vpop.f32.mrf.mxu0
        %1890 = vmatprep.mubr.bf16.mxu0 0
        %1891 = vmatmul.mubr.bf16.gmra.mxu0 %v1771
        %v1892 = vpop.f32.mrf.mxu0
        %v1893 = vadd.f32 0.0, %v1892
        %v1894 = vpop.f32.mrf.mxu0
        %v1895 = vpop.f32.mrf.mxu0
        %v1896 = vadd.f32 0.0, %v1895
        %v1897 = vpop.f32.mrf.mxu0
        %1898 = vmatprep.mubr.bf16.mxu0 0
        %1899 = vmatmul.mubr.bf16.gmra.mxu0 %v1774
        %v1900 = vpop.f32.mrf.mxu0
        %v1901 = vadd.f32 0.0, %v1900
        %v1902 = vpop.f32.mrf.mxu0
        %v1903 = vpop.f32.mrf.mxu0
        %v1904 = vadd.f32 0.0, %v1903
        %v1905 = vpop.f32.mrf.mxu0
        %1906 = vmatprep.mubr.bf16.mxu0 0
        %1907 = vmatmul.mubr.bf16.gmra.mxu0 %v1777
        %v1908 = vpop.f32.mrf.mxu0
        %v1909 = vadd.f32 0.0, %v1908
        %v1910 = vpop.f32.mrf.mxu0
        %v1911 = vpop.f32.mrf.mxu0
        %v1912 = vadd.f32 0.0, %v1911
        %v1913 = vpop.f32.mrf.mxu0
        %1914 = vmatprep.mubr.bf16.mxu0 0
        %1915 = vmatmul.mubr.bf16.gmra.mxu0 %v1780
        %v1916 = vpop.f32.mrf.mxu0
        %v1917 = vadd.f32 0.0, %v1916
        %v1918 = vpop.f32.mrf.mxu0
        %v1919 = vpop.f32.mrf.mxu0
        %v1920 = vadd.f32 0.0, %v1919
        %v1921 = vpop.f32.mrf.mxu0
        %1922 = vmatprep.mubr.bf16.mxu0 0
        %1923 = vmatmul.mubr.bf16.gmra.mxu0 %v1783
        %v1924 = vpop.f32.mrf.mxu0
        %v1925 = vadd.f32 0.0, %v1924
        %v1926 = vpop.f32.mrf.mxu0
        %v1927 = vpop.f32.mrf.mxu0
        %v1928 = vadd.f32 0.0, %v1927
        %v1929 = vpop.f32.mrf.mxu0
        %1930 = vmatprep.mubr.bf16.mxu0 0
        %1931 = vmatmul.mubr.bf16.gmra.mxu0 %v1786
        %v1932 = vpop.f32.mrf.mxu0
        %v1933 = vadd.f32 0.0, %v1932
        %v1934 = vpop.f32.mrf.mxu0
        %v1935 = vpop.f32.mrf.mxu0
        %v1936 = vadd.f32 0.0, %v1935
        %v1937 = vpop.f32.mrf.mxu0
        %1938 = vmatprep.mubr.bf16.mxu0 0
        %1939 = vmatmul.mubr.bf16.gmra.mxu0 %v1789
        %v1940 = vpop.f32.mrf.mxu0
        %v1941 = vadd.f32 0.0, %v1940
        %v1942 = vpop.f32.mrf.mxu0
        %v1943 = vpop.f32.mrf.mxu0
        %v1944 = vadd.f32 0.0, %v1943
        %v1945 = vpop.f32.mrf.mxu0
        %1946 = vmatprep.mubr.bf16.mxu0 0
        %1947 = vmatmul.mubr.bf16.gmra.mxu0 %v1792
        %v1948 = vpop.f32.mrf.mxu0
        %v1949 = vadd.f32 0.0, %v1948
        %v1950 = vpop.f32.mrf.mxu0
        %v1951 = vpop.f32.mrf.mxu0
        %v1952 = vadd.f32 0.0, %v1951
        %v1953 = vpop.f32.mrf.mxu0
        %1954 = vdwg.mxu0
        %v1955 = vadd.f32 %v1690, %v1829
        %v1956 = vadd.f32 %v1691, %v1832
        %v1957 = vadd.f32 %v1692, %v1837
        %v1958 = vadd.f32 %v1693, %v1840
        %v1959 = vadd.f32 %v1694, %v1845
        %v1960 = vadd.f32 %v1695, %v1848
        %v1961 = vadd.f32 %v1696, %v1853
        %v1962 = vadd.f32 %v1697, %v1856
        %v1963 = vadd.f32 %v1698, %v1861
        %v1964 = vadd.f32 %v1699, %v1864
        %v1965 = vadd.f32 %v1700, %v1869
        %v1966 = vadd.f32 %v1701, %v1872
        %v1967 = vadd.f32 %v1702, %v1877
        %v1968 = vadd.f32 %v1703, %v1880
        %v1969 = vadd.f32 %v1704, %v1885
        %v1970 = vadd.f32 %v1705, %v1888
        %v1971 = vadd.f32 %v1706, %v1893
        %v1972 = vadd.f32 %v1707, %v1896
        %v1973 = vadd.f32 %v1708, %v1901
        %v1974 = vadd.f32 %v1709, %v1904
        %v1975 = vadd.f32 %v1710, %v1909
        %v1976 = vadd.f32 %v1711, %v1912
        %v1977 = vadd.f32 %v1712, %v1917
        %v1978 = vadd.f32 %v1713, %v1920
        %v1979 = vadd.f32 %v1714, %v1925
        %v1980 = vadd.f32 %v1715, %v1928
        %v1981 = vadd.f32 %v1716, %v1933
        %v1982 = vadd.f32 %v1717, %v1936
        %v1983 = vadd.f32 %v1718, %v1941
        %v1984 = vadd.f32 %v1719, %v1944
        %v1985 = vadd.f32 %v1720, %v1949
        %v1986 = vadd.f32 %v1721, %v1952
        %v1987 = vpack.c.bf16 %v831, %v830
        %v1988 = vpack.c.bf16 %v833, %v832
        %v1989 = vpack.c.bf16 %v835, %v834
        %v1990 = vpack.c.bf16 %v837, %v836
        %v1991 = vpack.c.bf16 %v839, %v838
        %v1992 = vpack.c.bf16 %v841, %v840
        %v1993 = vpack.c.bf16 %v843, %v842
        %v1994 = vpack.c.bf16 %v845, %v844
        %v1995 = vpack.c.bf16 %v847, %v846
        %v1996 = vpack.c.bf16 %v849, %v848
        %v1997 = vpack.c.bf16 %v851, %v850
        %v1998 = vpack.c.bf16 %v853, %v852
        %v1999 = vpack.c.bf16 %v855, %v854
        %v2000 = vpack.c.bf16 %v857, %v856
        %v2001 = vpack.c.bf16 %v859, %v858
        %v2002 = vpack.c.bf16 %v861, %v860
        %v2003 = vld [vmem:[%s3 + $0x20] sm:$0xf]
        %v2004 = vld [vmem:[%s3 + $0x24] sm:$0xf]
        %v2007 = vunpack.c.l.b16 %v2003
        %v2008 = vunpack.c.l.b16 %v2004
        %v2009 = vpack.c.b16 %v2008, %v2007
        %v2012 = vsel %vm627, %v1987, 0
        %v2015 = vsel %vm627, %v1988, 0
        %v2018 = vsel %vm627, %v1989, 0
        %v2021 = vsel %vm627, %v1990, 0
        %v2024 = vsel %vm627, %v1991, 0
        %v2027 = vsel %vm627, %v1992, 0
        %v2030 = vsel %vm627, %v1993, 0
        %v2033 = vsel %vm627, %v1994, 0
        %v2036 = vsel %vm627, %v1995, 0
        %v2039 = vsel %vm627, %v1996, 0
        %v2042 = vsel %vm627, %v1997, 0
        %v2045 = vsel %vm627, %v1998, 0
        %v2048 = vsel %vm627, %v1999, 0
        %v2051 = vsel %vm627, %v2000, 0
        %v2054 = vsel %vm627, %v2001, 0
        %v2057 = vsel %vm627, %v2002, 0
        %2059 = vmatprep.subr.bf16.mxu0 0
        %2060 = vmatpush1.bf16.msra.mxu0 0
        %2061 = vmatprep.subr.bf16.mxu0 0
        %2062 = vmatpush1.bf16.msra.mxu0 0
        %2063 = vmatprep.subr.bf16.mxu0 0
        %2064 = vmatpush1.bf16.msra.mxu0 0
        %2065 = vmatprep.subr.bf16.mxu0 0
        %2066 = vmatpush1.bf16.msra.mxu0 0
        %2067 = vmatprep.subr.bf16.mxu0 0
        %2068 = vmatpush1.bf16.msra.mxu0 0
        %2069 = vmatprep.subr.bf16.mxu0 0
        %2070 = vmatpush1.bf16.msra.mxu0 0
        %2071 = vmatprep.subr.bf16.mxu0 0
        %2072 = vmatpush1.bf16.msra.mxu0 0
        %2073 = vmatprep.subr.bf16.mxu0 0
        %2074 = vmatpush1.bf16.msra.mxu0 %v2009
        %2075 = vmatprep.subr.bf16.mxu0 0
        %2076 = vmatpush2.bf16.msra.mxu0 0
        %2077 = vmatprep.subr.bf16.mxu0 0
        %2078 = vmatpush2.bf16.msra.mxu0 0
        %2079 = vmatprep.subr.bf16.mxu0 0
        %2080 = vmatpush2.bf16.msra.mxu0 0
        %2081 = vmatprep.subr.bf16.mxu0 0
        %2082 = vmatpush2.bf16.msra.mxu0 0
        %2083 = vmatprep.subr.bf16.mxu0 0
        %2084 = vmatpush2.bf16.msra.mxu0 0
        %2085 = vmatprep.subr.bf16.mxu0 0
        %2086 = vmatpush2.bf16.msra.mxu0 0
        %2087 = vmatprep.subr.bf16.mxu0 0
        %2088 = vmatpush2.bf16.msra.mxu0 0
        %2089 = vmatprep.subr.bf16.mxu0 0
        %2090 = vmatpush2.bf16.msra.mxu0 0
        %2091 = vmatprep.mubr.bf16.mxu0 0
        %2092 = vmatmul.mubr.bf16.gmra.mxu0 %v2012
        %v2093 = vpop.f32.mrf.mxu0
        %v2094 = vadd.f32 0.0, %v2093
        %v2095 = vpop.f32.mrf.mxu0
        %v2096 = vpop.f32.mrf.mxu0
        %v2097 = vadd.f32 0.0, %v2096
        %v2098 = vpop.f32.mrf.mxu0
        %2099 = vmatprep.mubr.bf16.mxu0 0
        %2100 = vmatmul.mubr.bf16.gmra.mxu0 %v2015
        %v2101 = vpop.f32.mrf.mxu0
        %v2102 = vadd.f32 0.0, %v2101
        %v2103 = vpop.f32.mrf.mxu0
        %v2104 = vpop.f32.mrf.mxu0
        %v2105 = vadd.f32 0.0, %v2104
        %v2106 = vpop.f32.mrf.mxu0
        %2107 = vmatprep.mubr.bf16.mxu0 0
        %2108 = vmatmul.mubr.bf16.gmra.mxu0 %v2018
        %v2109 = vpop.f32.mrf.mxu0
        %v2110 = vadd.f32 0.0, %v2109
        %v2111 = vpop.f32.mrf.mxu0
        %v2112 = vpop.f32.mrf.mxu0
        %v2113 = vadd.f32 0.0, %v2112
        %v2114 = vpop.f32.mrf.mxu0
        %2115 = vmatprep.mubr.bf16.mxu0 0
        %2116 = vmatmul.mubr.bf16.gmra.mxu0 %v2021
        %v2117 = vpop.f32.mrf.mxu0
        %v2118 = vadd.f32 0.0, %v2117
        %v2119 = vpop.f32.mrf.mxu0
        %v2120 = vpop.f32.mrf.mxu0
        %v2121 = vadd.f32 0.0, %v2120
        %v2122 = vpop.f32.mrf.mxu0
        %2123 = vmatprep.mubr.bf16.mxu0 0
        %2124 = vmatmul.mubr.bf16.gmra.mxu0 %v2024
        %v2125 = vpop.f32.mrf.mxu0
        %v2126 = vadd.f32 0.0, %v2125
        %v2127 = vpop.f32.mrf.mxu0
        %v2128 = vpop.f32.mrf.mxu0
        %v2129 = vadd.f32 0.0, %v2128
        %v2130 = vpop.f32.mrf.mxu0
        %2131 = vmatprep.mubr.bf16.mxu0 0
        %2132 = vmatmul.mubr.bf16.gmra.mxu0 %v2027
        %v2133 = vpop.f32.mrf.mxu0
        %v2134 = vadd.f32 0.0, %v2133
        %v2135 = vpop.f32.mrf.mxu0
        %v2136 = vpop.f32.mrf.mxu0
        %v2137 = vadd.f32 0.0, %v2136
        %v2138 = vpop.f32.mrf.mxu0
        %2139 = vmatprep.mubr.bf16.mxu0 0
        %2140 = vmatmul.mubr.bf16.gmra.mxu0 %v2030
        %v2141 = vpop.f32.mrf.mxu0
        %v2142 = vadd.f32 0.0, %v2141
        %v2143 = vpop.f32.mrf.mxu0
        %v2144 = vpop.f32.mrf.mxu0
        %v2145 = vadd.f32 0.0, %v2144
        %v2146 = vpop.f32.mrf.mxu0
        %2147 = vmatprep.mubr.bf16.mxu0 0
        %2148 = vmatmul.mubr.bf16.gmra.mxu0 %v2033
        %v2149 = vpop.f32.mrf.mxu0
        %v2150 = vadd.f32 0.0, %v2149
        %v2151 = vpop.f32.mrf.mxu0
        %v2152 = vpop.f32.mrf.mxu0
        %v2153 = vadd.f32 0.0, %v2152
        %v2154 = vpop.f32.mrf.mxu0
        %2155 = vmatprep.mubr.bf16.mxu0 0
        %2156 = vmatmul.mubr.bf16.gmra.mxu0 %v2036
        %v2157 = vpop.f32.mrf.mxu0
        %v2158 = vadd.f32 0.0, %v2157
        %v2159 = vpop.f32.mrf.mxu0
        %v2160 = vpop.f32.mrf.mxu0
        %v2161 = vadd.f32 0.0, %v2160
        %v2162 = vpop.f32.mrf.mxu0
        %2163 = vmatprep.mubr.bf16.mxu0 0
        %2164 = vmatmul.mubr.bf16.gmra.mxu0 %v2039
        %v2165 = vpop.f32.mrf.mxu0
        %v2166 = vadd.f32 0.0, %v2165
        %v2167 = vpop.f32.mrf.mxu0
        %v2168 = vpop.f32.mrf.mxu0
        %v2169 = vadd.f32 0.0, %v2168
        %v2170 = vpop.f32.mrf.mxu0
        %2171 = vmatprep.mubr.bf16.mxu0 0
        %2172 = vmatmul.mubr.bf16.gmra.mxu0 %v2042
        %v2173 = vpop.f32.mrf.mxu0
        %v2174 = vadd.f32 0.0, %v2173
        %v2175 = vpop.f32.mrf.mxu0
        %v2176 = vpop.f32.mrf.mxu0
        %v2177 = vadd.f32 0.0, %v2176
        %v2178 = vpop.f32.mrf.mxu0
        %2179 = vmatprep.mubr.bf16.mxu0 0
        %2180 = vmatmul.mubr.bf16.gmra.mxu0 %v2045
        %v2181 = vpop.f32.mrf.mxu0
        %v2182 = vadd.f32 0.0, %v2181
        %v2183 = vpop.f32.mrf.mxu0
        %v2184 = vpop.f32.mrf.mxu0
        %v2185 = vadd.f32 0.0, %v2184
        %v2186 = vpop.f32.mrf.mxu0
        %2187 = vmatprep.mubr.bf16.mxu0 0
        %2188 = vmatmul.mubr.bf16.gmra.mxu0 %v2048
        %v2189 = vpop.f32.mrf.mxu0
        %v2190 = vadd.f32 0.0, %v2189
        %v2191 = vpop.f32.mrf.mxu0
        %v2192 = vpop.f32.mrf.mxu0
        %v2193 = vadd.f32 0.0, %v2192
        %v2194 = vpop.f32.mrf.mxu0
        %2195 = vmatprep.mubr.bf16.mxu0 0
        %2196 = vmatmul.mubr.bf16.gmra.mxu0 %v2051
        %v2197 = vpop.f32.mrf.mxu0
        %v2198 = vadd.f32 0.0, %v2197
        %v2199 = vpop.f32.mrf.mxu0
        %v2200 = vpop.f32.mrf.mxu0
        %v2201 = vadd.f32 0.0, %v2200
        %v2202 = vpop.f32.mrf.mxu0
        %2203 = vmatprep.mubr.bf16.mxu0 0
        %2204 = vmatmul.mubr.bf16.gmra.mxu0 %v2054
        %v2205 = vpop.f32.mrf.mxu0
        %v2206 = vadd.f32 0.0, %v2205
        %v2207 = vpop.f32.mrf.mxu0
        %v2208 = vpop.f32.mrf.mxu0
        %v2209 = vadd.f32 0.0, %v2208
        %v2210 = vpop.f32.mrf.mxu0
        %2211 = vmatprep.mubr.bf16.mxu0 0
        %2212 = vmatmul.mubr.bf16.gmra.mxu0 %v2057
        %v2213 = vpop.f32.mrf.mxu0
        %v2214 = vadd.f32 0.0, %v2213
        %v2215 = vpop.f32.mrf.mxu0
        %v2216 = vpop.f32.mrf.mxu0
        %v2217 = vadd.f32 0.0, %v2216
        %v2218 = vpop.f32.mrf.mxu0
        %2219 = vdwg.mxu0
        %v2220 = vadd.f32 %v1955, %v2094
        %v2221 = vadd.f32 %v1956, %v2097
        %v2222 = vadd.f32 %v1957, %v2102
        %v2223 = vadd.f32 %v1958, %v2105
        %v2224 = vadd.f32 %v1959, %v2110
        %v2225 = vadd.f32 %v1960, %v2113
        %v2226 = vadd.f32 %v1961, %v2118
        %v2227 = vadd.f32 %v1962, %v2121
        %v2228 = vadd.f32 %v1963, %v2126
        %v2229 = vadd.f32 %v1964, %v2129
        %v2230 = vadd.f32 %v1965, %v2134
        %v2231 = vadd.f32 %v1966, %v2137
        %v2232 = vadd.f32 %v1967, %v2142
        %v2233 = vadd.f32 %v1968, %v2145
        %v2234 = vadd.f32 %v1969, %v2150
        %v2235 = vadd.f32 %v1970, %v2153
        %v2236 = vadd.f32 %v1971, %v2158
        %v2237 = vadd.f32 %v1972, %v2161
        %v2238 = vadd.f32 %v1973, %v2166
        %v2239 = vadd.f32 %v1974, %v2169
        %v2240 = vadd.f32 %v1975, %v2174
        %v2241 = vadd.f32 %v1976, %v2177
        %v2242 = vadd.f32 %v1977, %v2182
        %v2243 = vadd.f32 %v1978, %v2185
        %v2244 = vadd.f32 %v1979, %v2190
        %v2245 = vadd.f32 %v1980, %v2193
        %v2246 = vadd.f32 %v1981, %v2198
        %v2247 = vadd.f32 %v1982, %v2201
        %v2248 = vadd.f32 %v1983, %v2206
        %v2249 = vadd.f32 %v1984, %v2209
        %v2250 = vadd.f32 %v1985, %v2214
        %v2251 = vadd.f32 %v1986, %v2217
        %v2252 = vpack.c.bf16 %v863, %v862
        %v2253 = vpack.c.bf16 %v865, %v864
        %v2254 = vpack.c.bf16 %v867, %v866
        %v2255 = vpack.c.bf16 %v869, %v868
        %v2256 = vpack.c.bf16 %v871, %v870
        %v2257 = vpack.c.bf16 %v873, %v872
        %v2258 = vpack.c.bf16 %v875, %v874
        %v2259 = vpack.c.bf16 %v877, %v876
        %v2260 = vpack.c.bf16 %v879, %v878
        %v2261 = vpack.c.bf16 %v881, %v880
        %v2262 = vpack.c.bf16 %v883, %v882
        %v2263 = vpack.c.bf16 %v885, %v884
        %v2264 = vpack.c.bf16 %v887, %v886
        %v2265 = vpack.c.bf16 %v889, %v888
        %v2266 = vpack.c.bf16 %v891, %v890
        %v2267 = vpack.c.bf16 %v893, %v892
        %v2268 = vld [vmem:[%s3 + $0x28] sm:$0xf]
        %v2269 = vld [vmem:[%s3 + $0x2c] sm:$0xf]
        %v2272 = vunpack.c.l.b16 %v2268
        %v2273 = vunpack.c.l.b16 %v2269
        %v2274 = vpack.c.b16 %v2273, %v2272
        %v2277 = vsel %vm627, %v2252, 0
        %v2280 = vsel %vm627, %v2253, 0
        %v2283 = vsel %vm627, %v2254, 0
        %v2286 = vsel %vm627, %v2255, 0
        %v2289 = vsel %vm627, %v2256, 0
        %v2292 = vsel %vm627, %v2257, 0
        %v2295 = vsel %vm627, %v2258, 0
        %v2298 = vsel %vm627, %v2259, 0
        %v2301 = vsel %vm627, %v2260, 0
        %v2304 = vsel %vm627, %v2261, 0
        %v2307 = vsel %vm627, %v2262, 0
        %v2310 = vsel %vm627, %v2263, 0
        %v2313 = vsel %vm627, %v2264, 0
        %v2316 = vsel %vm627, %v2265, 0
        %v2319 = vsel %vm627, %v2266, 0
        %v2322 = vsel %vm627, %v2267, 0
        %2324 = vmatprep.subr.bf16.mxu0 0
        %2325 = vmatpush1.bf16.msra.mxu0 0
        %2326 = vmatprep.subr.bf16.mxu0 0
        %2327 = vmatpush1.bf16.msra.mxu0 0
        %2328 = vmatprep.subr.bf16.mxu0 0
        %2329 = vmatpush1.bf16.msra.mxu0 0
        %2330 = vmatprep.subr.bf16.mxu0 0
        %2331 = vmatpush1.bf16.msra.mxu0 0
        %2332 = vmatprep.subr.bf16.mxu0 0
        %2333 = vmatpush1.bf16.msra.mxu0 0
        %2334 = vmatprep.subr.bf16.mxu0 0
        %2335 = vmatpush1.bf16.msra.mxu0 0
        %2336 = vmatprep.subr.bf16.mxu0 0
        %2337 = vmatpush1.bf16.msra.mxu0 0
        %2338 = vmatprep.subr.bf16.mxu0 0
        %2339 = vmatpush1.bf16.msra.mxu0 %v2274
        %2340 = vmatprep.subr.bf16.mxu0 0
        %2341 = vmatpush2.bf16.msra.mxu0 0
        %2342 = vmatprep.subr.bf16.mxu0 0
        %2343 = vmatpush2.bf16.msra.mxu0 0
        %2344 = vmatprep.subr.bf16.mxu0 0
        %2345 = vmatpush2.bf16.msra.mxu0 0
        %2346 = vmatprep.subr.bf16.mxu0 0
        %2347 = vmatpush2.bf16.msra.mxu0 0
        %2348 = vmatprep.subr.bf16.mxu0 0
        %2349 = vmatpush2.bf16.msra.mxu0 0
        %2350 = vmatprep.subr.bf16.mxu0 0
        %2351 = vmatpush2.bf16.msra.mxu0 0
        %2352 = vmatprep.subr.bf16.mxu0 0
        %2353 = vmatpush2.bf16.msra.mxu0 0
        %2354 = vmatprep.subr.bf16.mxu0 0
        %2355 = vmatpush2.bf16.msra.mxu0 0
        %2356 = vmatprep.mubr.bf16.mxu0 0
        %2357 = vmatmul.mubr.bf16.gmra.mxu0 %v2277
        %v2358 = vpop.f32.mrf.mxu0
        %v2359 = vadd.f32 0.0, %v2358
        %v2360 = vpop.f32.mrf.mxu0
        %v2361 = vpop.f32.mrf.mxu0
        %v2362 = vadd.f32 0.0, %v2361
        %v2363 = vpop.f32.mrf.mxu0
        %2364 = vmatprep.mubr.bf16.mxu0 0
        %2365 = vmatmul.mubr.bf16.gmra.mxu0 %v2280
        %v2366 = vpop.f32.mrf.mxu0
        %v2367 = vadd.f32 0.0, %v2366
        %v2368 = vpop.f32.mrf.mxu0
        %v2369 = vpop.f32.mrf.mxu0
        %v2370 = vadd.f32 0.0, %v2369
        %v2371 = vpop.f32.mrf.mxu0
        %2372 = vmatprep.mubr.bf16.mxu0 0
        %2373 = vmatmul.mubr.bf16.gmra.mxu0 %v2283
        %v2374 = vpop.f32.mrf.mxu0
        %v2375 = vadd.f32 0.0, %v2374
        %v2376 = vpop.f32.mrf.mxu0
        %v2377 = vpop.f32.mrf.mxu0
        %v2378 = vadd.f32 0.0, %v2377
        %v2379 = vpop.f32.mrf.mxu0
        %2380 = vmatprep.mubr.bf16.mxu0 0
        %2381 = vmatmul.mubr.bf16.gmra.mxu0 %v2286
        %v2382 = vpop.f32.mrf.mxu0
        %v2383 = vadd.f32 0.0, %v2382
        %v2384 = vpop.f32.mrf.mxu0
        %v2385 = vpop.f32.mrf.mxu0
        %v2386 = vadd.f32 0.0, %v2385
        %v2387 = vpop.f32.mrf.mxu0
        %2388 = vmatprep.mubr.bf16.mxu0 0
        %2389 = vmatmul.mubr.bf16.gmra.mxu0 %v2289
        %v2390 = vpop.f32.mrf.mxu0
        %v2391 = vadd.f32 0.0, %v2390
        %v2392 = vpop.f32.mrf.mxu0
        %v2393 = vpop.f32.mrf.mxu0
        %v2394 = vadd.f32 0.0, %v2393
        %v2395 = vpop.f32.mrf.mxu0
        %2396 = vmatprep.mubr.bf16.mxu0 0
        %2397 = vmatmul.mubr.bf16.gmra.mxu0 %v2292
        %v2398 = vpop.f32.mrf.mxu0
        %v2399 = vadd.f32 0.0, %v2398
        %v2400 = vpop.f32.mrf.mxu0
        %v2401 = vpop.f32.mrf.mxu0
        %v2402 = vadd.f32 0.0, %v2401
        %v2403 = vpop.f32.mrf.mxu0
        %2404 = vmatprep.mubr.bf16.mxu0 0
        %2405 = vmatmul.mubr.bf16.gmra.mxu0 %v2295
        %v2406 = vpop.f32.mrf.mxu0
        %v2407 = vadd.f32 0.0, %v2406
        %v2408 = vpop.f32.mrf.mxu0
        %v2409 = vpop.f32.mrf.mxu0
        %v2410 = vadd.f32 0.0, %v2409
        %v2411 = vpop.f32.mrf.mxu0
        %2412 = vmatprep.mubr.bf16.mxu0 0
        %2413 = vmatmul.mubr.bf16.gmra.mxu0 %v2298
        %v2414 = vpop.f32.mrf.mxu0
        %v2415 = vadd.f32 0.0, %v2414
        %v2416 = vpop.f32.mrf.mxu0
        %v2417 = vpop.f32.mrf.mxu0
        %v2418 = vadd.f32 0.0, %v2417
        %v2419 = vpop.f32.mrf.mxu0
        %2420 = vmatprep.mubr.bf16.mxu0 0
        %2421 = vmatmul.mubr.bf16.gmra.mxu0 %v2301
        %v2422 = vpop.f32.mrf.mxu0
        %v2423 = vadd.f32 0.0, %v2422
        %v2424 = vpop.f32.mrf.mxu0
        %v2425 = vpop.f32.mrf.mxu0
        %v2426 = vadd.f32 0.0, %v2425
        %v2427 = vpop.f32.mrf.mxu0
        %2428 = vmatprep.mubr.bf16.mxu0 0
        %2429 = vmatmul.mubr.bf16.gmra.mxu0 %v2304
        %v2430 = vpop.f32.mrf.mxu0
        %v2431 = vadd.f32 0.0, %v2430
        %v2432 = vpop.f32.mrf.mxu0
        %v2433 = vpop.f32.mrf.mxu0
        %v2434 = vadd.f32 0.0, %v2433
        %v2435 = vpop.f32.mrf.mxu0
        %2436 = vmatprep.mubr.bf16.mxu0 0
        %2437 = vmatmul.mubr.bf16.gmra.mxu0 %v2307
        %v2438 = vpop.f32.mrf.mxu0
        %v2439 = vadd.f32 0.0, %v2438
        %v2440 = vpop.f32.mrf.mxu0
        %v2441 = vpop.f32.mrf.mxu0
        %v2442 = vadd.f32 0.0, %v2441
        %v2443 = vpop.f32.mrf.mxu0
        %2444 = vmatprep.mubr.bf16.mxu0 0
        %2445 = vmatmul.mubr.bf16.gmra.mxu0 %v2310
        %v2446 = vpop.f32.mrf.mxu0
        %v2447 = vadd.f32 0.0, %v2446
        %v2448 = vpop.f32.mrf.mxu0
        %v2449 = vpop.f32.mrf.mxu0
        %v2450 = vadd.f32 0.0, %v2449
        %v2451 = vpop.f32.mrf.mxu0
        %2452 = vmatprep.mubr.bf16.mxu0 0
        %2453 = vmatmul.mubr.bf16.gmra.mxu0 %v2313
        %v2454 = vpop.f32.mrf.mxu0
        %v2455 = vadd.f32 0.0, %v2454
        %v2456 = vpop.f32.mrf.mxu0
        %v2457 = vpop.f32.mrf.mxu0
        %v2458 = vadd.f32 0.0, %v2457
        %v2459 = vpop.f32.mrf.mxu0
        %2460 = vmatprep.mubr.bf16.mxu0 0
        %2461 = vmatmul.mubr.bf16.gmra.mxu0 %v2316
        %v2462 = vpop.f32.mrf.mxu0
        %v2463 = vadd.f32 0.0, %v2462
        %v2464 = vpop.f32.mrf.mxu0
        %v2465 = vpop.f32.mrf.mxu0
        %v2466 = vadd.f32 0.0, %v2465
        %v2467 = vpop.f32.mrf.mxu0
        %2468 = vmatprep.mubr.bf16.mxu0 0
        %2469 = vmatmul.mubr.bf16.gmra.mxu0 %v2319
        %v2470 = vpop.f32.mrf.mxu0
        %v2471 = vadd.f32 0.0, %v2470
        %v2472 = vpop.f32.mrf.mxu0
        %v2473 = vpop.f32.mrf.mxu0
        %v2474 = vadd.f32 0.0, %v2473
        %v2475 = vpop.f32.mrf.mxu0
        %2476 = vmatprep.mubr.bf16.mxu0 0
        %2477 = vmatmul.mubr.bf16.gmra.mxu0 %v2322
        %v2478 = vpop.f32.mrf.mxu0
        %v2479 = vadd.f32 0.0, %v2478
        %v2480 = vpop.f32.mrf.mxu0
        %v2481 = vpop.f32.mrf.mxu0
        %v2482 = vadd.f32 0.0, %v2481
        %v2483 = vpop.f32.mrf.mxu0
        %2484 = vdwg.mxu0
        %v2485 = vadd.f32 %v2220, %v2359
        %v2486 = vadd.f32 %v2221, %v2362
        %v2487 = vadd.f32 %v2222, %v2367
        %v2488 = vadd.f32 %v2223, %v2370
        %v2489 = vadd.f32 %v2224, %v2375
        %v2490 = vadd.f32 %v2225, %v2378
        %v2491 = vadd.f32 %v2226, %v2383
        %v2492 = vadd.f32 %v2227, %v2386
        %v2493 = vadd.f32 %v2228, %v2391
        %v2494 = vadd.f32 %v2229, %v2394
        %v2495 = vadd.f32 %v2230, %v2399
        %v2496 = vadd.f32 %v2231, %v2402
        %v2497 = vadd.f32 %v2232, %v2407
        %v2498 = vadd.f32 %v2233, %v2410
        %v2499 = vadd.f32 %v2234, %v2415
        %v2500 = vadd.f32 %v2235, %v2418
        %v2501 = vadd.f32 %v2236, %v2423
        %v2502 = vadd.f32 %v2237, %v2426
        %v2503 = vadd.f32 %v2238, %v2431
        %v2504 = vadd.f32 %v2239, %v2434
        %v2505 = vadd.f32 %v2240, %v2439
        %v2506 = vadd.f32 %v2241, %v2442
        %v2507 = vadd.f32 %v2242, %v2447
        %v2508 = vadd.f32 %v2243, %v2450
        %v2509 = vadd.f32 %v2244, %v2455
        %v2510 = vadd.f32 %v2245, %v2458
        %v2511 = vadd.f32 %v2246, %v2463
        %v2512 = vadd.f32 %v2247, %v2466
        %v2513 = vadd.f32 %v2248, %v2471
        %v2514 = vadd.f32 %v2249, %v2474
        %v2515 = vadd.f32 %v2250, %v2479
        %v2516 = vadd.f32 %v2251, %v2482
        %v2517 = vpack.c.bf16 %v896, %v895
        %v2518 = vpack.c.bf16 %v898, %v897
        %v2519 = vpack.c.bf16 %v900, %v899
        %v2520 = vpack.c.bf16 %v902, %v901
        %v2521 = vpack.c.bf16 %v904, %v903
        %v2522 = vpack.c.bf16 %v906, %v905
        %v2523 = vpack.c.bf16 %v908, %v907
        %v2524 = vpack.c.bf16 %v910, %v909
        %v2525 = vpack.c.bf16 %v912, %v911
        %v2526 = vpack.c.bf16 %v914, %v913
        %v2527 = vpack.c.bf16 %v916, %v915
        %v2528 = vpack.c.bf16 %v918, %v917
        %v2529 = vpack.c.bf16 %v920, %v919
        %v2530 = vpack.c.bf16 %v922, %v921
        %v2531 = vpack.c.bf16 %v924, %v923
        %v2532 = vpack.c.bf16 %v926, %v925
        %v2533 = vld [vmem:[%s3 + $0x30] sm:$0xf]
        %v2534 = vld [vmem:[%s3 + $0x34] sm:$0xf]
        %v2537 = vunpack.c.l.b16 %v2533
        %v2538 = vunpack.c.l.b16 %v2534
        %v2539 = vpack.c.b16 %v2538, %v2537
        %v2542 = vsel %vm627, %v2517, 0
        %v2545 = vsel %vm627, %v2518, 0
        %v2548 = vsel %vm627, %v2519, 0
        %v2551 = vsel %vm627, %v2520, 0
        %v2554 = vsel %vm627, %v2521, 0
        %v2557 = vsel %vm627, %v2522, 0
        %v2560 = vsel %vm627, %v2523, 0
        %v2563 = vsel %vm627, %v2524, 0
        %v2566 = vsel %vm627, %v2525, 0
        %v2569 = vsel %vm627, %v2526, 0
        %v2572 = vsel %vm627, %v2527, 0
        %v2575 = vsel %vm627, %v2528, 0
        %v2578 = vsel %vm627, %v2529, 0
        %v2581 = vsel %vm627, %v2530, 0
        %v2584 = vsel %vm627, %v2531, 0
        %v2587 = vsel %vm627, %v2532, 0
        %2589 = vmatprep.subr.bf16.mxu0 0
        %2590 = vmatpush1.bf16.msra.mxu0 0
        %2591 = vmatprep.subr.bf16.mxu0 0
        %2592 = vmatpush1.bf16.msra.mxu0 0
        %2593 = vmatprep.subr.bf16.mxu0 0
        %2594 = vmatpush1.bf16.msra.mxu0 0
        %2595 = vmatprep.subr.bf16.mxu0 0
        %2596 = vmatpush1.bf16.msra.mxu0 0
        %2597 = vmatprep.subr.bf16.mxu0 0
        %2598 = vmatpush1.bf16.msra.mxu0 0
        %2599 = vmatprep.subr.bf16.mxu0 0
        %2600 = vmatpush1.bf16.msra.mxu0 0
        %2601 = vmatprep.subr.bf16.mxu0 0
        %2602 = vmatpush1.bf16.msra.mxu0 0
        %2603 = vmatprep.subr.bf16.mxu0 0
        %2604 = vmatpush1.bf16.msra.mxu0 %v2539
        %2605 = vmatprep.subr.bf16.mxu0 0
        %2606 = vmatpush2.bf16.msra.mxu0 0
        %2607 = vmatprep.subr.bf16.mxu0 0
        %2608 = vmatpush2.bf16.msra.mxu0 0
        %2609 = vmatprep.subr.bf16.mxu0 0
        %2610 = vmatpush2.bf16.msra.mxu0 0
        %2611 = vmatprep.subr.bf16.mxu0 0
        %2612 = vmatpush2.bf16.msra.mxu0 0
        %2613 = vmatprep.subr.bf16.mxu0 0
        %2614 = vmatpush2.bf16.msra.mxu0 0
        %2615 = vmatprep.subr.bf16.mxu0 0
        %2616 = vmatpush2.bf16.msra.mxu0 0
        %2617 = vmatprep.subr.bf16.mxu0 0
        %2618 = vmatpush2.bf16.msra.mxu0 0
        %2619 = vmatprep.subr.bf16.mxu0 0
        %2620 = vmatpush2.bf16.msra.mxu0 0
        %2621 = vmatprep.mubr.bf16.mxu0 0
        %2622 = vmatmul.mubr.bf16.gmra.mxu0 %v2542
        %v2623 = vpop.f32.mrf.mxu0
        %v2624 = vadd.f32 0.0, %v2623
        %v2625 = vpop.f32.mrf.mxu0
        %v2626 = vpop.f32.mrf.mxu0
        %v2627 = vadd.f32 0.0, %v2626
        %v2628 = vpop.f32.mrf.mxu0
        %2629 = vmatprep.mubr.bf16.mxu0 0
        %2630 = vmatmul.mubr.bf16.gmra.mxu0 %v2545
        %v2631 = vpop.f32.mrf.mxu0
        %v2632 = vadd.f32 0.0, %v2631
        %v2633 = vpop.f32.mrf.mxu0
        %v2634 = vpop.f32.mrf.mxu0
        %v2635 = vadd.f32 0.0, %v2634
        %v2636 = vpop.f32.mrf.mxu0
        %2637 = vmatprep.mubr.bf16.mxu0 0
        %2638 = vmatmul.mubr.bf16.gmra.mxu0 %v2548
        %v2639 = vpop.f32.mrf.mxu0
        %v2640 = vadd.f32 0.0, %v2639
        %v2641 = vpop.f32.mrf.mxu0
        %v2642 = vpop.f32.mrf.mxu0
        %v2643 = vadd.f32 0.0, %v2642
        %v2644 = vpop.f32.mrf.mxu0
        %2645 = vmatprep.mubr.bf16.mxu0 0
        %2646 = vmatmul.mubr.bf16.gmra.mxu0 %v2551
        %v2647 = vpop.f32.mrf.mxu0
        %v2648 = vadd.f32 0.0, %v2647
        %v2649 = vpop.f32.mrf.mxu0
        %v2650 = vpop.f32.mrf.mxu0
        %v2651 = vadd.f32 0.0, %v2650
        %v2652 = vpop.f32.mrf.mxu0
        %2653 = vmatprep.mubr.bf16.mxu0 0
        %2654 = vmatmul.mubr.bf16.gmra.mxu0 %v2554
        %v2655 = vpop.f32.mrf.mxu0
        %v2656 = vadd.f32 0.0, %v2655
        %v2657 = vpop.f32.mrf.mxu0
        %v2658 = vpop.f32.mrf.mxu0
        %v2659 = vadd.f32 0.0, %v2658
        %v2660 = vpop.f32.mrf.mxu0
        %2661 = vmatprep.mubr.bf16.mxu0 0
        %2662 = vmatmul.mubr.bf16.gmra.mxu0 %v2557
        %v2663 = vpop.f32.mrf.mxu0
        %v2664 = vadd.f32 0.0, %v2663
        %v2665 = vpop.f32.mrf.mxu0
        %v2666 = vpop.f32.mrf.mxu0
        %v2667 = vadd.f32 0.0, %v2666
        %v2668 = vpop.f32.mrf.mxu0
        %2669 = vmatprep.mubr.bf16.mxu0 0
        %2670 = vmatmul.mubr.bf16.gmra.mxu0 %v2560
        %v2671 = vpop.f32.mrf.mxu0
        %v2672 = vadd.f32 0.0, %v2671
        %v2673 = vpop.f32.mrf.mxu0
        %v2674 = vpop.f32.mrf.mxu0
        %v2675 = vadd.f32 0.0, %v2674
        %v2676 = vpop.f32.mrf.mxu0
        %2677 = vmatprep.mubr.bf16.mxu0 0
        %2678 = vmatmul.mubr.bf16.gmra.mxu0 %v2563
        %v2679 = vpop.f32.mrf.mxu0
        %v2680 = vadd.f32 0.0, %v2679
        %v2681 = vpop.f32.mrf.mxu0
        %v2682 = vpop.f32.mrf.mxu0
        %v2683 = vadd.f32 0.0, %v2682
        %v2684 = vpop.f32.mrf.mxu0
        %2685 = vmatprep.mubr.bf16.mxu0 0
        %2686 = vmatmul.mubr.bf16.gmra.mxu0 %v2566
        %v2687 = vpop.f32.mrf.mxu0
        %v2688 = vadd.f32 0.0, %v2687
        %v2689 = vpop.f32.mrf.mxu0
        %v2690 = vpop.f32.mrf.mxu0
        %v2691 = vadd.f32 0.0, %v2690
        %v2692 = vpop.f32.mrf.mxu0
        %2693 = vmatprep.mubr.bf16.mxu0 0
        %2694 = vmatmul.mubr.bf16.gmra.mxu0 %v2569
        %v2695 = vpop.f32.mrf.mxu0
        %v2696 = vadd.f32 0.0, %v2695
        %v2697 = vpop.f32.mrf.mxu0
        %v2698 = vpop.f32.mrf.mxu0
        %v2699 = vadd.f32 0.0, %v2698
        %v2700 = vpop.f32.mrf.mxu0
        %2701 = vmatprep.mubr.bf16.mxu0 0
        %2702 = vmatmul.mubr.bf16.gmra.mxu0 %v2572
        %v2703 = vpop.f32.mrf.mxu0
        %v2704 = vadd.f32 0.0, %v2703
        %v2705 = vpop.f32.mrf.mxu0
        %v2706 = vpop.f32.mrf.mxu0
        %v2707 = vadd.f32 0.0, %v2706
        %v2708 = vpop.f32.mrf.mxu0
        %2709 = vmatprep.mubr.bf16.mxu0 0
        %2710 = vmatmul.mubr.bf16.gmra.mxu0 %v2575
        %v2711 = vpop.f32.mrf.mxu0
        %v2712 = vadd.f32 0.0, %v2711
        %v2713 = vpop.f32.mrf.mxu0
        %v2714 = vpop.f32.mrf.mxu0
        %v2715 = vadd.f32 0.0, %v2714
        %v2716 = vpop.f32.mrf.mxu0
        %2717 = vmatprep.mubr.bf16.mxu0 0
        %2718 = vmatmul.mubr.bf16.gmra.mxu0 %v2578
        %v2719 = vpop.f32.mrf.mxu0
        %v2720 = vadd.f32 0.0, %v2719
        %v2721 = vpop.f32.mrf.mxu0
        %v2722 = vpop.f32.mrf.mxu0
        %v2723 = vadd.f32 0.0, %v2722
        %v2724 = vpop.f32.mrf.mxu0
        %2725 = vmatprep.mubr.bf16.mxu0 0
        %2726 = vmatmul.mubr.bf16.gmra.mxu0 %v2581
        %v2727 = vpop.f32.mrf.mxu0
        %v2728 = vadd.f32 0.0, %v2727
        %v2729 = vpop.f32.mrf.mxu0
        %v2730 = vpop.f32.mrf.mxu0
        %v2731 = vadd.f32 0.0, %v2730
        %v2732 = vpop.f32.mrf.mxu0
        %2733 = vmatprep.mubr.bf16.mxu0 0
        %2734 = vmatmul.mubr.bf16.gmra.mxu0 %v2584
        %v2735 = vpop.f32.mrf.mxu0
        %v2736 = vadd.f32 0.0, %v2735
        %v2737 = vpop.f32.mrf.mxu0
        %v2738 = vpop.f32.mrf.mxu0
        %v2739 = vadd.f32 0.0, %v2738
        %v2740 = vpop.f32.mrf.mxu0
        %2741 = vmatprep.mubr.bf16.mxu0 0
        %2742 = vmatmul.mubr.bf16.gmra.mxu0 %v2587
        %v2743 = vpop.f32.mrf.mxu0
        %v2744 = vadd.f32 0.0, %v2743
        %v2745 = vpop.f32.mrf.mxu0
        %v2746 = vpop.f32.mrf.mxu0
        %v2747 = vadd.f32 0.0, %v2746
        %v2748 = vpop.f32.mrf.mxu0
        %2749 = vdwg.mxu0
        %v2750 = vadd.f32 %v2485, %v2624
        %v2751 = vadd.f32 %v2486, %v2627
        %v2752 = vadd.f32 %v2487, %v2632
        %v2753 = vadd.f32 %v2488, %v2635
        %v2754 = vadd.f32 %v2489, %v2640
        %v2755 = vadd.f32 %v2490, %v2643
        %v2756 = vadd.f32 %v2491, %v2648
        %v2757 = vadd.f32 %v2492, %v2651
        %v2758 = vadd.f32 %v2493, %v2656
        %v2759 = vadd.f32 %v2494, %v2659
        %v2760 = vadd.f32 %v2495, %v2664
        %v2761 = vadd.f32 %v2496, %v2667
        %v2762 = vadd.f32 %v2497, %v2672
        %v2763 = vadd.f32 %v2498, %v2675
        %v2764 = vadd.f32 %v2499, %v2680
        %v2765 = vadd.f32 %v2500, %v2683
        %v2766 = vadd.f32 %v2501, %v2688
        %v2767 = vadd.f32 %v2502, %v2691
        %v2768 = vadd.f32 %v2503, %v2696
        %v2769 = vadd.f32 %v2504, %v2699
        %v2770 = vadd.f32 %v2505, %v2704
        %v2771 = vadd.f32 %v2506, %v2707
        %v2772 = vadd.f32 %v2507, %v2712
        %v2773 = vadd.f32 %v2508, %v2715
        %v2774 = vadd.f32 %v2509, %v2720
        %v2775 = vadd.f32 %v2510, %v2723
        %v2776 = vadd.f32 %v2511, %v2728
        %v2777 = vadd.f32 %v2512, %v2731
        %v2778 = vadd.f32 %v2513, %v2736
        %v2779 = vadd.f32 %v2514, %v2739
        %v2780 = vadd.f32 %v2515, %v2744
        %v2781 = vadd.f32 %v2516, %v2747
        %v2782 = vpack.c.bf16 %v928, %v927
        %v2783 = vpack.c.bf16 %v930, %v929
        %v2784 = vpack.c.bf16 %v932, %v931
        %v2785 = vpack.c.bf16 %v934, %v933
        %v2786 = vpack.c.bf16 %v936, %v935
        %v2787 = vpack.c.bf16 %v938, %v937
        %v2788 = vpack.c.bf16 %v940, %v939
        %v2789 = vpack.c.bf16 %v942, %v941
        %v2790 = vpack.c.bf16 %v944, %v943
        %v2791 = vpack.c.bf16 %v946, %v945
        %v2792 = vpack.c.bf16 %v948, %v947
        %v2793 = vpack.c.bf16 %v950, %v949
        %v2794 = vpack.c.bf16 %v952, %v951
        %v2795 = vpack.c.bf16 %v954, %v953
        %v2796 = vpack.c.bf16 %v956, %v955
        %v2797 = vpack.c.bf16 %v958, %v957
        %v2798 = vld [vmem:[%s3 + $0x38] sm:$0xf]
        %v2799 = vld [vmem:[%s3 + $0x3c] sm:$0xf]
        %v2802 = vunpack.c.l.b16 %v2798
        %v2803 = vunpack.c.l.b16 %v2799
        %v2804 = vpack.c.b16 %v2803, %v2802
        %v2807 = vsel %vm627, %v2782, 0
        %v2810 = vsel %vm627, %v2783, 0
        %v2813 = vsel %vm627, %v2784, 0
        %v2816 = vsel %vm627, %v2785, 0
        %v2819 = vsel %vm627, %v2786, 0
        %v2822 = vsel %vm627, %v2787, 0
        %v2825 = vsel %vm627, %v2788, 0
        %v2828 = vsel %vm627, %v2789, 0
        %v2831 = vsel %vm627, %v2790, 0
        %v2834 = vsel %vm627, %v2791, 0
        %v2837 = vsel %vm627, %v2792, 0
        %v2840 = vsel %vm627, %v2793, 0
        %v2843 = vsel %vm627, %v2794, 0
        %v2846 = vsel %vm627, %v2795, 0
        %v2849 = vsel %vm627, %v2796, 0
        %v2852 = vsel %vm627, %v2797, 0
        %2854 = vmatprep.subr.bf16.mxu0 0
        %2855 = vmatpush1.bf16.msra.mxu0 0
        %2856 = vmatprep.subr.bf16.mxu0 0
        %2857 = vmatpush1.bf16.msra.mxu0 0
        %2858 = vmatprep.subr.bf16.mxu0 0
        %2859 = vmatpush1.bf16.msra.mxu0 0
        %2860 = vmatprep.subr.bf16.mxu0 0
        %2861 = vmatpush1.bf16.msra.mxu0 0
        %2862 = vmatprep.subr.bf16.mxu0 0
        %2863 = vmatpush1.bf16.msra.mxu0 0
        %2864 = vmatprep.subr.bf16.mxu0 0
        %2865 = vmatpush1.bf16.msra.mxu0 0
        %2866 = vmatprep.subr.bf16.mxu0 0
        %2867 = vmatpush1.bf16.msra.mxu0 0
        %2868 = vmatprep.subr.bf16.mxu0 0
        %2869 = vmatpush1.bf16.msra.mxu0 %v2804
        %2870 = vmatprep.subr.bf16.mxu0 0
        %2871 = vmatpush2.bf16.msra.mxu0 0
        %2872 = vmatprep.subr.bf16.mxu0 0
        %2873 = vmatpush2.bf16.msra.mxu0 0
        %2874 = vmatprep.subr.bf16.mxu0 0
        %2875 = vmatpush2.bf16.msra.mxu0 0
        %2876 = vmatprep.subr.bf16.mxu0 0
        %2877 = vmatpush2.bf16.msra.mxu0 0
        %2878 = vmatprep.subr.bf16.mxu0 0
        %2879 = vmatpush2.bf16.msra.mxu0 0
        %2880 = vmatprep.subr.bf16.mxu0 0
        %2881 = vmatpush2.bf16.msra.mxu0 0
        %2882 = vmatprep.subr.bf16.mxu0 0
        %2883 = vmatpush2.bf16.msra.mxu0 0
        %2884 = vmatprep.subr.bf16.mxu0 0
        %2885 = vmatpush2.bf16.msra.mxu0 0
        %2886 = vmatprep.mubr.bf16.mxu0 0
        %2887 = vmatmul.mubr.bf16.gmra.mxu0 %v2807
        %v2888 = vpop.f32.mrf.mxu0
        %v2889 = vadd.f32 0.0, %v2888
        %v2890 = vpop.f32.mrf.mxu0
        %v2891 = vpop.f32.mrf.mxu0
        %v2892 = vadd.f32 0.0, %v2891
        %v2893 = vpop.f32.mrf.mxu0
        %2894 = vmatprep.mubr.bf16.mxu0 0
        %2895 = vmatmul.mubr.bf16.gmra.mxu0 %v2810
        %v2896 = vpop.f32.mrf.mxu0
        %v2897 = vadd.f32 0.0, %v2896
        %v2898 = vpop.f32.mrf.mxu0
        %v2899 = vpop.f32.mrf.mxu0
        %v2900 = vadd.f32 0.0, %v2899
        %v2901 = vpop.f32.mrf.mxu0
        %2902 = vmatprep.mubr.bf16.mxu0 0
        %2903 = vmatmul.mubr.bf16.gmra.mxu0 %v2813
        %v2904 = vpop.f32.mrf.mxu0
        %v2905 = vadd.f32 0.0, %v2904
        %v2906 = vpop.f32.mrf.mxu0
        %v2907 = vpop.f32.mrf.mxu0
        %v2908 = vadd.f32 0.0, %v2907
        %v2909 = vpop.f32.mrf.mxu0
        %2910 = vmatprep.mubr.bf16.mxu0 0
        %2911 = vmatmul.mubr.bf16.gmra.mxu0 %v2816
        %v2912 = vpop.f32.mrf.mxu0
        %v2913 = vadd.f32 0.0, %v2912
        %v2914 = vpop.f32.mrf.mxu0
        %v2915 = vpop.f32.mrf.mxu0
        %v2916 = vadd.f32 0.0, %v2915
        %v2917 = vpop.f32.mrf.mxu0
        %2918 = vmatprep.mubr.bf16.mxu0 0
        %2919 = vmatmul.mubr.bf16.gmra.mxu0 %v2819
        %v2920 = vpop.f32.mrf.mxu0
        %v2921 = vadd.f32 0.0, %v2920
        %v2922 = vpop.f32.mrf.mxu0
        %v2923 = vpop.f32.mrf.mxu0
        %v2924 = vadd.f32 0.0, %v2923
        %v2925 = vpop.f32.mrf.mxu0
        %2926 = vmatprep.mubr.bf16.mxu0 0
        %2927 = vmatmul.mubr.bf16.gmra.mxu0 %v2822
        %v2928 = vpop.f32.mrf.mxu0
        %v2929 = vadd.f32 0.0, %v2928
        %v2930 = vpop.f32.mrf.mxu0
        %v2931 = vpop.f32.mrf.mxu0
        %v2932 = vadd.f32 0.0, %v2931
        %v2933 = vpop.f32.mrf.mxu0
        %2934 = vmatprep.mubr.bf16.mxu0 0
        %2935 = vmatmul.mubr.bf16.gmra.mxu0 %v2825
        %v2936 = vpop.f32.mrf.mxu0
        %v2937 = vadd.f32 0.0, %v2936
        %v2938 = vpop.f32.mrf.mxu0
        %v2939 = vpop.f32.mrf.mxu0
        %v2940 = vadd.f32 0.0, %v2939
        %v2941 = vpop.f32.mrf.mxu0
        %2942 = vmatprep.mubr.bf16.mxu0 0
        %2943 = vmatmul.mubr.bf16.gmra.mxu0 %v2828
        %v2944 = vpop.f32.mrf.mxu0
        %v2945 = vadd.f32 0.0, %v2944
        %v2946 = vpop.f32.mrf.mxu0
        %v2947 = vpop.f32.mrf.mxu0
        %v2948 = vadd.f32 0.0, %v2947
        %v2949 = vpop.f32.mrf.mxu0
        %2950 = vmatprep.mubr.bf16.mxu0 0
        %2951 = vmatmul.mubr.bf16.gmra.mxu0 %v2831
        %v2952 = vpop.f32.mrf.mxu0
        %v2953 = vadd.f32 0.0, %v2952
        %v2954 = vpop.f32.mrf.mxu0
        %v2955 = vpop.f32.mrf.mxu0
        %v2956 = vadd.f32 0.0, %v2955
        %v2957 = vpop.f32.mrf.mxu0
        %2958 = vmatprep.mubr.bf16.mxu0 0
        %2959 = vmatmul.mubr.bf16.gmra.mxu0 %v2834
        %v2960 = vpop.f32.mrf.mxu0
        %v2961 = vadd.f32 0.0, %v2960
        %v2962 = vpop.f32.mrf.mxu0
        %v2963 = vpop.f32.mrf.mxu0
        %v2964 = vadd.f32 0.0, %v2963
        %v2965 = vpop.f32.mrf.mxu0
        %2966 = vmatprep.mubr.bf16.mxu0 0
        %2967 = vmatmul.mubr.bf16.gmra.mxu0 %v2837
        %v2968 = vpop.f32.mrf.mxu0
        %v2969 = vadd.f32 0.0, %v2968
        %v2970 = vpop.f32.mrf.mxu0
        %v2971 = vpop.f32.mrf.mxu0
        %v2972 = vadd.f32 0.0, %v2971
        %v2973 = vpop.f32.mrf.mxu0
        %2974 = vmatprep.mubr.bf16.mxu0 0
        %2975 = vmatmul.mubr.bf16.gmra.mxu0 %v2840
        %v2976 = vpop.f32.mrf.mxu0
        %v2977 = vadd.f32 0.0, %v2976
        %v2978 = vpop.f32.mrf.mxu0
        %v2979 = vpop.f32.mrf.mxu0
        %v2980 = vadd.f32 0.0, %v2979
        %v2981 = vpop.f32.mrf.mxu0
        %2982 = vmatprep.mubr.bf16.mxu0 0
        %2983 = vmatmul.mubr.bf16.gmra.mxu0 %v2843
        %v2984 = vpop.f32.mrf.mxu0
        %v2985 = vadd.f32 0.0, %v2984
        %v2986 = vpop.f32.mrf.mxu0
        %v2987 = vpop.f32.mrf.mxu0
        %v2988 = vadd.f32 0.0, %v2987
        %v2989 = vpop.f32.mrf.mxu0
        %2990 = vmatprep.mubr.bf16.mxu0 0
        %2991 = vmatmul.mubr.bf16.gmra.mxu0 %v2846
        %v2992 = vpop.f32.mrf.mxu0
        %v2993 = vadd.f32 0.0, %v2992
        %v2994 = vpop.f32.mrf.mxu0
        %v2995 = vpop.f32.mrf.mxu0
        %v2996 = vadd.f32 0.0, %v2995
        %v2997 = vpop.f32.mrf.mxu0
        %2998 = vmatprep.mubr.bf16.mxu0 0
        %2999 = vmatmul.mubr.bf16.gmra.mxu0 %v2849
        %v3000 = vpop.f32.mrf.mxu0
        %v3001 = vadd.f32 0.0, %v3000
        %v3002 = vpop.f32.mrf.mxu0
        %v3003 = vpop.f32.mrf.mxu0
        %v3004 = vadd.f32 0.0, %v3003
        %v3005 = vpop.f32.mrf.mxu0
        %3006 = vmatprep.mubr.bf16.mxu0 0
        %3007 = vmatmul.mubr.bf16.gmra.mxu0 %v2852
        %v3008 = vpop.f32.mrf.mxu0
        %v3009 = vadd.f32 0.0, %v3008
        %v3010 = vpop.f32.mrf.mxu0
        %v3011 = vpop.f32.mrf.mxu0
        %v3012 = vadd.f32 0.0, %v3011
        %v3013 = vpop.f32.mrf.mxu0
        %3014 = vdwg.mxu0
        %v3015 = vadd.f32 %v2750, %v2889
        %v3016 = vadd.f32 %v2751, %v2892
        %v3017 = vadd.f32 %v2752, %v2897
        %v3018 = vadd.f32 %v2753, %v2900
        %v3019 = vadd.f32 %v2754, %v2905
        %v3020 = vadd.f32 %v2755, %v2908
        %v3021 = vadd.f32 %v2756, %v2913
        %v3022 = vadd.f32 %v2757, %v2916
        %v3023 = vadd.f32 %v2758, %v2921
        %v3024 = vadd.f32 %v2759, %v2924
        %v3025 = vadd.f32 %v2760, %v2929
        %v3026 = vadd.f32 %v2761, %v2932
        %v3027 = vadd.f32 %v2762, %v2937
        %v3028 = vadd.f32 %v2763, %v2940
        %v3029 = vadd.f32 %v2764, %v2945
        %v3030 = vadd.f32 %v2765, %v2948
        %v3031 = vadd.f32 %v2766, %v2953
        %v3032 = vadd.f32 %v2767, %v2956
        %v3033 = vadd.f32 %v2768, %v2961
        %v3034 = vadd.f32 %v2769, %v2964
        %v3035 = vadd.f32 %v2770, %v2969
        %v3036 = vadd.f32 %v2771, %v2972
        %v3037 = vadd.f32 %v2772, %v2977
        %v3038 = vadd.f32 %v2773, %v2980
        %v3039 = vadd.f32 %v2774, %v2985
        %v3040 = vadd.f32 %v2775, %v2988
        %v3041 = vadd.f32 %v2776, %v2993
        %v3042 = vadd.f32 %v2777, %v2996
        %v3043 = vadd.f32 %v2778, %v3001
        %v3044 = vadd.f32 %v2779, %v3004
        %v3045 = vadd.f32 %v2780, %v3009
        %v3046 = vadd.f32 %v2781, %v3012
        %v3047 = vpack.c.bf16 %v960, %v959
        %v3048 = vpack.c.bf16 %v962, %v961
        %v3049 = vpack.c.bf16 %v964, %v963
        %v3050 = vpack.c.bf16 %v966, %v965
        %v3051 = vpack.c.bf16 %v968, %v967
        %v3052 = vpack.c.bf16 %v970, %v969
        %v3053 = vpack.c.bf16 %v972, %v971
        %v3054 = vpack.c.bf16 %v974, %v973
        %v3055 = vpack.c.bf16 %v976, %v975
        %v3056 = vpack.c.bf16 %v978, %v977
        %v3057 = vpack.c.bf16 %v980, %v979
        %v3058 = vpack.c.bf16 %v982, %v981
        %v3059 = vpack.c.bf16 %v984, %v983
        %v3060 = vpack.c.bf16 %v986, %v985
        %v3061 = vpack.c.bf16 %v988, %v987
        %v3062 = vpack.c.bf16 %v990, %v989
        %v3063 = vld [vmem:[%s3 + $0x40] sm:$0xf]
        %v3064 = vld [vmem:[%s3 + $0x44] sm:$0xf]
        %v3067 = vunpack.c.l.b16 %v3063
        %v3068 = vunpack.c.l.b16 %v3064
        %v3069 = vpack.c.b16 %v3068, %v3067
        %v3072 = vsel %vm627, %v3047, 0
        %v3075 = vsel %vm627, %v3048, 0
        %v3078 = vsel %vm627, %v3049, 0
        %v3081 = vsel %vm627, %v3050, 0
        %v3084 = vsel %vm627, %v3051, 0
        %v3087 = vsel %vm627, %v3052, 0
        %v3090 = vsel %vm627, %v3053, 0
        %v3093 = vsel %vm627, %v3054, 0
        %v3096 = vsel %vm627, %v3055, 0
        %v3099 = vsel %vm627, %v3056, 0
        %v3102 = vsel %vm627, %v3057, 0
        %v3105 = vsel %vm627, %v3058, 0
        %v3108 = vsel %vm627, %v3059, 0
        %v3111 = vsel %vm627, %v3060, 0
        %v3114 = vsel %vm627, %v3061, 0
        %v3117 = vsel %vm627, %v3062, 0
        %3119 = vmatprep.subr.bf16.mxu0 0
        %3120 = vmatpush1.bf16.msra.mxu0 0
        %3121 = vmatprep.subr.bf16.mxu0 0
        %3122 = vmatpush1.bf16.msra.mxu0 0
        %3123 = vmatprep.subr.bf16.mxu0 0
        %3124 = vmatpush1.bf16.msra.mxu0 0
        %3125 = vmatprep.subr.bf16.mxu0 0
        %3126 = vmatpush1.bf16.msra.mxu0 0
        %3127 = vmatprep.subr.bf16.mxu0 0
        %3128 = vmatpush1.bf16.msra.mxu0 0
        %3129 = vmatprep.subr.bf16.mxu0 0
        %3130 = vmatpush1.bf16.msra.mxu0 0
        %3131 = vmatprep.subr.bf16.mxu0 0
        %3132 = vmatpush1.bf16.msra.mxu0 0
        %3133 = vmatprep.subr.bf16.mxu0 0
        %3134 = vmatpush1.bf16.msra.mxu0 %v3069
        %3135 = vmatprep.subr.bf16.mxu0 0
        %3136 = vmatpush2.bf16.msra.mxu0 0
        %3137 = vmatprep.subr.bf16.mxu0 0
        %3138 = vmatpush2.bf16.msra.mxu0 0
        %3139 = vmatprep.subr.bf16.mxu0 0
        %3140 = vmatpush2.bf16.msra.mxu0 0
        %3141 = vmatprep.subr.bf16.mxu0 0
        %3142 = vmatpush2.bf16.msra.mxu0 0
        %3143 = vmatprep.subr.bf16.mxu0 0
        %3144 = vmatpush2.bf16.msra.mxu0 0
        %3145 = vmatprep.subr.bf16.mxu0 0
        %3146 = vmatpush2.bf16.msra.mxu0 0
        %3147 = vmatprep.subr.bf16.mxu0 0
        %3148 = vmatpush2.bf16.msra.mxu0 0
        %3149 = vmatprep.subr.bf16.mxu0 0
        %3150 = vmatpush2.bf16.msra.mxu0 0
        %3151 = vmatprep.mubr.bf16.mxu0 0
        %3152 = vmatmul.mubr.bf16.gmra.mxu0 %v3072
        %v3153 = vpop.f32.mrf.mxu0
        %v3154 = vadd.f32 0.0, %v3153
        %v3155 = vpop.f32.mrf.mxu0
        %v3156 = vpop.f32.mrf.mxu0
        %v3157 = vadd.f32 0.0, %v3156
        %v3158 = vpop.f32.mrf.mxu0
        %3159 = vmatprep.mubr.bf16.mxu0 0
        %3160 = vmatmul.mubr.bf16.gmra.mxu0 %v3075
        %v3161 = vpop.f32.mrf.mxu0
        %v3162 = vadd.f32 0.0, %v3161
        %v3163 = vpop.f32.mrf.mxu0
        %v3164 = vpop.f32.mrf.mxu0
        %v3165 = vadd.f32 0.0, %v3164
        %v3166 = vpop.f32.mrf.mxu0
        %3167 = vmatprep.mubr.bf16.mxu0 0
        %3168 = vmatmul.mubr.bf16.gmra.mxu0 %v3078
        %v3169 = vpop.f32.mrf.mxu0
        %v3170 = vadd.f32 0.0, %v3169
        %v3171 = vpop.f32.mrf.mxu0
        %v3172 = vpop.f32.mrf.mxu0
        %v3173 = vadd.f32 0.0, %v3172
        %v3174 = vpop.f32.mrf.mxu0
        %3175 = vmatprep.mubr.bf16.mxu0 0
        %3176 = vmatmul.mubr.bf16.gmra.mxu0 %v3081
        %v3177 = vpop.f32.mrf.mxu0
        %v3178 = vadd.f32 0.0, %v3177
        %v3179 = vpop.f32.mrf.mxu0
        %v3180 = vpop.f32.mrf.mxu0
        %v3181 = vadd.f32 0.0, %v3180
        %v3182 = vpop.f32.mrf.mxu0
        %3183 = vmatprep.mubr.bf16.mxu0 0
        %3184 = vmatmul.mubr.bf16.gmra.mxu0 %v3084
        %v3185 = vpop.f32.mrf.mxu0
        %v3186 = vadd.f32 0.0, %v3185
        %v3187 = vpop.f32.mrf.mxu0
        %v3188 = vpop.f32.mrf.mxu0
        %v3189 = vadd.f32 0.0, %v3188
        %v3190 = vpop.f32.mrf.mxu0
        %3191 = vmatprep.mubr.bf16.mxu0 0
        %3192 = vmatmul.mubr.bf16.gmra.mxu0 %v3087
        %v3193 = vpop.f32.mrf.mxu0
        %v3194 = vadd.f32 0.0, %v3193
        %v3195 = vpop.f32.mrf.mxu0
        %v3196 = vpop.f32.mrf.mxu0
        %v3197 = vadd.f32 0.0, %v3196
        %v3198 = vpop.f32.mrf.mxu0
        %3199 = vmatprep.mubr.bf16.mxu0 0
        %3200 = vmatmul.mubr.bf16.gmra.mxu0 %v3090
        %v3201 = vpop.f32.mrf.mxu0
        %v3202 = vadd.f32 0.0, %v3201
        %v3203 = vpop.f32.mrf.mxu0
        %v3204 = vpop.f32.mrf.mxu0
        %v3205 = vadd.f32 0.0, %v3204
        %v3206 = vpop.f32.mrf.mxu0
        %3207 = vmatprep.mubr.bf16.mxu0 0
        %3208 = vmatmul.mubr.bf16.gmra.mxu0 %v3093
        %v3209 = vpop.f32.mrf.mxu0
        %v3210 = vadd.f32 0.0, %v3209
        %v3211 = vpop.f32.mrf.mxu0
        %v3212 = vpop.f32.mrf.mxu0
        %v3213 = vadd.f32 0.0, %v3212
        %v3214 = vpop.f32.mrf.mxu0
        %3215 = vmatprep.mubr.bf16.mxu0 0
        %3216 = vmatmul.mubr.bf16.gmra.mxu0 %v3096
        %v3217 = vpop.f32.mrf.mxu0
        %v3218 = vadd.f32 0.0, %v3217
        %v3219 = vpop.f32.mrf.mxu0
        %v3220 = vpop.f32.mrf.mxu0
        %v3221 = vadd.f32 0.0, %v3220
        %v3222 = vpop.f32.mrf.mxu0
        %3223 = vmatprep.mubr.bf16.mxu0 0
        %3224 = vmatmul.mubr.bf16.gmra.mxu0 %v3099
        %v3225 = vpop.f32.mrf.mxu0
        %v3226 = vadd.f32 0.0, %v3225
        %v3227 = vpop.f32.mrf.mxu0
        %v3228 = vpop.f32.mrf.mxu0
        %v3229 = vadd.f32 0.0, %v3228
        %v3230 = vpop.f32.mrf.mxu0
        %3231 = vmatprep.mubr.bf16.mxu0 0
        %3232 = vmatmul.mubr.bf16.gmra.mxu0 %v3102
        %v3233 = vpop.f32.mrf.mxu0
        %v3234 = vadd.f32 0.0, %v3233
        %v3235 = vpop.f32.mrf.mxu0
        %v3236 = vpop.f32.mrf.mxu0
        %v3237 = vadd.f32 0.0, %v3236
        %v3238 = vpop.f32.mrf.mxu0
        %3239 = vmatprep.mubr.bf16.mxu0 0
        %3240 = vmatmul.mubr.bf16.gmra.mxu0 %v3105
        %v3241 = vpop.f32.mrf.mxu0
        %v3242 = vadd.f32 0.0, %v3241
        %v3243 = vpop.f32.mrf.mxu0
        %v3244 = vpop.f32.mrf.mxu0
        %v3245 = vadd.f32 0.0, %v3244
        %v3246 = vpop.f32.mrf.mxu0
        %3247 = vmatprep.mubr.bf16.mxu0 0
        %3248 = vmatmul.mubr.bf16.gmra.mxu0 %v3108
        %v3249 = vpop.f32.mrf.mxu0
        %v3250 = vadd.f32 0.0, %v3249
        %v3251 = vpop.f32.mrf.mxu0
        %v3252 = vpop.f32.mrf.mxu0
        %v3253 = vadd.f32 0.0, %v3252
        %v3254 = vpop.f32.mrf.mxu0
        %3255 = vmatprep.mubr.bf16.mxu0 0
        %3256 = vmatmul.mubr.bf16.gmra.mxu0 %v3111
        %v3257 = vpop.f32.mrf.mxu0
        %v3258 = vadd.f32 0.0, %v3257
        %v3259 = vpop.f32.mrf.mxu0
        %v3260 = vpop.f32.mrf.mxu0
        %v3261 = vadd.f32 0.0, %v3260
        %v3262 = vpop.f32.mrf.mxu0
        %3263 = vmatprep.mubr.bf16.mxu0 0
        %3264 = vmatmul.mubr.bf16.gmra.mxu0 %v3114
        %v3265 = vpop.f32.mrf.mxu0
        %v3266 = vadd.f32 0.0, %v3265
        %v3267 = vpop.f32.mrf.mxu0
        %v3268 = vpop.f32.mrf.mxu0
        %v3269 = vadd.f32 0.0, %v3268
        %v3270 = vpop.f32.mrf.mxu0
        %3271 = vmatprep.mubr.bf16.mxu0 0
        %3272 = vmatmul.mubr.bf16.gmra.mxu0 %v3117
        %v3273 = vpop.f32.mrf.mxu0
        %v3274 = vadd.f32 0.0, %v3273
        %v3275 = vpop.f32.mrf.mxu0
        %v3276 = vpop.f32.mrf.mxu0
        %v3277 = vadd.f32 0.0, %v3276
        %v3278 = vpop.f32.mrf.mxu0
        %3279 = vdwg.mxu0
        %v3280 = vadd.f32 %v3015, %v3154
        %v3281 = vadd.f32 %v3016, %v3157
        %v3282 = vadd.f32 %v3017, %v3162
        %v3283 = vadd.f32 %v3018, %v3165
        %v3284 = vadd.f32 %v3019, %v3170
        %v3285 = vadd.f32 %v3020, %v3173
        %v3286 = vadd.f32 %v3021, %v3178
        %v3287 = vadd.f32 %v3022, %v3181
        %v3288 = vadd.f32 %v3023, %v3186
        %v3289 = vadd.f32 %v3024, %v3189
        %v3290 = vadd.f32 %v3025, %v3194
        %v3291 = vadd.f32 %v3026, %v3197
        %v3292 = vadd.f32 %v3027, %v3202
        %v3293 = vadd.f32 %v3028, %v3205
        %v3294 = vadd.f32 %v3029, %v3210
        %v3295 = vadd.f32 %v3030, %v3213
        %v3296 = vadd.f32 %v3031, %v3218
        %v3297 = vadd.f32 %v3032, %v3221
        %v3298 = vadd.f32 %v3033, %v3226
        %v3299 = vadd.f32 %v3034, %v3229
        %v3300 = vadd.f32 %v3035, %v3234
        %v3301 = vadd.f32 %v3036, %v3237
        %v3302 = vadd.f32 %v3037, %v3242
        %v3303 = vadd.f32 %v3038, %v3245
        %v3304 = vadd.f32 %v3039, %v3250
        %v3305 = vadd.f32 %v3040, %v3253
        %v3306 = vadd.f32 %v3041, %v3258
        %v3307 = vadd.f32 %v3042, %v3261
        %v3308 = vadd.f32 %v3043, %v3266
        %v3309 = vadd.f32 %v3044, %v3269
        %v3310 = vadd.f32 %v3045, %v3274
        %v3311 = vadd.f32 %v3046, %v3277
        %v3312 = vld [vmem:[%s4] sm:$0x1]
        %v3314 = vlaneseq
        %v3315 = vshrl.u32 %v3314, 7
        %v3316 = vsub.s32 0, %v3315
        %v3317 = vrot.slane %v3312, %v3316
        %v3319 = vadd.f32 %v3280, %v3317
        %v3320 = vadd.f32 %v3281, %v3317
        %v3321 = vadd.f32 %v3282, %v3317
        %v3322 = vadd.f32 %v3283, %v3317
        %v3323 = vadd.f32 %v3284, %v3317
        %v3324 = vadd.f32 %v3285, %v3317
        %v3325 = vadd.f32 %v3286, %v3317
        %v3326 = vadd.f32 %v3287, %v3317
        %v3327 = vadd.f32 %v3288, %v3317
        %v3328 = vadd.f32 %v3289, %v3317
        %v3329 = vadd.f32 %v3290, %v3317
        %v3330 = vadd.f32 %v3291, %v3317
        %v3331 = vadd.f32 %v3292, %v3317
        %v3332 = vadd.f32 %v3293, %v3317
        %v3333 = vadd.f32 %v3294, %v3317
        %v3334 = vadd.f32 %v3295, %v3317
        %v3335 = vadd.f32 %v3296, %v3317
        %v3336 = vadd.f32 %v3297, %v3317
        %v3337 = vadd.f32 %v3298, %v3317
        %v3338 = vadd.f32 %v3299, %v3317
        %v3339 = vadd.f32 %v3300, %v3317
        %v3340 = vadd.f32 %v3301, %v3317
        %v3341 = vadd.f32 %v3302, %v3317
        %v3342 = vadd.f32 %v3303, %v3317
        %v3343 = vadd.f32 %v3304, %v3317
        %v3344 = vadd.f32 %v3305, %v3317
        %v3345 = vadd.f32 %v3306, %v3317
        %v3346 = vadd.f32 %v3307, %v3317
        %v3347 = vadd.f32 %v3308, %v3317
        %v3348 = vadd.f32 %v3309, %v3317
        %v3349 = vadd.f32 %v3310, %v3317
        %v3350 = vadd.f32 %v3311, %v3317
        %v3351 = vmax.f32 %v3319, 0.0
        %v3352 = vmax.f32 %v3320, 0.0
        %v3353 = vmax.f32 %v3321, 0.0
        %v3354 = vmax.f32 %v3322, 0.0
        %v3355 = vmax.f32 %v3323, 0.0
        %v3356 = vmax.f32 %v3324, 0.0
        %v3357 = vmax.f32 %v3325, 0.0
        %v3358 = vmax.f32 %v3326, 0.0
        %v3359 = vmax.f32 %v3327, 0.0
        %v3360 = vmax.f32 %v3328, 0.0
        %v3361 = vmax.f32 %v3329, 0.0
        %v3362 = vmax.f32 %v3330, 0.0
        %v3363 = vmax.f32 %v3331, 0.0
        %v3364 = vmax.f32 %v3332, 0.0
        %v3365 = vmax.f32 %v3333, 0.0
        %v3366 = vmax.f32 %v3334, 0.0
        %v3367 = vmax.f32 %v3335, 0.0
        %v3368 = vmax.f32 %v3336, 0.0
        %v3369 = vmax.f32 %v3337, 0.0
        %v3370 = vmax.f32 %v3338, 0.0
        %v3371 = vmax.f32 %v3339, 0.0
        %v3372 = vmax.f32 %v3340, 0.0
        %v3373 = vmax.f32 %v3341, 0.0
        %v3374 = vmax.f32 %v3342, 0.0
        %v3375 = vmax.f32 %v3343, 0.0
        %v3376 = vmax.f32 %v3344, 0.0
        %v3377 = vmax.f32 %v3345, 0.0
        %v3378 = vmax.f32 %v3346, 0.0
        %v3379 = vmax.f32 %v3347, 0.0
        %v3380 = vmax.f32 %v3348, 0.0
        %v3381 = vmax.f32 %v3349, 0.0
        %v3382 = vmax.f32 %v3350, 0.0
        %v3383 = vpack.c.bf16 %v3352, %v3351
        %v3384 = vpack.c.bf16 %v3354, %v3353
        %v3385 = vpack.c.bf16 %v3356, %v3355
        %v3386 = vpack.c.bf16 %v3358, %v3357
        %v3387 = vpack.c.bf16 %v3360, %v3359
        %v3388 = vpack.c.bf16 %v3362, %v3361
        %v3389 = vpack.c.bf16 %v3364, %v3363
        %v3390 = vpack.c.bf16 %v3366, %v3365
        %v3391 = vpack.c.bf16 %v3368, %v3367
        %v3392 = vpack.c.bf16 %v3370, %v3369
        %v3393 = vpack.c.bf16 %v3372, %v3371
        %v3394 = vpack.c.bf16 %v3374, %v3373
        %v3395 = vpack.c.bf16 %v3376, %v3375
        %v3396 = vpack.c.bf16 %v3378, %v3377
        %v3397 = vpack.c.bf16 %v3380, %v3379
        %v3398 = vpack.c.bf16 %v3382, %v3381
        %v3399 = vld [vmem:[%s5] sm:$0xf]
        %v3400 = vld [vmem:[%s5 + $0x4] sm:$0xf]
        %v3401 = vld [vmem:[%s6] sm:$0x1]
        %v3403 = vlaneseq
        %v3404 = vshrl.u32 %v3403, 7
        %v3405 = vsub.s32 0, %v3404
        %v3406 = vrot.slane %v3401, %v3405
        %v3410 = vunpack.c.l.b16 %v3399
        %v3411 = vunpack.c.l.b16 %v3400
        %v3412 = vpack.c.b16 %v3411, %v3410
        %v3415 = vsel %vm627, %v3383, 0
        %v3418 = vsel %vm627, %v3384, 0
        %v3421 = vsel %vm627, %v3385, 0
        %v3424 = vsel %vm627, %v3386, 0
        %v3427 = vsel %vm627, %v3387, 0
        %v3430 = vsel %vm627, %v3388, 0
        %v3433 = vsel %vm627, %v3389, 0
        %v3436 = vsel %vm627, %v3390, 0
        %v3439 = vsel %vm627, %v3391, 0
        %v3442 = vsel %vm627, %v3392, 0
        %v3445 = vsel %vm627, %v3393, 0
        %v3448 = vsel %vm627, %v3394, 0
        %v3451 = vsel %vm627, %v3395, 0
        %v3454 = vsel %vm627, %v3396, 0
        %v3457 = vsel %vm627, %v3397, 0
        %v3460 = vsel %vm627, %v3398, 0
        %3462 = vmatprep.subr.bf16.mxu0 0
        %3463 = vmatpush1.bf16.msra.mxu0 0
        %3464 = vmatprep.subr.bf16.mxu0 0
        %3465 = vmatpush1.bf16.msra.mxu0 0
        %3466 = vmatprep.subr.bf16.mxu0 0
        %3467 = vmatpush1.bf16.msra.mxu0 0
        %3468 = vmatprep.subr.bf16.mxu0 0
        %3469 = vmatpush1.bf16.msra.mxu0 0
        %3470 = vmatprep.subr.bf16.mxu0 0
        %3471 = vmatpush1.bf16.msra.mxu0 0
        %3472 = vmatprep.subr.bf16.mxu0 0
        %3473 = vmatpush1.bf16.msra.mxu0 0
        %3474 = vmatprep.subr.bf16.mxu0 0
        %3475 = vmatpush1.bf16.msra.mxu0 0
        %3476 = vmatprep.subr.bf16.mxu0 0
        %3477 = vmatpush1.bf16.msra.mxu0 %v3412
        %3478 = vmatprep.subr.bf16.mxu0 0
        %3479 = vmatpush2.bf16.msra.mxu0 0
        %3480 = vmatprep.subr.bf16.mxu0 0
        %3481 = vmatpush2.bf16.msra.mxu0 0
        %3482 = vmatprep.subr.bf16.mxu0 0
        %3483 = vmatpush2.bf16.msra.mxu0 0
        %3484 = vmatprep.subr.bf16.mxu0 0
        %3485 = vmatpush2.bf16.msra.mxu0 0
        %3486 = vmatprep.subr.bf16.mxu0 0
        %3487 = vmatpush2.bf16.msra.mxu0 0
        %3488 = vmatprep.subr.bf16.mxu0 0
        %3489 = vmatpush2.bf16.msra.mxu0 0
        %3490 = vmatprep.subr.bf16.mxu0 0
        %3491 = vmatpush2.bf16.msra.mxu0 0
        %3492 = vmatprep.subr.bf16.mxu0 0
        %3493 = vmatpush2.bf16.msra.mxu0 0
        %3494 = vmatprep.mubr.bf16.mxu0 0
        %3495 = vmatmul.mubr.bf16.gmra.mxu0 %v3415
        %v3496 = vpop.f32.mrf.mxu0
        %v3497 = vadd.f32 %v3406, %v3496
        %v3498 = vpop.f32.mrf.mxu0
        %v3499 = vpop.f32.mrf.mxu0
        %v3500 = vadd.f32 %v3406, %v3499
        %v3501 = vpop.f32.mrf.mxu0
        %3502 = vmatprep.mubr.bf16.mxu0 0
        %3503 = vmatmul.mubr.bf16.gmra.mxu0 %v3418
        %v3504 = vpop.f32.mrf.mxu0
        %v3505 = vadd.f32 %v3406, %v3504
        %v3506 = vpop.f32.mrf.mxu0
        %v3507 = vpop.f32.mrf.mxu0
        %v3508 = vadd.f32 %v3406, %v3507
        %v3509 = vpop.f32.mrf.mxu0
        %3510 = vmatprep.mubr.bf16.mxu0 0
        %3511 = vmatmul.mubr.bf16.gmra.mxu0 %v3421
        %v3512 = vpop.f32.mrf.mxu0
        %v3513 = vadd.f32 %v3406, %v3512
        %v3514 = vpop.f32.mrf.mxu0
        %v3515 = vpop.f32.mrf.mxu0
        %v3516 = vadd.f32 %v3406, %v3515
        %v3517 = vpop.f32.mrf.mxu0
        %3518 = vmatprep.mubr.bf16.mxu0 0
        %3519 = vmatmul.mubr.bf16.gmra.mxu0 %v3424
        %v3520 = vpop.f32.mrf.mxu0
        %v3521 = vadd.f32 %v3406, %v3520
        %v3522 = vpop.f32.mrf.mxu0
        %v3523 = vpop.f32.mrf.mxu0
        %v3524 = vadd.f32 %v3406, %v3523
        %v3525 = vpop.f32.mrf.mxu0
        %3526 = vmatprep.mubr.bf16.mxu0 0
        %3527 = vmatmul.mubr.bf16.gmra.mxu0 %v3427
        %v3528 = vpop.f32.mrf.mxu0
        %v3529 = vadd.f32 %v3406, %v3528
        %v3530 = vpop.f32.mrf.mxu0
        %v3531 = vpop.f32.mrf.mxu0
        %v3532 = vadd.f32 %v3406, %v3531
        %v3533 = vpop.f32.mrf.mxu0
        %3534 = vmatprep.mubr.bf16.mxu0 0
        %3535 = vmatmul.mubr.bf16.gmra.mxu0 %v3430
        %v3536 = vpop.f32.mrf.mxu0
        %v3537 = vadd.f32 %v3406, %v3536
        %v3538 = vpop.f32.mrf.mxu0
        %v3539 = vpop.f32.mrf.mxu0
        %v3540 = vadd.f32 %v3406, %v3539
        %v3541 = vpop.f32.mrf.mxu0
        %3542 = vmatprep.mubr.bf16.mxu0 0
        %3543 = vmatmul.mubr.bf16.gmra.mxu0 %v3433
        %v3544 = vpop.f32.mrf.mxu0
        %v3545 = vadd.f32 %v3406, %v3544
        %v3546 = vpop.f32.mrf.mxu0
        %v3547 = vpop.f32.mrf.mxu0
        %v3548 = vadd.f32 %v3406, %v3547
        %v3549 = vpop.f32.mrf.mxu0
        %3550 = vmatprep.mubr.bf16.mxu0 0
        %3551 = vmatmul.mubr.bf16.gmra.mxu0 %v3436
        %v3552 = vpop.f32.mrf.mxu0
        %v3553 = vadd.f32 %v3406, %v3552
        %v3554 = vpop.f32.mrf.mxu0
        %v3555 = vpop.f32.mrf.mxu0
        %v3556 = vadd.f32 %v3406, %v3555
        %v3557 = vpop.f32.mrf.mxu0
        %3558 = vmatprep.mubr.bf16.mxu0 0
        %3559 = vmatmul.mubr.bf16.gmra.mxu0 %v3439
        %v3560 = vpop.f32.mrf.mxu0
        %v3561 = vadd.f32 %v3406, %v3560
        %v3562 = vpop.f32.mrf.mxu0
        %v3563 = vpop.f32.mrf.mxu0
        %v3564 = vadd.f32 %v3406, %v3563
        %v3565 = vpop.f32.mrf.mxu0
        %3566 = vmatprep.mubr.bf16.mxu0 0
        %3567 = vmatmul.mubr.bf16.gmra.mxu0 %v3442
        %v3568 = vpop.f32.mrf.mxu0
        %v3569 = vadd.f32 %v3406, %v3568
        %v3570 = vpop.f32.mrf.mxu0
        %v3571 = vpop.f32.mrf.mxu0
        %v3572 = vadd.f32 %v3406, %v3571
        %v3573 = vpop.f32.mrf.mxu0
        %3574 = vmatprep.mubr.bf16.mxu0 0
        %3575 = vmatmul.mubr.bf16.gmra.mxu0 %v3445
        %v3576 = vpop.f32.mrf.mxu0
        %v3577 = vadd.f32 %v3406, %v3576
        %v3578 = vpop.f32.mrf.mxu0
        %v3579 = vpop.f32.mrf.mxu0
        %v3580 = vadd.f32 %v3406, %v3579
        %v3581 = vpop.f32.mrf.mxu0
        %3582 = vmatprep.mubr.bf16.mxu0 0
        %3583 = vmatmul.mubr.bf16.gmra.mxu0 %v3448
        %v3584 = vpop.f32.mrf.mxu0
        %v3585 = vadd.f32 %v3406, %v3584
        %v3586 = vpop.f32.mrf.mxu0
        %v3587 = vpop.f32.mrf.mxu0
        %v3588 = vadd.f32 %v3406, %v3587
        %v3589 = vpop.f32.mrf.mxu0
        %3590 = vmatprep.mubr.bf16.mxu0 0
        %3591 = vmatmul.mubr.bf16.gmra.mxu0 %v3451
        %v3592 = vpop.f32.mrf.mxu0
        %v3593 = vadd.f32 %v3406, %v3592
        %v3594 = vpop.f32.mrf.mxu0
        %v3595 = vpop.f32.mrf.mxu0
        %v3596 = vadd.f32 %v3406, %v3595
        %v3597 = vpop.f32.mrf.mxu0
        %3598 = vmatprep.mubr.bf16.mxu0 0
        %3599 = vmatmul.mubr.bf16.gmra.mxu0 %v3454
        %v3600 = vpop.f32.mrf.mxu0
        %v3601 = vadd.f32 %v3406, %v3600
        %v3602 = vpop.f32.mrf.mxu0
        %v3603 = vpop.f32.mrf.mxu0
        %v3604 = vadd.f32 %v3406, %v3603
        %v3605 = vpop.f32.mrf.mxu0
        %3606 = vmatprep.mubr.bf16.mxu0 0
        %3607 = vmatmul.mubr.bf16.gmra.mxu0 %v3457
        %v3608 = vpop.f32.mrf.mxu0
        %v3609 = vadd.f32 %v3406, %v3608
        %v3610 = vpop.f32.mrf.mxu0
        %v3611 = vpop.f32.mrf.mxu0
        %v3612 = vadd.f32 %v3406, %v3611
        %v3613 = vpop.f32.mrf.mxu0
        %3614 = vmatprep.mubr.bf16.mxu0 0
        %3615 = vmatmul.mubr.bf16.gmra.mxu0 %v3460
        %v3616 = vpop.f32.mrf.mxu0
        %v3617 = vadd.f32 %v3406, %v3616
        %v3618 = vpop.f32.mrf.mxu0
        %v3619 = vpop.f32.mrf.mxu0
        %v3620 = vadd.f32 %v3406, %v3619
        %v3621 = vpop.f32.mrf.mxu0
        %3622 = vdwg.mxu0
        %v3623 = vld [vmem:[%s266] sm:$0xff]
        %v3624 = vld [vmem:[%s266 + $0x8] sm:$0xff]
        %v3625 = vld [vmem:[%s266 + $0x10] sm:$0xff]
        %v3626 = vld [vmem:[%s266 + $0x18] sm:$0xff]
        %v3627 = vld [vmem:[%s266 + $0x20] sm:$0xff]
        %v3628 = vld [vmem:[%s266 + $0x28] sm:$0xff]
        %v3629 = vld [vmem:[%s266 + $0x30] sm:$0xff]
        %v3630 = vld [vmem:[%s266 + $0x38] sm:$0xff]
        %v3631 = vld [vmem:[%s266 + $0x40] sm:$0xff]
        %v3632 = vld [vmem:[%s266 + $0x48] sm:$0xff]
        %v3633 = vld [vmem:[%s266 + $0x50] sm:$0xff]
        %v3634 = vld [vmem:[%s266 + $0x58] sm:$0xff]
        %v3635 = vld [vmem:[%s266 + $0x60] sm:$0xff]
        %v3636 = vld [vmem:[%s266 + $0x68] sm:$0xff]
        %v3637 = vld [vmem:[%s266 + $0x70] sm:$0xff]
        %v3638 = vld [vmem:[%s266 + $0x78] sm:$0xff]
        %v3639 = vld [vmem:[%s266 + $0x80] sm:$0xff]
        %v3640 = vld [vmem:[%s266 + $0x88] sm:$0xff]
        %v3641 = vld [vmem:[%s266 + $0x90] sm:$0xff]
        %v3642 = vld [vmem:[%s266 + $0x98] sm:$0xff]
        %v3643 = vld [vmem:[%s266 + $0xa0] sm:$0xff]
        %v3644 = vld [vmem:[%s266 + $0xa8] sm:$0xff]
        %v3645 = vld [vmem:[%s266 + $0xb0] sm:$0xff]
        %v3646 = vld [vmem:[%s266 + $0xb8] sm:$0xff]
        %v3647 = vld [vmem:[%s266 + $0xc0] sm:$0xff]
        %v3648 = vld [vmem:[%s266 + $0xc8] sm:$0xff]
        %v3649 = vld [vmem:[%s266 + $0xd0] sm:$0xff]
        %v3650 = vld [vmem:[%s266 + $0xd8] sm:$0xff]
        %v3651 = vld [vmem:[%s266 + $0xe0] sm:$0xff]
        %v3652 = vld [vmem:[%s266 + $0xe8] sm:$0xff]
        %v3653 = vld [vmem:[%s266 + $0xf0] sm:$0xff]
        %v3654 = vld [vmem:[%s266 + $0xf8] sm:$0xff]
        %v3655 = vadd.f32 %v3497, %v3623
        %v3656 = vadd.f32 %v3500, %v3624
        %v3657 = vadd.f32 %v3505, %v3625
        %v3658 = vadd.f32 %v3508, %v3626
        %v3659 = vadd.f32 %v3513, %v3627
        %v3660 = vadd.f32 %v3516, %v3628
        %v3661 = vadd.f32 %v3521, %v3629
        %v3662 = vadd.f32 %v3524, %v3630
        %v3663 = vadd.f32 %v3529, %v3631
        %v3664 = vadd.f32 %v3532, %v3632
        %v3665 = vadd.f32 %v3537, %v3633
        %v3666 = vadd.f32 %v3540, %v3634
        %v3667 = vadd.f32 %v3545, %v3635
        %v3668 = vadd.f32 %v3548, %v3636
        %v3669 = vadd.f32 %v3553, %v3637
        %v3670 = vadd.f32 %v3556, %v3638
        %v3671 = vadd.f32 %v3561, %v3639
        %v3672 = vadd.f32 %v3564, %v3640
        %v3673 = vadd.f32 %v3569, %v3641
        %v3674 = vadd.f32 %v3572, %v3642
        %v3675 = vadd.f32 %v3577, %v3643
        %v3676 = vadd.f32 %v3580, %v3644
        %v3677 = vadd.f32 %v3585, %v3645
        %v3678 = vadd.f32 %v3588, %v3646
        %v3679 = vadd.f32 %v3593, %v3647
        %v3680 = vadd.f32 %v3596, %v3648
        %v3681 = vadd.f32 %v3601, %v3649
        %v3682 = vadd.f32 %v3604, %v3650
        %v3683 = vadd.f32 %v3609, %v3651
        %v3684 = vadd.f32 %v3612, %v3652
        %v3685 = vadd.f32 %v3617, %v3653
        %v3686 = vadd.f32 %v3620, %v3654
        %v3687 = vmax.f32 %v3655, 0.0
        %v3688 = vmax.f32 %v3656, 0.0
        %v3689 = vmax.f32 %v3657, 0.0
        %v3690 = vmax.f32 %v3658, 0.0
        %v3691 = vmax.f32 %v3659, 0.0
        %v3692 = vmax.f32 %v3660, 0.0
        %v3693 = vmax.f32 %v3661, 0.0
        %v3694 = vmax.f32 %v3662, 0.0
        %v3695 = vmax.f32 %v3663, 0.0
        %v3696 = vmax.f32 %v3664, 0.0
        %v3697 = vmax.f32 %v3665, 0.0
        %v3698 = vmax.f32 %v3666, 0.0
        %v3699 = vmax.f32 %v3667, 0.0
        %v3700 = vmax.f32 %v3668, 0.0
        %v3701 = vmax.f32 %v3669, 0.0
        %v3702 = vmax.f32 %v3670, 0.0
        %v3703 = vmax.f32 %v3671, 0.0
        %v3704 = vmax.f32 %v3672, 0.0
        %v3705 = vmax.f32 %v3673, 0.0
        %v3706 = vmax.f32 %v3674, 0.0
        %v3707 = vmax.f32 %v3675, 0.0
        %v3708 = vmax.f32 %v3676, 0.0
        %v3709 = vmax.f32 %v3677, 0.0
        %v3710 = vmax.f32 %v3678, 0.0
        %v3711 = vmax.f32 %v3679, 0.0
        %v3712 = vmax.f32 %v3680, 0.0
        %v3713 = vmax.f32 %v3681, 0.0
        %v3714 = vmax.f32 %v3682, 0.0
        %v3715 = vmax.f32 %v3683, 0.0
        %v3716 = vmax.f32 %v3684, 0.0
        %v3717 = vmax.f32 %v3685, 0.0
        %v3718 = vmax.f32 %v3686, 0.0
        %3719 = vst.msk [vmem:[%s296] sm:$0xff] %vm385, %v3687
        %3720 = vst.msk [vmem:[%s296 + $0x8] sm:$0xff] %vm385, %v3688
        %3721 = vst.msk [vmem:[%s296 + $0x10] sm:$0xff] %vm385, %v3689
        %3722 = vst.msk [vmem:[%s296 + $0x18] sm:$0xff] %vm385, %v3690
        %3723 = vst.msk [vmem:[%s296 + $0x20] sm:$0xff] %vm385, %v3691
        %3724 = vst.msk [vmem:[%s296 + $0x28] sm:$0xff] %vm385, %v3692
        %3725 = vst.msk [vmem:[%s296 + $0x30] sm:$0xff] %vm385, %v3693
        %3726 = vst.msk [vmem:[%s296 + $0x38] sm:$0xff] %vm385, %v3694
        %3727 = vst.msk [vmem:[%s296 + $0x40] sm:$0xff] %vm385, %v3695
        %3728 = vst.msk [vmem:[%s296 + $0x48] sm:$0xff] %vm385, %v3696
        %3729 = vst.msk [vmem:[%s296 + $0x50] sm:$0xff] %vm385, %v3697
        %3730 = vst.msk [vmem:[%s296 + $0x58] sm:$0xff] %vm385, %v3698
        %3731 = vst.msk [vmem:[%s296 + $0x60] sm:$0xff] %vm385, %v3699
        %3732 = vst.msk [vmem:[%s296 + $0x68] sm:$0xff] %vm385, %v3700
        %3733 = vst.msk [vmem:[%s296 + $0x70] sm:$0xff] %vm385, %v3701
        %3734 = vst.msk [vmem:[%s296 + $0x78] sm:$0xff] %vm385, %v3702
        %3735 = vst.msk [vmem:[%s296 + $0x80] sm:$0xff] %vm385, %v3703
        %3736 = vst.msk [vmem:[%s296 + $0x88] sm:$0xff] %vm385, %v3704
        %3737 = vst.msk [vmem:[%s296 + $0x90] sm:$0xff] %vm385, %v3705
        %3738 = vst.msk [vmem:[%s296 + $0x98] sm:$0xff] %vm385, %v3706
        %3739 = vst.msk [vmem:[%s296 + $0xa0] sm:$0xff] %vm385, %v3707
        %3740 = vst.msk [vmem:[%s296 + $0xa8] sm:$0xff] %vm385, %v3708
        %3741 = vst.msk [vmem:[%s296 + $0xb0] sm:$0xff] %vm385, %v3709
        %3742 = vst.msk [vmem:[%s296 + $0xb8] sm:$0xff] %vm385, %v3710
        %3743 = vst.msk [vmem:[%s296 + $0xc0] sm:$0xff] %vm385, %v3711
        %3744 = vst.msk [vmem:[%s296 + $0xc8] sm:$0xff] %vm385, %v3712
        %3745 = vst.msk [vmem:[%s296 + $0xd0] sm:$0xff] %vm385, %v3713
        %3746 = vst.msk [vmem:[%s296 + $0xd8] sm:$0xff] %vm385, %v3714
        %3747 = vst.msk [vmem:[%s296 + $0xe0] sm:$0xff] %vm385, %v3715
        %3748 = vst.msk [vmem:[%s296 + $0xe8] sm:$0xff] %vm385, %v3716
        %3749 = vst.msk [vmem:[%s296 + $0xf0] sm:$0xff] %vm385, %v3717
        %3750 = vst.msk [vmem:[%s296 + $0xf8] sm:$0xff] %vm385, %v3718
        %s3751 = sand.u32 %s184, 1
        %s3752 = scalar_lea.sflag [#allocation5], %s3751
        %s3753 = sand.u32 %s184, 1
        %s3754 = smul.addr %s3753, 256
        %s3755 = scalar_lea.vmem [#allocation6], %s3754
        // Predicated region
        $region53: #{tpu_custom_call.1} parent=47 // pred_check
          %p3756 = pneg %p194
        $region54: #{tpu_custom_call.1} parent=47 // pred_check_branch
          %3758 = sbr.rel (%p3756) target = $region56
        $region55: #{tpu_custom_call.1} parent=47 // pred_region
          %s3760 = ssub.s32 4096, 4096
          %3761 = vsyncadd %s3752, %s3760
          %s3762 = smul.addr %s24, 32
          %s3763 = smul.addr %s3762, 128
          %s3764 = scalar_lea.hbm %s7, %s3763
          %s3765 = sshll.u32 %s3755, 4
          %s3766 = int_to_ptr.vmem [resolvable:$true] %s3765
          %3771 = dma.vmem_to_hbm [thread:$0]  %s3766, 4096, %s3764, %s3752, 128, 128, 8
        $region56: #{tpu_custom_call.1} parent=47 // pred_fallthru
          _
      $region48: #{tpu_custom_call.1} parent=5 // pred_fallthru
        _
      %p3772 = scmp.le.s32.totalorder 2, %s19
      // Predicated region
      $region57: #{tpu_custom_call.1} parent=5 // pred_check
        %p3773 = pneg %p3772
      $region58: #{tpu_custom_call.1} parent=5 // pred_check_branch
        %3775 = sbr.rel (%p3773) target = $region60
      $region59: #{tpu_custom_call.1} parent=5 // pred_region
        %s3776 = ssub.s32 %s19, 2
        // Predicated region
        $region61: #{tpu_custom_call.1} parent=59 // pred_check
          %p3777 = pneg %p200
        $region62: #{tpu_custom_call.1} parent=59 // pred_check_branch
          %3779 = sbr.rel (%p3777) target = $region64
        $region63: #{tpu_custom_call.1} parent=59 // pred_region
          %s3780 = sand.u32 %s185, 1
          %s3781 = scalar_lea.sflag [#allocation5], %s3780
          %s3782 = sand.u32 %s185, 1
          %s3783 = smul.addr %s3782, 256
          %s3784 = scalar_lea.vmem [#allocation6], %s3783
          %3785 = dma.done %s3781, 4096
        $region64: #{tpu_custom_call.1} parent=59 // pred_fallthru
          _
      $region60: #{tpu_custom_call.1} parent=5 // pred_fallthru
        _
    $region6: #{tpu_custom_call.1} parent=1 // loop_footer
      %s23 = sadd.s32 1, %s19
    $region7: #{tpu_custom_call.1} parent=1 // loop_footer_branch
      %18 = sbr.rel target = $region3
    $region8: #{tpu_custom_call.1} parent=1 // loop_exit
      _
    %3786 = vsyncpa [#allocation4], 1
    %s3787 = scalar_lea.sflag [#allocation4], 1
    %3788 = vsyncpa %s3787, 1
    %3789 = vsyncpa [#allocation5], 1
    %s3790 = scalar_lea.sflag [#allocation5], 1
    %3791 = vsyncpa %s3790, 1

</llo_original>
